<compile_context>
chip_gen: v7x
topology: tpu7x:2x2x1
jax: 0.10.0
libtpu: 0.0.40
codegen_flags: <defaults>
</compile_context>

<pallas_src>
import functools

import jax
import jax.numpy as jnp
from jax import lax
from jax.experimental import pallas as pl
from jax.experimental.pallas import tpu as pltpu

DIM = 64                      # ConvMixerBlock(dim=64)
KS = 8                        # depthwise kernel_size=8
PAD_LO = (KS - 1) // 2        # 3  -- PyTorch padding='same' with even kernel pads (3, 4)
PAD_HI = (KS - 1) - PAD_LO    # 4
BN_EPS = 1e-5
SUB = 8                       # depthwise sub-tile height (bounds vreg pressure)


def _gelu(x):
    # tanh-approximate GELU: transcendental goes to the EUP slot; ~3e-3 abs deviation.
    c = 0.7978845608028654  # sqrt(2/pi)
    return 0.5 * x * (1.0 + jnp.tanh(c * (x + 0.044715 * (x * x * x))))


def convmixer_block_kernel(xp_ref, dww_ref, prm_ref, pwwT_ref, o_ref, h_ref):
    _, TH, W, CP = o_ref.shape                 # (1, tile_H, W, packed_channels)
    n_sub = TH // SUB
    h0 = pl.program_id(1) * TH                 # first output row of this H tile

    dwb, bn1s, bn1b = prm_ref[0, :], prm_ref[1, :], prm_ref[2, :]
    pwb, bn2s, bn2b = prm_ref[3, :], prm_ref[4, :], prm_ref[5, :]

    # process kj == PAD_LO last so its shifted window doubles as the residual slab
    kj_order = tuple(k for k in range(KS) if k != PAD_LO) + (PAD_LO,)

    for s in range(n_sub):                     # static sub-tile loop (8 output rows each)
        hs = pl.multiple_of(h0 + s * SUB, SUB)
        acc = jnp.zeros((SUB, W, CP), jnp.float32)
        resid = None
        for kj in kj_order:                    # static W-offset taps (sublane shift)
            col = xp_ref[0, pl.ds(hs, SUB + KS - 1), kj:kj + W, :]   # (SUB+7, W, CP)
            for ki in range(KS):               # H-offset taps: free plane slices
                acc = acc + col[ki:ki + SUB, :, :] * dww_ref[kj, ki, :]
            if kj == PAD_LO:
                resid = col[PAD_LO:PAD_LO + SUB, :, :]               # == unpadded input
        h = _gelu(acc + dwb) * bn1s + bn1b + resid                   # GELU -> BN1 -> +x
        h_ref[s * SUB * W:(s + 1) * SUB * W, :] = (
            h.reshape(SUB * W, CP).astype(jnp.bfloat16))

    # pointwise 1x1 conv: (TH*W, CP) @ (CP, CP) block-diagonal bf16 MXU matmul (f32 acc)
    y = jnp.dot(h_ref[...], pwwT_ref[...], preferred_element_type=jnp.float32)
    y = _gelu(y + pwb) * bn2s + bn2b
    o_ref[...] = y.reshape(1, TH, W, CP).astype(o_ref.dtype)


def _is_multi_tensorcore():
    """True on chips with >1 TensorCore (v4/v5p/v7x); the H grid split only helps there."""
    try:
        kind = jax.devices()[0].device_kind.lower()
    except Exception:
        return False
    return any(tag in kind for tag in ("v4", "v5p", "v7", "7x"))


@functools.partial(jax.jit, static_argnames=("n_h",))
def _convmixer_block_impl(x_nchw, dw_w, dw_b, bn1, pw_w, pw_b, bn2, *, n_h):
    N, C, H, W = x_nchw.shape
    CP = 2 * C

    # ---- glue: batch-pair lane packing (one transpose) + spatial zero pad ----
    # TODO(synk): accept NHWC activations directly to drop the in/out transposes entirely.
    if N % 2:
        # zero partner image for odd batch; its output is sliced off below
        x_nchw = jnp.concatenate(
            [x_nchw, jnp.zeros((1, C, H, W), x_nchw.dtype)], axis=0)
    Ne = x_nchw.shape[0]
    Np = Ne // 2
    x_pk = jnp.transpose(x_nchw.reshape(Np, 2, C, H, W),
                         (0, 3, 4, 1, 2)).reshape(Np, H, W, CP)
    # pad W by one extra column so the padded width is a multiple of 8 (aligned loads)
    x_pad = jnp.pad(x_pk, ((0, 0), (PAD_LO, PAD_HI), (PAD_LO, PAD_HI + 1), (0, 0)))
    Hp, Wpp = H + KS - 1, W + KS

    # depthwise taps [kj, ki, c], tiled x2 along packed channels
    dww = jnp.tile(jnp.transpose(dw_w[:, 0, :, :], (2, 1, 0)), (1, 1, 2))  # (KS, KS, CP)

    # fold BN (inference) and merge the six per-channel vectors into one (8, CP) input
    g1, b1, m1, v1 = bn1
    inv1 = g1 / jnp.sqrt(v1 + BN_EPS)
    g2, b2, m2, v2 = bn2
    inv2 = g2 / jnp.sqrt(v2 + BN_EPS)
    prm = jnp.stack([
        jnp.tile(dw_b, 2),               # depthwise bias
        jnp.tile(inv1, 2),               # BN1 scale
        jnp.tile(b1 - m1 * inv1, 2),     # BN1 bias
        jnp.tile(pw_b, 2),               # pointwise bias
        jnp.tile(inv2, 2),               # BN2 scale
        jnp.tile(b2 - m2 * inv2, 2),     # BN2 bias
        jnp.zeros((CP,), jnp.float32),
        jnp.zeros((CP,), jnp.float32),
    ], axis=0)                           # (8, CP)

    # block-diagonal pointwise weight (bf16): both packed images share one MXU matmul
    wT = jnp.transpose(pw_w[:, :, 0, 0], (1, 0))                 # (C_in, C_out)
    pwwT = jnp.zeros((CP, CP), jnp.float32)
    pwwT = pwwT.at[:C, :C].set(wT).at[C:, C:].set(wT).astype(jnp.bfloat16)

    TH = H // n_h

    vmem_need = 2 * (Hp * Wpp * CP * 4 + TH * W * CP * 4
                     + KS * KS * CP * 4 + 8 * CP * 4 + CP * CP * 2) + TH * W * CP * 2
    vmem_limit = int(min(64 << 20, max(32 << 20, 2 * vmem_need)))

    out_pk = pl.pallas_call(
        convmixer_block_kernel,
        out_shape=jax.ShapeDtypeStruct((Np, H, W, CP), x_nchw.dtype),
        grid_spec=pltpu.PrefetchScalarGridSpec(
            num_scalar_prefetch=0,
            grid=(Np, n_h),
            in_specs=[
                # full padded image per pair (~270 KB at 16x16) — fine at CIFAR sizes.
                # TODO(synk): tile W / manual halo DMA for large images so the block
                # stays within v7x's 64 MiB VMEM.
                pl.BlockSpec((1, Hp, Wpp, CP), lambda n, h: (n, 0, 0, 0)),
                pl.BlockSpec((KS, KS, CP), lambda n, h: (0, 0, 0)),     # depthwise taps
                pl.BlockSpec((8, CP), lambda n, h: (0, 0)),             # merged params
                pl.BlockSpec((CP, CP), lambda n, h: (0, 0)),            # pointwise W^T
            ],
            out_specs=pl.BlockSpec((1, TH, W, CP), lambda n, h: (n, h, 0, 0)),
            scratch_shapes=[pltpu.VMEM((TH * W, CP), jnp.bfloat16)],
        ),
        compiler_params=pltpu.CompilerParams(
            dimension_semantics=("parallel", "parallel"),
            vmem_limit_bytes=vmem_limit),
    )(x_pad, dww, prm, pwwT)

    # unpack lanes -> batch (one transpose), back to NCHW
    out = jnp.transpose(out_pk.reshape(Np, H, W, 2, C),
                        (0, 3, 4, 1, 2)).reshape(Ne, C, H, W)
    return out[:N]


def convmixer_block(x_nchw, dw_w, dw_b, bn1, pw_w, pw_b, bn2):
    """Forward pass of ConvMixerBlock. x_nchw: (N, C, H, W) float32, returns NCHW."""
    N, C, H, W = x_nchw.shape
    assert H % SUB == 0 and W % 8 == 0, "kernel assumes H, W multiples of 8"
    Np = (N + 1) // 2
    n_h = 2 if (_is_multi_tensorcore() and Np < 2 and H % (2 * SUB) == 0) else 1
    return _convmixer_block_impl(x_nchw, dw_w, dw_b, bn1, pw_w, pw_b, bn2, n_h=n_h)


def reference(x, dw_w, dw_b, bn1, pw_w, pw_b, bn2):
    """Pure-JAX NCHW reference (mirrors the PyTorch module in eval mode, exact GELU)."""
    C = x.shape[1]
    h = lax.conv_general_dilated(
        x, dw_w, window_strides=(1, 1),
        padding=[(PAD_LO, PAD_HI), (PAD_LO, PAD_HI)],
        dimension_numbers=("NCHW", "OIHW", "NCHW"),
        feature_group_count=C)
    h = h + dw_b[None, :, None, None]
    h = jax.nn.gelu(h, approximate=False)
    g1, b1, m1, v1 = bn1
    h = (h - m1[None, :, None, None]) / jnp.sqrt(v1 + BN_EPS)[None, :, None, None]
    h = h * g1[None, :, None, None] + b1[None, :, None, None]
    h = h + x
    y = lax.conv_general_dilated(
        h, pw_w, window_strides=(1, 1), padding=[(0, 0), (0, 0)],
        dimension_numbers=("NCHW", "OIHW", "NCHW"))
    y = y + pw_b[None, :, None, None]
    y = jax.nn.gelu(y, approximate=False)
    g2, b2, m2, v2 = bn2
    y = (y - m2[None, :, None, None]) / jnp.sqrt(v2 + BN_EPS)[None, :, None, None]
    y = y * g2[None, :, None, None] + b2[None, :, None, None]
    return y


if __name__ == "__main__":
    key = jax.random.PRNGKey(0)
    ks = jax.random.split(key, 16)

    N, C, H, W = 2, DIM, 16, 16
    x = jax.random.normal(ks[0], (N, C, H, W), jnp.float32)

    # deterministic synthetic parameters (shapes from the module's __init__)
    dw_w = 0.1 * jax.random.normal(ks[1], (C, 1, KS, KS), jnp.float32)   # depthwise conv
    dw_b = 0.1 * jax.random.normal(ks[2], (C,), jnp.float32)
    bn1 = (1.0 + 0.1 * jax.random.normal(ks[3], (C,), jnp.float32),      # gamma
           0.1 * jax.random.normal(ks[4], (C,), jnp.float32),            # beta
           0.1 * jax.random.normal(ks[5], (C,), jnp.float32),            # running_mean
           jax.random.uniform(ks[6], (C,), jnp.float32, 0.5, 1.5))       # running_var
    pw_w = 0.1 * jax.random.normal(ks[7], (C, C, 1, 1), jnp.float32)     # pointwise conv
    pw_b = 0.1 * jax.random.normal(ks[8], (C,), jnp.float32)
    bn2 = (1.0 + 0.1 * jax.random.normal(ks[9], (C,), jnp.float32),
           0.1 * jax.random.normal(ks[10], (C,), jnp.float32),
           0.1 * jax.random.normal(ks[11], (C,), jnp.float32),
           jax.random.uniform(ks[12], (C,), jnp.float32, 0.5, 1.5))

    out = convmixer_block(x, dw_w, dw_b, bn1, pw_w, pw_b, bn2)
    out = jax.block_until_ready(out)

    ref = jax.block_until_ready(reference(x, dw_w, dw_b, bn1, pw_w, pw_b, bn2))
    max_err = float(jnp.max(jnp.abs(out - ref)))
    assert out.shape == (N, C, H, W)
    # tolerance accounts for tanh-approx GELU + bf16 MXU inputs (f32 accumulate)
    assert max_err < 5e-2, f"mismatch vs reference: max abs err {max_err}"

    print("KERNEL_OK")
</pallas_src>

<mosaic_0001>
module attributes {stable_mosaic.version = 11 : i64} {
  func.func @convmixer_block_kernel(%arg0: i32, %arg1: i32, %arg2: memref<1x23x24x128xf32, #tpu.memory_space<vmem>>, %arg3: memref<8x8x128xf32, #tpu.memory_space<vmem>>, %arg4: memref<8x128xf32, #tpu.memory_space<vmem>>, %arg5: memref<128x128xbf16, #tpu.memory_space<vmem>>, %arg6: memref<1x16x16x128xf32, #tpu.memory_space<vmem>>, %arg7: memref<256x128xbf16, #tpu.memory_space<vmem>>) attributes {dimension_semantics = [#tpu.dimension_semantics<parallel>, #tpu.dimension_semantics<parallel>], iteration_bounds = array<i64: 1, 1>, scalar_prefetch = 0 : i64, scratch_operands = 1 : i64, tpu.core_type = #tpu.core_type<tc>, window_params = [{transform_indices = @transform_0, window_bounds = array<i64: 1, 23, 24, 128>}, {pipeline_mode = #tpu.pipeline_mode<synchronous>, transform_indices = @transform_1, window_bounds = array<i64: 8, 8, 128>}, {pipeline_mode = #tpu.pipeline_mode<synchronous>, transform_indices = @transform_2, window_bounds = array<i64: 8, 128>}, {pipeline_mode = #tpu.pipeline_mode<synchronous>, transform_indices = @transform_3, window_bounds = array<i64: 128, 128>}, {transform_indices = @transform_4, window_bounds = array<i64: 1, 16, 16, 128>}]} {
    %c16_i32 = arith.constant 16 : i32
    %0 = arith.muli %arg1, %c16_i32 : i32
    %c0 = arith.constant 0 : index
    %c0_0 = arith.constant 0 : index
    %1 = vector.load %arg4[%c0, %c0_0] : memref<8x128xf32, #tpu.memory_space<vmem>>, vector<1x128xf32>
    %2 = vector.shape_cast %1 : vector<1x128xf32> to vector<128xf32>
    %c1 = arith.constant 1 : index
    %c0_1 = arith.constant 0 : index
    %3 = vector.load %arg4[%c1, %c0_1] : memref<8x128xf32, #tpu.memory_space<vmem>>, vector<1x128xf32>
    %4 = vector.shape_cast %3 : vector<1x128xf32> to vector<128xf32>
    %c2 = arith.constant 2 : index
    %c0_2 = arith.constant 0 : index
    %5 = vector.load %arg4[%c2, %c0_2] : memref<8x128xf32, #tpu.memory_space<vmem>>, vector<1x128xf32>
    %6 = vector.shape_cast %5 : vector<1x128xf32> to vector<128xf32>
    %c3 = arith.constant 3 : index
    %c0_3 = arith.constant 0 : index
    %7 = vector.load %arg4[%c3, %c0_3] : memref<8x128xf32, #tpu.memory_space<vmem>>, vector<1x128xf32>
    %8 = vector.shape_cast %7 : vector<1x128xf32> to vector<128xf32>
    %c4 = arith.constant 4 : index
    %c0_4 = arith.constant 0 : index
    %9 = vector.load %arg4[%c4, %c0_4] : memref<8x128xf32, #tpu.memory_space<vmem>>, vector<1x128xf32>
    %10 = vector.shape_cast %9 : vector<1x128xf32> to vector<128xf32>
    %c5 = arith.constant 5 : index
    %c0_5 = arith.constant 0 : index
    %11 = vector.load %arg4[%c5, %c0_5] : memref<8x128xf32, #tpu.memory_space<vmem>>, vector<1x128xf32>
    %12 = vector.shape_cast %11 : vector<1x128xf32> to vector<128xf32>
    %c0_i32 = arith.constant 0 : i32
    %13 = arith.addi %0, %c0_i32 : i32
    %14 = tpu.assume_multiple %13, 8 : i32
    %cst = arith.constant 0.000000e+00 : f32
    %15 = vector.broadcast %cst : f32 to vector<8x16x128xf32>
    %c0_6 = arith.constant 0 : index
    %16 = arith.index_cast %14 : i32 to index
    %c0_7 = arith.constant 0 : index
    %c0_8 = arith.constant 0 : index
    %17 = vector.load %arg2[%c0_6, %16, %c0_7, %c0_8] : memref<1x23x24x128xf32, #tpu.memory_space<vmem>>, vector<1x15x16x128xf32>
    %18 = vector.shape_cast %17 : vector<1x15x16x128xf32> to vector<15x16x128xf32>
    %19 = vector.extract_strided_slice %18 {offsets = [0, 0, 0], sizes = [8, 16, 128], strides = [1, 1, 1]} : vector<15x16x128xf32> to vector<8x16x128xf32>
    %c0_9 = arith.constant 0 : index
    %c0_10 = arith.constant 0 : index
    %c0_11 = arith.constant 0 : index
    %20 = vector.load %arg3[%c0_9, %c0_10, %c0_11] : memref<8x8x128xf32, #tpu.memory_space<vmem>>, vector<1x1x128xf32>
    %21 = vector.shape_cast %20 : vector<1x1x128xf32> to vector<128xf32>
    %22 = vector.shape_cast %21 : vector<128xf32> to vector<1x1x128xf32>
    %23 = vector.broadcast %22 : vector<1x1x128xf32> to vector<8x16x128xf32>
    %24 = arith.mulf %19, %23 : vector<8x16x128xf32>
    %25 = arith.addf %15, %24 : vector<8x16x128xf32>
    %26 = vector.extract_strided_slice %18 {offsets = [1, 0, 0], sizes = [8, 16, 128], strides = [1, 1, 1]} : vector<15x16x128xf32> to vector<8x16x128xf32>
    %c0_12 = arith.constant 0 : index
    %c1_13 = arith.constant 1 : index
    %c0_14 = arith.constant 0 : index
    %27 = vector.load %arg3[%c0_12, %c1_13, %c0_14] : memref<8x8x128xf32, #tpu.memory_space<vmem>>, vector<1x1x128xf32>
    %28 = vector.shape_cast %27 : vector<1x1x128xf32> to vector<128xf32>
    %29 = vector.shape_cast %28 : vector<128xf32> to vector<1x1x128xf32>
    %30 = vector.broadcast %29 : vector<1x1x128xf32> to vector<8x16x128xf32>
    %31 = arith.mulf %26, %30 : vector<8x16x128xf32>
    %32 = arith.addf %25, %31 : vector<8x16x128xf32>
    %33 = vector.extract_strided_slice %18 {offsets = [2, 0, 0], sizes = [8, 16, 128], strides = [1, 1, 1]} : vector<15x16x128xf32> to vector<8x16x128xf32>
    %c0_15 = arith.constant 0 : index
    %c2_16 = arith.constant 2 : index
    %c0_17 = arith.constant 0 : index
    %34 = vector.load %arg3[%c0_15, %c2_16, %c0_17] : memref<8x8x128xf32, #tpu.memory_space<vmem>>, vector<1x1x128xf32>
    %35 = vector.shape_cast %34 : vector<1x1x128xf32> to vector<128xf32>
    %36 = vector.shape_cast %35 : vector<128xf32> to vector<1x1x128xf32>
    %37 = vector.broadcast %36 : vector<1x1x128xf32> to vector<8x16x128xf32>
    %38 = arith.mulf %33, %37 : vector<8x16x128xf32>
    %39 = arith.addf %32, %38 : vector<8x16x128xf32>
    %40 = vector.extract_strided_slice %18 {offsets = [3, 0, 0], sizes = [8, 16, 128], strides = [1, 1, 1]} : vector<15x16x128xf32> to vector<8x16x128xf32>
    %c0_18 = arith.constant 0 : index
    %c3_19 = arith.constant 3 : index
    %c0_20 = arith.constant 0 : index
    %41 = vector.load %arg3[%c0_18, %c3_19, %c0_20] : memref<8x8x128xf32, #tpu.memory_space<vmem>>, vector<1x1x128xf32>
    %42 = vector.shape_cast %41 : vector<1x1x128xf32> to vector<128xf32>
    %43 = vector.shape_cast %42 : vector<128xf32> to vector<1x1x128xf32>
    %44 = vector.broadcast %43 : vector<1x1x128xf32> to vector<8x16x128xf32>
    %45 = arith.mulf %40, %44 : vector<8x16x128xf32>
    %46 = arith.addf %39, %45 : vector<8x16x128xf32>
    %47 = vector.extract_strided_slice %18 {offsets = [4, 0, 0], sizes = [8, 16, 128], strides = [1, 1, 1]} : vector<15x16x128xf32> to vector<8x16x128xf32>
    %c0_21 = arith.constant 0 : index
    %c4_22 = arith.constant 4 : index
    %c0_23 = arith.constant 0 : index
    %48 = vector.load %arg3[%c0_21, %c4_22, %c0_23] : memref<8x8x128xf32, #tpu.memory_space<vmem>>, vector<1x1x128xf32>
    %49 = vector.shape_cast %48 : vector<1x1x128xf32> to vector<128xf32>
    %50 = vector.shape_cast %49 : vector<128xf32> to vector<1x1x128xf32>
    %51 = vector.broadcast %50 : vector<1x1x128xf32> to vector<8x16x128xf32>
    %52 = arith.mulf %47, %51 : vector<8x16x128xf32>
    %53 = arith.addf %46, %52 : vector<8x16x128xf32>
    %54 = vector.extract_strided_slice %18 {offsets = [5, 0, 0], sizes = [8, 16, 128], strides = [1, 1, 1]} : vector<15x16x128xf32> to vector<8x16x128xf32>
    %c0_24 = arith.constant 0 : index
    %c5_25 = arith.constant 5 : index
    %c0_26 = arith.constant 0 : index
    %55 = vector.load %arg3[%c0_24, %c5_25, %c0_26] : memref<8x8x128xf32, #tpu.memory_space<vmem>>, vector<1x1x128xf32>
    %56 = vector.shape_cast %55 : vector<1x1x128xf32> to vector<128xf32>
    %57 = vector.shape_cast %56 : vector<128xf32> to vector<1x1x128xf32>
    %58 = vector.broadcast %57 : vector<1x1x128xf32> to vector<8x16x128xf32>
    %59 = arith.mulf %54, %58 : vector<8x16x128xf32>
    %60 = arith.addf %53, %59 : vector<8x16x128xf32>
    %61 = vector.extract_strided_slice %18 {offsets = [6, 0, 0], sizes = [8, 16, 128], strides = [1, 1, 1]} : vector<15x16x128xf32> to vector<8x16x128xf32>
    %c0_27 = arith.constant 0 : index
    %c6 = arith.constant 6 : index
    %c0_28 = arith.constant 0 : index
    %62 = vector.load %arg3[%c0_27, %c6, %c0_28] : memref<8x8x128xf32, #tpu.memory_space<vmem>>, vector<1x1x128xf32>
    %63 = vector.shape_cast %62 : vector<1x1x128xf32> to vector<128xf32>
    %64 = vector.shape_cast %63 : vector<128xf32> to vector<1x1x128xf32>
    %65 = vector.broadcast %64 : vector<1x1x128xf32> to vector<8x16x128xf32>
    %66 = arith.mulf %61, %65 : vector<8x16x128xf32>
    %67 = arith.addf %60, %66 : vector<8x16x128xf32>
    %68 = vector.extract_strided_slice %18 {offsets = [7, 0, 0], sizes = [8, 16, 128], strides = [1, 1, 1]} : vector<15x16x128xf32> to vector<8x16x128xf32>
    %c0_29 = arith.constant 0 : index
    %c7 = arith.constant 7 : index
    %c0_30 = arith.constant 0 : index
    %69 = vector.load %arg3[%c0_29, %c7, %c0_30] : memref<8x8x128xf32, #tpu.memory_space<vmem>>, vector<1x1x128xf32>
    %70 = vector.shape_cast %69 : vector<1x1x128xf32> to vector<128xf32>
    %71 = vector.shape_cast %70 : vector<128xf32> to vector<1x1x128xf32>
    %72 = vector.broadcast %71 : vector<1x1x128xf32> to vector<8x16x128xf32>
    %73 = arith.mulf %68, %72 : vector<8x16x128xf32>
    %74 = arith.addf %67, %73 : vector<8x16x128xf32>
    %c0_31 = arith.constant 0 : index
    %75 = arith.index_cast %14 : i32 to index
    %c1_32 = arith.constant 1 : index
    %c0_33 = arith.constant 0 : index
    %76 = vector.load %arg2[%c0_31, %75, %c1_32, %c0_33] : memref<1x23x24x128xf32, #tpu.memory_space<vmem>>, vector<1x15x16x128xf32>
    %77 = vector.shape_cast %76 : vector<1x15x16x128xf32> to vector<15x16x128xf32>
    %78 = vector.extract_strided_slice %77 {offsets = [0, 0, 0], sizes = [8, 16, 128], strides = [1, 1, 1]} : vector<15x16x128xf32> to vector<8x16x128xf32>
    %c1_34 = arith.constant 1 : index
    %c0_35 = arith.constant 0 : index
    %c0_36 = arith.constant 0 : index
    %79 = vector.load %arg3[%c1_34, %c0_35, %c0_36] : memref<8x8x128xf32, #tpu.memory_space<vmem>>, vector<1x1x128xf32>
    %80 = vector.shape_cast %79 : vector<1x1x128xf32> to vector<128xf32>
    %81 = vector.shape_cast %80 : vector<128xf32> to vector<1x1x128xf32>
    %82 = vector.broadcast %81 : vector<1x1x128xf32> to vector<8x16x128xf32>
    %83 = arith.mulf %78, %82 : vector<8x16x128xf32>
    %84 = arith.addf %74, %83 : vector<8x16x128xf32>
    %85 = vector.extract_strided_slice %77 {offsets = [1, 0, 0], sizes = [8, 16, 128], strides = [1, 1, 1]} : vector<15x16x128xf32> to vector<8x16x128xf32>
    %c1_37 = arith.constant 1 : index
    %c1_38 = arith.constant 1 : index
    %c0_39 = arith.constant 0 : index
    %86 = vector.load %arg3[%c1_37, %c1_38, %c0_39] : memref<8x8x128xf32, #tpu.memory_space<vmem>>, vector<1x1x128xf32>
    %87 = vector.shape_cast %86 : vector<1x1x128xf32> to vector<128xf32>
    %88 = vector.shape_cast %87 : vector<128xf32> to vector<1x1x128xf32>
    %89 = vector.broadcast %88 : vector<1x1x128xf32> to vector<8x16x128xf32>
    %90 = arith.mulf %85, %89 : vector<8x16x128xf32>
    %91 = arith.addf %84, %90 : vector<8x16x128xf32>
    %92 = vector.extract_strided_slice %77 {offsets = [2, 0, 0], sizes = [8, 16, 128], strides = [1, 1, 1]} : vector<15x16x128xf32> to vector<8x16x128xf32>
    %c1_40 = arith.constant 1 : index
    %c2_41 = arith.constant 2 : index
    %c0_42 = arith.constant 0 : index
    %93 = vector.load %arg3[%c1_40, %c2_41, %c0_42] : memref<8x8x128xf32, #tpu.memory_space<vmem>>, vector<1x1x128xf32>
    %94 = vector.shape_cast %93 : vector<1x1x128xf32> to vector<128xf32>
    %95 = vector.shape_cast %94 : vector<128xf32> to vector<1x1x128xf32>
    %96 = vector.broadcast %95 : vector<1x1x128xf32> to vector<8x16x128xf32>
    %97 = arith.mulf %92, %96 : vector<8x16x128xf32>
    %98 = arith.addf %91, %97 : vector<8x16x128xf32>
    %99 = vector.extract_strided_slice %77 {offsets = [3, 0, 0], sizes = [8, 16, 128], strides = [1, 1, 1]} : vector<15x16x128xf32> to vector<8x16x128xf32>
    %c1_43 = arith.constant 1 : index
    %c3_44 = arith.constant 3 : index
    %c0_45 = arith.constant 0 : index
    %100 = vector.load %arg3[%c1_43, %c3_44, %c0_45] : memref<8x8x128xf32, #tpu.memory_space<vmem>>, vector<1x1x128xf32>
    %101 = vector.shape_cast %100 : vector<1x1x128xf32> to vector<128xf32>
    %102 = vector.shape_cast %101 : vector<128xf32> to vector<1x1x128xf32>
    %103 = vector.broadcast %102 : vector<1x1x128xf32> to vector<8x16x128xf32>
    %104 = arith.mulf %99, %103 : vector<8x16x128xf32>
    %105 = arith.addf %98, %104 : vector<8x16x128xf32>
    %106 = vector.extract_strided_slice %77 {offsets = [4, 0, 0], sizes = [8, 16, 128], strides = [1, 1, 1]} : vector<15x16x128xf32> to vector<8x16x128xf32>
    %c1_46 = arith.constant 1 : index
    %c4_47 = arith.constant 4 : index
    %c0_48 = arith.constant 0 : index
    %107 = vector.load %arg3[%c1_46, %c4_47, %c0_48] : memref<8x8x128xf32, #tpu.memory_space<vmem>>, vector<1x1x128xf32>
    %108 = vector.shape_cast %107 : vector<1x1x128xf32> to vector<128xf32>
    %109 = vector.shape_cast %108 : vector<128xf32> to vector<1x1x128xf32>
    %110 = vector.broadcast %109 : vector<1x1x128xf32> to vector<8x16x128xf32>
    %111 = arith.mulf %106, %110 : vector<8x16x128xf32>
    %112 = arith.addf %105, %111 : vector<8x16x128xf32>
    %113 = vector.extract_strided_slice %77 {offsets = [5, 0, 0], sizes = [8, 16, 128], strides = [1, 1, 1]} : vector<15x16x128xf32> to vector<8x16x128xf32>
    %c1_49 = arith.constant 1 : index
    %c5_50 = arith.constant 5 : index
    %c0_51 = arith.constant 0 : index
    %114 = vector.load %arg3[%c1_49, %c5_50, %c0_51] : memref<8x8x128xf32, #tpu.memory_space<vmem>>, vector<1x1x128xf32>
    %115 = vector.shape_cast %114 : vector<1x1x128xf32> to vector<128xf32>
    %116 = vector.shape_cast %115 : vector<128xf32> to vector<1x1x128xf32>
    %117 = vector.broadcast %116 : vector<1x1x128xf32> to vector<8x16x128xf32>
    %118 = arith.mulf %113, %117 : vector<8x16x128xf32>
    %119 = arith.addf %112, %118 : vector<8x16x128xf32>
    %120 = vector.extract_strided_slice %77 {offsets = [6, 0, 0], sizes = [8, 16, 128], strides = [1, 1, 1]} : vector<15x16x128xf32> to vector<8x16x128xf32>
    %c1_52 = arith.constant 1 : index
    %c6_53 = arith.constant 6 : index
    %c0_54 = arith.constant 0 : index
    %121 = vector.load %arg3[%c1_52, %c6_53, %c0_54] : memref<8x8x128xf32, #tpu.memory_space<vmem>>, vector<1x1x128xf32>
    %122 = vector.shape_cast %121 : vector<1x1x128xf32> to vector<128xf32>
    %123 = vector.shape_cast %122 : vector<128xf32> to vector<1x1x128xf32>
    %124 = vector.broadcast %123 : vector<1x1x128xf32> to vector<8x16x128xf32>
    %125 = arith.mulf %120, %124 : vector<8x16x128xf32>
    %126 = arith.addf %119, %125 : vector<8x16x128xf32>
    %127 = vector.extract_strided_slice %77 {offsets = [7, 0, 0], sizes = [8, 16, 128], strides = [1, 1, 1]} : vector<15x16x128xf32> to vector<8x16x128xf32>
    %c1_55 = arith.constant 1 : index
    %c7_56 = arith.constant 7 : index
    %c0_57 = arith.constant 0 : index
    %128 = vector.load %arg3[%c1_55, %c7_56, %c0_57] : memref<8x8x128xf32, #tpu.memory_space<vmem>>, vector<1x1x128xf32>
    %129 = vector.shape_cast %128 : vector<1x1x128xf32> to vector<128xf32>
    %130 = vector.shape_cast %129 : vector<128xf32> to vector<1x1x128xf32>
    %131 = vector.broadcast %130 : vector<1x1x128xf32> to vector<8x16x128xf32>
    %132 = arith.mulf %127, %131 : vector<8x16x128xf32>
    %133 = arith.addf %126, %132 : vector<8x16x128xf32>
    %c0_58 = arith.constant 0 : index
    %134 = arith.index_cast %14 : i32 to index
    %c2_59 = arith.constant 2 : index
    %c0_60 = arith.constant 0 : index
    %135 = vector.load %arg2[%c0_58, %134, %c2_59, %c0_60] : memref<1x23x24x128xf32, #tpu.memory_space<vmem>>, vector<1x15x16x128xf32>
    %136 = vector.shape_cast %135 : vector<1x15x16x128xf32> to vector<15x16x128xf32>
    %137 = vector.extract_strided_slice %136 {offsets = [0, 0, 0], sizes = [8, 16, 128], strides = [1, 1, 1]} : vector<15x16x128xf32> to vector<8x16x128xf32>
    %c2_61 = arith.constant 2 : index
    %c0_62 = arith.constant 0 : index
    %c0_63 = arith.constant 0 : index
    %138 = vector.load %arg3[%c2_61, %c0_62, %c0_63] : memref<8x8x128xf32, #tpu.memory_space<vmem>>, vector<1x1x128xf32>
    %139 = vector.shape_cast %138 : vector<1x1x128xf32> to vector<128xf32>
    %140 = vector.shape_cast %139 : vector<128xf32> to vector<1x1x128xf32>
    %141 = vector.broadcast %140 : vector<1x1x128xf32> to vector<8x16x128xf32>
    %142 = arith.mulf %137, %141 : vector<8x16x128xf32>
    %143 = arith.addf %133, %142 : vector<8x16x128xf32>
    %144 = vector.extract_strided_slice %136 {offsets = [1, 0, 0], sizes = [8, 16, 128], strides = [1, 1, 1]} : vector<15x16x128xf32> to vector<8x16x128xf32>
    %c2_64 = arith.constant 2 : index
    %c1_65 = arith.constant 1 : index
    %c0_66 = arith.constant 0 : index
    %145 = vector.load %arg3[%c2_64, %c1_65, %c0_66] : memref<8x8x128xf32, #tpu.memory_space<vmem>>, vector<1x1x128xf32>
    %146 = vector.shape_cast %145 : vector<1x1x128xf32> to vector<128xf32>
    %147 = vector.shape_cast %146 : vector<128xf32> to vector<1x1x128xf32>
    %148 = vector.broadcast %147 : vector<1x1x128xf32> to vector<8x16x128xf32>
    %149 = arith.mulf %144, %148 : vector<8x16x128xf32>
    %150 = arith.addf %143, %149 : vector<8x16x128xf32>
    %151 = vector.extract_strided_slice %136 {offsets = [2, 0, 0], sizes = [8, 16, 128], strides = [1, 1, 1]} : vector<15x16x128xf32> to vector<8x16x128xf32>
    %c2_67 = arith.constant 2 : index
    %c2_68 = arith.constant 2 : index
    %c0_69 = arith.constant 0 : index
    %152 = vector.load %arg3[%c2_67, %c2_68, %c0_69] : memref<8x8x128xf32, #tpu.memory_space<vmem>>, vector<1x1x128xf32>
    %153 = vector.shape_cast %152 : vector<1x1x128xf32> to vector<128xf32>
    %154 = vector.shape_cast %153 : vector<128xf32> to vector<1x1x128xf32>
    %155 = vector.broadcast %154 : vector<1x1x128xf32> to vector<8x16x128xf32>
    %156 = arith.mulf %151, %155 : vector<8x16x128xf32>
    %157 = arith.addf %150, %156 : vector<8x16x128xf32>
    %158 = vector.extract_strided_slice %136 {offsets = [3, 0, 0], sizes = [8, 16, 128], strides = [1, 1, 1]} : vector<15x16x128xf32> to vector<8x16x128xf32>
    %c2_70 = arith.constant 2 : index
    %c3_71 = arith.constant 3 : index
    %c0_72 = arith.constant 0 : index
    %159 = vector.load %arg3[%c2_70, %c3_71, %c0_72] : memref<8x8x128xf32, #tpu.memory_space<vmem>>, vector<1x1x128xf32>
    %160 = vector.shape_cast %159 : vector<1x1x128xf32> to vector<128xf32>
    %161 = vector.shape_cast %160 : vector<128xf32> to vector<1x1x128xf32>
    %162 = vector.broadcast %161 : vector<1x1x128xf32> to vector<8x16x128xf32>
    %163 = arith.mulf %158, %162 : vector<8x16x128xf32>
    %164 = arith.addf %157, %163 : vector<8x16x128xf32>
    %165 = vector.extract_strided_slice %136 {offsets = [4, 0, 0], sizes = [8, 16, 128], strides = [1, 1, 1]} : vector<15x16x128xf32> to vector<8x16x128xf32>
    %c2_73 = arith.constant 2 : index
    %c4_74 = arith.constant 4 : index
    %c0_75 = arith.constant 0 : index
    %166 = vector.load %arg3[%c2_73, %c4_74, %c0_75] : memref<8x8x128xf32, #tpu.memory_space<vmem>>, vector<1x1x128xf32>
    %167 = vector.shape_cast %166 : vector<1x1x128xf32> to vector<128xf32>
    %168 = vector.shape_cast %167 : vector<128xf32> to vector<1x1x128xf32>
    %169 = vector.broadcast %168 : vector<1x1x128xf32> to vector<8x16x128xf32>
    %170 = arith.mulf %165, %169 : vector<8x16x128xf32>
    %171 = arith.addf %164, %170 : vector<8x16x128xf32>
    %172 = vector.extract_strided_slice %136 {offsets = [5, 0, 0], sizes = [8, 16, 128], strides = [1, 1, 1]} : vector<15x16x128xf32> to vector<8x16x128xf32>
    %c2_76 = arith.constant 2 : index
    %c5_77 = arith.constant 5 : index
    %c0_78 = arith.constant 0 : index
    %173 = vector.load %arg3[%c2_76, %c5_77, %c0_78] : memref<8x8x128xf32, #tpu.memory_space<vmem>>, vector<1x1x128xf32>
    %174 = vector.shape_cast %173 : vector<1x1x128xf32> to vector<128xf32>
    %175 = vector.shape_cast %174 : vector<128xf32> to vector<1x1x128xf32>
    %176 = vector.broadcast %175 : vector<1x1x128xf32> to vector<8x16x128xf32>
    %177 = arith.mulf %172, %176 : vector<8x16x128xf32>
    %178 = arith.addf %171, %177 : vector<8x16x128xf32>
    %179 = vector.extract_strided_slice %136 {offsets = [6, 0, 0], sizes = [8, 16, 128], strides = [1, 1, 1]} : vector<15x16x128xf32> to vector<8x16x128xf32>
    %c2_79 = arith.constant 2 : index
    %c6_80 = arith.constant 6 : index
    %c0_81 = arith.constant 0 : index
    %180 = vector.load %arg3[%c2_79, %c6_80, %c0_81] : memref<8x8x128xf32, #tpu.memory_space<vmem>>, vector<1x1x128xf32>
    %181 = vector.shape_cast %180 : vector<1x1x128xf32> to vector<128xf32>
    %182 = vector.shape_cast %181 : vector<128xf32> to vector<1x1x128xf32>
    %183 = vector.broadcast %182 : vector<1x1x128xf32> to vector<8x16x128xf32>
    %184 = arith.mulf %179, %183 : vector<8x16x128xf32>
    %185 = arith.addf %178, %184 : vector<8x16x128xf32>
    %186 = vector.extract_strided_slice %136 {offsets = [7, 0, 0], sizes = [8, 16, 128], strides = [1, 1, 1]} : vector<15x16x128xf32> to vector<8x16x128xf32>
    %c2_82 = arith.constant 2 : index
    %c7_83 = arith.constant 7 : index
    %c0_84 = arith.constant 0 : index
    %187 = vector.load %arg3[%c2_82, %c7_83, %c0_84] : memref<8x8x128xf32, #tpu.memory_space<vmem>>, vector<1x1x128xf32>
    %188 = vector.shape_cast %187 : vector<1x1x128xf32> to vector<128xf32>
    %189 = vector.shape_cast %188 : vector<128xf32> to vector<1x1x128xf32>
    %190 = vector.broadcast %189 : vector<1x1x128xf32> to vector<8x16x128xf32>
    %191 = arith.mulf %186, %190 : vector<8x16x128xf32>
    %192 = arith.addf %185, %191 : vector<8x16x128xf32>
    %c0_85 = arith.constant 0 : index
    %193 = arith.index_cast %14 : i32 to index
    %c4_86 = arith.constant 4 : index
    %c0_87 = arith.constant 0 : index
    %194 = vector.load %arg2[%c0_85, %193, %c4_86, %c0_87] : memref<1x23x24x128xf32, #tpu.memory_space<vmem>>, vector<1x15x16x128xf32>
    %195 = vector.shape_cast %194 : vector<1x15x16x128xf32> to vector<15x16x128xf32>
    %196 = vector.extract_strided_slice %195 {offsets = [0, 0, 0], sizes = [8, 16, 128], strides = [1, 1, 1]} : vector<15x16x128xf32> to vector<8x16x128xf32>
    %c4_88 = arith.constant 4 : index
    %c0_89 = arith.constant 0 : index
    %c0_90 = arith.constant 0 : index
    %197 = vector.load %arg3[%c4_88, %c0_89, %c0_90] : memref<8x8x128xf32, #tpu.memory_space<vmem>>, vector<1x1x128xf32>
    %198 = vector.shape_cast %197 : vector<1x1x128xf32> to vector<128xf32>
    %199 = vector.shape_cast %198 : vector<128xf32> to vector<1x1x128xf32>
    %200 = vector.broadcast %199 : vector<1x1x128xf32> to vector<8x16x128xf32>
    %201 = arith.mulf %196, %200 : vector<8x16x128xf32>
    %202 = arith.addf %192, %201 : vector<8x16x128xf32>
    %203 = vector.extract_strided_slice %195 {offsets = [1, 0, 0], sizes = [8, 16, 128], strides = [1, 1, 1]} : vector<15x16x128xf32> to vector<8x16x128xf32>
    %c4_91 = arith.constant 4 : index
    %c1_92 = arith.constant 1 : index
    %c0_93 = arith.constant 0 : index
    %204 = vector.load %arg3[%c4_91, %c1_92, %c0_93] : memref<8x8x128xf32, #tpu.memory_space<vmem>>, vector<1x1x128xf32>
    %205 = vector.shape_cast %204 : vector<1x1x128xf32> to vector<128xf32>
    %206 = vector.shape_cast %205 : vector<128xf32> to vector<1x1x128xf32>
    %207 = vector.broadcast %206 : vector<1x1x128xf32> to vector<8x16x128xf32>
    %208 = arith.mulf %203, %207 : vector<8x16x128xf32>
    %209 = arith.addf %202, %208 : vector<8x16x128xf32>
    %210 = vector.extract_strided_slice %195 {offsets = [2, 0, 0], sizes = [8, 16, 128], strides = [1, 1, 1]} : vector<15x16x128xf32> to vector<8x16x128xf32>
    %c4_94 = arith.constant 4 : index
    %c2_95 = arith.constant 2 : index
    %c0_96 = arith.constant 0 : index
    %211 = vector.load %arg3[%c4_94, %c2_95, %c0_96] : memref<8x8x128xf32, #tpu.memory_space<vmem>>, vector<1x1x128xf32>
    %212 = vector.shape_cast %211 : vector<1x1x128xf32> to vector<128xf32>
    %213 = vector.shape_cast %212 : vector<128xf32> to vector<1x1x128xf32>
    %214 = vector.broadcast %213 : vector<1x1x128xf32> to vector<8x16x128xf32>
    %215 = arith.mulf %210, %214 : vector<8x16x128xf32>
    %216 = arith.addf %209, %215 : vector<8x16x128xf32>
    %217 = vector.extract_strided_slice %195 {offsets = [3, 0, 0], sizes = [8, 16, 128], strides = [1, 1, 1]} : vector<15x16x128xf32> to vector<8x16x128xf32>
    %c4_97 = arith.constant 4 : index
    %c3_98 = arith.constant 3 : index
    %c0_99 = arith.constant 0 : index
    %218 = vector.load %arg3[%c4_97, %c3_98, %c0_99] : memref<8x8x128xf32, #tpu.memory_space<vmem>>, vector<1x1x128xf32>
    %219 = vector.shape_cast %218 : vector<1x1x128xf32> to vector<128xf32>
    %220 = vector.shape_cast %219 : vector<128xf32> to vector<1x1x128xf32>
    %221 = vector.broadcast %220 : vector<1x1x128xf32> to vector<8x16x128xf32>
    %222 = arith.mulf %217, %221 : vector<8x16x128xf32>
    %223 = arith.addf %216, %222 : vector<8x16x128xf32>
    %224 = vector.extract_strided_slice %195 {offsets = [4, 0, 0], sizes = [8, 16, 128], strides = [1, 1, 1]} : vector<15x16x128xf32> to vector<8x16x128xf32>
    %c4_100 = arith.constant 4 : index
    %c4_101 = arith.constant 4 : index
    %c0_102 = arith.constant 0 : index
    %225 = vector.load %arg3[%c4_100, %c4_101, %c0_102] : memref<8x8x128xf32, #tpu.memory_space<vmem>>, vector<1x1x128xf32>
    %226 = vector.shape_cast %225 : vector<1x1x128xf32> to vector<128xf32>
    %227 = vector.shape_cast %226 : vector<128xf32> to vector<1x1x128xf32>
    %228 = vector.broadcast %227 : vector<1x1x128xf32> to vector<8x16x128xf32>
    %229 = arith.mulf %224, %228 : vector<8x16x128xf32>
    %230 = arith.addf %223, %229 : vector<8x16x128xf32>
    %231 = vector.extract_strided_slice %195 {offsets = [5, 0, 0], sizes = [8, 16, 128], strides = [1, 1, 1]} : vector<15x16x128xf32> to vector<8x16x128xf32>
    %c4_103 = arith.constant 4 : index
    %c5_104 = arith.constant 5 : index
    %c0_105 = arith.constant 0 : index
    %232 = vector.load %arg3[%c4_103, %c5_104, %c0_105] : memref<8x8x128xf32, #tpu.memory_space<vmem>>, vector<1x1x128xf32>
    %233 = vector.shape_cast %232 : vector<1x1x128xf32> to vector<128xf32>
    %234 = vector.shape_cast %233 : vector<128xf32> to vector<1x1x128xf32>
    %235 = vector.broadcast %234 : vector<1x1x128xf32> to vector<8x16x128xf32>
    %236 = arith.mulf %231, %235 : vector<8x16x128xf32>
    %237 = arith.addf %230, %236 : vector<8x16x128xf32>
    %238 = vector.extract_strided_slice %195 {offsets = [6, 0, 0], sizes = [8, 16, 128], strides = [1, 1, 1]} : vector<15x16x128xf32> to vector<8x16x128xf32>
    %c4_106 = arith.constant 4 : index
    %c6_107 = arith.constant 6 : index
    %c0_108 = arith.constant 0 : index
    %239 = vector.load %arg3[%c4_106, %c6_107, %c0_108] : memref<8x8x128xf32, #tpu.memory_space<vmem>>, vector<1x1x128xf32>
    %240 = vector.shape_cast %239 : vector<1x1x128xf32> to vector<128xf32>
    %241 = vector.shape_cast %240 : vector<128xf32> to vector<1x1x128xf32>
    %242 = vector.broadcast %241 : vector<1x1x128xf32> to vector<8x16x128xf32>
    %243 = arith.mulf %238, %242 : vector<8x16x128xf32>
    %244 = arith.addf %237, %243 : vector<8x16x128xf32>
    %245 = vector.extract_strided_slice %195 {offsets = [7, 0, 0], sizes = [8, 16, 128], strides = [1, 1, 1]} : vector<15x16x128xf32> to vector<8x16x128xf32>
    %c4_109 = arith.constant 4 : index
    %c7_110 = arith.constant 7 : index
    %c0_111 = arith.constant 0 : index
    %246 = vector.load %arg3[%c4_109, %c7_110, %c0_111] : memref<8x8x128xf32, #tpu.memory_space<vmem>>, vector<1x1x128xf32>
    %247 = vector.shape_cast %246 : vector<1x1x128xf32> to vector<128xf32>
    %248 = vector.shape_cast %247 : vector<128xf32> to vector<1x1x128xf32>
    %249 = vector.broadcast %248 : vector<1x1x128xf32> to vector<8x16x128xf32>
    %250 = arith.mulf %245, %249 : vector<8x16x128xf32>
    %251 = arith.addf %244, %250 : vector<8x16x128xf32>
    %c0_112 = arith.constant 0 : index
    %252 = arith.index_cast %14 : i32 to index
    %c5_113 = arith.constant 5 : index
    %c0_114 = arith.constant 0 : index
    %253 = vector.load %arg2[%c0_112, %252, %c5_113, %c0_114] : memref<1x23x24x128xf32, #tpu.memory_space<vmem>>, vector<1x15x16x128xf32>
    %254 = vector.shape_cast %253 : vector<1x15x16x128xf32> to vector<15x16x128xf32>
    %255 = vector.extract_strided_slice %254 {offsets = [0, 0, 0], sizes = [8, 16, 128], strides = [1, 1, 1]} : vector<15x16x128xf32> to vector<8x16x128xf32>
    %c5_115 = arith.constant 5 : index
    %c0_116 = arith.constant 0 : index
    %c0_117 = arith.constant 0 : index
    %256 = vector.load %arg3[%c5_115, %c0_116, %c0_117] : memref<8x8x128xf32, #tpu.memory_space<vmem>>, vector<1x1x128xf32>
    %257 = vector.shape_cast %256 : vector<1x1x128xf32> to vector<128xf32>
    %258 = vector.shape_cast %257 : vector<128xf32> to vector<1x1x128xf32>
    %259 = vector.broadcast %258 : vector<1x1x128xf32> to vector<8x16x128xf32>
    %260 = arith.mulf %255, %259 : vector<8x16x128xf32>
    %261 = arith.addf %251, %260 : vector<8x16x128xf32>
    %262 = vector.extract_strided_slice %254 {offsets = [1, 0, 0], sizes = [8, 16, 128], strides = [1, 1, 1]} : vector<15x16x128xf32> to vector<8x16x128xf32>
    %c5_118 = arith.constant 5 : index
    %c1_119 = arith.constant 1 : index
    %c0_120 = arith.constant 0 : index
    %263 = vector.load %arg3[%c5_118, %c1_119, %c0_120] : memref<8x8x128xf32, #tpu.memory_space<vmem>>, vector<1x1x128xf32>
    %264 = vector.shape_cast %263 : vector<1x1x128xf32> to vector<128xf32>
    %265 = vector.shape_cast %264 : vector<128xf32> to vector<1x1x128xf32>
    %266 = vector.broadcast %265 : vector<1x1x128xf32> to vector<8x16x128xf32>
    %267 = arith.mulf %262, %266 : vector<8x16x128xf32>
    %268 = arith.addf %261, %267 : vector<8x16x128xf32>
    %269 = vector.extract_strided_slice %254 {offsets = [2, 0, 0], sizes = [8, 16, 128], strides = [1, 1, 1]} : vector<15x16x128xf32> to vector<8x16x128xf32>
    %c5_121 = arith.constant 5 : index
    %c2_122 = arith.constant 2 : index
    %c0_123 = arith.constant 0 : index
    %270 = vector.load %arg3[%c5_121, %c2_122, %c0_123] : memref<8x8x128xf32, #tpu.memory_space<vmem>>, vector<1x1x128xf32>
    %271 = vector.shape_cast %270 : vector<1x1x128xf32> to vector<128xf32>
    %272 = vector.shape_cast %271 : vector<128xf32> to vector<1x1x128xf32>
    %273 = vector.broadcast %272 : vector<1x1x128xf32> to vector<8x16x128xf32>
    %274 = arith.mulf %269, %273 : vector<8x16x128xf32>
    %275 = arith.addf %268, %274 : vector<8x16x128xf32>
    %276 = vector.extract_strided_slice %254 {offsets = [3, 0, 0], sizes = [8, 16, 128], strides = [1, 1, 1]} : vector<15x16x128xf32> to vector<8x16x128xf32>
    %c5_124 = arith.constant 5 : index
    %c3_125 = arith.constant 3 : index
    %c0_126 = arith.constant 0 : index
    %277 = vector.load %arg3[%c5_124, %c3_125, %c0_126] : memref<8x8x128xf32, #tpu.memory_space<vmem>>, vector<1x1x128xf32>
    %278 = vector.shape_cast %277 : vector<1x1x128xf32> to vector<128xf32>
    %279 = vector.shape_cast %278 : vector<128xf32> to vector<1x1x128xf32>
    %280 = vector.broadcast %279 : vector<1x1x128xf32> to vector<8x16x128xf32>
    %281 = arith.mulf %276, %280 : vector<8x16x128xf32>
    %282 = arith.addf %275, %281 : vector<8x16x128xf32>
    %283 = vector.extract_strided_slice %254 {offsets = [4, 0, 0], sizes = [8, 16, 128], strides = [1, 1, 1]} : vector<15x16x128xf32> to vector<8x16x128xf32>
    %c5_127 = arith.constant 5 : index
    %c4_128 = arith.constant 4 : index
    %c0_129 = arith.constant 0 : index
    %284 = vector.load %arg3[%c5_127, %c4_128, %c0_129] : memref<8x8x128xf32, #tpu.memory_space<vmem>>, vector<1x1x128xf32>
    %285 = vector.shape_cast %284 : vector<1x1x128xf32> to vector<128xf32>
    %286 = vector.shape_cast %285 : vector<128xf32> to vector<1x1x128xf32>
    %287 = vector.broadcast %286 : vector<1x1x128xf32> to vector<8x16x128xf32>
    %288 = arith.mulf %283, %287 : vector<8x16x128xf32>
    %289 = arith.addf %282, %288 : vector<8x16x128xf32>
    %290 = vector.extract_strided_slice %254 {offsets = [5, 0, 0], sizes = [8, 16, 128], strides = [1, 1, 1]} : vector<15x16x128xf32> to vector<8x16x128xf32>
    %c5_130 = arith.constant 5 : index
    %c5_131 = arith.constant 5 : index
    %c0_132 = arith.constant 0 : index
    %291 = vector.load %arg3[%c5_130, %c5_131, %c0_132] : memref<8x8x128xf32, #tpu.memory_space<vmem>>, vector<1x1x128xf32>
    %292 = vector.shape_cast %291 : vector<1x1x128xf32> to vector<128xf32>
    %293 = vector.shape_cast %292 : vector<128xf32> to vector<1x1x128xf32>
    %294 = vector.broadcast %293 : vector<1x1x128xf32> to vector<8x16x128xf32>
    %295 = arith.mulf %290, %294 : vector<8x16x128xf32>
    %296 = arith.addf %289, %295 : vector<8x16x128xf32>
    %297 = vector.extract_strided_slice %254 {offsets = [6, 0, 0], sizes = [8, 16, 128], strides = [1, 1, 1]} : vector<15x16x128xf32> to vector<8x16x128xf32>
    %c5_133 = arith.constant 5 : index
    %c6_134 = arith.constant 6 : index
    %c0_135 = arith.constant 0 : index
    %298 = vector.load %arg3[%c5_133, %c6_134, %c0_135] : memref<8x8x128xf32, #tpu.memory_space<vmem>>, vector<1x1x128xf32>
    %299 = vector.shape_cast %298 : vector<1x1x128xf32> to vector<128xf32>
    %300 = vector.shape_cast %299 : vector<128xf32> to vector<1x1x128xf32>
    %301 = vector.broadcast %300 : vector<1x1x128xf32> to vector<8x16x128xf32>
    %302 = arith.mulf %297, %301 : vector<8x16x128xf32>
    %303 = arith.addf %296, %302 : vector<8x16x128xf32>
    %304 = vector.extract_strided_slice %254 {offsets = [7, 0, 0], sizes = [8, 16, 128], strides = [1, 1, 1]} : vector<15x16x128xf32> to vector<8x16x128xf32>
    %c5_136 = arith.constant 5 : index
    %c7_137 = arith.constant 7 : index
    %c0_138 = arith.constant 0 : index
    %305 = vector.load %arg3[%c5_136, %c7_137, %c0_138] : memref<8x8x128xf32, #tpu.memory_space<vmem>>, vector<1x1x128xf32>
    %306 = vector.shape_cast %305 : vector<1x1x128xf32> to vector<128xf32>
    %307 = vector.shape_cast %306 : vector<128xf32> to vector<1x1x128xf32>
    %308 = vector.broadcast %307 : vector<1x1x128xf32> to vector<8x16x128xf32>
    %309 = arith.mulf %304, %308 : vector<8x16x128xf32>
    %310 = arith.addf %303, %309 : vector<8x16x128xf32>
    %c0_139 = arith.constant 0 : index
    %311 = arith.index_cast %14 : i32 to index
    %c6_140 = arith.constant 6 : index
    %c0_141 = arith.constant 0 : index
    %312 = vector.load %arg2[%c0_139, %311, %c6_140, %c0_141] : memref<1x23x24x128xf32, #tpu.memory_space<vmem>>, vector<1x15x16x128xf32>
    %313 = vector.shape_cast %312 : vector<1x15x16x128xf32> to vector<15x16x128xf32>
    %314 = vector.extract_strided_slice %313 {offsets = [0, 0, 0], sizes = [8, 16, 128], strides = [1, 1, 1]} : vector<15x16x128xf32> to vector<8x16x128xf32>
    %c6_142 = arith.constant 6 : index
    %c0_143 = arith.constant 0 : index
    %c0_144 = arith.constant 0 : index
    %315 = vector.load %arg3[%c6_142, %c0_143, %c0_144] : memref<8x8x128xf32, #tpu.memory_space<vmem>>, vector<1x1x128xf32>
    %316 = vector.shape_cast %315 : vector<1x1x128xf32> to vector<128xf32>
    %317 = vector.shape_cast %316 : vector<128xf32> to vector<1x1x128xf32>
    %318 = vector.broadcast %317 : vector<1x1x128xf32> to vector<8x16x128xf32>
    %319 = arith.mulf %314, %318 : vector<8x16x128xf32>
    %320 = arith.addf %310, %319 : vector<8x16x128xf32>
    %321 = vector.extract_strided_slice %313 {offsets = [1, 0, 0], sizes = [8, 16, 128], strides = [1, 1, 1]} : vector<15x16x128xf32> to vector<8x16x128xf32>
    %c6_145 = arith.constant 6 : index
    %c1_146 = arith.constant 1 : index
    %c0_147 = arith.constant 0 : index
    %322 = vector.load %arg3[%c6_145, %c1_146, %c0_147] : memref<8x8x128xf32, #tpu.memory_space<vmem>>, vector<1x1x128xf32>
    %323 = vector.shape_cast %322 : vector<1x1x128xf32> to vector<128xf32>
    %324 = vector.shape_cast %323 : vector<128xf32> to vector<1x1x128xf32>
    %325 = vector.broadcast %324 : vector<1x1x128xf32> to vector<8x16x128xf32>
    %326 = arith.mulf %321, %325 : vector<8x16x128xf32>
    %327 = arith.addf %320, %326 : vector<8x16x128xf32>
    %328 = vector.extract_strided_slice %313 {offsets = [2, 0, 0], sizes = [8, 16, 128], strides = [1, 1, 1]} : vector<15x16x128xf32> to vector<8x16x128xf32>
    %c6_148 = arith.constant 6 : index
    %c2_149 = arith.constant 2 : index
    %c0_150 = arith.constant 0 : index
    %329 = vector.load %arg3[%c6_148, %c2_149, %c0_150] : memref<8x8x128xf32, #tpu.memory_space<vmem>>, vector<1x1x128xf32>
    %330 = vector.shape_cast %329 : vector<1x1x128xf32> to vector<128xf32>
    %331 = vector.shape_cast %330 : vector<128xf32> to vector<1x1x128xf32>
    %332 = vector.broadcast %331 : vector<1x1x128xf32> to vector<8x16x128xf32>
    %333 = arith.mulf %328, %332 : vector<8x16x128xf32>
    %334 = arith.addf %327, %333 : vector<8x16x128xf32>
    %335 = vector.extract_strided_slice %313 {offsets = [3, 0, 0], sizes = [8, 16, 128], strides = [1, 1, 1]} : vector<15x16x128xf32> to vector<8x16x128xf32>
    %c6_151 = arith.constant 6 : index
    %c3_152 = arith.constant 3 : index
    %c0_153 = arith.constant 0 : index
    %336 = vector.load %arg3[%c6_151, %c3_152, %c0_153] : memref<8x8x128xf32, #tpu.memory_space<vmem>>, vector<1x1x128xf32>
    %337 = vector.shape_cast %336 : vector<1x1x128xf32> to vector<128xf32>
    %338 = vector.shape_cast %337 : vector<128xf32> to vector<1x1x128xf32>
    %339 = vector.broadcast %338 : vector<1x1x128xf32> to vector<8x16x128xf32>
    %340 = arith.mulf %335, %339 : vector<8x16x128xf32>
    %341 = arith.addf %334, %340 : vector<8x16x128xf32>
    %342 = vector.extract_strided_slice %313 {offsets = [4, 0, 0], sizes = [8, 16, 128], strides = [1, 1, 1]} : vector<15x16x128xf32> to vector<8x16x128xf32>
    %c6_154 = arith.constant 6 : index
    %c4_155 = arith.constant 4 : index
    %c0_156 = arith.constant 0 : index
    %343 = vector.load %arg3[%c6_154, %c4_155, %c0_156] : memref<8x8x128xf32, #tpu.memory_space<vmem>>, vector<1x1x128xf32>
    %344 = vector.shape_cast %343 : vector<1x1x128xf32> to vector<128xf32>
    %345 = vector.shape_cast %344 : vector<128xf32> to vector<1x1x128xf32>
    %346 = vector.broadcast %345 : vector<1x1x128xf32> to vector<8x16x128xf32>
    %347 = arith.mulf %342, %346 : vector<8x16x128xf32>
    %348 = arith.addf %341, %347 : vector<8x16x128xf32>
    %349 = vector.extract_strided_slice %313 {offsets = [5, 0, 0], sizes = [8, 16, 128], strides = [1, 1, 1]} : vector<15x16x128xf32> to vector<8x16x128xf32>
    %c6_157 = arith.constant 6 : index
    %c5_158 = arith.constant 5 : index
    %c0_159 = arith.constant 0 : index
    %350 = vector.load %arg3[%c6_157, %c5_158, %c0_159] : memref<8x8x128xf32, #tpu.memory_space<vmem>>, vector<1x1x128xf32>
    %351 = vector.shape_cast %350 : vector<1x1x128xf32> to vector<128xf32>
    %352 = vector.shape_cast %351 : vector<128xf32> to vector<1x1x128xf32>
    %353 = vector.broadcast %352 : vector<1x1x128xf32> to vector<8x16x128xf32>
    %354 = arith.mulf %349, %353 : vector<8x16x128xf32>
    %355 = arith.addf %348, %354 : vector<8x16x128xf32>
    %356 = vector.extract_strided_slice %313 {offsets = [6, 0, 0], sizes = [8, 16, 128], strides = [1, 1, 1]} : vector<15x16x128xf32> to vector<8x16x128xf32>
    %c6_160 = arith.constant 6 : index
    %c6_161 = arith.constant 6 : index
    %c0_162 = arith.constant 0 : index
    %357 = vector.load %arg3[%c6_160, %c6_161, %c0_162] : memref<8x8x128xf32, #tpu.memory_space<vmem>>, vector<1x1x128xf32>
    %358 = vector.shape_cast %357 : vector<1x1x128xf32> to vector<128xf32>
    %359 = vector.shape_cast %358 : vector<128xf32> to vector<1x1x128xf32>
    %360 = vector.broadcast %359 : vector<1x1x128xf32> to vector<8x16x128xf32>
    %361 = arith.mulf %356, %360 : vector<8x16x128xf32>
    %362 = arith.addf %355, %361 : vector<8x16x128xf32>
    %363 = vector.extract_strided_slice %313 {offsets = [7, 0, 0], sizes = [8, 16, 128], strides = [1, 1, 1]} : vector<15x16x128xf32> to vector<8x16x128xf32>
    %c6_163 = arith.constant 6 : index
    %c7_164 = arith.constant 7 : index
    %c0_165 = arith.constant 0 : index
    %364 = vector.load %arg3[%c6_163, %c7_164, %c0_165] : memref<8x8x128xf32, #tpu.memory_space<vmem>>, vector<1x1x128xf32>
    %365 = vector.shape_cast %364 : vector<1x1x128xf32> to vector<128xf32>
    %366 = vector.shape_cast %365 : vector<128xf32> to vector<1x1x128xf32>
    %367 = vector.broadcast %366 : vector<1x1x128xf32> to vector<8x16x128xf32>
    %368 = arith.mulf %363, %367 : vector<8x16x128xf32>
    %369 = arith.addf %362, %368 : vector<8x16x128xf32>
    %c0_166 = arith.constant 0 : index
    %370 = arith.index_cast %14 : i32 to index
    %c7_167 = arith.constant 7 : index
    %c0_168 = arith.constant 0 : index
    %371 = vector.load %arg2[%c0_166, %370, %c7_167, %c0_168] : memref<1x23x24x128xf32, #tpu.memory_space<vmem>>, vector<1x15x16x128xf32>
    %372 = vector.shape_cast %371 : vector<1x15x16x128xf32> to vector<15x16x128xf32>
    %373 = vector.extract_strided_slice %372 {offsets = [0, 0, 0], sizes = [8, 16, 128], strides = [1, 1, 1]} : vector<15x16x128xf32> to vector<8x16x128xf32>
    %c7_169 = arith.constant 7 : index
    %c0_170 = arith.constant 0 : index
    %c0_171 = arith.constant 0 : index
    %374 = vector.load %arg3[%c7_169, %c0_170, %c0_171] : memref<8x8x128xf32, #tpu.memory_space<vmem>>, vector<1x1x128xf32>
    %375 = vector.shape_cast %374 : vector<1x1x128xf32> to vector<128xf32>
    %376 = vector.shape_cast %375 : vector<128xf32> to vector<1x1x128xf32>
    %377 = vector.broadcast %376 : vector<1x1x128xf32> to vector<8x16x128xf32>
    %378 = arith.mulf %373, %377 : vector<8x16x128xf32>
    %379 = arith.addf %369, %378 : vector<8x16x128xf32>
    %380 = vector.extract_strided_slice %372 {offsets = [1, 0, 0], sizes = [8, 16, 128], strides = [1, 1, 1]} : vector<15x16x128xf32> to vector<8x16x128xf32>
    %c7_172 = arith.constant 7 : index
    %c1_173 = arith.constant 1 : index
    %c0_174 = arith.constant 0 : index
    %381 = vector.load %arg3[%c7_172, %c1_173, %c0_174] : memref<8x8x128xf32, #tpu.memory_space<vmem>>, vector<1x1x128xf32>
    %382 = vector.shape_cast %381 : vector<1x1x128xf32> to vector<128xf32>
    %383 = vector.shape_cast %382 : vector<128xf32> to vector<1x1x128xf32>
    %384 = vector.broadcast %383 : vector<1x1x128xf32> to vector<8x16x128xf32>
    %385 = arith.mulf %380, %384 : vector<8x16x128xf32>
    %386 = arith.addf %379, %385 : vector<8x16x128xf32>
    %387 = vector.extract_strided_slice %372 {offsets = [2, 0, 0], sizes = [8, 16, 128], strides = [1, 1, 1]} : vector<15x16x128xf32> to vector<8x16x128xf32>
    %c7_175 = arith.constant 7 : index
    %c2_176 = arith.constant 2 : index
    %c0_177 = arith.constant 0 : index
    %388 = vector.load %arg3[%c7_175, %c2_176, %c0_177] : memref<8x8x128xf32, #tpu.memory_space<vmem>>, vector<1x1x128xf32>
    %389 = vector.shape_cast %388 : vector<1x1x128xf32> to vector<128xf32>
    %390 = vector.shape_cast %389 : vector<128xf32> to vector<1x1x128xf32>
    %391 = vector.broadcast %390 : vector<1x1x128xf32> to vector<8x16x128xf32>
    %392 = arith.mulf %387, %391 : vector<8x16x128xf32>
    %393 = arith.addf %386, %392 : vector<8x16x128xf32>
    %394 = vector.extract_strided_slice %372 {offsets = [3, 0, 0], sizes = [8, 16, 128], strides = [1, 1, 1]} : vector<15x16x128xf32> to vector<8x16x128xf32>
    %c7_178 = arith.constant 7 : index
    %c3_179 = arith.constant 3 : index
    %c0_180 = arith.constant 0 : index
    %395 = vector.load %arg3[%c7_178, %c3_179, %c0_180] : memref<8x8x128xf32, #tpu.memory_space<vmem>>, vector<1x1x128xf32>
    %396 = vector.shape_cast %395 : vector<1x1x128xf32> to vector<128xf32>
    %397 = vector.shape_cast %396 : vector<128xf32> to vector<1x1x128xf32>
    %398 = vector.broadcast %397 : vector<1x1x128xf32> to vector<8x16x128xf32>
    %399 = arith.mulf %394, %398 : vector<8x16x128xf32>
    %400 = arith.addf %393, %399 : vector<8x16x128xf32>
    %401 = vector.extract_strided_slice %372 {offsets = [4, 0, 0], sizes = [8, 16, 128], strides = [1, 1, 1]} : vector<15x16x128xf32> to vector<8x16x128xf32>
    %c7_181 = arith.constant 7 : index
    %c4_182 = arith.constant 4 : index
    %c0_183 = arith.constant 0 : index
    %402 = vector.load %arg3[%c7_181, %c4_182, %c0_183] : memref<8x8x128xf32, #tpu.memory_space<vmem>>, vector<1x1x128xf32>
    %403 = vector.shape_cast %402 : vector<1x1x128xf32> to vector<128xf32>
    %404 = vector.shape_cast %403 : vector<128xf32> to vector<1x1x128xf32>
    %405 = vector.broadcast %404 : vector<1x1x128xf32> to vector<8x16x128xf32>
    %406 = arith.mulf %401, %405 : vector<8x16x128xf32>
    %407 = arith.addf %400, %406 : vector<8x16x128xf32>
    %408 = vector.extract_strided_slice %372 {offsets = [5, 0, 0], sizes = [8, 16, 128], strides = [1, 1, 1]} : vector<15x16x128xf32> to vector<8x16x128xf32>
    %c7_184 = arith.constant 7 : index
    %c5_185 = arith.constant 5 : index
    %c0_186 = arith.constant 0 : index
    %409 = vector.load %arg3[%c7_184, %c5_185, %c0_186] : memref<8x8x128xf32, #tpu.memory_space<vmem>>, vector<1x1x128xf32>
    %410 = vector.shape_cast %409 : vector<1x1x128xf32> to vector<128xf32>
    %411 = vector.shape_cast %410 : vector<128xf32> to vector<1x1x128xf32>
    %412 = vector.broadcast %411 : vector<1x1x128xf32> to vector<8x16x128xf32>
    %413 = arith.mulf %408, %412 : vector<8x16x128xf32>
    %414 = arith.addf %407, %413 : vector<8x16x128xf32>
    %415 = vector.extract_strided_slice %372 {offsets = [6, 0, 0], sizes = [8, 16, 128], strides = [1, 1, 1]} : vector<15x16x128xf32> to vector<8x16x128xf32>
    %c7_187 = arith.constant 7 : index
    %c6_188 = arith.constant 6 : index
    %c0_189 = arith.constant 0 : index
    %416 = vector.load %arg3[%c7_187, %c6_188, %c0_189] : memref<8x8x128xf32, #tpu.memory_space<vmem>>, vector<1x1x128xf32>
    %417 = vector.shape_cast %416 : vector<1x1x128xf32> to vector<128xf32>
    %418 = vector.shape_cast %417 : vector<128xf32> to vector<1x1x128xf32>
    %419 = vector.broadcast %418 : vector<1x1x128xf32> to vector<8x16x128xf32>
    %420 = arith.mulf %415, %419 : vector<8x16x128xf32>
    %421 = arith.addf %414, %420 : vector<8x16x128xf32>
    %422 = vector.extract_strided_slice %372 {offsets = [7, 0, 0], sizes = [8, 16, 128], strides = [1, 1, 1]} : vector<15x16x128xf32> to vector<8x16x128xf32>
    %c7_190 = arith.constant 7 : index
    %c7_191 = arith.constant 7 : index
    %c0_192 = arith.constant 0 : index
    %423 = vector.load %arg3[%c7_190, %c7_191, %c0_192] : memref<8x8x128xf32, #tpu.memory_space<vmem>>, vector<1x1x128xf32>
    %424 = vector.shape_cast %423 : vector<1x1x128xf32> to vector<128xf32>
    %425 = vector.shape_cast %424 : vector<128xf32> to vector<1x1x128xf32>
    %426 = vector.broadcast %425 : vector<1x1x128xf32> to vector<8x16x128xf32>
    %427 = arith.mulf %422, %426 : vector<8x16x128xf32>
    %428 = arith.addf %421, %427 : vector<8x16x128xf32>
    %c0_193 = arith.constant 0 : index
    %429 = arith.index_cast %14 : i32 to index
    %c3_194 = arith.constant 3 : index
    %c0_195 = arith.constant 0 : index
    %430 = vector.load %arg2[%c0_193, %429, %c3_194, %c0_195] : memref<1x23x24x128xf32, #tpu.memory_space<vmem>>, vector<1x15x16x128xf32>
    %431 = vector.shape_cast %430 : vector<1x15x16x128xf32> to vector<15x16x128xf32>
    %432 = vector.extract_strided_slice %431 {offsets = [0, 0, 0], sizes = [8, 16, 128], strides = [1, 1, 1]} : vector<15x16x128xf32> to vector<8x16x128xf32>
    %c3_196 = arith.constant 3 : index
    %c0_197 = arith.constant 0 : index
    %c0_198 = arith.constant 0 : index
    %433 = vector.load %arg3[%c3_196, %c0_197, %c0_198] : memref<8x8x128xf32, #tpu.memory_space<vmem>>, vector<1x1x128xf32>
    %434 = vector.shape_cast %433 : vector<1x1x128xf32> to vector<128xf32>
    %435 = vector.shape_cast %434 : vector<128xf32> to vector<1x1x128xf32>
    %436 = vector.broadcast %435 : vector<1x1x128xf32> to vector<8x16x128xf32>
    %437 = arith.mulf %432, %436 : vector<8x16x128xf32>
    %438 = arith.addf %428, %437 : vector<8x16x128xf32>
    %439 = vector.extract_strided_slice %431 {offsets = [1, 0, 0], sizes = [8, 16, 128], strides = [1, 1, 1]} : vector<15x16x128xf32> to vector<8x16x128xf32>
    %c3_199 = arith.constant 3 : index
    %c1_200 = arith.constant 1 : index
    %c0_201 = arith.constant 0 : index
    %440 = vector.load %arg3[%c3_199, %c1_200, %c0_201] : memref<8x8x128xf32, #tpu.memory_space<vmem>>, vector<1x1x128xf32>
    %441 = vector.shape_cast %440 : vector<1x1x128xf32> to vector<128xf32>
    %442 = vector.shape_cast %441 : vector<128xf32> to vector<1x1x128xf32>
    %443 = vector.broadcast %442 : vector<1x1x128xf32> to vector<8x16x128xf32>
    %444 = arith.mulf %439, %443 : vector<8x16x128xf32>
    %445 = arith.addf %438, %444 : vector<8x16x128xf32>
    %446 = vector.extract_strided_slice %431 {offsets = [2, 0, 0], sizes = [8, 16, 128], strides = [1, 1, 1]} : vector<15x16x128xf32> to vector<8x16x128xf32>
    %c3_202 = arith.constant 3 : index
    %c2_203 = arith.constant 2 : index
    %c0_204 = arith.constant 0 : index
    %447 = vector.load %arg3[%c3_202, %c2_203, %c0_204] : memref<8x8x128xf32, #tpu.memory_space<vmem>>, vector<1x1x128xf32>
    %448 = vector.shape_cast %447 : vector<1x1x128xf32> to vector<128xf32>
    %449 = vector.shape_cast %448 : vector<128xf32> to vector<1x1x128xf32>
    %450 = vector.broadcast %449 : vector<1x1x128xf32> to vector<8x16x128xf32>
    %451 = arith.mulf %446, %450 : vector<8x16x128xf32>
    %452 = arith.addf %445, %451 : vector<8x16x128xf32>
    %453 = vector.extract_strided_slice %431 {offsets = [3, 0, 0], sizes = [8, 16, 128], strides = [1, 1, 1]} : vector<15x16x128xf32> to vector<8x16x128xf32>
    %c3_205 = arith.constant 3 : index
    %c3_206 = arith.constant 3 : index
    %c0_207 = arith.constant 0 : index
    %454 = vector.load %arg3[%c3_205, %c3_206, %c0_207] : memref<8x8x128xf32, #tpu.memory_space<vmem>>, vector<1x1x128xf32>
    %455 = vector.shape_cast %454 : vector<1x1x128xf32> to vector<128xf32>
    %456 = vector.shape_cast %455 : vector<128xf32> to vector<1x1x128xf32>
    %457 = vector.broadcast %456 : vector<1x1x128xf32> to vector<8x16x128xf32>
    %458 = arith.mulf %453, %457 : vector<8x16x128xf32>
    %459 = arith.addf %452, %458 : vector<8x16x128xf32>
    %460 = vector.extract_strided_slice %431 {offsets = [4, 0, 0], sizes = [8, 16, 128], strides = [1, 1, 1]} : vector<15x16x128xf32> to vector<8x16x128xf32>
    %c3_208 = arith.constant 3 : index
    %c4_209 = arith.constant 4 : index
    %c0_210 = arith.constant 0 : index
    %461 = vector.load %arg3[%c3_208, %c4_209, %c0_210] : memref<8x8x128xf32, #tpu.memory_space<vmem>>, vector<1x1x128xf32>
    %462 = vector.shape_cast %461 : vector<1x1x128xf32> to vector<128xf32>
    %463 = vector.shape_cast %462 : vector<128xf32> to vector<1x1x128xf32>
    %464 = vector.broadcast %463 : vector<1x1x128xf32> to vector<8x16x128xf32>
    %465 = arith.mulf %460, %464 : vector<8x16x128xf32>
    %466 = arith.addf %459, %465 : vector<8x16x128xf32>
    %467 = vector.extract_strided_slice %431 {offsets = [5, 0, 0], sizes = [8, 16, 128], strides = [1, 1, 1]} : vector<15x16x128xf32> to vector<8x16x128xf32>
    %c3_211 = arith.constant 3 : index
    %c5_212 = arith.constant 5 : index
    %c0_213 = arith.constant 0 : index
    %468 = vector.load %arg3[%c3_211, %c5_212, %c0_213] : memref<8x8x128xf32, #tpu.memory_space<vmem>>, vector<1x1x128xf32>
    %469 = vector.shape_cast %468 : vector<1x1x128xf32> to vector<128xf32>
    %470 = vector.shape_cast %469 : vector<128xf32> to vector<1x1x128xf32>
    %471 = vector.broadcast %470 : vector<1x1x128xf32> to vector<8x16x128xf32>
    %472 = arith.mulf %467, %471 : vector<8x16x128xf32>
    %473 = arith.addf %466, %472 : vector<8x16x128xf32>
    %474 = vector.extract_strided_slice %431 {offsets = [6, 0, 0], sizes = [8, 16, 128], strides = [1, 1, 1]} : vector<15x16x128xf32> to vector<8x16x128xf32>
    %c3_214 = arith.constant 3 : index
    %c6_215 = arith.constant 6 : index
    %c0_216 = arith.constant 0 : index
    %475 = vector.load %arg3[%c3_214, %c6_215, %c0_216] : memref<8x8x128xf32, #tpu.memory_space<vmem>>, vector<1x1x128xf32>
    %476 = vector.shape_cast %475 : vector<1x1x128xf32> to vector<128xf32>
    %477 = vector.shape_cast %476 : vector<128xf32> to vector<1x1x128xf32>
    %478 = vector.broadcast %477 : vector<1x1x128xf32> to vector<8x16x128xf32>
    %479 = arith.mulf %474, %478 : vector<8x16x128xf32>
    %480 = arith.addf %473, %479 : vector<8x16x128xf32>
    %481 = vector.extract_strided_slice %431 {offsets = [7, 0, 0], sizes = [8, 16, 128], strides = [1, 1, 1]} : vector<15x16x128xf32> to vector<8x16x128xf32>
    %c3_217 = arith.constant 3 : index
    %c7_218 = arith.constant 7 : index
    %c0_219 = arith.constant 0 : index
    %482 = vector.load %arg3[%c3_217, %c7_218, %c0_219] : memref<8x8x128xf32, #tpu.memory_space<vmem>>, vector<1x1x128xf32>
    %483 = vector.shape_cast %482 : vector<1x1x128xf32> to vector<128xf32>
    %484 = vector.shape_cast %483 : vector<128xf32> to vector<1x1x128xf32>
    %485 = vector.broadcast %484 : vector<1x1x128xf32> to vector<8x16x128xf32>
    %486 = arith.mulf %481, %485 : vector<8x16x128xf32>
    %487 = arith.addf %480, %486 : vector<8x16x128xf32>
    %488 = vector.extract_strided_slice %431 {offsets = [3, 0, 0], sizes = [8, 16, 128], strides = [1, 1, 1]} : vector<15x16x128xf32> to vector<8x16x128xf32>
    %489 = vector.shape_cast %2 : vector<128xf32> to vector<1x1x128xf32>
    %490 = vector.broadcast %489 : vector<1x1x128xf32> to vector<8x16x128xf32>
    %491 = arith.addf %487, %490 : vector<8x16x128xf32>
    %cst_220 = arith.constant 5.000000e-01 : f32
    %492 = vector.broadcast %cst_220 : f32 to vector<8x16x128xf32>
    %493 = arith.mulf %492, %491 : vector<8x16x128xf32>
    %494 = arith.mulf %491, %491 : vector<8x16x128xf32>
    %495 = arith.mulf %494, %491 : vector<8x16x128xf32>
    %cst_221 = arith.constant 4.471500e-02 : f32
    %496 = vector.broadcast %cst_221 : f32 to vector<8x16x128xf32>
    %497 = arith.mulf %496, %495 : vector<8x16x128xf32>
    %498 = arith.addf %491, %497 : vector<8x16x128xf32>
    %cst_222 = arith.constant 0.797884583 : f32
    %499 = vector.broadcast %cst_222 : f32 to vector<8x16x128xf32>
    %500 = arith.mulf %499, %498 : vector<8x16x128xf32>
    %501 = math.tanh %500 : vector<8x16x128xf32>
    %cst_223 = arith.constant 1.000000e+00 : f32
    %502 = vector.broadcast %cst_223 : f32 to vector<8x16x128xf32>
    %503 = arith.addf %502, %501 : vector<8x16x128xf32>
    %504 = arith.mulf %493, %503 : vector<8x16x128xf32>
    %505 = vector.shape_cast %4 : vector<128xf32> to vector<1x1x128xf32>
    %506 = vector.broadcast %505 : vector<1x1x128xf32> to vector<8x16x128xf32>
    %507 = arith.mulf %504, %506 : vector<8x16x128xf32>
    %508 = vector.shape_cast %6 : vector<128xf32> to vector<1x1x128xf32>
    %509 = vector.broadcast %508 : vector<1x1x128xf32> to vector<8x16x128xf32>
    %510 = arith.addf %507, %509 : vector<8x16x128xf32>
    %511 = arith.addf %510, %488 : vector<8x16x128xf32>
    %512 = vector.shape_cast %511 : vector<8x16x128xf32> to vector<128x128xf32>
    %513 = arith.truncf %512 : vector<128x128xf32> to vector<128x128xbf16>
    %c0_224 = arith.constant 0 : index
    %c0_225 = arith.constant 0 : index
    %514 = vector.load %arg7[%c0_224, %c0_225] : memref<256x128xbf16, #tpu.memory_space<vmem>>, vector<128x128xbf16>
    tpu.vector_store %arg7[%c0_224, %c0_225], %513 {strides = array<i32>} : memref<256x128xbf16, #tpu.memory_space<vmem>>, vector<128x128xbf16>,
    %c8_i32 = arith.constant 8 : i32
    %515 = arith.addi %0, %c8_i32 : i32
    %516 = tpu.assume_multiple %515, 8 : i32
    %cst_226 = arith.constant 0.000000e+00 : f32
    %517 = vector.broadcast %cst_226 : f32 to vector<8x16x128xf32>
    %c0_227 = arith.constant 0 : index
    %518 = arith.index_cast %516 : i32 to index
    %c0_228 = arith.constant 0 : index
    %c0_229 = arith.constant 0 : index
    %519 = vector.load %arg2[%c0_227, %518, %c0_228, %c0_229] : memref<1x23x24x128xf32, #tpu.memory_space<vmem>>, vector<1x15x16x128xf32>
    %520 = vector.shape_cast %519 : vector<1x15x16x128xf32> to vector<15x16x128xf32>
    %521 = vector.extract_strided_slice %520 {offsets = [0, 0, 0], sizes = [8, 16, 128], strides = [1, 1, 1]} : vector<15x16x128xf32> to vector<8x16x128xf32>
    %c0_230 = arith.constant 0 : index
    %c0_231 = arith.constant 0 : index
    %c0_232 = arith.constant 0 : index
    %522 = vector.load %arg3[%c0_230, %c0_231, %c0_232] : memref<8x8x128xf32, #tpu.memory_space<vmem>>, vector<1x1x128xf32>
    %523 = vector.shape_cast %522 : vector<1x1x128xf32> to vector<128xf32>
    %524 = vector.shape_cast %523 : vector<128xf32> to vector<1x1x128xf32>
    %525 = vector.broadcast %524 : vector<1x1x128xf32> to vector<8x16x128xf32>
    %526 = arith.mulf %521, %525 : vector<8x16x128xf32>
    %527 = arith.addf %517, %526 : vector<8x16x128xf32>
    %528 = vector.extract_strided_slice %520 {offsets = [1, 0, 0], sizes = [8, 16, 128], strides = [1, 1, 1]} : vector<15x16x128xf32> to vector<8x16x128xf32>
    %c0_233 = arith.constant 0 : index
    %c1_234 = arith.constant 1 : index
    %c0_235 = arith.constant 0 : index
    %529 = vector.load %arg3[%c0_233, %c1_234, %c0_235] : memref<8x8x128xf32, #tpu.memory_space<vmem>>, vector<1x1x128xf32>
    %530 = vector.shape_cast %529 : vector<1x1x128xf32> to vector<128xf32>
    %531 = vector.shape_cast %530 : vector<128xf32> to vector<1x1x128xf32>
    %532 = vector.broadcast %531 : vector<1x1x128xf32> to vector<8x16x128xf32>
    %533 = arith.mulf %528, %532 : vector<8x16x128xf32>
    %534 = arith.addf %527, %533 : vector<8x16x128xf32>
    %535 = vector.extract_strided_slice %520 {offsets = [2, 0, 0], sizes = [8, 16, 128], strides = [1, 1, 1]} : vector<15x16x128xf32> to vector<8x16x128xf32>
    %c0_236 = arith.constant 0 : index
    %c2_237 = arith.constant 2 : index
    %c0_238 = arith.constant 0 : index
    %536 = vector.load %arg3[%c0_236, %c2_237, %c0_238] : memref<8x8x128xf32, #tpu.memory_space<vmem>>, vector<1x1x128xf32>
    %537 = vector.shape_cast %536 : vector<1x1x128xf32> to vector<128xf32>
    %538 = vector.shape_cast %537 : vector<128xf32> to vector<1x1x128xf32>
    %539 = vector.broadcast %538 : vector<1x1x128xf32> to vector<8x16x128xf32>
    %540 = arith.mulf %535, %539 : vector<8x16x128xf32>
    %541 = arith.addf %534, %540 : vector<8x16x128xf32>
    %542 = vector.extract_strided_slice %520 {offsets = [3, 0, 0], sizes = [8, 16, 128], strides = [1, 1, 1]} : vector<15x16x128xf32> to vector<8x16x128xf32>
    %c0_239 = arith.constant 0 : index
    %c3_240 = arith.constant 3 : index
    %c0_241 = arith.constant 0 : index
    %543 = vector.load %arg3[%c0_239, %c3_240, %c0_241] : memref<8x8x128xf32, #tpu.memory_space<vmem>>, vector<1x1x128xf32>
    %544 = vector.shape_cast %543 : vector<1x1x128xf32> to vector<128xf32>
    %545 = vector.shape_cast %544 : vector<128xf32> to vector<1x1x128xf32>
    %546 = vector.broadcast %545 : vector<1x1x128xf32> to vector<8x16x128xf32>
    %547 = arith.mulf %542, %546 : vector<8x16x128xf32>
    %548 = arith.addf %541, %547 : vector<8x16x128xf32>
    %549 = vector.extract_strided_slice %520 {offsets = [4, 0, 0], sizes = [8, 16, 128], strides = [1, 1, 1]} : vector<15x16x128xf32> to vector<8x16x128xf32>
    %c0_242 = arith.constant 0 : index
    %c4_243 = arith.constant 4 : index
    %c0_244 = arith.constant 0 : index
    %550 = vector.load %arg3[%c0_242, %c4_243, %c0_244] : memref<8x8x128xf32, #tpu.memory_space<vmem>>, vector<1x1x128xf32>
    %551 = vector.shape_cast %550 : vector<1x1x128xf32> to vector<128xf32>
    %552 = vector.shape_cast %551 : vector<128xf32> to vector<1x1x128xf32>
    %553 = vector.broadcast %552 : vector<1x1x128xf32> to vector<8x16x128xf32>
    %554 = arith.mulf %549, %553 : vector<8x16x128xf32>
    %555 = arith.addf %548, %554 : vector<8x16x128xf32>
    %556 = vector.extract_strided_slice %520 {offsets = [5, 0, 0], sizes = [8, 16, 128], strides = [1, 1, 1]} : vector<15x16x128xf32> to vector<8x16x128xf32>
    %c0_245 = arith.constant 0 : index
    %c5_246 = arith.constant 5 : index
    %c0_247 = arith.constant 0 : index
    %557 = vector.load %arg3[%c0_245, %c5_246, %c0_247] : memref<8x8x128xf32, #tpu.memory_space<vmem>>, vector<1x1x128xf32>
    %558 = vector.shape_cast %557 : vector<1x1x128xf32> to vector<128xf32>
    %559 = vector.shape_cast %558 : vector<128xf32> to vector<1x1x128xf32>
    %560 = vector.broadcast %559 : vector<1x1x128xf32> to vector<8x16x128xf32>
    %561 = arith.mulf %556, %560 : vector<8x16x128xf32>
    %562 = arith.addf %555, %561 : vector<8x16x128xf32>
    %563 = vector.extract_strided_slice %520 {offsets = [6, 0, 0], sizes = [8, 16, 128], strides = [1, 1, 1]} : vector<15x16x128xf32> to vector<8x16x128xf32>
    %c0_248 = arith.constant 0 : index
    %c6_249 = arith.constant 6 : index
    %c0_250 = arith.constant 0 : index
    %564 = vector.load %arg3[%c0_248, %c6_249, %c0_250] : memref<8x8x128xf32, #tpu.memory_space<vmem>>, vector<1x1x128xf32>
    %565 = vector.shape_cast %564 : vector<1x1x128xf32> to vector<128xf32>
    %566 = vector.shape_cast %565 : vector<128xf32> to vector<1x1x128xf32>
    %567 = vector.broadcast %566 : vector<1x1x128xf32> to vector<8x16x128xf32>
    %568 = arith.mulf %563, %567 : vector<8x16x128xf32>
    %569 = arith.addf %562, %568 : vector<8x16x128xf32>
    %570 = vector.extract_strided_slice %520 {offsets = [7, 0, 0], sizes = [8, 16, 128], strides = [1, 1, 1]} : vector<15x16x128xf32> to vector<8x16x128xf32>
    %c0_251 = arith.constant 0 : index
    %c7_252 = arith.constant 7 : index
    %c0_253 = arith.constant 0 : index
    %571 = vector.load %arg3[%c0_251, %c7_252, %c0_253] : memref<8x8x128xf32, #tpu.memory_space<vmem>>, vector<1x1x128xf32>
    %572 = vector.shape_cast %571 : vector<1x1x128xf32> to vector<128xf32>
    %573 = vector.shape_cast %572 : vector<128xf32> to vector<1x1x128xf32>
    %574 = vector.broadcast %573 : vector<1x1x128xf32> to vector<8x16x128xf32>
    %575 = arith.mulf %570, %574 : vector<8x16x128xf32>
    %576 = arith.addf %569, %575 : vector<8x16x128xf32>
    %c0_254 = arith.constant 0 : index
    %577 = arith.index_cast %516 : i32 to index
    %c1_255 = arith.constant 1 : index
    %c0_256 = arith.constant 0 : index
    %578 = vector.load %arg2[%c0_254, %577, %c1_255, %c0_256] : memref<1x23x24x128xf32, #tpu.memory_space<vmem>>, vector<1x15x16x128xf32>
    %579 = vector.shape_cast %578 : vector<1x15x16x128xf32> to vector<15x16x128xf32>
    %580 = vector.extract_strided_slice %579 {offsets = [0, 0, 0], sizes = [8, 16, 128], strides = [1, 1, 1]} : vector<15x16x128xf32> to vector<8x16x128xf32>
    %c1_257 = arith.constant 1 : index
    %c0_258 = arith.constant 0 : index
    %c0_259 = arith.constant 0 : index
    %581 = vector.load %arg3[%c1_257, %c0_258, %c0_259] : memref<8x8x128xf32, #tpu.memory_space<vmem>>, vector<1x1x128xf32>
    %582 = vector.shape_cast %581 : vector<1x1x128xf32> to vector<128xf32>
    %583 = vector.shape_cast %582 : vector<128xf32> to vector<1x1x128xf32>
    %584 = vector.broadcast %583 : vector<1x1x128xf32> to vector<8x16x128xf32>
    %585 = arith.mulf %580, %584 : vector<8x16x128xf32>
    %586 = arith.addf %576, %585 : vector<8x16x128xf32>
    %587 = vector.extract_strided_slice %579 {offsets = [1, 0, 0], sizes = [8, 16, 128], strides = [1, 1, 1]} : vector<15x16x128xf32> to vector<8x16x128xf32>
    %c1_260 = arith.constant 1 : index
    %c1_261 = arith.constant 1 : index
    %c0_262 = arith.constant 0 : index
    %588 = vector.load %arg3[%c1_260, %c1_261, %c0_262] : memref<8x8x128xf32, #tpu.memory_space<vmem>>, vector<1x1x128xf32>
    %589 = vector.shape_cast %588 : vector<1x1x128xf32> to vector<128xf32>
    %590 = vector.shape_cast %589 : vector<128xf32> to vector<1x1x128xf32>
    %591 = vector.broadcast %590 : vector<1x1x128xf32> to vector<8x16x128xf32>
    %592 = arith.mulf %587, %591 : vector<8x16x128xf32>
    %593 = arith.addf %586, %592 : vector<8x16x128xf32>
    %594 = vector.extract_strided_slice %579 {offsets = [2, 0, 0], sizes = [8, 16, 128], strides = [1, 1, 1]} : vector<15x16x128xf32> to vector<8x16x128xf32>
    %c1_263 = arith.constant 1 : index
    %c2_264 = arith.constant 2 : index
    %c0_265 = arith.constant 0 : index
    %595 = vector.load %arg3[%c1_263, %c2_264, %c0_265] : memref<8x8x128xf32, #tpu.memory_space<vmem>>, vector<1x1x128xf32>
    %596 = vector.shape_cast %595 : vector<1x1x128xf32> to vector<128xf32>
    %597 = vector.shape_cast %596 : vector<128xf32> to vector<1x1x128xf32>
    %598 = vector.broadcast %597 : vector<1x1x128xf32> to vector<8x16x128xf32>
    %599 = arith.mulf %594, %598 : vector<8x16x128xf32>
    %600 = arith.addf %593, %599 : vector<8x16x128xf32>
    %601 = vector.extract_strided_slice %579 {offsets = [3, 0, 0], sizes = [8, 16, 128], strides = [1, 1, 1]} : vector<15x16x128xf32> to vector<8x16x128xf32>
    %c1_266 = arith.constant 1 : index
    %c3_267 = arith.constant 3 : index
    %c0_268 = arith.constant 0 : index
    %602 = vector.load %arg3[%c1_266, %c3_267, %c0_268] : memref<8x8x128xf32, #tpu.memory_space<vmem>>, vector<1x1x128xf32>
    %603 = vector.shape_cast %602 : vector<1x1x128xf32> to vector<128xf32>
    %604 = vector.shape_cast %603 : vector<128xf32> to vector<1x1x128xf32>
    %605 = vector.broadcast %604 : vector<1x1x128xf32> to vector<8x16x128xf32>
    %606 = arith.mulf %601, %605 : vector<8x16x128xf32>
    %607 = arith.addf %600, %606 : vector<8x16x128xf32>
    %608 = vector.extract_strided_slice %579 {offsets = [4, 0, 0], sizes = [8, 16, 128], strides = [1, 1, 1]} : vector<15x16x128xf32> to vector<8x16x128xf32>
    %c1_269 = arith.constant 1 : index
    %c4_270 = arith.constant 4 : index
    %c0_271 = arith.constant 0 : index
    %609 = vector.load %arg3[%c1_269, %c4_270, %c0_271] : memref<8x8x128xf32, #tpu.memory_space<vmem>>, vector<1x1x128xf32>
    %610 = vector.shape_cast %609 : vector<1x1x128xf32> to vector<128xf32>
    %611 = vector.shape_cast %610 : vector<128xf32> to vector<1x1x128xf32>
    %612 = vector.broadcast %611 : vector<1x1x128xf32> to vector<8x16x128xf32>
    %613 = arith.mulf %608, %612 : vector<8x16x128xf32>
    %614 = arith.addf %607, %613 : vector<8x16x128xf32>
    %615 = vector.extract_strided_slice %579 {offsets = [5, 0, 0], sizes = [8, 16, 128], strides = [1, 1, 1]} : vector<15x16x128xf32> to vector<8x16x128xf32>
    %c1_272 = arith.constant 1 : index
    %c5_273 = arith.constant 5 : index
    %c0_274 = arith.constant 0 : index
    %616 = vector.load %arg3[%c1_272, %c5_273, %c0_274] : memref<8x8x128xf32, #tpu.memory_space<vmem>>, vector<1x1x128xf32>
    %617 = vector.shape_cast %616 : vector<1x1x128xf32> to vector<128xf32>
    %618 = vector.shape_cast %617 : vector<128xf32> to vector<1x1x128xf32>
    %619 = vector.broadcast %618 : vector<1x1x128xf32> to vector<8x16x128xf32>
    %620 = arith.mulf %615, %619 : vector<8x16x128xf32>
    %621 = arith.addf %614, %620 : vector<8x16x128xf32>
    %622 = vector.extract_strided_slice %579 {offsets = [6, 0, 0], sizes = [8, 16, 128], strides = [1, 1, 1]} : vector<15x16x128xf32> to vector<8x16x128xf32>
    %c1_275 = arith.constant 1 : index
    %c6_276 = arith.constant 6 : index
    %c0_277 = arith.constant 0 : index
    %623 = vector.load %arg3[%c1_275, %c6_276, %c0_277] : memref<8x8x128xf32, #tpu.memory_space<vmem>>, vector<1x1x128xf32>
    %624 = vector.shape_cast %623 : vector<1x1x128xf32> to vector<128xf32>
    %625 = vector.shape_cast %624 : vector<128xf32> to vector<1x1x128xf32>
    %626 = vector.broadcast %625 : vector<1x1x128xf32> to vector<8x16x128xf32>
    %627 = arith.mulf %622, %626 : vector<8x16x128xf32>
    %628 = arith.addf %621, %627 : vector<8x16x128xf32>
    %629 = vector.extract_strided_slice %579 {offsets = [7, 0, 0], sizes = [8, 16, 128], strides = [1, 1, 1]} : vector<15x16x128xf32> to vector<8x16x128xf32>
    %c1_278 = arith.constant 1 : index
    %c7_279 = arith.constant 7 : index
    %c0_280 = arith.constant 0 : index
    %630 = vector.load %arg3[%c1_278, %c7_279, %c0_280] : memref<8x8x128xf32, #tpu.memory_space<vmem>>, vector<1x1x128xf32>
    %631 = vector.shape_cast %630 : vector<1x1x128xf32> to vector<128xf32>
    %632 = vector.shape_cast %631 : vector<128xf32> to vector<1x1x128xf32>
    %633 = vector.broadcast %632 : vector<1x1x128xf32> to vector<8x16x128xf32>
    %634 = arith.mulf %629, %633 : vector<8x16x128xf32>
    %635 = arith.addf %628, %634 : vector<8x16x128xf32>
    %c0_281 = arith.constant 0 : index
    %636 = arith.index_cast %516 : i32 to index
    %c2_282 = arith.constant 2 : index
    %c0_283 = arith.constant 0 : index
    %637 = vector.load %arg2[%c0_281, %636, %c2_282, %c0_283] : memref<1x23x24x128xf32, #tpu.memory_space<vmem>>, vector<1x15x16x128xf32>
    %638 = vector.shape_cast %637 : vector<1x15x16x128xf32> to vector<15x16x128xf32>
    %639 = vector.extract_strided_slice %638 {offsets = [0, 0, 0], sizes = [8, 16, 128], strides = [1, 1, 1]} : vector<15x16x128xf32> to vector<8x16x128xf32>
    %c2_284 = arith.constant 2 : index
    %c0_285 = arith.constant 0 : index
    %c0_286 = arith.constant 0 : index
    %640 = vector.load %arg3[%c2_284, %c0_285, %c0_286] : memref<8x8x128xf32, #tpu.memory_space<vmem>>, vector<1x1x128xf32>
    %641 = vector.shape_cast %640 : vector<1x1x128xf32> to vector<128xf32>
    %642 = vector.shape_cast %641 : vector<128xf32> to vector<1x1x128xf32>
    %643 = vector.broadcast %642 : vector<1x1x128xf32> to vector<8x16x128xf32>
    %644 = arith.mulf %639, %643 : vector<8x16x128xf32>
    %645 = arith.addf %635, %644 : vector<8x16x128xf32>
    %646 = vector.extract_strided_slice %638 {offsets = [1, 0, 0], sizes = [8, 16, 128], strides = [1, 1, 1]} : vector<15x16x128xf32> to vector<8x16x128xf32>
    %c2_287 = arith.constant 2 : index
    %c1_288 = arith.constant 1 : index
    %c0_289 = arith.constant 0 : index
    %647 = vector.load %arg3[%c2_287, %c1_288, %c0_289] : memref<8x8x128xf32, #tpu.memory_space<vmem>>, vector<1x1x128xf32>
    %648 = vector.shape_cast %647 : vector<1x1x128xf32> to vector<128xf32>
    %649 = vector.shape_cast %648 : vector<128xf32> to vector<1x1x128xf32>
    %650 = vector.broadcast %649 : vector<1x1x128xf32> to vector<8x16x128xf32>
    %651 = arith.mulf %646, %650 : vector<8x16x128xf32>
    %652 = arith.addf %645, %651 : vector<8x16x128xf32>
    %653 = vector.extract_strided_slice %638 {offsets = [2, 0, 0], sizes = [8, 16, 128], strides = [1, 1, 1]} : vector<15x16x128xf32> to vector<8x16x128xf32>
    %c2_290 = arith.constant 2 : index
    %c2_291 = arith.constant 2 : index
    %c0_292 = arith.constant 0 : index
    %654 = vector.load %arg3[%c2_290, %c2_291, %c0_292] : memref<8x8x128xf32, #tpu.memory_space<vmem>>, vector<1x1x128xf32>
    %655 = vector.shape_cast %654 : vector<1x1x128xf32> to vector<128xf32>
    %656 = vector.shape_cast %655 : vector<128xf32> to vector<1x1x128xf32>
    %657 = vector.broadcast %656 : vector<1x1x128xf32> to vector<8x16x128xf32>
    %658 = arith.mulf %653, %657 : vector<8x16x128xf32>
    %659 = arith.addf %652, %658 : vector<8x16x128xf32>
    %660 = vector.extract_strided_slice %638 {offsets = [3, 0, 0], sizes = [8, 16, 128], strides = [1, 1, 1]} : vector<15x16x128xf32> to vector<8x16x128xf32>
    %c2_293 = arith.constant 2 : index
    %c3_294 = arith.constant 3 : index
    %c0_295 = arith.constant 0 : index
    %661 = vector.load %arg3[%c2_293, %c3_294, %c0_295] : memref<8x8x128xf32, #tpu.memory_space<vmem>>, vector<1x1x128xf32>
    %662 = vector.shape_cast %661 : vector<1x1x128xf32> to vector<128xf32>
    %663 = vector.shape_cast %662 : vector<128xf32> to vector<1x1x128xf32>
    %664 = vector.broadcast %663 : vector<1x1x128xf32> to vector<8x16x128xf32>
    %665 = arith.mulf %660, %664 : vector<8x16x128xf32>
    %666 = arith.addf %659, %665 : vector<8x16x128xf32>
    %667 = vector.extract_strided_slice %638 {offsets = [4, 0, 0], sizes = [8, 16, 128], strides = [1, 1, 1]} : vector<15x16x128xf32> to vector<8x16x128xf32>
    %c2_296 = arith.constant 2 : index
    %c4_297 = arith.constant 4 : index
    %c0_298 = arith.constant 0 : index
    %668 = vector.load %arg3[%c2_296, %c4_297, %c0_298] : memref<8x8x128xf32, #tpu.memory_space<vmem>>, vector<1x1x128xf32>
    %669 = vector.shape_cast %668 : vector<1x1x128xf32> to vector<128xf32>
    %670 = vector.shape_cast %669 : vector<128xf32> to vector<1x1x128xf32>
    %671 = vector.broadcast %670 : vector<1x1x128xf32> to vector<8x16x128xf32>
    %672 = arith.mulf %667, %671 : vector<8x16x128xf32>
    %673 = arith.addf %666, %672 : vector<8x16x128xf32>
    %674 = vector.extract_strided_slice %638 {offsets = [5, 0, 0], sizes = [8, 16, 128], strides = [1, 1, 1]} : vector<15x16x128xf32> to vector<8x16x128xf32>
    %c2_299 = arith.constant 2 : index
    %c5_300 = arith.constant 5 : index
    %c0_301 = arith.constant 0 : index
    %675 = vector.load %arg3[%c2_299, %c5_300, %c0_301] : memref<8x8x128xf32, #tpu.memory_space<vmem>>, vector<1x1x128xf32>
    %676 = vector.shape_cast %675 : vector<1x1x128xf32> to vector<128xf32>
    %677 = vector.shape_cast %676 : vector<128xf32> to vector<1x1x128xf32>
    %678 = vector.broadcast %677 : vector<1x1x128xf32> to vector<8x16x128xf32>
    %679 = arith.mulf %674, %678 : vector<8x16x128xf32>
    %680 = arith.addf %673, %679 : vector<8x16x128xf32>
    %681 = vector.extract_strided_slice %638 {offsets = [6, 0, 0], sizes = [8, 16, 128], strides = [1, 1, 1]} : vector<15x16x128xf32> to vector<8x16x128xf32>
    %c2_302 = arith.constant 2 : index
    %c6_303 = arith.constant 6 : index
    %c0_304 = arith.constant 0 : index
    %682 = vector.load %arg3[%c2_302, %c6_303, %c0_304] : memref<8x8x128xf32, #tpu.memory_space<vmem>>, vector<1x1x128xf32>
    %683 = vector.shape_cast %682 : vector<1x1x128xf32> to vector<128xf32>
    %684 = vector.shape_cast %683 : vector<128xf32> to vector<1x1x128xf32>
    %685 = vector.broadcast %684 : vector<1x1x128xf32> to vector<8x16x128xf32>
    %686 = arith.mulf %681, %685 : vector<8x16x128xf32>
    %687 = arith.addf %680, %686 : vector<8x16x128xf32>
    %688 = vector.extract_strided_slice %638 {offsets = [7, 0, 0], sizes = [8, 16, 128], strides = [1, 1, 1]} : vector<15x16x128xf32> to vector<8x16x128xf32>
    %c2_305 = arith.constant 2 : index
    %c7_306 = arith.constant 7 : index
    %c0_307 = arith.constant 0 : index
    %689 = vector.load %arg3[%c2_305, %c7_306, %c0_307] : memref<8x8x128xf32, #tpu.memory_space<vmem>>, vector<1x1x128xf32>
    %690 = vector.shape_cast %689 : vector<1x1x128xf32> to vector<128xf32>
    %691 = vector.shape_cast %690 : vector<128xf32> to vector<1x1x128xf32>
    %692 = vector.broadcast %691 : vector<1x1x128xf32> to vector<8x16x128xf32>
    %693 = arith.mulf %688, %692 : vector<8x16x128xf32>
    %694 = arith.addf %687, %693 : vector<8x16x128xf32>
    %c0_308 = arith.constant 0 : index
    %695 = arith.index_cast %516 : i32 to index
    %c4_309 = arith.constant 4 : index
    %c0_310 = arith.constant 0 : index
    %696 = vector.load %arg2[%c0_308, %695, %c4_309, %c0_310] : memref<1x23x24x128xf32, #tpu.memory_space<vmem>>, vector<1x15x16x128xf32>
    %697 = vector.shape_cast %696 : vector<1x15x16x128xf32> to vector<15x16x128xf32>
    %698 = vector.extract_strided_slice %697 {offsets = [0, 0, 0], sizes = [8, 16, 128], strides = [1, 1, 1]} : vector<15x16x128xf32> to vector<8x16x128xf32>
    %c4_311 = arith.constant 4 : index
    %c0_312 = arith.constant 0 : index
    %c0_313 = arith.constant 0 : index
    %699 = vector.load %arg3[%c4_311, %c0_312, %c0_313] : memref<8x8x128xf32, #tpu.memory_space<vmem>>, vector<1x1x128xf32>
    %700 = vector.shape_cast %699 : vector<1x1x128xf32> to vector<128xf32>
    %701 = vector.shape_cast %700 : vector<128xf32> to vector<1x1x128xf32>
    %702 = vector.broadcast %701 : vector<1x1x128xf32> to vector<8x16x128xf32>
    %703 = arith.mulf %698, %702 : vector<8x16x128xf32>
    %704 = arith.addf %694, %703 : vector<8x16x128xf32>
    %705 = vector.extract_strided_slice %697 {offsets = [1, 0, 0], sizes = [8, 16, 128], strides = [1, 1, 1]} : vector<15x16x128xf32> to vector<8x16x128xf32>
    %c4_314 = arith.constant 4 : index
    %c1_315 = arith.constant 1 : index
    %c0_316 = arith.constant 0 : index
    %706 = vector.load %arg3[%c4_314, %c1_315, %c0_316] : memref<8x8x128xf32, #tpu.memory_space<vmem>>, vector<1x1x128xf32>
    %707 = vector.shape_cast %706 : vector<1x1x128xf32> to vector<128xf32>
    %708 = vector.shape_cast %707 : vector<128xf32> to vector<1x1x128xf32>
    %709 = vector.broadcast %708 : vector<1x1x128xf32> to vector<8x16x128xf32>
    %710 = arith.mulf %705, %709 : vector<8x16x128xf32>
    %711 = arith.addf %704, %710 : vector<8x16x128xf32>
    %712 = vector.extract_strided_slice %697 {offsets = [2, 0, 0], sizes = [8, 16, 128], strides = [1, 1, 1]} : vector<15x16x128xf32> to vector<8x16x128xf32>
    %c4_317 = arith.constant 4 : index
    %c2_318 = arith.constant 2 : index
    %c0_319 = arith.constant 0 : index
    %713 = vector.load %arg3[%c4_317, %c2_318, %c0_319] : memref<8x8x128xf32, #tpu.memory_space<vmem>>, vector<1x1x128xf32>
    %714 = vector.shape_cast %713 : vector<1x1x128xf32> to vector<128xf32>
    %715 = vector.shape_cast %714 : vector<128xf32> to vector<1x1x128xf32>
    %716 = vector.broadcast %715 : vector<1x1x128xf32> to vector<8x16x128xf32>
    %717 = arith.mulf %712, %716 : vector<8x16x128xf32>
    %718 = arith.addf %711, %717 : vector<8x16x128xf32>
    %719 = vector.extract_strided_slice %697 {offsets = [3, 0, 0], sizes = [8, 16, 128], strides = [1, 1, 1]} : vector<15x16x128xf32> to vector<8x16x128xf32>
    %c4_320 = arith.constant 4 : index
    %c3_321 = arith.constant 3 : index
    %c0_322 = arith.constant 0 : index
    %720 = vector.load %arg3[%c4_320, %c3_321, %c0_322] : memref<8x8x128xf32, #tpu.memory_space<vmem>>, vector<1x1x128xf32>
    %721 = vector.shape_cast %720 : vector<1x1x128xf32> to vector<128xf32>
    %722 = vector.shape_cast %721 : vector<128xf32> to vector<1x1x128xf32>
    %723 = vector.broadcast %722 : vector<1x1x128xf32> to vector<8x16x128xf32>
    %724 = arith.mulf %719, %723 : vector<8x16x128xf32>
    %725 = arith.addf %718, %724 : vector<8x16x128xf32>
    %726 = vector.extract_strided_slice %697 {offsets = [4, 0, 0], sizes = [8, 16, 128], strides = [1, 1, 1]} : vector<15x16x128xf32> to vector<8x16x128xf32>
    %c4_323 = arith.constant 4 : index
    %c4_324 = arith.constant 4 : index
    %c0_325 = arith.constant 0 : index
    %727 = vector.load %arg3[%c4_323, %c4_324, %c0_325] : memref<8x8x128xf32, #tpu.memory_space<vmem>>, vector<1x1x128xf32>
    %728 = vector.shape_cast %727 : vector<1x1x128xf32> to vector<128xf32>
    %729 = vector.shape_cast %728 : vector<128xf32> to vector<1x1x128xf32>
    %730 = vector.broadcast %729 : vector<1x1x128xf32> to vector<8x16x128xf32>
    %731 = arith.mulf %726, %730 : vector<8x16x128xf32>
    %732 = arith.addf %725, %731 : vector<8x16x128xf32>
    %733 = vector.extract_strided_slice %697 {offsets = [5, 0, 0], sizes = [8, 16, 128], strides = [1, 1, 1]} : vector<15x16x128xf32> to vector<8x16x128xf32>
    %c4_326 = arith.constant 4 : index
    %c5_327 = arith.constant 5 : index
    %c0_328 = arith.constant 0 : index
    %734 = vector.load %arg3[%c4_326, %c5_327, %c0_328] : memref<8x8x128xf32, #tpu.memory_space<vmem>>, vector<1x1x128xf32>
    %735 = vector.shape_cast %734 : vector<1x1x128xf32> to vector<128xf32>
    %736 = vector.shape_cast %735 : vector<128xf32> to vector<1x1x128xf32>
    %737 = vector.broadcast %736 : vector<1x1x128xf32> to vector<8x16x128xf32>
    %738 = arith.mulf %733, %737 : vector<8x16x128xf32>
    %739 = arith.addf %732, %738 : vector<8x16x128xf32>
    %740 = vector.extract_strided_slice %697 {offsets = [6, 0, 0], sizes = [8, 16, 128], strides = [1, 1, 1]} : vector<15x16x128xf32> to vector<8x16x128xf32>
    %c4_329 = arith.constant 4 : index
    %c6_330 = arith.constant 6 : index
    %c0_331 = arith.constant 0 : index
    %741 = vector.load %arg3[%c4_329, %c6_330, %c0_331] : memref<8x8x128xf32, #tpu.memory_space<vmem>>, vector<1x1x128xf32>
    %742 = vector.shape_cast %741 : vector<1x1x128xf32> to vector<128xf32>
    %743 = vector.shape_cast %742 : vector<128xf32> to vector<1x1x128xf32>
    %744 = vector.broadcast %743 : vector<1x1x128xf32> to vector<8x16x128xf32>
    %745 = arith.mulf %740, %744 : vector<8x16x128xf32>
    %746 = arith.addf %739, %745 : vector<8x16x128xf32>
    %747 = vector.extract_strided_slice %697 {offsets = [7, 0, 0], sizes = [8, 16, 128], strides = [1, 1, 1]} : vector<15x16x128xf32> to vector<8x16x128xf32>
    %c4_332 = arith.constant 4 : index
    %c7_333 = arith.constant 7 : index
    %c0_334 = arith.constant 0 : index
    %748 = vector.load %arg3[%c4_332, %c7_333, %c0_334] : memref<8x8x128xf32, #tpu.memory_space<vmem>>, vector<1x1x128xf32>
    %749 = vector.shape_cast %748 : vector<1x1x128xf32> to vector<128xf32>
    %750 = vector.shape_cast %749 : vector<128xf32> to vector<1x1x128xf32>
    %751 = vector.broadcast %750 : vector<1x1x128xf32> to vector<8x16x128xf32>
    %752 = arith.mulf %747, %751 : vector<8x16x128xf32>
    %753 = arith.addf %746, %752 : vector<8x16x128xf32>
    %c0_335 = arith.constant 0 : index
    %754 = arith.index_cast %516 : i32 to index
    %c5_336 = arith.constant 5 : index
    %c0_337 = arith.constant 0 : index
    %755 = vector.load %arg2[%c0_335, %754, %c5_336, %c0_337] : memref<1x23x24x128xf32, #tpu.memory_space<vmem>>, vector<1x15x16x128xf32>
    %756 = vector.shape_cast %755 : vector<1x15x16x128xf32> to vector<15x16x128xf32>
    %757 = vector.extract_strided_slice %756 {offsets = [0, 0, 0], sizes = [8, 16, 128], strides = [1, 1, 1]} : vector<15x16x128xf32> to vector<8x16x128xf32>
    %c5_338 = arith.constant 5 : index
    %c0_339 = arith.constant 0 : index
    %c0_340 = arith.constant 0 : index
    %758 = vector.load %arg3[%c5_338, %c0_339, %c0_340] : memref<8x8x128xf32, #tpu.memory_space<vmem>>, vector<1x1x128xf32>
    %759 = vector.shape_cast %758 : vector<1x1x128xf32> to vector<128xf32>
    %760 = vector.shape_cast %759 : vector<128xf32> to vector<1x1x128xf32>
    %761 = vector.broadcast %760 : vector<1x1x128xf32> to vector<8x16x128xf32>
    %762 = arith.mulf %757, %761 : vector<8x16x128xf32>
    %763 = arith.addf %753, %762 : vector<8x16x128xf32>
    %764 = vector.extract_strided_slice %756 {offsets = [1, 0, 0], sizes = [8, 16, 128], strides = [1, 1, 1]} : vector<15x16x128xf32> to vector<8x16x128xf32>
    %c5_341 = arith.constant 5 : index
    %c1_342 = arith.constant 1 : index
    %c0_343 = arith.constant 0 : index
    %765 = vector.load %arg3[%c5_341, %c1_342, %c0_343] : memref<8x8x128xf32, #tpu.memory_space<vmem>>, vector<1x1x128xf32>
    %766 = vector.shape_cast %765 : vector<1x1x128xf32> to vector<128xf32>
    %767 = vector.shape_cast %766 : vector<128xf32> to vector<1x1x128xf32>
    %768 = vector.broadcast %767 : vector<1x1x128xf32> to vector<8x16x128xf32>
    %769 = arith.mulf %764, %768 : vector<8x16x128xf32>
    %770 = arith.addf %763, %769 : vector<8x16x128xf32>
    %771 = vector.extract_strided_slice %756 {offsets = [2, 0, 0], sizes = [8, 16, 128], strides = [1, 1, 1]} : vector<15x16x128xf32> to vector<8x16x128xf32>
    %c5_344 = arith.constant 5 : index
    %c2_345 = arith.constant 2 : index
    %c0_346 = arith.constant 0 : index
    %772 = vector.load %arg3[%c5_344, %c2_345, %c0_346] : memref<8x8x128xf32, #tpu.memory_space<vmem>>, vector<1x1x128xf32>
    %773 = vector.shape_cast %772 : vector<1x1x128xf32> to vector<128xf32>
    %774 = vector.shape_cast %773 : vector<128xf32> to vector<1x1x128xf32>
    %775 = vector.broadcast %774 : vector<1x1x128xf32> to vector<8x16x128xf32>
    %776 = arith.mulf %771, %775 : vector<8x16x128xf32>
    %777 = arith.addf %770, %776 : vector<8x16x128xf32>
    %778 = vector.extract_strided_slice %756 {offsets = [3, 0, 0], sizes = [8, 16, 128], strides = [1, 1, 1]} : vector<15x16x128xf32> to vector<8x16x128xf32>
    %c5_347 = arith.constant 5 : index
    %c3_348 = arith.constant 3 : index
    %c0_349 = arith.constant 0 : index
    %779 = vector.load %arg3[%c5_347, %c3_348, %c0_349] : memref<8x8x128xf32, #tpu.memory_space<vmem>>, vector<1x1x128xf32>
    %780 = vector.shape_cast %779 : vector<1x1x128xf32> to vector<128xf32>
    %781 = vector.shape_cast %780 : vector<128xf32> to vector<1x1x128xf32>
    %782 = vector.broadcast %781 : vector<1x1x128xf32> to vector<8x16x128xf32>
    %783 = arith.mulf %778, %782 : vector<8x16x128xf32>
    %784 = arith.addf %777, %783 : vector<8x16x128xf32>
    %785 = vector.extract_strided_slice %756 {offsets = [4, 0, 0], sizes = [8, 16, 128], strides = [1, 1, 1]} : vector<15x16x128xf32> to vector<8x16x128xf32>
    %c5_350 = arith.constant 5 : index
    %c4_351 = arith.constant 4 : index
    %c0_352 = arith.constant 0 : index
    %786 = vector.load %arg3[%c5_350, %c4_351, %c0_352] : memref<8x8x128xf32, #tpu.memory_space<vmem>>, vector<1x1x128xf32>
    %787 = vector.shape_cast %786 : vector<1x1x128xf32> to vector<128xf32>
    %788 = vector.shape_cast %787 : vector<128xf32> to vector<1x1x128xf32>
    %789 = vector.broadcast %788 : vector<1x1x128xf32> to vector<8x16x128xf32>
    %790 = arith.mulf %785, %789 : vector<8x16x128xf32>
    %791 = arith.addf %784, %790 : vector<8x16x128xf32>
    %792 = vector.extract_strided_slice %756 {offsets = [5, 0, 0], sizes = [8, 16, 128], strides = [1, 1, 1]} : vector<15x16x128xf32> to vector<8x16x128xf32>
    %c5_353 = arith.constant 5 : index
    %c5_354 = arith.constant 5 : index
    %c0_355 = arith.constant 0 : index
    %793 = vector.load %arg3[%c5_353, %c5_354, %c0_355] : memref<8x8x128xf32, #tpu.memory_space<vmem>>, vector<1x1x128xf32>
    %794 = vector.shape_cast %793 : vector<1x1x128xf32> to vector<128xf32>
    %795 = vector.shape_cast %794 : vector<128xf32> to vector<1x1x128xf32>
    %796 = vector.broadcast %795 : vector<1x1x128xf32> to vector<8x16x128xf32>
    %797 = arith.mulf %792, %796 : vector<8x16x128xf32>
    %798 = arith.addf %791, %797 : vector<8x16x128xf32>
    %799 = vector.extract_strided_slice %756 {offsets = [6, 0, 0], sizes = [8, 16, 128], strides = [1, 1, 1]} : vector<15x16x128xf32> to vector<8x16x128xf32>
    %c5_356 = arith.constant 5 : index
    %c6_357 = arith.constant 6 : index
    %c0_358 = arith.constant 0 : index
    %800 = vector.load %arg3[%c5_356, %c6_357, %c0_358] : memref<8x8x128xf32, #tpu.memory_space<vmem>>, vector<1x1x128xf32>
    %801 = vector.shape_cast %800 : vector<1x1x128xf32> to vector<128xf32>
    %802 = vector.shape_cast %801 : vector<128xf32> to vector<1x1x128xf32>
    %803 = vector.broadcast %802 : vector<1x1x128xf32> to vector<8x16x128xf32>
    %804 = arith.mulf %799, %803 : vector<8x16x128xf32>
    %805 = arith.addf %798, %804 : vector<8x16x128xf32>
    %806 = vector.extract_strided_slice %756 {offsets = [7, 0, 0], sizes = [8, 16, 128], strides = [1, 1, 1]} : vector<15x16x128xf32> to vector<8x16x128xf32>
    %c5_359 = arith.constant 5 : index
    %c7_360 = arith.constant 7 : index
    %c0_361 = arith.constant 0 : index
    %807 = vector.load %arg3[%c5_359, %c7_360, %c0_361] : memref<8x8x128xf32, #tpu.memory_space<vmem>>, vector<1x1x128xf32>
    %808 = vector.shape_cast %807 : vector<1x1x128xf32> to vector<128xf32>
    %809 = vector.shape_cast %808 : vector<128xf32> to vector<1x1x128xf32>
    %810 = vector.broadcast %809 : vector<1x1x128xf32> to vector<8x16x128xf32>
    %811 = arith.mulf %806, %810 : vector<8x16x128xf32>
    %812 = arith.addf %805, %811 : vector<8x16x128xf32>
    %c0_362 = arith.constant 0 : index
    %813 = arith.index_cast %516 : i32 to index
    %c6_363 = arith.constant 6 : index
    %c0_364 = arith.constant 0 : index
    %814 = vector.load %arg2[%c0_362, %813, %c6_363, %c0_364] : memref<1x23x24x128xf32, #tpu.memory_space<vmem>>, vector<1x15x16x128xf32>
    %815 = vector.shape_cast %814 : vector<1x15x16x128xf32> to vector<15x16x128xf32>
    %816 = vector.extract_strided_slice %815 {offsets = [0, 0, 0], sizes = [8, 16, 128], strides = [1, 1, 1]} : vector<15x16x128xf32> to vector<8x16x128xf32>
    %c6_365 = arith.constant 6 : index
    %c0_366 = arith.constant 0 : index
    %c0_367 = arith.constant 0 : index
    %817 = vector.load %arg3[%c6_365, %c0_366, %c0_367] : memref<8x8x128xf32, #tpu.memory_space<vmem>>, vector<1x1x128xf32>
    %818 = vector.shape_cast %817 : vector<1x1x128xf32> to vector<128xf32>
    %819 = vector.shape_cast %818 : vector<128xf32> to vector<1x1x128xf32>
    %820 = vector.broadcast %819 : vector<1x1x128xf32> to vector<8x16x128xf32>
    %821 = arith.mulf %816, %820 : vector<8x16x128xf32>
    %822 = arith.addf %812, %821 : vector<8x16x128xf32>
    %823 = vector.extract_strided_slice %815 {offsets = [1, 0, 0], sizes = [8, 16, 128], strides = [1, 1, 1]} : vector<15x16x128xf32> to vector<8x16x128xf32>
    %c6_368 = arith.constant 6 : index
    %c1_369 = arith.constant 1 : index
    %c0_370 = arith.constant 0 : index
    %824 = vector.load %arg3[%c6_368, %c1_369, %c0_370] : memref<8x8x128xf32, #tpu.memory_space<vmem>>, vector<1x1x128xf32>
    %825 = vector.shape_cast %824 : vector<1x1x128xf32> to vector<128xf32>
    %826 = vector.shape_cast %825 : vector<128xf32> to vector<1x1x128xf32>
    %827 = vector.broadcast %826 : vector<1x1x128xf32> to vector<8x16x128xf32>
    %828 = arith.mulf %823, %827 : vector<8x16x128xf32>
    %829 = arith.addf %822, %828 : vector<8x16x128xf32>
    %830 = vector.extract_strided_slice %815 {offsets = [2, 0, 0], sizes = [8, 16, 128], strides = [1, 1, 1]} : vector<15x16x128xf32> to vector<8x16x128xf32>
    %c6_371 = arith.constant 6 : index
    %c2_372 = arith.constant 2 : index
    %c0_373 = arith.constant 0 : index
    %831 = vector.load %arg3[%c6_371, %c2_372, %c0_373] : memref<8x8x128xf32, #tpu.memory_space<vmem>>, vector<1x1x128xf32>
    %832 = vector.shape_cast %831 : vector<1x1x128xf32> to vector<128xf32>
    %833 = vector.shape_cast %832 : vector<128xf32> to vector<1x1x128xf32>
    %834 = vector.broadcast %833 : vector<1x1x128xf32> to vector<8x16x128xf32>
    %835 = arith.mulf %830, %834 : vector<8x16x128xf32>
    %836 = arith.addf %829, %835 : vector<8x16x128xf32>
    %837 = vector.extract_strided_slice %815 {offsets = [3, 0, 0], sizes = [8, 16, 128], strides = [1, 1, 1]} : vector<15x16x128xf32> to vector<8x16x128xf32>
    %c6_374 = arith.constant 6 : index
    %c3_375 = arith.constant 3 : index
    %c0_376 = arith.constant 0 : index
    %838 = vector.load %arg3[%c6_374, %c3_375, %c0_376] : memref<8x8x128xf32, #tpu.memory_space<vmem>>, vector<1x1x128xf32>
    %839 = vector.shape_cast %838 : vector<1x1x128xf32> to vector<128xf32>
    %840 = vector.shape_cast %839 : vector<128xf32> to vector<1x1x128xf32>
    %841 = vector.broadcast %840 : vector<1x1x128xf32> to vector<8x16x128xf32>
    %842 = arith.mulf %837, %841 : vector<8x16x128xf32>
    %843 = arith.addf %836, %842 : vector<8x16x128xf32>
    %844 = vector.extract_strided_slice %815 {offsets = [4, 0, 0], sizes = [8, 16, 128], strides = [1, 1, 1]} : vector<15x16x128xf32> to vector<8x16x128xf32>
    %c6_377 = arith.constant 6 : index
    %c4_378 = arith.constant 4 : index
    %c0_379 = arith.constant 0 : index
    %845 = vector.load %arg3[%c6_377, %c4_378, %c0_379] : memref<8x8x128xf32, #tpu.memory_space<vmem>>, vector<1x1x128xf32>
    %846 = vector.shape_cast %845 : vector<1x1x128xf32> to vector<128xf32>
    %847 = vector.shape_cast %846 : vector<128xf32> to vector<1x1x128xf32>
    %848 = vector.broadcast %847 : vector<1x1x128xf32> to vector<8x16x128xf32>
    %849 = arith.mulf %844, %848 : vector<8x16x128xf32>
    %850 = arith.addf %843, %849 : vector<8x16x128xf32>
    %851 = vector.extract_strided_slice %815 {offsets = [5, 0, 0], sizes = [8, 16, 128], strides = [1, 1, 1]} : vector<15x16x128xf32> to vector<8x16x128xf32>
    %c6_380 = arith.constant 6 : index
    %c5_381 = arith.constant 5 : index
    %c0_382 = arith.constant 0 : index
    %852 = vector.load %arg3[%c6_380, %c5_381, %c0_382] : memref<8x8x128xf32, #tpu.memory_space<vmem>>, vector<1x1x128xf32>
    %853 = vector.shape_cast %852 : vector<1x1x128xf32> to vector<128xf32>
    %854 = vector.shape_cast %853 : vector<128xf32> to vector<1x1x128xf32>
    %855 = vector.broadcast %854 : vector<1x1x128xf32> to vector<8x16x128xf32>
    %856 = arith.mulf %851, %855 : vector<8x16x128xf32>
    %857 = arith.addf %850, %856 : vector<8x16x128xf32>
    %858 = vector.extract_strided_slice %815 {offsets = [6, 0, 0], sizes = [8, 16, 128], strides = [1, 1, 1]} : vector<15x16x128xf32> to vector<8x16x128xf32>
    %c6_383 = arith.constant 6 : index
    %c6_384 = arith.constant 6 : index
    %c0_385 = arith.constant 0 : index
    %859 = vector.load %arg3[%c6_383, %c6_384, %c0_385] : memref<8x8x128xf32, #tpu.memory_space<vmem>>, vector<1x1x128xf32>
    %860 = vector.shape_cast %859 : vector<1x1x128xf32> to vector<128xf32>
    %861 = vector.shape_cast %860 : vector<128xf32> to vector<1x1x128xf32>
    %862 = vector.broadcast %861 : vector<1x1x128xf32> to vector<8x16x128xf32>
    %863 = arith.mulf %858, %862 : vector<8x16x128xf32>
    %864 = arith.addf %857, %863 : vector<8x16x128xf32>
    %865 = vector.extract_strided_slice %815 {offsets = [7, 0, 0], sizes = [8, 16, 128], strides = [1, 1, 1]} : vector<15x16x128xf32> to vector<8x16x128xf32>
    %c6_386 = arith.constant 6 : index
    %c7_387 = arith.constant 7 : index
    %c0_388 = arith.constant 0 : index
    %866 = vector.load %arg3[%c6_386, %c7_387, %c0_388] : memref<8x8x128xf32, #tpu.memory_space<vmem>>, vector<1x1x128xf32>
    %867 = vector.shape_cast %866 : vector<1x1x128xf32> to vector<128xf32>
    %868 = vector.shape_cast %867 : vector<128xf32> to vector<1x1x128xf32>
    %869 = vector.broadcast %868 : vector<1x1x128xf32> to vector<8x16x128xf32>
    %870 = arith.mulf %865, %869 : vector<8x16x128xf32>
    %871 = arith.addf %864, %870 : vector<8x16x128xf32>
    %c0_389 = arith.constant 0 : index
    %872 = arith.index_cast %516 : i32 to index
    %c7_390 = arith.constant 7 : index
    %c0_391 = arith.constant 0 : index
    %873 = vector.load %arg2[%c0_389, %872, %c7_390, %c0_391] : memref<1x23x24x128xf32, #tpu.memory_space<vmem>>, vector<1x15x16x128xf32>
    %874 = vector.shape_cast %873 : vector<1x15x16x128xf32> to vector<15x16x128xf32>
    %875 = vector.extract_strided_slice %874 {offsets = [0, 0, 0], sizes = [8, 16, 128], strides = [1, 1, 1]} : vector<15x16x128xf32> to vector<8x16x128xf32>
    %c7_392 = arith.constant 7 : index
    %c0_393 = arith.constant 0 : index
    %c0_394 = arith.constant 0 : index
    %876 = vector.load %arg3[%c7_392, %c0_393, %c0_394] : memref<8x8x128xf32, #tpu.memory_space<vmem>>, vector<1x1x128xf32>
    %877 = vector.shape_cast %876 : vector<1x1x128xf32> to vector<128xf32>
    %878 = vector.shape_cast %877 : vector<128xf32> to vector<1x1x128xf32>
    %879 = vector.broadcast %878 : vector<1x1x128xf32> to vector<8x16x128xf32>
    %880 = arith.mulf %875, %879 : vector<8x16x128xf32>
    %881 = arith.addf %871, %880 : vector<8x16x128xf32>
    %882 = vector.extract_strided_slice %874 {offsets = [1, 0, 0], sizes = [8, 16, 128], strides = [1, 1, 1]} : vector<15x16x128xf32> to vector<8x16x128xf32>
    %c7_395 = arith.constant 7 : index
    %c1_396 = arith.constant 1 : index
    %c0_397 = arith.constant 0 : index
    %883 = vector.load %arg3[%c7_395, %c1_396, %c0_397] : memref<8x8x128xf32, #tpu.memory_space<vmem>>, vector<1x1x128xf32>
    %884 = vector.shape_cast %883 : vector<1x1x128xf32> to vector<128xf32>
    %885 = vector.shape_cast %884 : vector<128xf32> to vector<1x1x128xf32>
    %886 = vector.broadcast %885 : vector<1x1x128xf32> to vector<8x16x128xf32>
    %887 = arith.mulf %882, %886 : vector<8x16x128xf32>
    %888 = arith.addf %881, %887 : vector<8x16x128xf32>
    %889 = vector.extract_strided_slice %874 {offsets = [2, 0, 0], sizes = [8, 16, 128], strides = [1, 1, 1]} : vector<15x16x128xf32> to vector<8x16x128xf32>
    %c7_398 = arith.constant 7 : index
    %c2_399 = arith.constant 2 : index
    %c0_400 = arith.constant 0 : index
    %890 = vector.load %arg3[%c7_398, %c2_399, %c0_400] : memref<8x8x128xf32, #tpu.memory_space<vmem>>, vector<1x1x128xf32>
    %891 = vector.shape_cast %890 : vector<1x1x128xf32> to vector<128xf32>
    %892 = vector.shape_cast %891 : vector<128xf32> to vector<1x1x128xf32>
    %893 = vector.broadcast %892 : vector<1x1x128xf32> to vector<8x16x128xf32>
    %894 = arith.mulf %889, %893 : vector<8x16x128xf32>
    %895 = arith.addf %888, %894 : vector<8x16x128xf32>
    %896 = vector.extract_strided_slice %874 {offsets = [3, 0, 0], sizes = [8, 16, 128], strides = [1, 1, 1]} : vector<15x16x128xf32> to vector<8x16x128xf32>
    %c7_401 = arith.constant 7 : index
    %c3_402 = arith.constant 3 : index
    %c0_403 = arith.constant 0 : index
    %897 = vector.load %arg3[%c7_401, %c3_402, %c0_403] : memref<8x8x128xf32, #tpu.memory_space<vmem>>, vector<1x1x128xf32>
    %898 = vector.shape_cast %897 : vector<1x1x128xf32> to vector<128xf32>
    %899 = vector.shape_cast %898 : vector<128xf32> to vector<1x1x128xf32>
    %900 = vector.broadcast %899 : vector<1x1x128xf32> to vector<8x16x128xf32>
    %901 = arith.mulf %896, %900 : vector<8x16x128xf32>
    %902 = arith.addf %895, %901 : vector<8x16x128xf32>
    %903 = vector.extract_strided_slice %874 {offsets = [4, 0, 0], sizes = [8, 16, 128], strides = [1, 1, 1]} : vector<15x16x128xf32> to vector<8x16x128xf32>
    %c7_404 = arith.constant 7 : index
    %c4_405 = arith.constant 4 : index
    %c0_406 = arith.constant 0 : index
    %904 = vector.load %arg3[%c7_404, %c4_405, %c0_406] : memref<8x8x128xf32, #tpu.memory_space<vmem>>, vector<1x1x128xf32>
    %905 = vector.shape_cast %904 : vector<1x1x128xf32> to vector<128xf32>
    %906 = vector.shape_cast %905 : vector<128xf32> to vector<1x1x128xf32>
    %907 = vector.broadcast %906 : vector<1x1x128xf32> to vector<8x16x128xf32>
    %908 = arith.mulf %903, %907 : vector<8x16x128xf32>
    %909 = arith.addf %902, %908 : vector<8x16x128xf32>
    %910 = vector.extract_strided_slice %874 {offsets = [5, 0, 0], sizes = [8, 16, 128], strides = [1, 1, 1]} : vector<15x16x128xf32> to vector<8x16x128xf32>
    %c7_407 = arith.constant 7 : index
    %c5_408 = arith.constant 5 : index
    %c0_409 = arith.constant 0 : index
    %911 = vector.load %arg3[%c7_407, %c5_408, %c0_409] : memref<8x8x128xf32, #tpu.memory_space<vmem>>, vector<1x1x128xf32>
    %912 = vector.shape_cast %911 : vector<1x1x128xf32> to vector<128xf32>
    %913 = vector.shape_cast %912 : vector<128xf32> to vector<1x1x128xf32>
    %914 = vector.broadcast %913 : vector<1x1x128xf32> to vector<8x16x128xf32>
    %915 = arith.mulf %910, %914 : vector<8x16x128xf32>
    %916 = arith.addf %909, %915 : vector<8x16x128xf32>
    %917 = vector.extract_strided_slice %874 {offsets = [6, 0, 0], sizes = [8, 16, 128], strides = [1, 1, 1]} : vector<15x16x128xf32> to vector<8x16x128xf32>
    %c7_410 = arith.constant 7 : index
    %c6_411 = arith.constant 6 : index
    %c0_412 = arith.constant 0 : index
    %918 = vector.load %arg3[%c7_410, %c6_411, %c0_412] : memref<8x8x128xf32, #tpu.memory_space<vmem>>, vector<1x1x128xf32>
    %919 = vector.shape_cast %918 : vector<1x1x128xf32> to vector<128xf32>
    %920 = vector.shape_cast %919 : vector<128xf32> to vector<1x1x128xf32>
    %921 = vector.broadcast %920 : vector<1x1x128xf32> to vector<8x16x128xf32>
    %922 = arith.mulf %917, %921 : vector<8x16x128xf32>
    %923 = arith.addf %916, %922 : vector<8x16x128xf32>
    %924 = vector.extract_strided_slice %874 {offsets = [7, 0, 0], sizes = [8, 16, 128], strides = [1, 1, 1]} : vector<15x16x128xf32> to vector<8x16x128xf32>
    %c7_413 = arith.constant 7 : index
    %c7_414 = arith.constant 7 : index
    %c0_415 = arith.constant 0 : index
    %925 = vector.load %arg3[%c7_413, %c7_414, %c0_415] : memref<8x8x128xf32, #tpu.memory_space<vmem>>, vector<1x1x128xf32>
    %926 = vector.shape_cast %925 : vector<1x1x128xf32> to vector<128xf32>
    %927 = vector.shape_cast %926 : vector<128xf32> to vector<1x1x128xf32>
    %928 = vector.broadcast %927 : vector<1x1x128xf32> to vector<8x16x128xf32>
    %929 = arith.mulf %924, %928 : vector<8x16x128xf32>
    %930 = arith.addf %923, %929 : vector<8x16x128xf32>
    %c0_416 = arith.constant 0 : index
    %931 = arith.index_cast %516 : i32 to index
    %c3_417 = arith.constant 3 : index
    %c0_418 = arith.constant 0 : index
    %932 = vector.load %arg2[%c0_416, %931, %c3_417, %c0_418] : memref<1x23x24x128xf32, #tpu.memory_space<vmem>>, vector<1x15x16x128xf32>
    %933 = vector.shape_cast %932 : vector<1x15x16x128xf32> to vector<15x16x128xf32>
    %934 = vector.extract_strided_slice %933 {offsets = [0, 0, 0], sizes = [8, 16, 128], strides = [1, 1, 1]} : vector<15x16x128xf32> to vector<8x16x128xf32>
    %c3_419 = arith.constant 3 : index
    %c0_420 = arith.constant 0 : index
    %c0_421 = arith.constant 0 : index
    %935 = vector.load %arg3[%c3_419, %c0_420, %c0_421] : memref<8x8x128xf32, #tpu.memory_space<vmem>>, vector<1x1x128xf32>
    %936 = vector.shape_cast %935 : vector<1x1x128xf32> to vector<128xf32>
    %937 = vector.shape_cast %936 : vector<128xf32> to vector<1x1x128xf32>
    %938 = vector.broadcast %937 : vector<1x1x128xf32> to vector<8x16x128xf32>
    %939 = arith.mulf %934, %938 : vector<8x16x128xf32>
    %940 = arith.addf %930, %939 : vector<8x16x128xf32>
    %941 = vector.extract_strided_slice %933 {offsets = [1, 0, 0], sizes = [8, 16, 128], strides = [1, 1, 1]} : vector<15x16x128xf32> to vector<8x16x128xf32>
    %c3_422 = arith.constant 3 : index
    %c1_423 = arith.constant 1 : index
    %c0_424 = arith.constant 0 : index
    %942 = vector.load %arg3[%c3_422, %c1_423, %c0_424] : memref<8x8x128xf32, #tpu.memory_space<vmem>>, vector<1x1x128xf32>
    %943 = vector.shape_cast %942 : vector<1x1x128xf32> to vector<128xf32>
    %944 = vector.shape_cast %943 : vector<128xf32> to vector<1x1x128xf32>
    %945 = vector.broadcast %944 : vector<1x1x128xf32> to vector<8x16x128xf32>
    %946 = arith.mulf %941, %945 : vector<8x16x128xf32>
    %947 = arith.addf %940, %946 : vector<8x16x128xf32>
    %948 = vector.extract_strided_slice %933 {offsets = [2, 0, 0], sizes = [8, 16, 128], strides = [1, 1, 1]} : vector<15x16x128xf32> to vector<8x16x128xf32>
    %c3_425 = arith.constant 3 : index
    %c2_426 = arith.constant 2 : index
    %c0_427 = arith.constant 0 : index
    %949 = vector.load %arg3[%c3_425, %c2_426, %c0_427] : memref<8x8x128xf32, #tpu.memory_space<vmem>>, vector<1x1x128xf32>
    %950 = vector.shape_cast %949 : vector<1x1x128xf32> to vector<128xf32>
    %951 = vector.shape_cast %950 : vector<128xf32> to vector<1x1x128xf32>
    %952 = vector.broadcast %951 : vector<1x1x128xf32> to vector<8x16x128xf32>
    %953 = arith.mulf %948, %952 : vector<8x16x128xf32>
    %954 = arith.addf %947, %953 : vector<8x16x128xf32>
    %955 = vector.extract_strided_slice %933 {offsets = [3, 0, 0], sizes = [8, 16, 128], strides = [1, 1, 1]} : vector<15x16x128xf32> to vector<8x16x128xf32>
    %c3_428 = arith.constant 3 : index
    %c3_429 = arith.constant 3 : index
    %c0_430 = arith.constant 0 : index
    %956 = vector.load %arg3[%c3_428, %c3_429, %c0_430] : memref<8x8x128xf32, #tpu.memory_space<vmem>>, vector<1x1x128xf32>
    %957 = vector.shape_cast %956 : vector<1x1x128xf32> to vector<128xf32>
    %958 = vector.shape_cast %957 : vector<128xf32> to vector<1x1x128xf32>
    %959 = vector.broadcast %958 : vector<1x1x128xf32> to vector<8x16x128xf32>
    %960 = arith.mulf %955, %959 : vector<8x16x128xf32>
    %961 = arith.addf %954, %960 : vector<8x16x128xf32>
    %962 = vector.extract_strided_slice %933 {offsets = [4, 0, 0], sizes = [8, 16, 128], strides = [1, 1, 1]} : vector<15x16x128xf32> to vector<8x16x128xf32>
    %c3_431 = arith.constant 3 : index
    %c4_432 = arith.constant 4 : index
    %c0_433 = arith.constant 0 : index
    %963 = vector.load %arg3[%c3_431, %c4_432, %c0_433] : memref<8x8x128xf32, #tpu.memory_space<vmem>>, vector<1x1x128xf32>
    %964 = vector.shape_cast %963 : vector<1x1x128xf32> to vector<128xf32>
    %965 = vector.shape_cast %964 : vector<128xf32> to vector<1x1x128xf32>
    %966 = vector.broadcast %965 : vector<1x1x128xf32> to vector<8x16x128xf32>
    %967 = arith.mulf %962, %966 : vector<8x16x128xf32>
    %968 = arith.addf %961, %967 : vector<8x16x128xf32>
    %969 = vector.extract_strided_slice %933 {offsets = [5, 0, 0], sizes = [8, 16, 128], strides = [1, 1, 1]} : vector<15x16x128xf32> to vector<8x16x128xf32>
    %c3_434 = arith.constant 3 : index
    %c5_435 = arith.constant 5 : index
    %c0_436 = arith.constant 0 : index
    %970 = vector.load %arg3[%c3_434, %c5_435, %c0_436] : memref<8x8x128xf32, #tpu.memory_space<vmem>>, vector<1x1x128xf32>
    %971 = vector.shape_cast %970 : vector<1x1x128xf32> to vector<128xf32>
    %972 = vector.shape_cast %971 : vector<128xf32> to vector<1x1x128xf32>
    %973 = vector.broadcast %972 : vector<1x1x128xf32> to vector<8x16x128xf32>
    %974 = arith.mulf %969, %973 : vector<8x16x128xf32>
    %975 = arith.addf %968, %974 : vector<8x16x128xf32>
    %976 = vector.extract_strided_slice %933 {offsets = [6, 0, 0], sizes = [8, 16, 128], strides = [1, 1, 1]} : vector<15x16x128xf32> to vector<8x16x128xf32>
    %c3_437 = arith.constant 3 : index
    %c6_438 = arith.constant 6 : index
    %c0_439 = arith.constant 0 : index
    %977 = vector.load %arg3[%c3_437, %c6_438, %c0_439] : memref<8x8x128xf32, #tpu.memory_space<vmem>>, vector<1x1x128xf32>
    %978 = vector.shape_cast %977 : vector<1x1x128xf32> to vector<128xf32>
    %979 = vector.shape_cast %978 : vector<128xf32> to vector<1x1x128xf32>
    %980 = vector.broadcast %979 : vector<1x1x128xf32> to vector<8x16x128xf32>
    %981 = arith.mulf %976, %980 : vector<8x16x128xf32>
    %982 = arith.addf %975, %981 : vector<8x16x128xf32>
    %983 = vector.extract_strided_slice %933 {offsets = [7, 0, 0], sizes = [8, 16, 128], strides = [1, 1, 1]} : vector<15x16x128xf32> to vector<8x16x128xf32>
    %c3_440 = arith.constant 3 : index
    %c7_441 = arith.constant 7 : index
    %c0_442 = arith.constant 0 : index
    %984 = vector.load %arg3[%c3_440, %c7_441, %c0_442] : memref<8x8x128xf32, #tpu.memory_space<vmem>>, vector<1x1x128xf32>
    %985 = vector.shape_cast %984 : vector<1x1x128xf32> to vector<128xf32>
    %986 = vector.shape_cast %985 : vector<128xf32> to vector<1x1x128xf32>
    %987 = vector.broadcast %986 : vector<1x1x128xf32> to vector<8x16x128xf32>
    %988 = arith.mulf %983, %987 : vector<8x16x128xf32>
    %989 = arith.addf %982, %988 : vector<8x16x128xf32>
    %990 = vector.extract_strided_slice %933 {offsets = [3, 0, 0], sizes = [8, 16, 128], strides = [1, 1, 1]} : vector<15x16x128xf32> to vector<8x16x128xf32>
    %991 = vector.shape_cast %2 : vector<128xf32> to vector<1x1x128xf32>
    %992 = vector.broadcast %991 : vector<1x1x128xf32> to vector<8x16x128xf32>
    %993 = arith.addf %989, %992 : vector<8x16x128xf32>
    %cst_443 = arith.constant 5.000000e-01 : f32
    %994 = vector.broadcast %cst_443 : f32 to vector<8x16x128xf32>
    %995 = arith.mulf %994, %993 : vector<8x16x128xf32>
    %996 = arith.mulf %993, %993 : vector<8x16x128xf32>
    %997 = arith.mulf %996, %993 : vector<8x16x128xf32>
    %cst_444 = arith.constant 4.471500e-02 : f32
    %998 = vector.broadcast %cst_444 : f32 to vector<8x16x128xf32>
    %999 = arith.mulf %998, %997 : vector<8x16x128xf32>
    %1000 = arith.addf %993, %999 : vector<8x16x128xf32>
    %cst_445 = arith.constant 0.797884583 : f32
    %1001 = vector.broadcast %cst_445 : f32 to vector<8x16x128xf32>
    %1002 = arith.mulf %1001, %1000 : vector<8x16x128xf32>
    %1003 = math.tanh %1002 : vector<8x16x128xf32>
    %cst_446 = arith.constant 1.000000e+00 : f32
    %1004 = vector.broadcast %cst_446 : f32 to vector<8x16x128xf32>
    %1005 = arith.addf %1004, %1003 : vector<8x16x128xf32>
    %1006 = arith.mulf %995, %1005 : vector<8x16x128xf32>
    %1007 = vector.shape_cast %4 : vector<128xf32> to vector<1x1x128xf32>
    %1008 = vector.broadcast %1007 : vector<1x1x128xf32> to vector<8x16x128xf32>
    %1009 = arith.mulf %1006, %1008 : vector<8x16x128xf32>
    %1010 = vector.shape_cast %6 : vector<128xf32> to vector<1x1x128xf32>
    %1011 = vector.broadcast %1010 : vector<1x1x128xf32> to vector<8x16x128xf32>
    %1012 = arith.addf %1009, %1011 : vector<8x16x128xf32>
    %1013 = arith.addf %1012, %990 : vector<8x16x128xf32>
    %1014 = vector.shape_cast %1013 : vector<8x16x128xf32> to vector<128x128xf32>
    %1015 = arith.truncf %1014 : vector<128x128xf32> to vector<128x128xbf16>
    %c128 = arith.constant 128 : index
    %c0_447 = arith.constant 0 : index
    %1016 = vector.load %arg7[%c128, %c0_447] : memref<256x128xbf16, #tpu.memory_space<vmem>>, vector<128x128xbf16>
    tpu.vector_store %arg7[%c128, %c0_447], %1015 {strides = array<i32>} : memref<256x128xbf16, #tpu.memory_space<vmem>>, vector<128x128xbf16>,
    %c0_448 = arith.constant 0 : index
    %c0_449 = arith.constant 0 : index
    %1017 = vector.load %arg7[%c0_448, %c0_449] : memref<256x128xbf16, #tpu.memory_space<vmem>>, vector<256x128xbf16>
    %c0_450 = arith.constant 0 : index
    %c0_451 = arith.constant 0 : index
    %1018 = vector.load %arg5[%c0_450, %c0_451] : memref<128x128xbf16, #tpu.memory_space<vmem>>, vector<128x128xbf16>
    %cst_452 = arith.constant dense<0.000000e+00> : vector<256x128xf32>
    %1019 = tpu.matmul %1017, %1018, %cst_452 {dimension_numbers = #tpu.dot_dimension_numbers<[1], [0], [0], [1], [0, 0, 1, 1], [], []>} : vector<256x128xbf16>, vector<128x128xbf16>, vector<256x128xf32> -> vector<256x128xf32>
    %1020 = vector.shape_cast %8 : vector<128xf32> to vector<1x128xf32>
    %1021 = vector.broadcast %1020 : vector<1x128xf32> to vector<256x128xf32>
    %1022 = arith.addf %1019, %1021 : vector<256x128xf32>
    %cst_453 = arith.constant 5.000000e-01 : f32
    %1023 = vector.broadcast %cst_453 : f32 to vector<256x128xf32>
    %1024 = arith.mulf %1023, %1022 : vector<256x128xf32>
    %1025 = arith.mulf %1022, %1022 : vector<256x128xf32>
    %1026 = arith.mulf %1025, %1022 : vector<256x128xf32>
    %cst_454 = arith.constant 4.471500e-02 : f32
    %1027 = vector.broadcast %cst_454 : f32 to vector<256x128xf32>
    %1028 = arith.mulf %1027, %1026 : vector<256x128xf32>
    %1029 = arith.addf %1022, %1028 : vector<256x128xf32>
    %cst_455 = arith.constant 0.797884583 : f32
    %1030 = vector.broadcast %cst_455 : f32 to vector<256x128xf32>
    %1031 = arith.mulf %1030, %1029 : vector<256x128xf32>
    %1032 = math.tanh %1031 : vector<256x128xf32>
    %cst_456 = arith.constant 1.000000e+00 : f32
    %1033 = vector.broadcast %cst_456 : f32 to vector<256x128xf32>
    %1034 = arith.addf %1033, %1032 : vector<256x128xf32>
    %1035 = arith.mulf %1024, %1034 : vector<256x128xf32>
    %1036 = vector.shape_cast %10 : vector<128xf32> to vector<1x128xf32>
    %1037 = vector.broadcast %1036 : vector<1x128xf32> to vector<256x128xf32>
    %1038 = arith.mulf %1035, %1037 : vector<256x128xf32>
    %1039 = vector.shape_cast %12 : vector<128xf32> to vector<1x128xf32>
    %1040 = vector.broadcast %1039 : vector<1x128xf32> to vector<256x128xf32>
    %1041 = arith.addf %1038, %1040 : vector<256x128xf32>
    %1042 = vector.shape_cast %1041 : vector<256x128xf32> to vector<1x16x16x128xf32>
    %c0_457 = arith.constant 0 : index
    %c0_458 = arith.constant 0 : index
    %c0_459 = arith.constant 0 : index
    %c0_460 = arith.constant 0 : index
    %1043 = vector.load %arg6[%c0_457, %c0_458, %c0_459, %c0_460] : memref<1x16x16x128xf32, #tpu.memory_space<vmem>>, vector<1x16x16x128xf32>
    tpu.vector_store %arg6[%c0_457, %c0_458, %c0_459, %c0_460], %1042 {strides = array<i32>} : memref<1x16x16x128xf32, #tpu.memory_space<vmem>>, vector<1x16x16x128xf32>,
    return
  }
  func.func @transform_0(%arg0: i32, %arg1: i32) -> (i32, i32, i32, i32) {
    %c0_i32 = arith.constant 0 : i32
    %c0_i32_0 = arith.constant 0 : i32
    %c0_i32_1 = arith.constant 0 : i32
    %c0_i32_2 = arith.constant 0 : i32
    return %arg0, %c0_i32, %c0_i32_0, %c0_i32_1 : i32, i32, i32, i32
  }
  func.func @transform_1(%arg0: i32, %arg1: i32) -> (i32, i32, i32) {
    %c0_i32 = arith.constant 0 : i32
    %c0_i32_0 = arith.constant 0 : i32
    %c0_i32_1 = arith.constant 0 : i32
    %c0_i32_2 = arith.constant 0 : i32
    return %c0_i32, %c0_i32_0, %c0_i32_1 : i32, i32, i32
  }
  func.func @transform_2(%arg0: i32, %arg1: i32) -> (i32, i32) {
    %c0_i32 = arith.constant 0 : i32
    %c0_i32_0 = arith.constant 0 : i32
    %c0_i32_1 = arith.constant 0 : i32
    return %c0_i32, %c0_i32_0 : i32, i32
  }
  func.func @transform_3(%arg0: i32, %arg1: i32) -> (i32, i32) {
    %c0_i32 = arith.constant 0 : i32
    %c0_i32_0 = arith.constant 0 : i32
    %c0_i32_1 = arith.constant 0 : i32
    return %c0_i32, %c0_i32_0 : i32, i32
  }
  func.func @transform_4(%arg0: i32, %arg1: i32) -> (i32, i32, i32, i32) {
    %c0_i32 = arith.constant 0 : i32
    %c0_i32_0 = arith.constant 0 : i32
    %c0_i32_1 = arith.constant 0 : i32
    return %arg0, %arg1, %c0_i32, %c0_i32_0 : i32, i32, i32, i32
  }
}

</mosaic_0001>

<llo_original>
// kernel: tile.64
$region0: #{tile.64}
  %s0 = inlined_call_operand.vmem [shape: f32[2,64], index: 0, kind: input, shape index: {}]
  %s1 = inlined_call_operand.vmem [shape: f32[1,128], index: 1, kind: output, shape index: {}]
  $region1: #{tile.64} parent=0
    #allocation0 [shape = 'u8[4096]{0}', space=vmem, size = 0x1000, scoped, tag = 'scoped mem for output reshape']
    #allocation1 [shape = 'u8[4096]{0}', space=vmem, size = 0x1000, scoped, tag = 'scoped mem for input reshape']
    %s3 = sshllo.u32 0, 2
    %v4 = vld [vmem:[%s0] sm:%s3]
    %5 = vst [vmem:[#allocation1] sm:%s3] %v4
    %v6 = vld [vmem:[#allocation1] sm:$0x1]
    %vm7 = vcmask 523264
    %8 = vst.msk [vmem:[#allocation0] sm:$0x1] %vm7, %v6
    %s9 = scalar_lea.vmem [#allocation1], 1
    %v10 = vld [vmem:[%s9] sm:$0x1]
    %11 = vrot.lane.b32.xlu0 %v10, 64
    %v12 = vpop.permute.xlu0 %11
    %vm13 = vcmask 1048064
    %14 = vst.msk [vmem:[#allocation0] sm:$0x1] %vm13, %v12
    %s16 = sshllo.u32 0, 1
    %v18 = vld [vmem:[#allocation0] sm:%s16]
    %s19 = sshllo.u32 0, 1
    %20 = vst [vmem:[%s1] sm:%s19] %v18

// kernel: tile.55
$region0: #{tile.55}
  #allocation0 [shape = 's32[1]{0}', space=sflag, size = 0x4, scoped, tag = 'scoped memory for tile.55']
  %s0 = inlined_call_operand.vmem [shape: f32[64], index: 0, kind: input, shape index: {}]
  %s1 = inlined_call_operand.vmem [shape: f32[2,64], index: 1, kind: output, shape index: {}]
  // Predicated region
  $region2: #{tile.55} parent=0 // pred_check
    _
  $region3: #{tile.55} parent=0 // pred_check_branch
    %3 = sbr.rel (0) target = $region5
  $region4: #{tile.55} parent=0 // pred_region
    _
  $region5: #{tile.55} parent=0 // pred_fallthru
    _
  %v4 = vld [vmem:[%s0] ss:$0 sm:$0xff]
  %5 = vst [vmem:[%s1] sm:$0x3] %v4

// kernel: tile.43
$region0: #{tile.43}
  #allocation2 [shape = 's32[1]{0}', space=sflag, size = 0x4, scoped, tag = 'scoped memory for tile.43']
  %s0 = inlined_call_operand.hbm [shape: f32[64], index: 0, kind: input, shape index: {}]
  %s1 = inlined_call_operand.vmem [shape: f32[2,64], index: 1, kind: output, shape index: {}]
  $region1: #{tile.43} parent=0
    #allocation0 [shape = 'u8[512]{0}', space=vmem, size = 0x400, scoped, tag = 'operand span for operand 0']
    #allocation1 [shape = 's32[1]{0}', space=sflag, size = 0x4, scoped, tag = 'scoped memory for tile.43']
    %2 = vsyncpa [#allocation1], 0
    // Predicated region
    $region2: #{tile.43} parent=1 // pred_check
      _
    $region3: #{tile.43} parent=1 // pred_check_branch
      %4 = sbr.rel (0) target = $region5
    $region4: #{tile.43} parent=1 // pred_region
      %s6 = ssub.s32 16, 16
      %7 = vsyncadd [#allocation1], %s6
      %s9 = sshll.u32 [#allocation0], 4
      %s10 = int_to_ptr.vmem [resolvable:$true] %s9
      %12 = dma.hbm_to_vmem [thread:$0]  %s0, 16, %s10, [#allocation1]
    $region5: #{tile.43} parent=1 // pred_fallthru
      _
    // Predicated region
    $region6: #{tile.43} parent=1 // pred_check
      _
    $region7: #{tile.43} parent=1 // pred_check_branch
      %14 = sbr.rel (0) target = $region9
    $region8: #{tile.43} parent=1 // pred_region
      %15 = dma.done [#allocation1], 16
    $region9: #{tile.43} parent=1 // pred_fallthru
      _
    %v16 = vld [vmem:[#allocation0] ss:$0 sm:$0xff]
    %17 = vst [vmem:[%s1] sm:$0x3] %v16
    %18 = vsyncpa [#allocation1], 1

// kernel: tile.39
$region0: #{tile.39}
  %s0 = inlined_call_operand.vmem [shape: f32[8,8,2,64], index: 0, kind: input, shape index: {}]
  %s1 = inlined_call_operand.vmem [shape: f32[8,8,128], index: 1, kind: output, shape index: {}]
  $region1: #{tile.39} parent=0
    #allocation0 [shape = 'u8[262144]{0}', space=vmem, size = 0x40000, scoped, tag = 'scoped mem for input reshape']
    %s3 = sshllo.u32 0, 2
    %s4 = smul.addr 2, 63
    %s5 = scalar_lea.vmem %s0, %s4
    %v6 = vld [vmem:[%s5] sm:%s3]
    %s7 = scalar_lea.vmem [#allocation0], 504
    %8 = vst [vmem:[%s7] sm:%s3] %v6
    %s9 = smul.addr 2, 62
    %s10 = scalar_lea.vmem %s0, %s9
    %v11 = vld [vmem:[%s10] sm:%s3]
    %s12 = scalar_lea.vmem [#allocation0], 496
    %13 = vst [vmem:[%s12] sm:%s3] %v11
    %s14 = smul.addr 2, 61
    %s15 = scalar_lea.vmem %s0, %s14
    %v16 = vld [vmem:[%s15] sm:%s3]
    %s17 = scalar_lea.vmem [#allocation0], 488
    %18 = vst [vmem:[%s17] sm:%s3] %v16
    %s19 = smul.addr 2, 60
    %s20 = scalar_lea.vmem %s0, %s19
    %v21 = vld [vmem:[%s20] sm:%s3]
    %s22 = scalar_lea.vmem [#allocation0], 480
    %23 = vst [vmem:[%s22] sm:%s3] %v21
    %s24 = smul.addr 2, 59
    %s25 = scalar_lea.vmem %s0, %s24
    %v26 = vld [vmem:[%s25] sm:%s3]
    %s27 = scalar_lea.vmem [#allocation0], 472
    %28 = vst [vmem:[%s27] sm:%s3] %v26
    %s29 = smul.addr 2, 58
    %s30 = scalar_lea.vmem %s0, %s29
    %v31 = vld [vmem:[%s30] sm:%s3]
    %s32 = scalar_lea.vmem [#allocation0], 464
    %33 = vst [vmem:[%s32] sm:%s3] %v31
    %s34 = smul.addr 2, 57
    %s35 = scalar_lea.vmem %s0, %s34
    %v36 = vld [vmem:[%s35] sm:%s3]
    %s37 = scalar_lea.vmem [#allocation0], 456
    %38 = vst [vmem:[%s37] sm:%s3] %v36
    %s39 = smul.addr 2, 56
    %s40 = scalar_lea.vmem %s0, %s39
    %v41 = vld [vmem:[%s40] sm:%s3]
    %s42 = scalar_lea.vmem [#allocation0], 448
    %43 = vst [vmem:[%s42] sm:%s3] %v41
    %s44 = smul.addr 2, 55
    %s45 = scalar_lea.vmem %s0, %s44
    %v46 = vld [vmem:[%s45] sm:%s3]
    %s47 = scalar_lea.vmem [#allocation0], 440
    %48 = vst [vmem:[%s47] sm:%s3] %v46
    %s49 = smul.addr 2, 54
    %s50 = scalar_lea.vmem %s0, %s49
    %v51 = vld [vmem:[%s50] sm:%s3]
    %s52 = scalar_lea.vmem [#allocation0], 432
    %53 = vst [vmem:[%s52] sm:%s3] %v51
    %s54 = smul.addr 2, 53
    %s55 = scalar_lea.vmem %s0, %s54
    %v56 = vld [vmem:[%s55] sm:%s3]
    %s57 = scalar_lea.vmem [#allocation0], 424
    %58 = vst [vmem:[%s57] sm:%s3] %v56
    %s59 = smul.addr 2, 52
    %s60 = scalar_lea.vmem %s0, %s59
    %v61 = vld [vmem:[%s60] sm:%s3]
    %s62 = scalar_lea.vmem [#allocation0], 416
    %63 = vst [vmem:[%s62] sm:%s3] %v61
    %s64 = smul.addr 2, 51
    %s65 = scalar_lea.vmem %s0, %s64
    %v66 = vld [vmem:[%s65] sm:%s3]
    %s67 = scalar_lea.vmem [#allocation0], 408
    %68 = vst [vmem:[%s67] sm:%s3] %v66
    %s69 = smul.addr 2, 50
    %s70 = scalar_lea.vmem %s0, %s69
    %v71 = vld [vmem:[%s70] sm:%s3]
    %s72 = scalar_lea.vmem [#allocation0], 400
    %73 = vst [vmem:[%s72] sm:%s3] %v71
    %s74 = smul.addr 2, 49
    %s75 = scalar_lea.vmem %s0, %s74
    %v76 = vld [vmem:[%s75] sm:%s3]
    %s77 = scalar_lea.vmem [#allocation0], 392
    %78 = vst [vmem:[%s77] sm:%s3] %v76
    %s79 = smul.addr 2, 48
    %s80 = scalar_lea.vmem %s0, %s79
    %v81 = vld [vmem:[%s80] sm:%s3]
    %s82 = scalar_lea.vmem [#allocation0], 384
    %83 = vst [vmem:[%s82] sm:%s3] %v81
    %s84 = smul.addr 2, 47
    %s85 = scalar_lea.vmem %s0, %s84
    %v86 = vld [vmem:[%s85] sm:%s3]
    %s87 = scalar_lea.vmem [#allocation0], 376
    %88 = vst [vmem:[%s87] sm:%s3] %v86
    %s89 = smul.addr 2, 46
    %s90 = scalar_lea.vmem %s0, %s89
    %v91 = vld [vmem:[%s90] sm:%s3]
    %s92 = scalar_lea.vmem [#allocation0], 368
    %93 = vst [vmem:[%s92] sm:%s3] %v91
    %s94 = smul.addr 2, 45
    %s95 = scalar_lea.vmem %s0, %s94
    %v96 = vld [vmem:[%s95] sm:%s3]
    %s97 = scalar_lea.vmem [#allocation0], 360
    %98 = vst [vmem:[%s97] sm:%s3] %v96
    %s99 = smul.addr 2, 44
    %s100 = scalar_lea.vmem %s0, %s99
    %v101 = vld [vmem:[%s100] sm:%s3]
    %s102 = scalar_lea.vmem [#allocation0], 352
    %103 = vst [vmem:[%s102] sm:%s3] %v101
    %s104 = smul.addr 2, 43
    %s105 = scalar_lea.vmem %s0, %s104
    %v106 = vld [vmem:[%s105] sm:%s3]
    %s107 = scalar_lea.vmem [#allocation0], 344
    %108 = vst [vmem:[%s107] sm:%s3] %v106
    %s109 = smul.addr 2, 42
    %s110 = scalar_lea.vmem %s0, %s109
    %v111 = vld [vmem:[%s110] sm:%s3]
    %s112 = scalar_lea.vmem [#allocation0], 336
    %113 = vst [vmem:[%s112] sm:%s3] %v111
    %s114 = smul.addr 2, 41
    %s115 = scalar_lea.vmem %s0, %s114
    %v116 = vld [vmem:[%s115] sm:%s3]
    %s117 = scalar_lea.vmem [#allocation0], 328
    %118 = vst [vmem:[%s117] sm:%s3] %v116
    %s119 = smul.addr 2, 40
    %s120 = scalar_lea.vmem %s0, %s119
    %v121 = vld [vmem:[%s120] sm:%s3]
    %s122 = scalar_lea.vmem [#allocation0], 320
    %123 = vst [vmem:[%s122] sm:%s3] %v121
    %s124 = smul.addr 2, 39
    %s125 = scalar_lea.vmem %s0, %s124
    %v126 = vld [vmem:[%s125] sm:%s3]
    %s127 = scalar_lea.vmem [#allocation0], 312
    %128 = vst [vmem:[%s127] sm:%s3] %v126
    %s129 = smul.addr 2, 38
    %s130 = scalar_lea.vmem %s0, %s129
    %v131 = vld [vmem:[%s130] sm:%s3]
    %s132 = scalar_lea.vmem [#allocation0], 304
    %133 = vst [vmem:[%s132] sm:%s3] %v131
    %s134 = smul.addr 2, 37
    %s135 = scalar_lea.vmem %s0, %s134
    %v136 = vld [vmem:[%s135] sm:%s3]
    %s137 = scalar_lea.vmem [#allocation0], 296
    %138 = vst [vmem:[%s137] sm:%s3] %v136
    %s139 = smul.addr 2, 36
    %s140 = scalar_lea.vmem %s0, %s139
    %v141 = vld [vmem:[%s140] sm:%s3]
    %s142 = scalar_lea.vmem [#allocation0], 288
    %143 = vst [vmem:[%s142] sm:%s3] %v141
    %s144 = smul.addr 2, 35
    %s145 = scalar_lea.vmem %s0, %s144
    %v146 = vld [vmem:[%s145] sm:%s3]
    %s147 = scalar_lea.vmem [#allocation0], 280
    %148 = vst [vmem:[%s147] sm:%s3] %v146
    %s149 = smul.addr 2, 34
    %s150 = scalar_lea.vmem %s0, %s149
    %v151 = vld [vmem:[%s150] sm:%s3]
    %s152 = scalar_lea.vmem [#allocation0], 272
    %153 = vst [vmem:[%s152] sm:%s3] %v151
    %s154 = smul.addr 2, 33
    %s155 = scalar_lea.vmem %s0, %s154
    %v156 = vld [vmem:[%s155] sm:%s3]
    %s157 = scalar_lea.vmem [#allocation0], 264
    %158 = vst [vmem:[%s157] sm:%s3] %v156
    %s159 = smul.addr 2, 32
    %s160 = scalar_lea.vmem %s0, %s159
    %v161 = vld [vmem:[%s160] sm:%s3]
    %s162 = scalar_lea.vmem [#allocation0], 256
    %163 = vst [vmem:[%s162] sm:%s3] %v161
    %s164 = smul.addr 2, 31
    %s165 = scalar_lea.vmem %s0, %s164
    %v166 = vld [vmem:[%s165] sm:%s3]
    %s167 = scalar_lea.vmem [#allocation0], 248
    %168 = vst [vmem:[%s167] sm:%s3] %v166
    %s169 = smul.addr 2, 30
    %s170 = scalar_lea.vmem %s0, %s169
    %v171 = vld [vmem:[%s170] sm:%s3]
    %s172 = scalar_lea.vmem [#allocation0], 240
    %173 = vst [vmem:[%s172] sm:%s3] %v171
    %s174 = smul.addr 2, 29
    %s175 = scalar_lea.vmem %s0, %s174
    %v176 = vld [vmem:[%s175] sm:%s3]
    %s177 = scalar_lea.vmem [#allocation0], 232
    %178 = vst [vmem:[%s177] sm:%s3] %v176
    %s179 = smul.addr 2, 28
    %s180 = scalar_lea.vmem %s0, %s179
    %v181 = vld [vmem:[%s180] sm:%s3]
    %s182 = scalar_lea.vmem [#allocation0], 224
    %183 = vst [vmem:[%s182] sm:%s3] %v181
    %s184 = smul.addr 2, 27
    %s185 = scalar_lea.vmem %s0, %s184
    %v186 = vld [vmem:[%s185] sm:%s3]
    %s187 = scalar_lea.vmem [#allocation0], 216
    %188 = vst [vmem:[%s187] sm:%s3] %v186
    %s189 = smul.addr 2, 26
    %s190 = scalar_lea.vmem %s0, %s189
    %v191 = vld [vmem:[%s190] sm:%s3]
    %s192 = scalar_lea.vmem [#allocation0], 208
    %193 = vst [vmem:[%s192] sm:%s3] %v191
    %s194 = smul.addr 2, 25
    %s195 = scalar_lea.vmem %s0, %s194
    %v196 = vld [vmem:[%s195] sm:%s3]
    %s197 = scalar_lea.vmem [#allocation0], 200
    %198 = vst [vmem:[%s197] sm:%s3] %v196
    %s199 = smul.addr 2, 24
    %s200 = scalar_lea.vmem %s0, %s199
    %v201 = vld [vmem:[%s200] sm:%s3]
    %s202 = scalar_lea.vmem [#allocation0], 192
    %203 = vst [vmem:[%s202] sm:%s3] %v201
    %s204 = smul.addr 2, 23
    %s205 = scalar_lea.vmem %s0, %s204
    %v206 = vld [vmem:[%s205] sm:%s3]
    %s207 = scalar_lea.vmem [#allocation0], 184
    %208 = vst [vmem:[%s207] sm:%s3] %v206
    %s209 = smul.addr 2, 22
    %s210 = scalar_lea.vmem %s0, %s209
    %v211 = vld [vmem:[%s210] sm:%s3]
    %s212 = scalar_lea.vmem [#allocation0], 176
    %213 = vst [vmem:[%s212] sm:%s3] %v211
    %s214 = smul.addr 2, 21
    %s215 = scalar_lea.vmem %s0, %s214
    %v216 = vld [vmem:[%s215] sm:%s3]
    %s217 = scalar_lea.vmem [#allocation0], 168
    %218 = vst [vmem:[%s217] sm:%s3] %v216
    %s219 = smul.addr 2, 20
    %s220 = scalar_lea.vmem %s0, %s219
    %v221 = vld [vmem:[%s220] sm:%s3]
    %s222 = scalar_lea.vmem [#allocation0], 160
    %223 = vst [vmem:[%s222] sm:%s3] %v221
    %s224 = smul.addr 2, 19
    %s225 = scalar_lea.vmem %s0, %s224
    %v226 = vld [vmem:[%s225] sm:%s3]
    %s227 = scalar_lea.vmem [#allocation0], 152
    %228 = vst [vmem:[%s227] sm:%s3] %v226
    %s229 = smul.addr 2, 18
    %s230 = scalar_lea.vmem %s0, %s229
    %v231 = vld [vmem:[%s230] sm:%s3]
    %s232 = scalar_lea.vmem [#allocation0], 144
    %233 = vst [vmem:[%s232] sm:%s3] %v231
    %s234 = smul.addr 2, 17
    %s235 = scalar_lea.vmem %s0, %s234
    %v236 = vld [vmem:[%s235] sm:%s3]
    %s237 = scalar_lea.vmem [#allocation0], 136
    %238 = vst [vmem:[%s237] sm:%s3] %v236
    %s239 = smul.addr 2, 16
    %s240 = scalar_lea.vmem %s0, %s239
    %v241 = vld [vmem:[%s240] sm:%s3]
    %s242 = scalar_lea.vmem [#allocation0], 128
    %243 = vst [vmem:[%s242] sm:%s3] %v241
    %s244 = smul.addr 2, 15
    %s245 = scalar_lea.vmem %s0, %s244
    %v246 = vld [vmem:[%s245] sm:%s3]
    %s247 = scalar_lea.vmem [#allocation0], 120
    %248 = vst [vmem:[%s247] sm:%s3] %v246
    %s249 = smul.addr 2, 14
    %s250 = scalar_lea.vmem %s0, %s249
    %v251 = vld [vmem:[%s250] sm:%s3]
    %s252 = scalar_lea.vmem [#allocation0], 112
    %253 = vst [vmem:[%s252] sm:%s3] %v251
    %s254 = smul.addr 2, 13
    %s255 = scalar_lea.vmem %s0, %s254
    %v256 = vld [vmem:[%s255] sm:%s3]
    %s257 = scalar_lea.vmem [#allocation0], 104
    %258 = vst [vmem:[%s257] sm:%s3] %v256
    %s259 = smul.addr 2, 12
    %s260 = scalar_lea.vmem %s0, %s259
    %v261 = vld [vmem:[%s260] sm:%s3]
    %s262 = scalar_lea.vmem [#allocation0], 96
    %263 = vst [vmem:[%s262] sm:%s3] %v261
    %s264 = smul.addr 2, 11
    %s265 = scalar_lea.vmem %s0, %s264
    %v266 = vld [vmem:[%s265] sm:%s3]
    %s267 = scalar_lea.vmem [#allocation0], 88
    %268 = vst [vmem:[%s267] sm:%s3] %v266
    %s269 = smul.addr 2, 10
    %s270 = scalar_lea.vmem %s0, %s269
    %v271 = vld [vmem:[%s270] sm:%s3]
    %s272 = scalar_lea.vmem [#allocation0], 80
    %273 = vst [vmem:[%s272] sm:%s3] %v271
    %s274 = smul.addr 2, 9
    %s275 = scalar_lea.vmem %s0, %s274
    %v276 = vld [vmem:[%s275] sm:%s3]
    %s277 = scalar_lea.vmem [#allocation0], 72
    %278 = vst [vmem:[%s277] sm:%s3] %v276
    %s279 = smul.addr 2, 8
    %s280 = scalar_lea.vmem %s0, %s279
    %v281 = vld [vmem:[%s280] sm:%s3]
    %s282 = scalar_lea.vmem [#allocation0], 64
    %283 = vst [vmem:[%s282] sm:%s3] %v281
    %s284 = smul.addr 2, 7
    %s285 = scalar_lea.vmem %s0, %s284
    %v286 = vld [vmem:[%s285] sm:%s3]
    %s287 = scalar_lea.vmem [#allocation0], 56
    %288 = vst [vmem:[%s287] sm:%s3] %v286
    %s289 = smul.addr 2, 6
    %s290 = scalar_lea.vmem %s0, %s289
    %v291 = vld [vmem:[%s290] sm:%s3]
    %s292 = scalar_lea.vmem [#allocation0], 48
    %293 = vst [vmem:[%s292] sm:%s3] %v291
    %s294 = smul.addr 2, 5
    %s295 = scalar_lea.vmem %s0, %s294
    %v296 = vld [vmem:[%s295] sm:%s3]
    %s297 = scalar_lea.vmem [#allocation0], 40
    %298 = vst [vmem:[%s297] sm:%s3] %v296
    %s299 = smul.addr 2, 4
    %s300 = scalar_lea.vmem %s0, %s299
    %v301 = vld [vmem:[%s300] sm:%s3]
    %s302 = scalar_lea.vmem [#allocation0], 32
    %303 = vst [vmem:[%s302] sm:%s3] %v301
    %s304 = smul.addr 2, 3
    %s305 = scalar_lea.vmem %s0, %s304
    %v306 = vld [vmem:[%s305] sm:%s3]
    %s307 = scalar_lea.vmem [#allocation0], 24
    %308 = vst [vmem:[%s307] sm:%s3] %v306
    %s309 = smul.addr 2, 2
    %s310 = scalar_lea.vmem %s0, %s309
    %v311 = vld [vmem:[%s310] sm:%s3]
    %s312 = scalar_lea.vmem [#allocation0], 16
    %313 = vst [vmem:[%s312] sm:%s3] %v311
    %s314 = scalar_lea.vmem %s0, 2
    %v315 = vld [vmem:[%s314] sm:%s3]
    %s316 = scalar_lea.vmem [#allocation0], 8
    %317 = vst [vmem:[%s316] sm:%s3] %v315
    %v318 = vld [vmem:[%s0] sm:%s3]
    %319 = vst [vmem:[#allocation0] sm:%s3] %v318
    %v320 = vld [vmem:[#allocation0] ss:$8 sm:$0xf]
    %v321 = vld [vmem:[#allocation0] ss:$8 sm:$0xf0]
    %vm322 = vcmask 1047556
    %v323 = vsel %vm322, %v321, %v320
    %vm324 = vcmask 523264
    %325 = vst.msk [vmem:[%s1] sm:$0xff] %vm324, %v323
    %s326 = scalar_lea.vmem [#allocation0], 64
    %v327 = vld [vmem:[%s326] ss:$8 sm:$0xf]
    %s328 = scalar_lea.vmem [#allocation0], 64
    %v329 = vld [vmem:[%s328] ss:$8 sm:$0xf0]
    %vm330 = vcmask 1047556
    %v331 = vsel %vm330, %v329, %v327
    %vm332 = vcmask 523264
    %s333 = scalar_lea.vmem %s1, 8
    %334 = vst.msk [vmem:[%s333] sm:$0xff] %vm332, %v331
    %s335 = scalar_lea.vmem [#allocation0], 128
    %v336 = vld [vmem:[%s335] ss:$8 sm:$0xf]
    %s337 = scalar_lea.vmem [#allocation0], 128
    %v338 = vld [vmem:[%s337] ss:$8 sm:$0xf0]
    %vm339 = vcmask 1047556
    %v340 = vsel %vm339, %v338, %v336
    %vm341 = vcmask 523264
    %s342 = scalar_lea.vmem %s1, 16
    %343 = vst.msk [vmem:[%s342] sm:$0xff] %vm341, %v340
    %s344 = scalar_lea.vmem [#allocation0], 192
    %v345 = vld [vmem:[%s344] ss:$8 sm:$0xf]
    %s346 = scalar_lea.vmem [#allocation0], 192
    %v347 = vld [vmem:[%s346] ss:$8 sm:$0xf0]
    %vm348 = vcmask 1047556
    %v349 = vsel %vm348, %v347, %v345
    %vm350 = vcmask 523264
    %s351 = scalar_lea.vmem %s1, 24
    %352 = vst.msk [vmem:[%s351] sm:$0xff] %vm350, %v349
    %s353 = scalar_lea.vmem [#allocation0], 256
    %v354 = vld [vmem:[%s353] ss:$8 sm:$0xf]
    %s355 = scalar_lea.vmem [#allocation0], 256
    %v356 = vld [vmem:[%s355] ss:$8 sm:$0xf0]
    %vm357 = vcmask 1047556
    %v358 = vsel %vm357, %v356, %v354
    %vm359 = vcmask 523264
    %s360 = scalar_lea.vmem %s1, 32
    %361 = vst.msk [vmem:[%s360] sm:$0xff] %vm359, %v358
    %s362 = scalar_lea.vmem [#allocation0], 320
    %v363 = vld [vmem:[%s362] ss:$8 sm:$0xf]
    %s364 = scalar_lea.vmem [#allocation0], 320
    %v365 = vld [vmem:[%s364] ss:$8 sm:$0xf0]
    %vm366 = vcmask 1047556
    %v367 = vsel %vm366, %v365, %v363
    %vm368 = vcmask 523264
    %s369 = scalar_lea.vmem %s1, 40
    %370 = vst.msk [vmem:[%s369] sm:$0xff] %vm368, %v367
    %s371 = scalar_lea.vmem [#allocation0], 384
    %v372 = vld [vmem:[%s371] ss:$8 sm:$0xf]
    %s373 = scalar_lea.vmem [#allocation0], 384
    %v374 = vld [vmem:[%s373] ss:$8 sm:$0xf0]
    %vm375 = vcmask 1047556
    %v376 = vsel %vm375, %v374, %v372
    %vm377 = vcmask 523264
    %s378 = scalar_lea.vmem %s1, 48
    %379 = vst.msk [vmem:[%s378] sm:$0xff] %vm377, %v376
    %s380 = scalar_lea.vmem [#allocation0], 448
    %v381 = vld [vmem:[%s380] ss:$8 sm:$0xf]
    %s382 = scalar_lea.vmem [#allocation0], 448
    %v383 = vld [vmem:[%s382] ss:$8 sm:$0xf0]
    %vm384 = vcmask 1047556
    %v385 = vsel %vm384, %v383, %v381
    %vm386 = vcmask 523264
    %s387 = scalar_lea.vmem %s1, 56
    %388 = vst.msk [vmem:[%s387] sm:$0xff] %vm386, %v385
    %s389 = scalar_lea.vmem [#allocation0], 1
    %v390 = vld [vmem:[%s389] ss:$8 sm:$0xf]
    %s391 = scalar_lea.vmem [#allocation0], 1
    %v392 = vld [vmem:[%s391] ss:$8 sm:$0xf0]
    %vm393 = vcmask 1047556
    %v394 = vsel %vm393, %v392, %v390
    %395 = vrot.lane.b32.xlu0 %v394, 64
    %v396 = vpop.permute.xlu0 %395
    %vm397 = vcmask 1048064
    %398 = vst.msk [vmem:[%s1] sm:$0xff] %vm397, %v396
    %s399 = scalar_lea.vmem [#allocation0], 257
    %v400 = vld [vmem:[%s399] ss:$8 sm:$0xf]
    %s401 = scalar_lea.vmem [#allocation0], 257
    %v402 = vld [vmem:[%s401] ss:$8 sm:$0xf0]
    %vm403 = vcmask 1047556
    %v404 = vsel %vm403, %v402, %v400
    %405 = vrot.lane.b32.xlu0 %v404, 64
    %v406 = vpop.permute.xlu0 %405
    %vm407 = vcmask 1048064
    %s408 = scalar_lea.vmem %s1, 32
    %409 = vst.msk [vmem:[%s408] sm:$0xff] %vm407, %v406
    %s410 = scalar_lea.vmem [#allocation0], 65
    %v411 = vld [vmem:[%s410] ss:$8 sm:$0xf]
    %s412 = scalar_lea.vmem [#allocation0], 65
    %v413 = vld [vmem:[%s412] ss:$8 sm:$0xf0]
    %vm414 = vcmask 1047556
    %v415 = vsel %vm414, %v413, %v411
    %416 = vrot.lane.b32.xlu0 %v415, 64
    %v417 = vpop.permute.xlu0 %416
    %vm418 = vcmask 1048064
    %s419 = scalar_lea.vmem %s1, 8
    %420 = vst.msk [vmem:[%s419] sm:$0xff] %vm418, %v417
    %s421 = scalar_lea.vmem [#allocation0], 321
    %v422 = vld [vmem:[%s421] ss:$8 sm:$0xf]
    %s423 = scalar_lea.vmem [#allocation0], 321
    %v424 = vld [vmem:[%s423] ss:$8 sm:$0xf0]
    %vm425 = vcmask 1047556
    %v426 = vsel %vm425, %v424, %v422
    %427 = vrot.lane.b32.xlu0 %v426, 64
    %v428 = vpop.permute.xlu0 %427
    %vm429 = vcmask 1048064
    %s430 = scalar_lea.vmem %s1, 40
    %431 = vst.msk [vmem:[%s430] sm:$0xff] %vm429, %v428
    %s432 = scalar_lea.vmem [#allocation0], 129
    %v433 = vld [vmem:[%s432] ss:$8 sm:$0xf]
    %s434 = scalar_lea.vmem [#allocation0], 129
    %v435 = vld [vmem:[%s434] ss:$8 sm:$0xf0]
    %vm436 = vcmask 1047556
    %v437 = vsel %vm436, %v435, %v433
    %438 = vrot.lane.b32.xlu0 %v437, 64
    %v439 = vpop.permute.xlu0 %438
    %vm440 = vcmask 1048064
    %s441 = scalar_lea.vmem %s1, 16
    %442 = vst.msk [vmem:[%s441] sm:$0xff] %vm440, %v439
    %s443 = scalar_lea.vmem [#allocation0], 385
    %v444 = vld [vmem:[%s443] ss:$8 sm:$0xf]
    %s445 = scalar_lea.vmem [#allocation0], 385
    %v446 = vld [vmem:[%s445] ss:$8 sm:$0xf0]
    %vm447 = vcmask 1047556
    %v448 = vsel %vm447, %v446, %v444
    %449 = vrot.lane.b32.xlu0 %v448, 64
    %v450 = vpop.permute.xlu0 %449
    %vm451 = vcmask 1048064
    %s452 = scalar_lea.vmem %s1, 48
    %453 = vst.msk [vmem:[%s452] sm:$0xff] %vm451, %v450
    %s454 = scalar_lea.vmem [#allocation0], 193
    %v455 = vld [vmem:[%s454] ss:$8 sm:$0xf]
    %s456 = scalar_lea.vmem [#allocation0], 193
    %v457 = vld [vmem:[%s456] ss:$8 sm:$0xf0]
    %vm458 = vcmask 1047556
    %v459 = vsel %vm458, %v457, %v455
    %460 = vrot.lane.b32.xlu0 %v459, 64
    %v461 = vpop.permute.xlu0 %460
    %vm462 = vcmask 1048064
    %s463 = scalar_lea.vmem %s1, 24
    %464 = vst.msk [vmem:[%s463] sm:$0xff] %vm462, %v461
    %s465 = scalar_lea.vmem [#allocation0], 449
    %v466 = vld [vmem:[%s465] ss:$8 sm:$0xf]
    %s467 = scalar_lea.vmem [#allocation0], 449
    %v468 = vld [vmem:[%s467] ss:$8 sm:$0xf0]
    %vm469 = vcmask 1047556
    %v470 = vsel %vm469, %v468, %v466
    %471 = vrot.lane.b32.xlu0 %v470, 64
    %v472 = vpop.permute.xlu0 %471
    %vm473 = vcmask 1048064
    %s474 = scalar_lea.vmem %s1, 56
    %475 = vst.msk [vmem:[%s474] sm:$0xff] %vm473, %v472

// kernel: _convmixer_block_impl.1
$region0: #{_convmixer_block_impl.1}
  #allocation0 [shape = 'u32[]', space=smem, size = 0x4, offset = 0x4, fixed_abs, tag = 'smem constant byte address 0x4 - core index']
  #allocation1 [shape = 'u32[144,128]{1,0:T(1,128)}', space=vmem, size = 0x12000, scoped, tag = 'internal scratch']
  #allocation2 [shape = 'bf16[256,128]{1,0:T(16,128)(2,1)}', space=vmem, size = 0x10000, scoped, tag = 'scratch operand']
  %s0 = inlined_call_operand.vmem [shape: f32[1,23,24,128], index: 0, kind: input, shape index: {}]
  %s1 = inlined_call_operand.vmem [shape: f32[8,8,128], index: 1, kind: input, shape index: {}]
  %s2 = inlined_call_operand.vmem [shape: f32[8,128], index: 2, kind: input, shape index: {}]
  %s3 = inlined_call_operand.vmem [shape: bf16[128,128], index: 3, kind: input, shape index: {}]
  %s4 = inlined_call_operand.vmem [shape: f32[1,16,16,128], index: 4, kind: output, shape index: {}]
  %s5 = sld [smem:[#allocation0]]
  $region26: #{_convmixer_block_impl.1} parent=0
    _
  %s7 = ssub.s32 1, %s5
  %s8 = scalar_select 0, %s7, %s5
  // Predicated region
  $region2: #{_convmixer_block_impl.1} parent=0 // pred_check
    _
  $region3: #{_convmixer_block_impl.1} parent=0 // pred_check_branch
    %10 = sbr.rel (0) target = $region5
  $region4: #{_convmixer_block_impl.1} parent=0 // pred_region
    _
  $region5: #{_convmixer_block_impl.1} parent=0 // pred_fallthru
    _
  // Predicated region
  $region6: #{_convmixer_block_impl.1} parent=0 // pred_check
    _
  $region7: #{_convmixer_block_impl.1} parent=0 // pred_check_branch
    %12 = sbr.rel (0) target = $region9
  $region8: #{_convmixer_block_impl.1} parent=0 // pred_region
    _
  $region9: #{_convmixer_block_impl.1} parent=0 // pred_fallthru
    _
  // Predicated region
  $region10: #{_convmixer_block_impl.1} parent=0 // pred_check
    _
  $region11: #{_convmixer_block_impl.1} parent=0 // pred_check_branch
    %14 = sbr.rel (0) target = $region13
  $region12: #{_convmixer_block_impl.1} parent=0 // pred_region
    _
  $region13: #{_convmixer_block_impl.1} parent=0 // pred_fallthru
    _
  // Predicated region
  $region14: #{_convmixer_block_impl.1} parent=0 // pred_check
    _
  $region15: #{_convmixer_block_impl.1} parent=0 // pred_check_branch
    %16 = sbr.rel (0) target = $region17
  $region16: #{_convmixer_block_impl.1} parent=0 // pred_region
    _
  $region17: #{_convmixer_block_impl.1} parent=0 // pred_fallthru
    _
  %s18 = smul.u32 0, 16
  %v19 = vld [vmem:[%s2] sm:$0x1]
  %v20 = vld [vmem:[%s2 + $0x1] sm:$0x1]
  %v21 = vld [vmem:[%s2 + $0x2] sm:$0x1]
  %v22 = vld [vmem:[%s2 + $0x3] sm:$0x1]
  %v23 = vld [vmem:[%s2 + $0x4] sm:$0x1]
  %v24 = vld [vmem:[%s2 + $0x5] sm:$0x1]
  %s25 = smul.u32 %s18, 24
  %s26 = scalar_lea.vmem %s0, %s25
  %v27 = vld [vmem:[%s26] sm:$0xff]
  %v28 = vld [vmem:[%s26 + $0x8] sm:$0xff]
  %v29 = vld [vmem:[%s26 + $0x18] sm:$0xff]
  %v30 = vld [vmem:[%s26 + $0x20] sm:$0xff]
  %v31 = vld [vmem:[%s26 + $0x30] sm:$0xff]
  %v32 = vld [vmem:[%s26 + $0x38] sm:$0xff]
  %v33 = vld [vmem:[%s26 + $0x48] sm:$0xff]
  %v34 = vld [vmem:[%s26 + $0x50] sm:$0xff]
  %v35 = vld [vmem:[%s26 + $0x60] sm:$0xff]
  %v36 = vld [vmem:[%s26 + $0x68] sm:$0xff]
  %v37 = vld [vmem:[%s26 + $0x78] sm:$0xff]
  %v38 = vld [vmem:[%s26 + $0x80] sm:$0xff]
  %v39 = vld [vmem:[%s26 + $0x90] sm:$0xff]
  %v40 = vld [vmem:[%s26 + $0x98] sm:$0xff]
  %v41 = vld [vmem:[%s26 + $0xa8] sm:$0xff]
  %v42 = vld [vmem:[%s26 + $0xb0] sm:$0xff]
  %v43 = vld [vmem:[%s26 + $0xc0] sm:$0xff]
  %v44 = vld [vmem:[%s26 + $0xc8] sm:$0xff]
  %v45 = vld [vmem:[%s26 + $0xd8] sm:$0xff]
  %v46 = vld [vmem:[%s26 + $0xe0] sm:$0xff]
  %v47 = vld [vmem:[%s26 + $0xf0] sm:$0xff]
  %v48 = vld [vmem:[%s26 + $0xf8] sm:$0xff]
  %v49 = vld [vmem:[%s26 + $0x108] sm:$0xff]
  %v50 = vld [vmem:[%s26 + $0x110] sm:$0xff]
  %v51 = vld [vmem:[%s26 + $0x120] sm:$0xff]
  %v52 = vld [vmem:[%s26 + $0x128] sm:$0xff]
  %v53 = vld [vmem:[%s26 + $0x138] sm:$0xff]
  %v54 = vld [vmem:[%s26 + $0x140] sm:$0xff]
  %v55 = vld [vmem:[%s26 + $0x150] sm:$0xff]
  %v56 = vld [vmem:[%s26 + $0x158] sm:$0xff]
  %v57 = vld [vmem:[%s1] sm:$0x1]
  %v58 = vlaneseq
  %v59 = vshrl.u32 %v58, 7
  %v60 = vsub.s32 0, %v59
  %v61 = vrot.slane %v57, %v60
  %v62 = vmul.f32 %v27, %v61
  %v63 = vmul.f32 %v28, %v61
  %v64 = vmul.f32 %v29, %v61
  %v65 = vmul.f32 %v30, %v61
  %v66 = vmul.f32 %v31, %v61
  %v67 = vmul.f32 %v32, %v61
  %v68 = vmul.f32 %v33, %v61
  %v69 = vmul.f32 %v34, %v61
  %v70 = vmul.f32 %v35, %v61
  %v71 = vmul.f32 %v36, %v61
  %v72 = vmul.f32 %v37, %v61
  %v73 = vmul.f32 %v38, %v61
  %v74 = vmul.f32 %v39, %v61
  %v75 = vmul.f32 %v40, %v61
  %v76 = vmul.f32 %v41, %v61
  %v77 = vmul.f32 %v42, %v61
  %v78 = vadd.f32 %v62, 0.0
  %v79 = vadd.f32 %v63, 0.0
  %v80 = vadd.f32 %v64, 0.0
  %v81 = vadd.f32 %v65, 0.0
  %v82 = vadd.f32 %v66, 0.0
  %v83 = vadd.f32 %v67, 0.0
  %v84 = vadd.f32 %v68, 0.0
  %v85 = vadd.f32 %v69, 0.0
  %v86 = vadd.f32 %v70, 0.0
  %v87 = vadd.f32 %v71, 0.0
  %v88 = vadd.f32 %v72, 0.0
  %v89 = vadd.f32 %v73, 0.0
  %v90 = vadd.f32 %v74, 0.0
  %v91 = vadd.f32 %v75, 0.0
  %v92 = vadd.f32 %v76, 0.0
  %v93 = vadd.f32 %v77, 0.0
  %v94 = vld [vmem:[%s1 + $0x1] sm:$0x1]
  %v95 = vlaneseq
  %v96 = vshrl.u32 %v95, 7
  %v97 = vsub.s32 0, %v96
  %v98 = vrot.slane %v94, %v97
  %v99 = vmul.f32 %v29, %v98
  %v100 = vmul.f32 %v30, %v98
  %v101 = vmul.f32 %v31, %v98
  %v102 = vmul.f32 %v32, %v98
  %v103 = vmul.f32 %v33, %v98
  %v104 = vmul.f32 %v34, %v98
  %v105 = vmul.f32 %v35, %v98
  %v106 = vmul.f32 %v36, %v98
  %v107 = vmul.f32 %v37, %v98
  %v108 = vmul.f32 %v38, %v98
  %v109 = vmul.f32 %v39, %v98
  %v110 = vmul.f32 %v40, %v98
  %v111 = vmul.f32 %v41, %v98
  %v112 = vmul.f32 %v42, %v98
  %v113 = vmul.f32 %v43, %v98
  %v114 = vmul.f32 %v44, %v98
  %v115 = vadd.f32 %v78, %v99
  %v116 = vadd.f32 %v79, %v100
  %v117 = vadd.f32 %v80, %v101
  %v118 = vadd.f32 %v81, %v102
  %v119 = vadd.f32 %v82, %v103
  %v120 = vadd.f32 %v83, %v104
  %v121 = vadd.f32 %v84, %v105
  %v122 = vadd.f32 %v85, %v106
  %v123 = vadd.f32 %v86, %v107
  %v124 = vadd.f32 %v87, %v108
  %v125 = vadd.f32 %v88, %v109
  %v126 = vadd.f32 %v89, %v110
  %v127 = vadd.f32 %v90, %v111
  %v128 = vadd.f32 %v91, %v112
  %v129 = vadd.f32 %v92, %v113
  %v130 = vadd.f32 %v93, %v114
  %v131 = vld [vmem:[%s1 + $0x2] sm:$0x1]
  %v132 = vlaneseq
  %v133 = vshrl.u32 %v132, 7
  %v134 = vsub.s32 0, %v133
  %v135 = vrot.slane %v131, %v134
  %v136 = vmul.f32 %v31, %v135
  %v137 = vmul.f32 %v32, %v135
  %v138 = vmul.f32 %v33, %v135
  %v139 = vmul.f32 %v34, %v135
  %v140 = vmul.f32 %v35, %v135
  %v141 = vmul.f32 %v36, %v135
  %v142 = vmul.f32 %v37, %v135
  %v143 = vmul.f32 %v38, %v135
  %v144 = vmul.f32 %v39, %v135
  %v145 = vmul.f32 %v40, %v135
  %v146 = vmul.f32 %v41, %v135
  %v147 = vmul.f32 %v42, %v135
  %v148 = vmul.f32 %v43, %v135
  %v149 = vmul.f32 %v44, %v135
  %v150 = vmul.f32 %v45, %v135
  %v151 = vmul.f32 %v46, %v135
  %v152 = vadd.f32 %v115, %v136
  %v153 = vadd.f32 %v116, %v137
  %v154 = vadd.f32 %v117, %v138
  %v155 = vadd.f32 %v118, %v139
  %v156 = vadd.f32 %v119, %v140
  %v157 = vadd.f32 %v120, %v141
  %v158 = vadd.f32 %v121, %v142
  %v159 = vadd.f32 %v122, %v143
  %v160 = vadd.f32 %v123, %v144
  %v161 = vadd.f32 %v124, %v145
  %v162 = vadd.f32 %v125, %v146
  %v163 = vadd.f32 %v126, %v147
  %v164 = vadd.f32 %v127, %v148
  %v165 = vadd.f32 %v128, %v149
  %v166 = vadd.f32 %v129, %v150
  %v167 = vadd.f32 %v130, %v151
  %v168 = vld [vmem:[%s1 + $0x3] sm:$0x1]
  %v169 = vlaneseq
  %v170 = vshrl.u32 %v169, 7
  %v171 = vsub.s32 0, %v170
  %v172 = vrot.slane %v168, %v171
  %v173 = vmul.f32 %v33, %v172
  %v174 = vmul.f32 %v34, %v172
  %v175 = vmul.f32 %v35, %v172
  %v176 = vmul.f32 %v36, %v172
  %v177 = vmul.f32 %v37, %v172
  %v178 = vmul.f32 %v38, %v172
  %v179 = vmul.f32 %v39, %v172
  %v180 = vmul.f32 %v40, %v172
  %v181 = vmul.f32 %v41, %v172
  %v182 = vmul.f32 %v42, %v172
  %v183 = vmul.f32 %v43, %v172
  %v184 = vmul.f32 %v44, %v172
  %v185 = vmul.f32 %v45, %v172
  %v186 = vmul.f32 %v46, %v172
  %v187 = vmul.f32 %v47, %v172
  %v188 = vmul.f32 %v48, %v172
  %v189 = vadd.f32 %v152, %v173
  %v190 = vadd.f32 %v153, %v174
  %v191 = vadd.f32 %v154, %v175
  %v192 = vadd.f32 %v155, %v176
  %v193 = vadd.f32 %v156, %v177
  %v194 = vadd.f32 %v157, %v178
  %v195 = vadd.f32 %v158, %v179
  %v196 = vadd.f32 %v159, %v180
  %v197 = vadd.f32 %v160, %v181
  %v198 = vadd.f32 %v161, %v182
  %v199 = vadd.f32 %v162, %v183
  %v200 = vadd.f32 %v163, %v184
  %v201 = vadd.f32 %v164, %v185
  %v202 = vadd.f32 %v165, %v186
  %v203 = vadd.f32 %v166, %v187
  %v204 = vadd.f32 %v167, %v188
  %v205 = vld [vmem:[%s1 + $0x4] sm:$0x1]
  %v206 = vlaneseq
  %v207 = vshrl.u32 %v206, 7
  %v208 = vsub.s32 0, %v207
  %v209 = vrot.slane %v205, %v208
  %v210 = vmul.f32 %v35, %v209
  %v211 = vmul.f32 %v36, %v209
  %v212 = vmul.f32 %v37, %v209
  %v213 = vmul.f32 %v38, %v209
  %v214 = vmul.f32 %v39, %v209
  %v215 = vmul.f32 %v40, %v209
  %v216 = vmul.f32 %v41, %v209
  %v217 = vmul.f32 %v42, %v209
  %v218 = vmul.f32 %v43, %v209
  %v219 = vmul.f32 %v44, %v209
  %v220 = vmul.f32 %v45, %v209
  %v221 = vmul.f32 %v46, %v209
  %v222 = vmul.f32 %v47, %v209
  %v223 = vmul.f32 %v48, %v209
  %v224 = vmul.f32 %v49, %v209
  %v225 = vmul.f32 %v50, %v209
  %v226 = vadd.f32 %v189, %v210
  %v227 = vadd.f32 %v190, %v211
  %v228 = vadd.f32 %v191, %v212
  %v229 = vadd.f32 %v192, %v213
  %v230 = vadd.f32 %v193, %v214
  %v231 = vadd.f32 %v194, %v215
  %v232 = vadd.f32 %v195, %v216
  %v233 = vadd.f32 %v196, %v217
  %v234 = vadd.f32 %v197, %v218
  %v235 = vadd.f32 %v198, %v219
  %v236 = vadd.f32 %v199, %v220
  %v237 = vadd.f32 %v200, %v221
  %v238 = vadd.f32 %v201, %v222
  %v239 = vadd.f32 %v202, %v223
  %v240 = vadd.f32 %v203, %v224
  %v241 = vadd.f32 %v204, %v225
  %v242 = vld [vmem:[%s1 + $0x5] sm:$0x1]
  %v243 = vlaneseq
  %v244 = vshrl.u32 %v243, 7
  %v245 = vsub.s32 0, %v244
  %v246 = vrot.slane %v242, %v245
  %v247 = vmul.f32 %v37, %v246
  %v248 = vmul.f32 %v38, %v246
  %v249 = vmul.f32 %v39, %v246
  %v250 = vmul.f32 %v40, %v246
  %v251 = vmul.f32 %v41, %v246
  %v252 = vmul.f32 %v42, %v246
  %v253 = vmul.f32 %v43, %v246
  %v254 = vmul.f32 %v44, %v246
  %v255 = vmul.f32 %v45, %v246
  %v256 = vmul.f32 %v46, %v246
  %v257 = vmul.f32 %v47, %v246
  %v258 = vmul.f32 %v48, %v246
  %v259 = vmul.f32 %v49, %v246
  %v260 = vmul.f32 %v50, %v246
  %v261 = vmul.f32 %v51, %v246
  %v262 = vmul.f32 %v52, %v246
  %v263 = vadd.f32 %v226, %v247
  %v264 = vadd.f32 %v227, %v248
  %v265 = vadd.f32 %v228, %v249
  %v266 = vadd.f32 %v229, %v250
  %v267 = vadd.f32 %v230, %v251
  %v268 = vadd.f32 %v231, %v252
  %v269 = vadd.f32 %v232, %v253
  %v270 = vadd.f32 %v233, %v254
  %v271 = vadd.f32 %v234, %v255
  %v272 = vadd.f32 %v235, %v256
  %v273 = vadd.f32 %v236, %v257
  %v274 = vadd.f32 %v237, %v258
  %v275 = vadd.f32 %v238, %v259
  %v276 = vadd.f32 %v239, %v260
  %v277 = vadd.f32 %v240, %v261
  %v278 = vadd.f32 %v241, %v262
  %v279 = vld [vmem:[%s1 + $0x6] sm:$0x1]
  %v280 = vlaneseq
  %v281 = vshrl.u32 %v280, 7
  %v282 = vsub.s32 0, %v281
  %v283 = vrot.slane %v279, %v282
  %v284 = vmul.f32 %v39, %v283
  %v285 = vmul.f32 %v40, %v283
  %v286 = vmul.f32 %v41, %v283
  %v287 = vmul.f32 %v42, %v283
  %v288 = vmul.f32 %v43, %v283
  %v289 = vmul.f32 %v44, %v283
  %v290 = vmul.f32 %v45, %v283
  %v291 = vmul.f32 %v46, %v283
  %v292 = vmul.f32 %v47, %v283
  %v293 = vmul.f32 %v48, %v283
  %v294 = vmul.f32 %v49, %v283
  %v295 = vmul.f32 %v50, %v283
  %v296 = vmul.f32 %v51, %v283
  %v297 = vmul.f32 %v52, %v283
  %v298 = vmul.f32 %v53, %v283
  %v299 = vmul.f32 %v54, %v283
  %v300 = vadd.f32 %v263, %v284
  %v301 = vadd.f32 %v264, %v285
  %v302 = vadd.f32 %v265, %v286
  %v303 = vadd.f32 %v266, %v287
  %v304 = vadd.f32 %v267, %v288
  %v305 = vadd.f32 %v268, %v289
  %v306 = vadd.f32 %v269, %v290
  %v307 = vadd.f32 %v270, %v291
  %v308 = vadd.f32 %v271, %v292
  %v309 = vadd.f32 %v272, %v293
  %v310 = vadd.f32 %v273, %v294
  %v311 = vadd.f32 %v274, %v295
  %v312 = vadd.f32 %v275, %v296
  %v313 = vadd.f32 %v276, %v297
  %v314 = vadd.f32 %v277, %v298
  %v315 = vadd.f32 %v278, %v299
  %v316 = vld [vmem:[%s1 + $0x7] sm:$0x1]
  %v317 = vlaneseq
  %v318 = vshrl.u32 %v317, 7
  %v319 = vsub.s32 0, %v318
  %v320 = vrot.slane %v316, %v319
  %v321 = vmul.f32 %v41, %v320
  %v322 = vmul.f32 %v42, %v320
  %v323 = vmul.f32 %v43, %v320
  %v324 = vmul.f32 %v44, %v320
  %v325 = vmul.f32 %v45, %v320
  %v326 = vmul.f32 %v46, %v320
  %v327 = vmul.f32 %v47, %v320
  %v328 = vmul.f32 %v48, %v320
  %v329 = vmul.f32 %v49, %v320
  %v330 = vmul.f32 %v50, %v320
  %v331 = vmul.f32 %v51, %v320
  %v332 = vmul.f32 %v52, %v320
  %v333 = vmul.f32 %v53, %v320
  %v334 = vmul.f32 %v54, %v320
  %v335 = vmul.f32 %v55, %v320
  %v336 = vmul.f32 %v56, %v320
  %v337 = vadd.f32 %v300, %v321
  %v338 = vadd.f32 %v301, %v322
  %v339 = vadd.f32 %v302, %v323
  %v340 = vadd.f32 %v303, %v324
  %v341 = vadd.f32 %v304, %v325
  %v342 = vadd.f32 %v305, %v326
  %v343 = vadd.f32 %v306, %v327
  %v344 = vadd.f32 %v307, %v328
  %v345 = vadd.f32 %v308, %v329
  %v346 = vadd.f32 %v309, %v330
  %v347 = vadd.f32 %v310, %v331
  %v348 = vadd.f32 %v311, %v332
  %v349 = vadd.f32 %v312, %v333
  %v350 = vadd.f32 %v313, %v334
  %v351 = vadd.f32 %v314, %v335
  %v352 = vadd.f32 %v315, %v336
  %v353 = vld [vmem:[%s26 + $0x1] sm:$0xff]
  %v354 = vld [vmem:[%s26 + $0x9] sm:$0xff]
  %v355 = vld [vmem:[%s26 + $0x19] sm:$0xff]
  %v356 = vld [vmem:[%s26 + $0x21] sm:$0xff]
  %v357 = vld [vmem:[%s26 + $0x31] sm:$0xff]
  %v358 = vld [vmem:[%s26 + $0x39] sm:$0xff]
  %v359 = vld [vmem:[%s26 + $0x49] sm:$0xff]
  %v360 = vld [vmem:[%s26 + $0x51] sm:$0xff]
  %v361 = vld [vmem:[%s26 + $0x61] sm:$0xff]
  %v362 = vld [vmem:[%s26 + $0x69] sm:$0xff]
  %v363 = vld [vmem:[%s26 + $0x79] sm:$0xff]
  %v364 = vld [vmem:[%s26 + $0x81] sm:$0xff]
  %v365 = vld [vmem:[%s26 + $0x91] sm:$0xff]
  %v366 = vld [vmem:[%s26 + $0x99] sm:$0xff]
  %v367 = vld [vmem:[%s26 + $0xa9] sm:$0xff]
  %v368 = vld [vmem:[%s26 + $0xb1] sm:$0xff]
  %v369 = vld [vmem:[%s26 + $0xc1] sm:$0xff]
  %v370 = vld [vmem:[%s26 + $0xc9] sm:$0xff]
  %v371 = vld [vmem:[%s26 + $0xd9] sm:$0xff]
  %v372 = vld [vmem:[%s26 + $0xe1] sm:$0xff]
  %v373 = vld [vmem:[%s26 + $0xf1] sm:$0xff]
  %v374 = vld [vmem:[%s26 + $0xf9] sm:$0xff]
  %v375 = vld [vmem:[%s26 + $0x109] sm:$0xff]
  %v376 = vld [vmem:[%s26 + $0x111] sm:$0xff]
  %v377 = vld [vmem:[%s26 + $0x121] sm:$0xff]
  %v378 = vld [vmem:[%s26 + $0x129] sm:$0xff]
  %v379 = vld [vmem:[%s26 + $0x139] sm:$0xff]
  %v380 = vld [vmem:[%s26 + $0x141] sm:$0xff]
  %v381 = vld [vmem:[%s26 + $0x151] sm:$0xff]
  %v382 = vld [vmem:[%s26 + $0x159] sm:$0xff]
  %s383 = scalar_lea.vmem %s1, 8
  %v384 = vld [vmem:[%s383] sm:$0x1]
  %v385 = vlaneseq
  %v386 = vshrl.u32 %v385, 7
  %v387 = vsub.s32 0, %v386
  %v388 = vrot.slane %v384, %v387
  %v389 = vmul.f32 %v353, %v388
  %v390 = vmul.f32 %v354, %v388
  %v391 = vmul.f32 %v355, %v388
  %v392 = vmul.f32 %v356, %v388
  %v393 = vmul.f32 %v357, %v388
  %v394 = vmul.f32 %v358, %v388
  %v395 = vmul.f32 %v359, %v388
  %v396 = vmul.f32 %v360, %v388
  %v397 = vmul.f32 %v361, %v388
  %v398 = vmul.f32 %v362, %v388
  %v399 = vmul.f32 %v363, %v388
  %v400 = vmul.f32 %v364, %v388
  %v401 = vmul.f32 %v365, %v388
  %v402 = vmul.f32 %v366, %v388
  %v403 = vmul.f32 %v367, %v388
  %v404 = vmul.f32 %v368, %v388
  %v405 = vadd.f32 %v337, %v389
  %v406 = vadd.f32 %v338, %v390
  %v407 = vadd.f32 %v339, %v391
  %v408 = vadd.f32 %v340, %v392
  %v409 = vadd.f32 %v341, %v393
  %v410 = vadd.f32 %v342, %v394
  %v411 = vadd.f32 %v343, %v395
  %v412 = vadd.f32 %v344, %v396
  %v413 = vadd.f32 %v345, %v397
  %v414 = vadd.f32 %v346, %v398
  %v415 = vadd.f32 %v347, %v399
  %v416 = vadd.f32 %v348, %v400
  %v417 = vadd.f32 %v349, %v401
  %v418 = vadd.f32 %v350, %v402
  %v419 = vadd.f32 %v351, %v403
  %v420 = vadd.f32 %v352, %v404
  %v421 = vld [vmem:[%s383 + $0x1] sm:$0x1]
  %v422 = vlaneseq
  %v423 = vshrl.u32 %v422, 7
  %v424 = vsub.s32 0, %v423
  %v425 = vrot.slane %v421, %v424
  %v426 = vmul.f32 %v355, %v425
  %v427 = vmul.f32 %v356, %v425
  %v428 = vmul.f32 %v357, %v425
  %v429 = vmul.f32 %v358, %v425
  %v430 = vmul.f32 %v359, %v425
  %v431 = vmul.f32 %v360, %v425
  %v432 = vmul.f32 %v361, %v425
  %v433 = vmul.f32 %v362, %v425
  %v434 = vmul.f32 %v363, %v425
  %v435 = vmul.f32 %v364, %v425
  %v436 = vmul.f32 %v365, %v425
  %v437 = vmul.f32 %v366, %v425
  %v438 = vmul.f32 %v367, %v425
  %v439 = vmul.f32 %v368, %v425
  %v440 = vmul.f32 %v369, %v425
  %v441 = vmul.f32 %v370, %v425
  %v442 = vadd.f32 %v405, %v426
  %v443 = vadd.f32 %v406, %v427
  %v444 = vadd.f32 %v407, %v428
  %v445 = vadd.f32 %v408, %v429
  %v446 = vadd.f32 %v409, %v430
  %v447 = vadd.f32 %v410, %v431
  %v448 = vadd.f32 %v411, %v432
  %v449 = vadd.f32 %v412, %v433
  %v450 = vadd.f32 %v413, %v434
  %v451 = vadd.f32 %v414, %v435
  %v452 = vadd.f32 %v415, %v436
  %v453 = vadd.f32 %v416, %v437
  %v454 = vadd.f32 %v417, %v438
  %v455 = vadd.f32 %v418, %v439
  %v456 = vadd.f32 %v419, %v440
  %v457 = vadd.f32 %v420, %v441
  %v458 = vld [vmem:[%s383 + $0x2] sm:$0x1]
  %v459 = vlaneseq
  %v460 = vshrl.u32 %v459, 7
  %v461 = vsub.s32 0, %v460
  %v462 = vrot.slane %v458, %v461
  %v463 = vmul.f32 %v357, %v462
  %v464 = vmul.f32 %v358, %v462
  %v465 = vmul.f32 %v359, %v462
  %v466 = vmul.f32 %v360, %v462
  %v467 = vmul.f32 %v361, %v462
  %v468 = vmul.f32 %v362, %v462
  %v469 = vmul.f32 %v363, %v462
  %v470 = vmul.f32 %v364, %v462
  %v471 = vmul.f32 %v365, %v462
  %v472 = vmul.f32 %v366, %v462
  %v473 = vmul.f32 %v367, %v462
  %v474 = vmul.f32 %v368, %v462
  %v475 = vmul.f32 %v369, %v462
  %v476 = vmul.f32 %v370, %v462
  %v477 = vmul.f32 %v371, %v462
  %v478 = vmul.f32 %v372, %v462
  %v479 = vadd.f32 %v442, %v463
  %v480 = vadd.f32 %v443, %v464
  %v481 = vadd.f32 %v444, %v465
  %v482 = vadd.f32 %v445, %v466
  %v483 = vadd.f32 %v446, %v467
  %v484 = vadd.f32 %v447, %v468
  %v485 = vadd.f32 %v448, %v469
  %v486 = vadd.f32 %v449, %v470
  %v487 = vadd.f32 %v450, %v471
  %v488 = vadd.f32 %v451, %v472
  %v489 = vadd.f32 %v452, %v473
  %v490 = vadd.f32 %v453, %v474
  %v491 = vadd.f32 %v454, %v475
  %v492 = vadd.f32 %v455, %v476
  %v493 = vadd.f32 %v456, %v477
  %v494 = vadd.f32 %v457, %v478
  %v495 = vld [vmem:[%s383 + $0x3] sm:$0x1]
  %v496 = vlaneseq
  %v497 = vshrl.u32 %v496, 7
  %v498 = vsub.s32 0, %v497
  %v499 = vrot.slane %v495, %v498
  %v500 = vmul.f32 %v359, %v499
  %v501 = vmul.f32 %v360, %v499
  %v502 = vmul.f32 %v361, %v499
  %v503 = vmul.f32 %v362, %v499
  %v504 = vmul.f32 %v363, %v499
  %v505 = vmul.f32 %v364, %v499
  %v506 = vmul.f32 %v365, %v499
  %v507 = vmul.f32 %v366, %v499
  %v508 = vmul.f32 %v367, %v499
  %v509 = vmul.f32 %v368, %v499
  %v510 = vmul.f32 %v369, %v499
  %v511 = vmul.f32 %v370, %v499
  %v512 = vmul.f32 %v371, %v499
  %v513 = vmul.f32 %v372, %v499
  %v514 = vmul.f32 %v373, %v499
  %v515 = vmul.f32 %v374, %v499
  %v516 = vadd.f32 %v479, %v500
  %v517 = vadd.f32 %v480, %v501
  %v518 = vadd.f32 %v481, %v502
  %v519 = vadd.f32 %v482, %v503
  %v520 = vadd.f32 %v483, %v504
  %v521 = vadd.f32 %v484, %v505
  %v522 = vadd.f32 %v485, %v506
  %v523 = vadd.f32 %v486, %v507
  %v524 = vadd.f32 %v487, %v508
  %v525 = vadd.f32 %v488, %v509
  %v526 = vadd.f32 %v489, %v510
  %v527 = vadd.f32 %v490, %v511
  %v528 = vadd.f32 %v491, %v512
  %v529 = vadd.f32 %v492, %v513
  %v530 = vadd.f32 %v493, %v514
  %v531 = vadd.f32 %v494, %v515
  %v532 = vld [vmem:[%s383 + $0x4] sm:$0x1]
  %v533 = vlaneseq
  %v534 = vshrl.u32 %v533, 7
  %v535 = vsub.s32 0, %v534
  %v536 = vrot.slane %v532, %v535
  %v537 = vmul.f32 %v361, %v536
  %v538 = vmul.f32 %v362, %v536
  %v539 = vmul.f32 %v363, %v536
  %v540 = vmul.f32 %v364, %v536
  %v541 = vmul.f32 %v365, %v536
  %v542 = vmul.f32 %v366, %v536
  %v543 = vmul.f32 %v367, %v536
  %v544 = vmul.f32 %v368, %v536
  %v545 = vmul.f32 %v369, %v536
  %v546 = vmul.f32 %v370, %v536
  %v547 = vmul.f32 %v371, %v536
  %v548 = vmul.f32 %v372, %v536
  %v549 = vmul.f32 %v373, %v536
  %v550 = vmul.f32 %v374, %v536
  %v551 = vmul.f32 %v375, %v536
  %v552 = vmul.f32 %v376, %v536
  %v553 = vadd.f32 %v516, %v537
  %v554 = vadd.f32 %v517, %v538
  %v555 = vadd.f32 %v518, %v539
  %v556 = vadd.f32 %v519, %v540
  %v557 = vadd.f32 %v520, %v541
  %v558 = vadd.f32 %v521, %v542
  %v559 = vadd.f32 %v522, %v543
  %v560 = vadd.f32 %v523, %v544
  %v561 = vadd.f32 %v524, %v545
  %v562 = vadd.f32 %v525, %v546
  %v563 = vadd.f32 %v526, %v547
  %v564 = vadd.f32 %v527, %v548
  %v565 = vadd.f32 %v528, %v549
  %v566 = vadd.f32 %v529, %v550
  %v567 = vadd.f32 %v530, %v551
  %v568 = vadd.f32 %v531, %v552
  %v569 = vld [vmem:[%s383 + $0x5] sm:$0x1]
  %v570 = vlaneseq
  %v571 = vshrl.u32 %v570, 7
  %v572 = vsub.s32 0, %v571
  %v573 = vrot.slane %v569, %v572
  %v574 = vmul.f32 %v363, %v573
  %v575 = vmul.f32 %v364, %v573
  %v576 = vmul.f32 %v365, %v573
  %v577 = vmul.f32 %v366, %v573
  %v578 = vmul.f32 %v367, %v573
  %v579 = vmul.f32 %v368, %v573
  %v580 = vmul.f32 %v369, %v573
  %v581 = vmul.f32 %v370, %v573
  %v582 = vmul.f32 %v371, %v573
  %v583 = vmul.f32 %v372, %v573
  %v584 = vmul.f32 %v373, %v573
  %v585 = vmul.f32 %v374, %v573
  %v586 = vmul.f32 %v375, %v573
  %v587 = vmul.f32 %v376, %v573
  %v588 = vmul.f32 %v377, %v573
  %v589 = vmul.f32 %v378, %v573
  %v590 = vadd.f32 %v553, %v574
  %v591 = vadd.f32 %v554, %v575
  %v592 = vadd.f32 %v555, %v576
  %v593 = vadd.f32 %v556, %v577
  %v594 = vadd.f32 %v557, %v578
  %v595 = vadd.f32 %v558, %v579
  %v596 = vadd.f32 %v559, %v580
  %v597 = vadd.f32 %v560, %v581
  %v598 = vadd.f32 %v561, %v582
  %v599 = vadd.f32 %v562, %v583
  %v600 = vadd.f32 %v563, %v584
  %v601 = vadd.f32 %v564, %v585
  %v602 = vadd.f32 %v565, %v586
  %v603 = vadd.f32 %v566, %v587
  %v604 = vadd.f32 %v567, %v588
  %v605 = vadd.f32 %v568, %v589
  %v606 = vld [vmem:[%s383 + $0x6] sm:$0x1]
  %v607 = vlaneseq
  %v608 = vshrl.u32 %v607, 7
  %v609 = vsub.s32 0, %v608
  %v610 = vrot.slane %v606, %v609
  %v611 = vmul.f32 %v365, %v610
  %v612 = vmul.f32 %v366, %v610
  %v613 = vmul.f32 %v367, %v610
  %v614 = vmul.f32 %v368, %v610
  %v615 = vmul.f32 %v369, %v610
  %v616 = vmul.f32 %v370, %v610
  %v617 = vmul.f32 %v371, %v610
  %v618 = vmul.f32 %v372, %v610
  %v619 = vmul.f32 %v373, %v610
  %v620 = vmul.f32 %v374, %v610
  %v621 = vmul.f32 %v375, %v610
  %v622 = vmul.f32 %v376, %v610
  %v623 = vmul.f32 %v377, %v610
  %v624 = vmul.f32 %v378, %v610
  %v625 = vmul.f32 %v379, %v610
  %v626 = vmul.f32 %v380, %v610
  %v627 = vadd.f32 %v590, %v611
  %v628 = vadd.f32 %v591, %v612
  %v629 = vadd.f32 %v592, %v613
  %v630 = vadd.f32 %v593, %v614
  %v631 = vadd.f32 %v594, %v615
  %v632 = vadd.f32 %v595, %v616
  %v633 = vadd.f32 %v596, %v617
  %v634 = vadd.f32 %v597, %v618
  %v635 = vadd.f32 %v598, %v619
  %v636 = vadd.f32 %v599, %v620
  %v637 = vadd.f32 %v600, %v621
  %v638 = vadd.f32 %v601, %v622
  %v639 = vadd.f32 %v602, %v623
  %v640 = vadd.f32 %v603, %v624
  %v641 = vadd.f32 %v604, %v625
  %v642 = vadd.f32 %v605, %v626
  %v643 = vld [vmem:[%s383 + $0x7] sm:$0x1]
  %v644 = vlaneseq
  %v645 = vshrl.u32 %v644, 7
  %v646 = vsub.s32 0, %v645
  %v647 = vrot.slane %v643, %v646
  %v648 = vmul.f32 %v367, %v647
  %v649 = vmul.f32 %v368, %v647
  %v650 = vmul.f32 %v369, %v647
  %v651 = vmul.f32 %v370, %v647
  %v652 = vmul.f32 %v371, %v647
  %v653 = vmul.f32 %v372, %v647
  %v654 = vmul.f32 %v373, %v647
  %v655 = vmul.f32 %v374, %v647
  %v656 = vmul.f32 %v375, %v647
  %v657 = vmul.f32 %v376, %v647
  %v658 = vmul.f32 %v377, %v647
  %v659 = vmul.f32 %v378, %v647
  %v660 = vmul.f32 %v379, %v647
  %v661 = vmul.f32 %v380, %v647
  %v662 = vmul.f32 %v381, %v647
  %v663 = vmul.f32 %v382, %v647
  %v664 = vadd.f32 %v627, %v648
  %v665 = vadd.f32 %v628, %v649
  %v666 = vadd.f32 %v629, %v650
  %v667 = vadd.f32 %v630, %v651
  %v668 = vadd.f32 %v631, %v652
  %v669 = vadd.f32 %v632, %v653
  %v670 = vadd.f32 %v633, %v654
  %v671 = vadd.f32 %v634, %v655
  %v672 = vadd.f32 %v635, %v656
  %v673 = vadd.f32 %v636, %v657
  %v674 = vadd.f32 %v637, %v658
  %v675 = vadd.f32 %v638, %v659
  %v676 = vadd.f32 %v639, %v660
  %v677 = vadd.f32 %v640, %v661
  %v678 = vadd.f32 %v641, %v662
  %v679 = vadd.f32 %v642, %v663
  %v680 = vld [vmem:[%s26 + $0x2] sm:$0xff]
  %v681 = vld [vmem:[%s26 + $0xa] sm:$0xff]
  %v682 = vld [vmem:[%s26 + $0x1a] sm:$0xff]
  %v683 = vld [vmem:[%s26 + $0x22] sm:$0xff]
  %v684 = vld [vmem:[%s26 + $0x32] sm:$0xff]
  %v685 = vld [vmem:[%s26 + $0x3a] sm:$0xff]
  %v686 = vld [vmem:[%s26 + $0x4a] sm:$0xff]
  %v687 = vld [vmem:[%s26 + $0x52] sm:$0xff]
  %v688 = vld [vmem:[%s26 + $0x62] sm:$0xff]
  %v689 = vld [vmem:[%s26 + $0x6a] sm:$0xff]
  %v690 = vld [vmem:[%s26 + $0x7a] sm:$0xff]
  %v691 = vld [vmem:[%s26 + $0x82] sm:$0xff]
  %v692 = vld [vmem:[%s26 + $0x92] sm:$0xff]
  %v693 = vld [vmem:[%s26 + $0x9a] sm:$0xff]
  %v694 = vld [vmem:[%s26 + $0xaa] sm:$0xff]
  %v695 = vld [vmem:[%s26 + $0xb2] sm:$0xff]
  %v696 = vld [vmem:[%s26 + $0xc2] sm:$0xff]
  %v697 = vld [vmem:[%s26 + $0xca] sm:$0xff]
  %v698 = vld [vmem:[%s26 + $0xda] sm:$0xff]
  %v699 = vld [vmem:[%s26 + $0xe2] sm:$0xff]
  %v700 = vld [vmem:[%s26 + $0xf2] sm:$0xff]
  %v701 = vld [vmem:[%s26 + $0xfa] sm:$0xff]
  %v702 = vld [vmem:[%s26 + $0x10a] sm:$0xff]
  %v703 = vld [vmem:[%s26 + $0x112] sm:$0xff]
  %v704 = vld [vmem:[%s26 + $0x122] sm:$0xff]
  %v705 = vld [vmem:[%s26 + $0x12a] sm:$0xff]
  %v706 = vld [vmem:[%s26 + $0x13a] sm:$0xff]
  %v707 = vld [vmem:[%s26 + $0x142] sm:$0xff]
  %v708 = vld [vmem:[%s26 + $0x152] sm:$0xff]
  %v709 = vld [vmem:[%s26 + $0x15a] sm:$0xff]
  %s710 = scalar_lea.vmem %s1, 16
  %v711 = vld [vmem:[%s710] sm:$0x1]
  %v712 = vlaneseq
  %v713 = vshrl.u32 %v712, 7
  %v714 = vsub.s32 0, %v713
  %v715 = vrot.slane %v711, %v714
  %v716 = vmul.f32 %v680, %v715
  %v717 = vmul.f32 %v681, %v715
  %v718 = vmul.f32 %v682, %v715
  %v719 = vmul.f32 %v683, %v715
  %v720 = vmul.f32 %v684, %v715
  %v721 = vmul.f32 %v685, %v715
  %v722 = vmul.f32 %v686, %v715
  %v723 = vmul.f32 %v687, %v715
  %v724 = vmul.f32 %v688, %v715
  %v725 = vmul.f32 %v689, %v715
  %v726 = vmul.f32 %v690, %v715
  %v727 = vmul.f32 %v691, %v715
  %v728 = vmul.f32 %v692, %v715
  %v729 = vmul.f32 %v693, %v715
  %v730 = vmul.f32 %v694, %v715
  %v731 = vmul.f32 %v695, %v715
  %v732 = vadd.f32 %v664, %v716
  %v733 = vadd.f32 %v665, %v717
  %v734 = vadd.f32 %v666, %v718
  %v735 = vadd.f32 %v667, %v719
  %v736 = vadd.f32 %v668, %v720
  %v737 = vadd.f32 %v669, %v721
  %v738 = vadd.f32 %v670, %v722
  %v739 = vadd.f32 %v671, %v723
  %v740 = vadd.f32 %v672, %v724
  %v741 = vadd.f32 %v673, %v725
  %v742 = vadd.f32 %v674, %v726
  %v743 = vadd.f32 %v675, %v727
  %v744 = vadd.f32 %v676, %v728
  %v745 = vadd.f32 %v677, %v729
  %v746 = vadd.f32 %v678, %v730
  %v747 = vadd.f32 %v679, %v731
  %v748 = vld [vmem:[%s710 + $0x1] sm:$0x1]
  %v749 = vlaneseq
  %v750 = vshrl.u32 %v749, 7
  %v751 = vsub.s32 0, %v750
  %v752 = vrot.slane %v748, %v751
  %v753 = vmul.f32 %v682, %v752
  %v754 = vmul.f32 %v683, %v752
  %v755 = vmul.f32 %v684, %v752
  %v756 = vmul.f32 %v685, %v752
  %v757 = vmul.f32 %v686, %v752
  %v758 = vmul.f32 %v687, %v752
  %v759 = vmul.f32 %v688, %v752
  %v760 = vmul.f32 %v689, %v752
  %v761 = vmul.f32 %v690, %v752
  %v762 = vmul.f32 %v691, %v752
  %v763 = vmul.f32 %v692, %v752
  %v764 = vmul.f32 %v693, %v752
  %v765 = vmul.f32 %v694, %v752
  %v766 = vmul.f32 %v695, %v752
  %v767 = vmul.f32 %v696, %v752
  %v768 = vmul.f32 %v697, %v752
  %v769 = vadd.f32 %v732, %v753
  %v770 = vadd.f32 %v733, %v754
  %v771 = vadd.f32 %v734, %v755
  %v772 = vadd.f32 %v735, %v756
  %v773 = vadd.f32 %v736, %v757
  %v774 = vadd.f32 %v737, %v758
  %v775 = vadd.f32 %v738, %v759
  %v776 = vadd.f32 %v739, %v760
  %v777 = vadd.f32 %v740, %v761
  %v778 = vadd.f32 %v741, %v762
  %v779 = vadd.f32 %v742, %v763
  %v780 = vadd.f32 %v743, %v764
  %v781 = vadd.f32 %v744, %v765
  %v782 = vadd.f32 %v745, %v766
  %v783 = vadd.f32 %v746, %v767
  %v784 = vadd.f32 %v747, %v768
  %v785 = vld [vmem:[%s710 + $0x2] sm:$0x1]
  %v786 = vlaneseq
  %v787 = vshrl.u32 %v786, 7
  %v788 = vsub.s32 0, %v787
  %v789 = vrot.slane %v785, %v788
  %v790 = vmul.f32 %v684, %v789
  %v791 = vmul.f32 %v685, %v789
  %v792 = vmul.f32 %v686, %v789
  %v793 = vmul.f32 %v687, %v789
  %v794 = vmul.f32 %v688, %v789
  %v795 = vmul.f32 %v689, %v789
  %v796 = vmul.f32 %v690, %v789
  %v797 = vmul.f32 %v691, %v789
  %v798 = vmul.f32 %v692, %v789
  %v799 = vmul.f32 %v693, %v789
  %v800 = vmul.f32 %v694, %v789
  %v801 = vmul.f32 %v695, %v789
  %v802 = vmul.f32 %v696, %v789
  %v803 = vmul.f32 %v697, %v789
  %v804 = vmul.f32 %v698, %v789
  %v805 = vmul.f32 %v699, %v789
  %v806 = vadd.f32 %v769, %v790
  %v807 = vadd.f32 %v770, %v791
  %v808 = vadd.f32 %v771, %v792
  %v809 = vadd.f32 %v772, %v793
  %v810 = vadd.f32 %v773, %v794
  %v811 = vadd.f32 %v774, %v795
  %v812 = vadd.f32 %v775, %v796
  %v813 = vadd.f32 %v776, %v797
  %v814 = vadd.f32 %v777, %v798
  %v815 = vadd.f32 %v778, %v799
  %v816 = vadd.f32 %v779, %v800
  %v817 = vadd.f32 %v780, %v801
  %v818 = vadd.f32 %v781, %v802
  %v819 = vadd.f32 %v782, %v803
  %v820 = vadd.f32 %v783, %v804
  %v821 = vadd.f32 %v784, %v805
  %v822 = vld [vmem:[%s710 + $0x3] sm:$0x1]
  %v823 = vlaneseq
  %v824 = vshrl.u32 %v823, 7
  %v825 = vsub.s32 0, %v824
  %v826 = vrot.slane %v822, %v825
  %v827 = vmul.f32 %v686, %v826
  %v828 = vmul.f32 %v687, %v826
  %v829 = vmul.f32 %v688, %v826
  %v830 = vmul.f32 %v689, %v826
  %v831 = vmul.f32 %v690, %v826
  %v832 = vmul.f32 %v691, %v826
  %v833 = vmul.f32 %v692, %v826
  %v834 = vmul.f32 %v693, %v826
  %v835 = vmul.f32 %v694, %v826
  %v836 = vmul.f32 %v695, %v826
  %v837 = vmul.f32 %v696, %v826
  %v838 = vmul.f32 %v697, %v826
  %v839 = vmul.f32 %v698, %v826
  %v840 = vmul.f32 %v699, %v826
  %v841 = vmul.f32 %v700, %v826
  %v842 = vmul.f32 %v701, %v826
  %v843 = vadd.f32 %v806, %v827
  %v844 = vadd.f32 %v807, %v828
  %v845 = vadd.f32 %v808, %v829
  %v846 = vadd.f32 %v809, %v830
  %v847 = vadd.f32 %v810, %v831
  %v848 = vadd.f32 %v811, %v832
  %v849 = vadd.f32 %v812, %v833
  %v850 = vadd.f32 %v813, %v834
  %v851 = vadd.f32 %v814, %v835
  %v852 = vadd.f32 %v815, %v836
  %v853 = vadd.f32 %v816, %v837
  %v854 = vadd.f32 %v817, %v838
  %v855 = vadd.f32 %v818, %v839
  %v856 = vadd.f32 %v819, %v840
  %v857 = vadd.f32 %v820, %v841
  %v858 = vadd.f32 %v821, %v842
  %v859 = vld [vmem:[%s710 + $0x4] sm:$0x1]
  %v860 = vlaneseq
  %v861 = vshrl.u32 %v860, 7
  %v862 = vsub.s32 0, %v861
  %v863 = vrot.slane %v859, %v862
  %v864 = vmul.f32 %v688, %v863
  %v865 = vmul.f32 %v689, %v863
  %v866 = vmul.f32 %v690, %v863
  %v867 = vmul.f32 %v691, %v863
  %v868 = vmul.f32 %v692, %v863
  %v869 = vmul.f32 %v693, %v863
  %v870 = vmul.f32 %v694, %v863
  %v871 = vmul.f32 %v695, %v863
  %v872 = vmul.f32 %v696, %v863
  %v873 = vmul.f32 %v697, %v863
  %v874 = vmul.f32 %v698, %v863
  %v875 = vmul.f32 %v699, %v863
  %v876 = vmul.f32 %v700, %v863
  %v877 = vmul.f32 %v701, %v863
  %v878 = vmul.f32 %v702, %v863
  %v879 = vmul.f32 %v703, %v863
  %v880 = vadd.f32 %v843, %v864
  %v881 = vadd.f32 %v844, %v865
  %v882 = vadd.f32 %v845, %v866
  %v883 = vadd.f32 %v846, %v867
  %v884 = vadd.f32 %v847, %v868
  %v885 = vadd.f32 %v848, %v869
  %v886 = vadd.f32 %v849, %v870
  %v887 = vadd.f32 %v850, %v871
  %v888 = vadd.f32 %v851, %v872
  %v889 = vadd.f32 %v852, %v873
  %v890 = vadd.f32 %v853, %v874
  %v891 = vadd.f32 %v854, %v875
  %v892 = vadd.f32 %v855, %v876
  %v893 = vadd.f32 %v856, %v877
  %v894 = vadd.f32 %v857, %v878
  %v895 = vadd.f32 %v858, %v879
  %v896 = vld [vmem:[%s710 + $0x5] sm:$0x1]
  %v897 = vlaneseq
  %v898 = vshrl.u32 %v897, 7
  %v899 = vsub.s32 0, %v898
  %v900 = vrot.slane %v896, %v899
  %v901 = vmul.f32 %v690, %v900
  %v902 = vmul.f32 %v691, %v900
  %v903 = vmul.f32 %v692, %v900
  %v904 = vmul.f32 %v693, %v900
  %v905 = vmul.f32 %v694, %v900
  %v906 = vmul.f32 %v695, %v900
  %v907 = vmul.f32 %v696, %v900
  %v908 = vmul.f32 %v697, %v900
  %v909 = vmul.f32 %v698, %v900
  %v910 = vmul.f32 %v699, %v900
  %v911 = vmul.f32 %v700, %v900
  %v912 = vmul.f32 %v701, %v900
  %v913 = vmul.f32 %v702, %v900
  %v914 = vmul.f32 %v703, %v900
  %v915 = vmul.f32 %v704, %v900
  %v916 = vmul.f32 %v705, %v900
  %v917 = vadd.f32 %v880, %v901
  %v918 = vadd.f32 %v881, %v902
  %v919 = vadd.f32 %v882, %v903
  %v920 = vadd.f32 %v883, %v904
  %v921 = vadd.f32 %v884, %v905
  %v922 = vadd.f32 %v885, %v906
  %v923 = vadd.f32 %v886, %v907
  %v924 = vadd.f32 %v887, %v908
  %v925 = vadd.f32 %v888, %v909
  %v926 = vadd.f32 %v889, %v910
  %v927 = vadd.f32 %v890, %v911
  %v928 = vadd.f32 %v891, %v912
  %v929 = vadd.f32 %v892, %v913
  %v930 = vadd.f32 %v893, %v914
  %v931 = vadd.f32 %v894, %v915
  %v932 = vadd.f32 %v895, %v916
  %v933 = vld [vmem:[%s710 + $0x6] sm:$0x1]
  %v934 = vlaneseq
  %v935 = vshrl.u32 %v934, 7
  %v936 = vsub.s32 0, %v935
  %v937 = vrot.slane %v933, %v936
  %v938 = vmul.f32 %v692, %v937
  %v939 = vmul.f32 %v693, %v937
  %v940 = vmul.f32 %v694, %v937
  %v941 = vmul.f32 %v695, %v937
  %v942 = vmul.f32 %v696, %v937
  %v943 = vmul.f32 %v697, %v937
  %v944 = vmul.f32 %v698, %v937
  %v945 = vmul.f32 %v699, %v937
  %v946 = vmul.f32 %v700, %v937
  %v947 = vmul.f32 %v701, %v937
  %v948 = vmul.f32 %v702, %v937
  %v949 = vmul.f32 %v703, %v937
  %v950 = vmul.f32 %v704, %v937
  %v951 = vmul.f32 %v705, %v937
  %v952 = vmul.f32 %v706, %v937
  %v953 = vmul.f32 %v707, %v937
  %v954 = vadd.f32 %v917, %v938
  %v955 = vadd.f32 %v918, %v939
  %v956 = vadd.f32 %v919, %v940
  %v957 = vadd.f32 %v920, %v941
  %v958 = vadd.f32 %v921, %v942
  %v959 = vadd.f32 %v922, %v943
  %v960 = vadd.f32 %v923, %v944
  %v961 = vadd.f32 %v924, %v945
  %v962 = vadd.f32 %v925, %v946
  %v963 = vadd.f32 %v926, %v947
  %v964 = vadd.f32 %v927, %v948
  %v965 = vadd.f32 %v928, %v949
  %v966 = vadd.f32 %v929, %v950
  %v967 = vadd.f32 %v930, %v951
  %v968 = vadd.f32 %v931, %v952
  %v969 = vadd.f32 %v932, %v953
  %v970 = vld [vmem:[%s710 + $0x7] sm:$0x1]
  %v971 = vlaneseq
  %v972 = vshrl.u32 %v971, 7
  %v973 = vsub.s32 0, %v972
  %v974 = vrot.slane %v970, %v973
  %v975 = vmul.f32 %v694, %v974
  %v976 = vmul.f32 %v695, %v974
  %v977 = vmul.f32 %v696, %v974
  %v978 = vmul.f32 %v697, %v974
  %v979 = vmul.f32 %v698, %v974
  %v980 = vmul.f32 %v699, %v974
  %v981 = vmul.f32 %v700, %v974
  %v982 = vmul.f32 %v701, %v974
  %v983 = vmul.f32 %v702, %v974
  %v984 = vmul.f32 %v703, %v974
  %v985 = vmul.f32 %v704, %v974
  %v986 = vmul.f32 %v705, %v974
  %v987 = vmul.f32 %v706, %v974
  %v988 = vmul.f32 %v707, %v974
  %v989 = vmul.f32 %v708, %v974
  %v990 = vmul.f32 %v709, %v974
  %v991 = vadd.f32 %v954, %v975
  %v992 = vadd.f32 %v955, %v976
  %v993 = vadd.f32 %v956, %v977
  %v994 = vadd.f32 %v957, %v978
  %v995 = vadd.f32 %v958, %v979
  %v996 = vadd.f32 %v959, %v980
  %v997 = vadd.f32 %v960, %v981
  %v998 = vadd.f32 %v961, %v982
  %v999 = vadd.f32 %v962, %v983
  %v1000 = vadd.f32 %v963, %v984
  %v1001 = vadd.f32 %v964, %v985
  %v1002 = vadd.f32 %v965, %v986
  %v1003 = vadd.f32 %v966, %v987
  %v1004 = vadd.f32 %v967, %v988
  %v1005 = vadd.f32 %v968, %v989
  %v1006 = vadd.f32 %v969, %v990
  %v1007 = vld [vmem:[%s26 + $0x4] sm:$0xff]
  %v1008 = vld [vmem:[%s26 + $0xc] sm:$0xff]
  %v1009 = vld [vmem:[%s26 + $0x1c] sm:$0xff]
  %v1010 = vld [vmem:[%s26 + $0x24] sm:$0xff]
  %v1011 = vld [vmem:[%s26 + $0x34] sm:$0xff]
  %v1012 = vld [vmem:[%s26 + $0x3c] sm:$0xff]
  %v1013 = vld [vmem:[%s26 + $0x4c] sm:$0xff]
  %v1014 = vld [vmem:[%s26 + $0x54] sm:$0xff]
  %v1015 = vld [vmem:[%s26 + $0x64] sm:$0xff]
  %v1016 = vld [vmem:[%s26 + $0x6c] sm:$0xff]
  %v1017 = vld [vmem:[%s26 + $0x7c] sm:$0xff]
  %v1018 = vld [vmem:[%s26 + $0x84] sm:$0xff]
  %v1019 = vld [vmem:[%s26 + $0x94] sm:$0xff]
  %v1020 = vld [vmem:[%s26 + $0x9c] sm:$0xff]
  %v1021 = vld [vmem:[%s26 + $0xac] sm:$0xff]
  %v1022 = vld [vmem:[%s26 + $0xb4] sm:$0xff]
  %v1023 = vld [vmem:[%s26 + $0xc4] sm:$0xff]
  %v1024 = vld [vmem:[%s26 + $0xcc] sm:$0xff]
  %v1025 = vld [vmem:[%s26 + $0xdc] sm:$0xff]
  %v1026 = vld [vmem:[%s26 + $0xe4] sm:$0xff]
  %v1027 = vld [vmem:[%s26 + $0xf4] sm:$0xff]
  %v1028 = vld [vmem:[%s26 + $0xfc] sm:$0xff]
  %v1029 = vld [vmem:[%s26 + $0x10c] sm:$0xff]
  %v1030 = vld [vmem:[%s26 + $0x114] sm:$0xff]
  %v1031 = vld [vmem:[%s26 + $0x124] sm:$0xff]
  %v1032 = vld [vmem:[%s26 + $0x12c] sm:$0xff]
  %v1033 = vld [vmem:[%s26 + $0x13c] sm:$0xff]
  %v1034 = vld [vmem:[%s26 + $0x144] sm:$0xff]
  %v1035 = vld [vmem:[%s26 + $0x154] sm:$0xff]
  %v1036 = vld [vmem:[%s26 + $0x15c] sm:$0xff]
  %s1037 = scalar_lea.vmem %s1, 32
  %v1038 = vld [vmem:[%s1037] sm:$0x1]
  %v1039 = vlaneseq
  %v1040 = vshrl.u32 %v1039, 7
  %v1041 = vsub.s32 0, %v1040
  %v1042 = vrot.slane %v1038, %v1041
  %v1043 = vmul.f32 %v1007, %v1042
  %v1044 = vmul.f32 %v1008, %v1042
  %v1045 = vmul.f32 %v1009, %v1042
  %v1046 = vmul.f32 %v1010, %v1042
  %v1047 = vmul.f32 %v1011, %v1042
  %v1048 = vmul.f32 %v1012, %v1042
  %v1049 = vmul.f32 %v1013, %v1042
  %v1050 = vmul.f32 %v1014, %v1042
  %v1051 = vmul.f32 %v1015, %v1042
  %v1052 = vmul.f32 %v1016, %v1042
  %v1053 = vmul.f32 %v1017, %v1042
  %v1054 = vmul.f32 %v1018, %v1042
  %v1055 = vmul.f32 %v1019, %v1042
  %v1056 = vmul.f32 %v1020, %v1042
  %v1057 = vmul.f32 %v1021, %v1042
  %v1058 = vmul.f32 %v1022, %v1042
  %v1059 = vadd.f32 %v991, %v1043
  %v1060 = vadd.f32 %v992, %v1044
  %v1061 = vadd.f32 %v993, %v1045
  %v1062 = vadd.f32 %v994, %v1046
  %v1063 = vadd.f32 %v995, %v1047
  %v1064 = vadd.f32 %v996, %v1048
  %v1065 = vadd.f32 %v997, %v1049
  %v1066 = vadd.f32 %v998, %v1050
  %v1067 = vadd.f32 %v999, %v1051
  %v1068 = vadd.f32 %v1000, %v1052
  %v1069 = vadd.f32 %v1001, %v1053
  %v1070 = vadd.f32 %v1002, %v1054
  %v1071 = vadd.f32 %v1003, %v1055
  %v1072 = vadd.f32 %v1004, %v1056
  %v1073 = vadd.f32 %v1005, %v1057
  %v1074 = vadd.f32 %v1006, %v1058
  %v1075 = vld [vmem:[%s1037 + $0x1] sm:$0x1]
  %v1076 = vlaneseq
  %v1077 = vshrl.u32 %v1076, 7
  %v1078 = vsub.s32 0, %v1077
  %v1079 = vrot.slane %v1075, %v1078
  %v1080 = vmul.f32 %v1009, %v1079
  %v1081 = vmul.f32 %v1010, %v1079
  %v1082 = vmul.f32 %v1011, %v1079
  %v1083 = vmul.f32 %v1012, %v1079
  %v1084 = vmul.f32 %v1013, %v1079
  %v1085 = vmul.f32 %v1014, %v1079
  %v1086 = vmul.f32 %v1015, %v1079
  %v1087 = vmul.f32 %v1016, %v1079
  %v1088 = vmul.f32 %v1017, %v1079
  %v1089 = vmul.f32 %v1018, %v1079
  %v1090 = vmul.f32 %v1019, %v1079
  %v1091 = vmul.f32 %v1020, %v1079
  %v1092 = vmul.f32 %v1021, %v1079
  %v1093 = vmul.f32 %v1022, %v1079
  %v1094 = vmul.f32 %v1023, %v1079
  %v1095 = vmul.f32 %v1024, %v1079
  %v1096 = vadd.f32 %v1059, %v1080
  %v1097 = vadd.f32 %v1060, %v1081
  %v1098 = vadd.f32 %v1061, %v1082
  %v1099 = vadd.f32 %v1062, %v1083
  %v1100 = vadd.f32 %v1063, %v1084
  %v1101 = vadd.f32 %v1064, %v1085
  %v1102 = vadd.f32 %v1065, %v1086
  %v1103 = vadd.f32 %v1066, %v1087
  %v1104 = vadd.f32 %v1067, %v1088
  %v1105 = vadd.f32 %v1068, %v1089
  %v1106 = vadd.f32 %v1069, %v1090
  %v1107 = vadd.f32 %v1070, %v1091
  %v1108 = vadd.f32 %v1071, %v1092
  %v1109 = vadd.f32 %v1072, %v1093
  %v1110 = vadd.f32 %v1073, %v1094
  %v1111 = vadd.f32 %v1074, %v1095
  %v1112 = vld [vmem:[%s1037 + $0x2] sm:$0x1]
  %v1113 = vlaneseq
  %v1114 = vshrl.u32 %v1113, 7
  %v1115 = vsub.s32 0, %v1114
  %v1116 = vrot.slane %v1112, %v1115
  %v1117 = vmul.f32 %v1011, %v1116
  %v1118 = vmul.f32 %v1012, %v1116
  %v1119 = vmul.f32 %v1013, %v1116
  %v1120 = vmul.f32 %v1014, %v1116
  %v1121 = vmul.f32 %v1015, %v1116
  %v1122 = vmul.f32 %v1016, %v1116
  %v1123 = vmul.f32 %v1017, %v1116
  %v1124 = vmul.f32 %v1018, %v1116
  %v1125 = vmul.f32 %v1019, %v1116
  %v1126 = vmul.f32 %v1020, %v1116
  %v1127 = vmul.f32 %v1021, %v1116
  %v1128 = vmul.f32 %v1022, %v1116
  %v1129 = vmul.f32 %v1023, %v1116
  %v1130 = vmul.f32 %v1024, %v1116
  %v1131 = vmul.f32 %v1025, %v1116
  %v1132 = vmul.f32 %v1026, %v1116
  %v1133 = vadd.f32 %v1096, %v1117
  %v1134 = vadd.f32 %v1097, %v1118
  %v1135 = vadd.f32 %v1098, %v1119
  %v1136 = vadd.f32 %v1099, %v1120
  %v1137 = vadd.f32 %v1100, %v1121
  %v1138 = vadd.f32 %v1101, %v1122
  %v1139 = vadd.f32 %v1102, %v1123
  %v1140 = vadd.f32 %v1103, %v1124
  %v1141 = vadd.f32 %v1104, %v1125
  %v1142 = vadd.f32 %v1105, %v1126
  %v1143 = vadd.f32 %v1106, %v1127
  %v1144 = vadd.f32 %v1107, %v1128
  %v1145 = vadd.f32 %v1108, %v1129
  %v1146 = vadd.f32 %v1109, %v1130
  %v1147 = vadd.f32 %v1110, %v1131
  %v1148 = vadd.f32 %v1111, %v1132
  %v1149 = vld [vmem:[%s1037 + $0x3] sm:$0x1]
  %v1150 = vlaneseq
  %v1151 = vshrl.u32 %v1150, 7
  %v1152 = vsub.s32 0, %v1151
  %v1153 = vrot.slane %v1149, %v1152
  %v1154 = vmul.f32 %v1013, %v1153
  %v1155 = vmul.f32 %v1014, %v1153
  %v1156 = vmul.f32 %v1015, %v1153
  %v1157 = vmul.f32 %v1016, %v1153
  %v1158 = vmul.f32 %v1017, %v1153
  %v1159 = vmul.f32 %v1018, %v1153
  %v1160 = vmul.f32 %v1019, %v1153
  %v1161 = vmul.f32 %v1020, %v1153
  %v1162 = vmul.f32 %v1021, %v1153
  %v1163 = vmul.f32 %v1022, %v1153
  %v1164 = vmul.f32 %v1023, %v1153
  %v1165 = vmul.f32 %v1024, %v1153
  %v1166 = vmul.f32 %v1025, %v1153
  %v1167 = vmul.f32 %v1026, %v1153
  %v1168 = vmul.f32 %v1027, %v1153
  %v1169 = vmul.f32 %v1028, %v1153
  %v1170 = vadd.f32 %v1133, %v1154
  %v1171 = vadd.f32 %v1134, %v1155
  %v1172 = vadd.f32 %v1135, %v1156
  %v1173 = vadd.f32 %v1136, %v1157
  %v1174 = vadd.f32 %v1137, %v1158
  %v1175 = vadd.f32 %v1138, %v1159
  %v1176 = vadd.f32 %v1139, %v1160
  %v1177 = vadd.f32 %v1140, %v1161
  %v1178 = vadd.f32 %v1141, %v1162
  %v1179 = vadd.f32 %v1142, %v1163
  %v1180 = vadd.f32 %v1143, %v1164
  %v1181 = vadd.f32 %v1144, %v1165
  %v1182 = vadd.f32 %v1145, %v1166
  %v1183 = vadd.f32 %v1146, %v1167
  %v1184 = vadd.f32 %v1147, %v1168
  %v1185 = vadd.f32 %v1148, %v1169
  %v1186 = vld [vmem:[%s1037 + $0x4] sm:$0x1]
  %v1187 = vlaneseq
  %v1188 = vshrl.u32 %v1187, 7
  %v1189 = vsub.s32 0, %v1188
  %v1190 = vrot.slane %v1186, %v1189
  %v1191 = vmul.f32 %v1015, %v1190
  %v1192 = vmul.f32 %v1016, %v1190
  %v1193 = vmul.f32 %v1017, %v1190
  %v1194 = vmul.f32 %v1018, %v1190
  %v1195 = vmul.f32 %v1019, %v1190
  %v1196 = vmul.f32 %v1020, %v1190
  %v1197 = vmul.f32 %v1021, %v1190
  %v1198 = vmul.f32 %v1022, %v1190
  %v1199 = vmul.f32 %v1023, %v1190
  %v1200 = vmul.f32 %v1024, %v1190
  %v1201 = vmul.f32 %v1025, %v1190
  %v1202 = vmul.f32 %v1026, %v1190
  %v1203 = vmul.f32 %v1027, %v1190
  %v1204 = vmul.f32 %v1028, %v1190
  %v1205 = vmul.f32 %v1029, %v1190
  %v1206 = vmul.f32 %v1030, %v1190
  %v1207 = vadd.f32 %v1170, %v1191
  %v1208 = vadd.f32 %v1171, %v1192
  %v1209 = vadd.f32 %v1172, %v1193
  %v1210 = vadd.f32 %v1173, %v1194
  %v1211 = vadd.f32 %v1174, %v1195
  %v1212 = vadd.f32 %v1175, %v1196
  %v1213 = vadd.f32 %v1176, %v1197
  %v1214 = vadd.f32 %v1177, %v1198
  %v1215 = vadd.f32 %v1178, %v1199
  %v1216 = vadd.f32 %v1179, %v1200
  %v1217 = vadd.f32 %v1180, %v1201
  %v1218 = vadd.f32 %v1181, %v1202
  %v1219 = vadd.f32 %v1182, %v1203
  %v1220 = vadd.f32 %v1183, %v1204
  %v1221 = vadd.f32 %v1184, %v1205
  %v1222 = vadd.f32 %v1185, %v1206
  %v1223 = vld [vmem:[%s1037 + $0x5] sm:$0x1]
  %v1224 = vlaneseq
  %v1225 = vshrl.u32 %v1224, 7
  %v1226 = vsub.s32 0, %v1225
  %v1227 = vrot.slane %v1223, %v1226
  %v1228 = vmul.f32 %v1017, %v1227
  %v1229 = vmul.f32 %v1018, %v1227
  %v1230 = vmul.f32 %v1019, %v1227
  %v1231 = vmul.f32 %v1020, %v1227
  %v1232 = vmul.f32 %v1021, %v1227
  %v1233 = vmul.f32 %v1022, %v1227
  %v1234 = vmul.f32 %v1023, %v1227
  %v1235 = vmul.f32 %v1024, %v1227
  %v1236 = vmul.f32 %v1025, %v1227
  %v1237 = vmul.f32 %v1026, %v1227
  %v1238 = vmul.f32 %v1027, %v1227
  %v1239 = vmul.f32 %v1028, %v1227
  %v1240 = vmul.f32 %v1029, %v1227
  %v1241 = vmul.f32 %v1030, %v1227
  %v1242 = vmul.f32 %v1031, %v1227
  %v1243 = vmul.f32 %v1032, %v1227
  %v1244 = vadd.f32 %v1207, %v1228
  %v1245 = vadd.f32 %v1208, %v1229
  %v1246 = vadd.f32 %v1209, %v1230
  %v1247 = vadd.f32 %v1210, %v1231
  %v1248 = vadd.f32 %v1211, %v1232
  %v1249 = vadd.f32 %v1212, %v1233
  %v1250 = vadd.f32 %v1213, %v1234
  %v1251 = vadd.f32 %v1214, %v1235
  %v1252 = vadd.f32 %v1215, %v1236
  %v1253 = vadd.f32 %v1216, %v1237
  %v1254 = vadd.f32 %v1217, %v1238
  %v1255 = vadd.f32 %v1218, %v1239
  %v1256 = vadd.f32 %v1219, %v1240
  %v1257 = vadd.f32 %v1220, %v1241
  %v1258 = vadd.f32 %v1221, %v1242
  %v1259 = vadd.f32 %v1222, %v1243
  %v1260 = vld [vmem:[%s1037 + $0x6] sm:$0x1]
  %v1261 = vlaneseq
  %v1262 = vshrl.u32 %v1261, 7
  %v1263 = vsub.s32 0, %v1262
  %v1264 = vrot.slane %v1260, %v1263
  %v1265 = vmul.f32 %v1019, %v1264
  %v1266 = vmul.f32 %v1020, %v1264
  %v1267 = vmul.f32 %v1021, %v1264
  %v1268 = vmul.f32 %v1022, %v1264
  %v1269 = vmul.f32 %v1023, %v1264
  %v1270 = vmul.f32 %v1024, %v1264
  %v1271 = vmul.f32 %v1025, %v1264
  %v1272 = vmul.f32 %v1026, %v1264
  %v1273 = vmul.f32 %v1027, %v1264
  %v1274 = vmul.f32 %v1028, %v1264
  %v1275 = vmul.f32 %v1029, %v1264
  %v1276 = vmul.f32 %v1030, %v1264
  %v1277 = vmul.f32 %v1031, %v1264
  %v1278 = vmul.f32 %v1032, %v1264
  %v1279 = vmul.f32 %v1033, %v1264
  %v1280 = vmul.f32 %v1034, %v1264
  %v1281 = vadd.f32 %v1244, %v1265
  %v1282 = vadd.f32 %v1245, %v1266
  %v1283 = vadd.f32 %v1246, %v1267
  %v1284 = vadd.f32 %v1247, %v1268
  %v1285 = vadd.f32 %v1248, %v1269
  %v1286 = vadd.f32 %v1249, %v1270
  %v1287 = vadd.f32 %v1250, %v1271
  %v1288 = vadd.f32 %v1251, %v1272
  %v1289 = vadd.f32 %v1252, %v1273
  %v1290 = vadd.f32 %v1253, %v1274
  %v1291 = vadd.f32 %v1254, %v1275
  %v1292 = vadd.f32 %v1255, %v1276
  %v1293 = vadd.f32 %v1256, %v1277
  %v1294 = vadd.f32 %v1257, %v1278
  %v1295 = vadd.f32 %v1258, %v1279
  %v1296 = vadd.f32 %v1259, %v1280
  %v1297 = vld [vmem:[%s1037 + $0x7] sm:$0x1]
  %v1298 = vlaneseq
  %v1299 = vshrl.u32 %v1298, 7
  %v1300 = vsub.s32 0, %v1299
  %v1301 = vrot.slane %v1297, %v1300
  %v1302 = vmul.f32 %v1021, %v1301
  %v1303 = vmul.f32 %v1022, %v1301
  %v1304 = vmul.f32 %v1023, %v1301
  %v1305 = vmul.f32 %v1024, %v1301
  %v1306 = vmul.f32 %v1025, %v1301
  %v1307 = vmul.f32 %v1026, %v1301
  %v1308 = vmul.f32 %v1027, %v1301
  %v1309 = vmul.f32 %v1028, %v1301
  %v1310 = vmul.f32 %v1029, %v1301
  %v1311 = vmul.f32 %v1030, %v1301
  %v1312 = vmul.f32 %v1031, %v1301
  %v1313 = vmul.f32 %v1032, %v1301
  %v1314 = vmul.f32 %v1033, %v1301
  %v1315 = vmul.f32 %v1034, %v1301
  %v1316 = vmul.f32 %v1035, %v1301
  %v1317 = vmul.f32 %v1036, %v1301
  %v1318 = vadd.f32 %v1281, %v1302
  %v1319 = vadd.f32 %v1282, %v1303
  %v1320 = vadd.f32 %v1283, %v1304
  %v1321 = vadd.f32 %v1284, %v1305
  %v1322 = vadd.f32 %v1285, %v1306
  %v1323 = vadd.f32 %v1286, %v1307
  %v1324 = vadd.f32 %v1287, %v1308
  %v1325 = vadd.f32 %v1288, %v1309
  %v1326 = vadd.f32 %v1289, %v1310
  %v1327 = vadd.f32 %v1290, %v1311
  %v1328 = vadd.f32 %v1291, %v1312
  %v1329 = vadd.f32 %v1292, %v1313
  %v1330 = vadd.f32 %v1293, %v1314
  %v1331 = vadd.f32 %v1294, %v1315
  %v1332 = vadd.f32 %v1295, %v1316
  %v1333 = vadd.f32 %v1296, %v1317
  %v1334 = vld [vmem:[%s26 + $0x5] sm:$0xff]
  %v1335 = vld [vmem:[%s26 + $0xd] sm:$0xff]
  %v1336 = vld [vmem:[%s26 + $0x1d] sm:$0xff]
  %v1337 = vld [vmem:[%s26 + $0x25] sm:$0xff]
  %v1338 = vld [vmem:[%s26 + $0x35] sm:$0xff]
  %v1339 = vld [vmem:[%s26 + $0x3d] sm:$0xff]
  %v1340 = vld [vmem:[%s26 + $0x4d] sm:$0xff]
  %v1341 = vld [vmem:[%s26 + $0x55] sm:$0xff]
  %v1342 = vld [vmem:[%s26 + $0x65] sm:$0xff]
  %v1343 = vld [vmem:[%s26 + $0x6d] sm:$0xff]
  %v1344 = vld [vmem:[%s26 + $0x7d] sm:$0xff]
  %v1345 = vld [vmem:[%s26 + $0x85] sm:$0xff]
  %v1346 = vld [vmem:[%s26 + $0x95] sm:$0xff]
  %v1347 = vld [vmem:[%s26 + $0x9d] sm:$0xff]
  %v1348 = vld [vmem:[%s26 + $0xad] sm:$0xff]
  %v1349 = vld [vmem:[%s26 + $0xb5] sm:$0xff]
  %v1350 = vld [vmem:[%s26 + $0xc5] sm:$0xff]
  %v1351 = vld [vmem:[%s26 + $0xcd] sm:$0xff]
  %v1352 = vld [vmem:[%s26 + $0xdd] sm:$0xff]
  %v1353 = vld [vmem:[%s26 + $0xe5] sm:$0xff]
  %v1354 = vld [vmem:[%s26 + $0xf5] sm:$0xff]
  %v1355 = vld [vmem:[%s26 + $0xfd] sm:$0xff]
  %v1356 = vld [vmem:[%s26 + $0x10d] sm:$0xff]
  %v1357 = vld [vmem:[%s26 + $0x115] sm:$0xff]
  %v1358 = vld [vmem:[%s26 + $0x125] sm:$0xff]
  %v1359 = vld [vmem:[%s26 + $0x12d] sm:$0xff]
  %v1360 = vld [vmem:[%s26 + $0x13d] sm:$0xff]
  %v1361 = vld [vmem:[%s26 + $0x145] sm:$0xff]
  %v1362 = vld [vmem:[%s26 + $0x155] sm:$0xff]
  %v1363 = vld [vmem:[%s26 + $0x15d] sm:$0xff]
  %s1364 = scalar_lea.vmem %s1, 40
  %v1365 = vld [vmem:[%s1364] sm:$0x1]
  %v1366 = vlaneseq
  %v1367 = vshrl.u32 %v1366, 7
  %v1368 = vsub.s32 0, %v1367
  %v1369 = vrot.slane %v1365, %v1368
  %v1370 = vmul.f32 %v1334, %v1369
  %v1371 = vmul.f32 %v1335, %v1369
  %v1372 = vmul.f32 %v1336, %v1369
  %v1373 = vmul.f32 %v1337, %v1369
  %v1374 = vmul.f32 %v1338, %v1369
  %v1375 = vmul.f32 %v1339, %v1369
  %v1376 = vmul.f32 %v1340, %v1369
  %v1377 = vmul.f32 %v1341, %v1369
  %v1378 = vmul.f32 %v1342, %v1369
  %v1379 = vmul.f32 %v1343, %v1369
  %v1380 = vmul.f32 %v1344, %v1369
  %v1381 = vmul.f32 %v1345, %v1369
  %v1382 = vmul.f32 %v1346, %v1369
  %v1383 = vmul.f32 %v1347, %v1369
  %v1384 = vmul.f32 %v1348, %v1369
  %v1385 = vmul.f32 %v1349, %v1369
  %v1386 = vadd.f32 %v1318, %v1370
  %v1387 = vadd.f32 %v1319, %v1371
  %v1388 = vadd.f32 %v1320, %v1372
  %v1389 = vadd.f32 %v1321, %v1373
  %v1390 = vadd.f32 %v1322, %v1374
  %v1391 = vadd.f32 %v1323, %v1375
  %v1392 = vadd.f32 %v1324, %v1376
  %v1393 = vadd.f32 %v1325, %v1377
  %v1394 = vadd.f32 %v1326, %v1378
  %v1395 = vadd.f32 %v1327, %v1379
  %v1396 = vadd.f32 %v1328, %v1380
  %v1397 = vadd.f32 %v1329, %v1381
  %v1398 = vadd.f32 %v1330, %v1382
  %v1399 = vadd.f32 %v1331, %v1383
  %v1400 = vadd.f32 %v1332, %v1384
  %v1401 = vadd.f32 %v1333, %v1385
  %v1402 = vld [vmem:[%s1364 + $0x1] sm:$0x1]
  %v1403 = vlaneseq
  %v1404 = vshrl.u32 %v1403, 7
  %v1405 = vsub.s32 0, %v1404
  %v1406 = vrot.slane %v1402, %v1405
  %v1407 = vmul.f32 %v1336, %v1406
  %v1408 = vmul.f32 %v1337, %v1406
  %v1409 = vmul.f32 %v1338, %v1406
  %v1410 = vmul.f32 %v1339, %v1406
  %v1411 = vmul.f32 %v1340, %v1406
  %v1412 = vmul.f32 %v1341, %v1406
  %v1413 = vmul.f32 %v1342, %v1406
  %v1414 = vmul.f32 %v1343, %v1406
  %v1415 = vmul.f32 %v1344, %v1406
  %v1416 = vmul.f32 %v1345, %v1406
  %v1417 = vmul.f32 %v1346, %v1406
  %v1418 = vmul.f32 %v1347, %v1406
  %v1419 = vmul.f32 %v1348, %v1406
  %v1420 = vmul.f32 %v1349, %v1406
  %v1421 = vmul.f32 %v1350, %v1406
  %v1422 = vmul.f32 %v1351, %v1406
  %v1423 = vadd.f32 %v1386, %v1407
  %v1424 = vadd.f32 %v1387, %v1408
  %v1425 = vadd.f32 %v1388, %v1409
  %v1426 = vadd.f32 %v1389, %v1410
  %v1427 = vadd.f32 %v1390, %v1411
  %v1428 = vadd.f32 %v1391, %v1412
  %v1429 = vadd.f32 %v1392, %v1413
  %v1430 = vadd.f32 %v1393, %v1414
  %v1431 = vadd.f32 %v1394, %v1415
  %v1432 = vadd.f32 %v1395, %v1416
  %v1433 = vadd.f32 %v1396, %v1417
  %v1434 = vadd.f32 %v1397, %v1418
  %v1435 = vadd.f32 %v1398, %v1419
  %v1436 = vadd.f32 %v1399, %v1420
  %v1437 = vadd.f32 %v1400, %v1421
  %v1438 = vadd.f32 %v1401, %v1422
  %v1439 = vld [vmem:[%s1364 + $0x2] sm:$0x1]
  %v1440 = vlaneseq
  %v1441 = vshrl.u32 %v1440, 7
  %v1442 = vsub.s32 0, %v1441
  %v1443 = vrot.slane %v1439, %v1442
  %v1444 = vmul.f32 %v1338, %v1443
  %v1445 = vmul.f32 %v1339, %v1443
  %v1446 = vmul.f32 %v1340, %v1443
  %v1447 = vmul.f32 %v1341, %v1443
  %v1448 = vmul.f32 %v1342, %v1443
  %v1449 = vmul.f32 %v1343, %v1443
  %v1450 = vmul.f32 %v1344, %v1443
  %v1451 = vmul.f32 %v1345, %v1443
  %v1452 = vmul.f32 %v1346, %v1443
  %v1453 = vmul.f32 %v1347, %v1443
  %v1454 = vmul.f32 %v1348, %v1443
  %v1455 = vmul.f32 %v1349, %v1443
  %v1456 = vmul.f32 %v1350, %v1443
  %v1457 = vmul.f32 %v1351, %v1443
  %v1458 = vmul.f32 %v1352, %v1443
  %v1459 = vmul.f32 %v1353, %v1443
  %v1460 = vadd.f32 %v1423, %v1444
  %v1461 = vadd.f32 %v1424, %v1445
  %v1462 = vadd.f32 %v1425, %v1446
  %v1463 = vadd.f32 %v1426, %v1447
  %v1464 = vadd.f32 %v1427, %v1448
  %v1465 = vadd.f32 %v1428, %v1449
  %v1466 = vadd.f32 %v1429, %v1450
  %v1467 = vadd.f32 %v1430, %v1451
  %v1468 = vadd.f32 %v1431, %v1452
  %v1469 = vadd.f32 %v1432, %v1453
  %v1470 = vadd.f32 %v1433, %v1454
  %v1471 = vadd.f32 %v1434, %v1455
  %v1472 = vadd.f32 %v1435, %v1456
  %v1473 = vadd.f32 %v1436, %v1457
  %v1474 = vadd.f32 %v1437, %v1458
  %v1475 = vadd.f32 %v1438, %v1459
  %v1476 = vld [vmem:[%s1364 + $0x3] sm:$0x1]
  %v1477 = vlaneseq
  %v1478 = vshrl.u32 %v1477, 7
  %v1479 = vsub.s32 0, %v1478
  %v1480 = vrot.slane %v1476, %v1479
  %v1481 = vmul.f32 %v1340, %v1480
  %v1482 = vmul.f32 %v1341, %v1480
  %v1483 = vmul.f32 %v1342, %v1480
  %v1484 = vmul.f32 %v1343, %v1480
  %v1485 = vmul.f32 %v1344, %v1480
  %v1486 = vmul.f32 %v1345, %v1480
  %v1487 = vmul.f32 %v1346, %v1480
  %v1488 = vmul.f32 %v1347, %v1480
  %v1489 = vmul.f32 %v1348, %v1480
  %v1490 = vmul.f32 %v1349, %v1480
  %v1491 = vmul.f32 %v1350, %v1480
  %v1492 = vmul.f32 %v1351, %v1480
  %v1493 = vmul.f32 %v1352, %v1480
  %v1494 = vmul.f32 %v1353, %v1480
  %v1495 = vmul.f32 %v1354, %v1480
  %v1496 = vmul.f32 %v1355, %v1480
  %v1497 = vadd.f32 %v1460, %v1481
  %v1498 = vadd.f32 %v1461, %v1482
  %v1499 = vadd.f32 %v1462, %v1483
  %v1500 = vadd.f32 %v1463, %v1484
  %v1501 = vadd.f32 %v1464, %v1485
  %v1502 = vadd.f32 %v1465, %v1486
  %v1503 = vadd.f32 %v1466, %v1487
  %v1504 = vadd.f32 %v1467, %v1488
  %v1505 = vadd.f32 %v1468, %v1489
  %v1506 = vadd.f32 %v1469, %v1490
  %v1507 = vadd.f32 %v1470, %v1491
  %v1508 = vadd.f32 %v1471, %v1492
  %v1509 = vadd.f32 %v1472, %v1493
  %v1510 = vadd.f32 %v1473, %v1494
  %v1511 = vadd.f32 %v1474, %v1495
  %v1512 = vadd.f32 %v1475, %v1496
  %v1513 = vld [vmem:[%s1364 + $0x4] sm:$0x1]
  %v1514 = vlaneseq
  %v1515 = vshrl.u32 %v1514, 7
  %v1516 = vsub.s32 0, %v1515
  %v1517 = vrot.slane %v1513, %v1516
  %v1518 = vmul.f32 %v1342, %v1517
  %v1519 = vmul.f32 %v1343, %v1517
  %v1520 = vmul.f32 %v1344, %v1517
  %v1521 = vmul.f32 %v1345, %v1517
  %v1522 = vmul.f32 %v1346, %v1517
  %v1523 = vmul.f32 %v1347, %v1517
  %v1524 = vmul.f32 %v1348, %v1517
  %v1525 = vmul.f32 %v1349, %v1517
  %v1526 = vmul.f32 %v1350, %v1517
  %v1527 = vmul.f32 %v1351, %v1517
  %v1528 = vmul.f32 %v1352, %v1517
  %v1529 = vmul.f32 %v1353, %v1517
  %v1530 = vmul.f32 %v1354, %v1517
  %v1531 = vmul.f32 %v1355, %v1517
  %v1532 = vmul.f32 %v1356, %v1517
  %v1533 = vmul.f32 %v1357, %v1517
  %v1534 = vadd.f32 %v1497, %v1518
  %v1535 = vadd.f32 %v1498, %v1519
  %v1536 = vadd.f32 %v1499, %v1520
  %v1537 = vadd.f32 %v1500, %v1521
  %v1538 = vadd.f32 %v1501, %v1522
  %v1539 = vadd.f32 %v1502, %v1523
  %v1540 = vadd.f32 %v1503, %v1524
  %v1541 = vadd.f32 %v1504, %v1525
  %v1542 = vadd.f32 %v1505, %v1526
  %v1543 = vadd.f32 %v1506, %v1527
  %v1544 = vadd.f32 %v1507, %v1528
  %v1545 = vadd.f32 %v1508, %v1529
  %v1546 = vadd.f32 %v1509, %v1530
  %v1547 = vadd.f32 %v1510, %v1531
  %v1548 = vadd.f32 %v1511, %v1532
  %v1549 = vadd.f32 %v1512, %v1533
  %v1550 = vld [vmem:[%s1364 + $0x5] sm:$0x1]
  %v1551 = vlaneseq
  %v1552 = vshrl.u32 %v1551, 7
  %v1553 = vsub.s32 0, %v1552
  %v1554 = vrot.slane %v1550, %v1553
  %v1555 = vmul.f32 %v1344, %v1554
  %v1556 = vmul.f32 %v1345, %v1554
  %v1557 = vmul.f32 %v1346, %v1554
  %v1558 = vmul.f32 %v1347, %v1554
  %v1559 = vmul.f32 %v1348, %v1554
  %v1560 = vmul.f32 %v1349, %v1554
  %v1561 = vmul.f32 %v1350, %v1554
  %v1562 = vmul.f32 %v1351, %v1554
  %v1563 = vmul.f32 %v1352, %v1554
  %v1564 = vmul.f32 %v1353, %v1554
  %v1565 = vmul.f32 %v1354, %v1554
  %v1566 = vmul.f32 %v1355, %v1554
  %v1567 = vmul.f32 %v1356, %v1554
  %v1568 = vmul.f32 %v1357, %v1554
  %v1569 = vmul.f32 %v1358, %v1554
  %v1570 = vmul.f32 %v1359, %v1554
  %v1571 = vadd.f32 %v1534, %v1555
  %v1572 = vadd.f32 %v1535, %v1556
  %v1573 = vadd.f32 %v1536, %v1557
  %v1574 = vadd.f32 %v1537, %v1558
  %v1575 = vadd.f32 %v1538, %v1559
  %v1576 = vadd.f32 %v1539, %v1560
  %v1577 = vadd.f32 %v1540, %v1561
  %v1578 = vadd.f32 %v1541, %v1562
  %v1579 = vadd.f32 %v1542, %v1563
  %v1580 = vadd.f32 %v1543, %v1564
  %v1581 = vadd.f32 %v1544, %v1565
  %v1582 = vadd.f32 %v1545, %v1566
  %v1583 = vadd.f32 %v1546, %v1567
  %v1584 = vadd.f32 %v1547, %v1568
  %v1585 = vadd.f32 %v1548, %v1569
  %v1586 = vadd.f32 %v1549, %v1570
  %v1587 = vld [vmem:[%s1364 + $0x6] sm:$0x1]
  %v1588 = vlaneseq
  %v1589 = vshrl.u32 %v1588, 7
  %v1590 = vsub.s32 0, %v1589
  %v1591 = vrot.slane %v1587, %v1590
  %v1592 = vmul.f32 %v1346, %v1591
  %v1593 = vmul.f32 %v1347, %v1591
  %v1594 = vmul.f32 %v1348, %v1591
  %v1595 = vmul.f32 %v1349, %v1591
  %v1596 = vmul.f32 %v1350, %v1591
  %v1597 = vmul.f32 %v1351, %v1591
  %v1598 = vmul.f32 %v1352, %v1591
  %v1599 = vmul.f32 %v1353, %v1591
  %v1600 = vmul.f32 %v1354, %v1591
  %v1601 = vmul.f32 %v1355, %v1591
  %v1602 = vmul.f32 %v1356, %v1591
  %v1603 = vmul.f32 %v1357, %v1591
  %v1604 = vmul.f32 %v1358, %v1591
  %v1605 = vmul.f32 %v1359, %v1591
  %v1606 = vmul.f32 %v1360, %v1591
  %v1607 = vmul.f32 %v1361, %v1591
  %v1608 = vadd.f32 %v1571, %v1592
  %v1609 = vadd.f32 %v1572, %v1593
  %v1610 = vadd.f32 %v1573, %v1594
  %v1611 = vadd.f32 %v1574, %v1595
  %v1612 = vadd.f32 %v1575, %v1596
  %v1613 = vadd.f32 %v1576, %v1597
  %v1614 = vadd.f32 %v1577, %v1598
  %v1615 = vadd.f32 %v1578, %v1599
  %v1616 = vadd.f32 %v1579, %v1600
  %v1617 = vadd.f32 %v1580, %v1601
  %v1618 = vadd.f32 %v1581, %v1602
  %v1619 = vadd.f32 %v1582, %v1603
  %v1620 = vadd.f32 %v1583, %v1604
  %v1621 = vadd.f32 %v1584, %v1605
  %v1622 = vadd.f32 %v1585, %v1606
  %v1623 = vadd.f32 %v1586, %v1607
  %v1624 = vld [vmem:[%s1364 + $0x7] sm:$0x1]
  %v1625 = vlaneseq
  %v1626 = vshrl.u32 %v1625, 7
  %v1627 = vsub.s32 0, %v1626
  %v1628 = vrot.slane %v1624, %v1627
  %v1629 = vmul.f32 %v1348, %v1628
  %v1630 = vmul.f32 %v1349, %v1628
  %v1631 = vmul.f32 %v1350, %v1628
  %v1632 = vmul.f32 %v1351, %v1628
  %v1633 = vmul.f32 %v1352, %v1628
  %v1634 = vmul.f32 %v1353, %v1628
  %v1635 = vmul.f32 %v1354, %v1628
  %v1636 = vmul.f32 %v1355, %v1628
  %v1637 = vmul.f32 %v1356, %v1628
  %v1638 = vmul.f32 %v1357, %v1628
  %v1639 = vmul.f32 %v1358, %v1628
  %v1640 = vmul.f32 %v1359, %v1628
  %v1641 = vmul.f32 %v1360, %v1628
  %v1642 = vmul.f32 %v1361, %v1628
  %v1643 = vmul.f32 %v1362, %v1628
  %v1644 = vmul.f32 %v1363, %v1628
  %v1645 = vadd.f32 %v1608, %v1629
  %v1646 = vadd.f32 %v1609, %v1630
  %v1647 = vadd.f32 %v1610, %v1631
  %v1648 = vadd.f32 %v1611, %v1632
  %v1649 = vadd.f32 %v1612, %v1633
  %v1650 = vadd.f32 %v1613, %v1634
  %v1651 = vadd.f32 %v1614, %v1635
  %v1652 = vadd.f32 %v1615, %v1636
  %v1653 = vadd.f32 %v1616, %v1637
  %v1654 = vadd.f32 %v1617, %v1638
  %v1655 = vadd.f32 %v1618, %v1639
  %v1656 = vadd.f32 %v1619, %v1640
  %v1657 = vadd.f32 %v1620, %v1641
  %v1658 = vadd.f32 %v1621, %v1642
  %v1659 = vadd.f32 %v1622, %v1643
  %v1660 = vadd.f32 %v1623, %v1644
  %v1661 = vld [vmem:[%s26 + $0x6] sm:$0xff]
  %v1662 = vld [vmem:[%s26 + $0xe] sm:$0xff]
  %v1663 = vld [vmem:[%s26 + $0x1e] sm:$0xff]
  %v1664 = vld [vmem:[%s26 + $0x26] sm:$0xff]
  %v1665 = vld [vmem:[%s26 + $0x36] sm:$0xff]
  %v1666 = vld [vmem:[%s26 + $0x3e] sm:$0xff]
  %v1667 = vld [vmem:[%s26 + $0x4e] sm:$0xff]
  %v1668 = vld [vmem:[%s26 + $0x56] sm:$0xff]
  %v1669 = vld [vmem:[%s26 + $0x66] sm:$0xff]
  %v1670 = vld [vmem:[%s26 + $0x6e] sm:$0xff]
  %v1671 = vld [vmem:[%s26 + $0x7e] sm:$0xff]
  %v1672 = vld [vmem:[%s26 + $0x86] sm:$0xff]
  %v1673 = vld [vmem:[%s26 + $0x96] sm:$0xff]
  %v1674 = vld [vmem:[%s26 + $0x9e] sm:$0xff]
  %v1675 = vld [vmem:[%s26 + $0xae] sm:$0xff]
  %v1676 = vld [vmem:[%s26 + $0xb6] sm:$0xff]
  %v1677 = vld [vmem:[%s26 + $0xc6] sm:$0xff]
  %v1678 = vld [vmem:[%s26 + $0xce] sm:$0xff]
  %v1679 = vld [vmem:[%s26 + $0xde] sm:$0xff]
  %v1680 = vld [vmem:[%s26 + $0xe6] sm:$0xff]
  %v1681 = vld [vmem:[%s26 + $0xf6] sm:$0xff]
  %v1682 = vld [vmem:[%s26 + $0xfe] sm:$0xff]
  %v1683 = vld [vmem:[%s26 + $0x10e] sm:$0xff]
  %v1684 = vld [vmem:[%s26 + $0x116] sm:$0xff]
  %v1685 = vld [vmem:[%s26 + $0x126] sm:$0xff]
  %v1686 = vld [vmem:[%s26 + $0x12e] sm:$0xff]
  %v1687 = vld [vmem:[%s26 + $0x13e] sm:$0xff]
  %v1688 = vld [vmem:[%s26 + $0x146] sm:$0xff]
  %v1689 = vld [vmem:[%s26 + $0x156] sm:$0xff]
  %v1690 = vld [vmem:[%s26 + $0x15e] sm:$0xff]
  %s1691 = scalar_lea.vmem %s1, 48
  %v1692 = vld [vmem:[%s1691] sm:$0x1]
  %v1693 = vlaneseq
  %v1694 = vshrl.u32 %v1693, 7
  %v1695 = vsub.s32 0, %v1694
  %v1696 = vrot.slane %v1692, %v1695
  %v1697 = vmul.f32 %v1661, %v1696
  %v1698 = vmul.f32 %v1662, %v1696
  %v1699 = vmul.f32 %v1663, %v1696
  %v1700 = vmul.f32 %v1664, %v1696
  %v1701 = vmul.f32 %v1665, %v1696
  %v1702 = vmul.f32 %v1666, %v1696
  %v1703 = vmul.f32 %v1667, %v1696
  %v1704 = vmul.f32 %v1668, %v1696
  %v1705 = vmul.f32 %v1669, %v1696
  %v1706 = vmul.f32 %v1670, %v1696
  %v1707 = vmul.f32 %v1671, %v1696
  %v1708 = vmul.f32 %v1672, %v1696
  %v1709 = vmul.f32 %v1673, %v1696
  %v1710 = vmul.f32 %v1674, %v1696
  %v1711 = vmul.f32 %v1675, %v1696
  %v1712 = vmul.f32 %v1676, %v1696
  %v1713 = vadd.f32 %v1645, %v1697
  %v1714 = vadd.f32 %v1646, %v1698
  %v1715 = vadd.f32 %v1647, %v1699
  %v1716 = vadd.f32 %v1648, %v1700
  %v1717 = vadd.f32 %v1649, %v1701
  %v1718 = vadd.f32 %v1650, %v1702
  %v1719 = vadd.f32 %v1651, %v1703
  %v1720 = vadd.f32 %v1652, %v1704
  %v1721 = vadd.f32 %v1653, %v1705
  %v1722 = vadd.f32 %v1654, %v1706
  %v1723 = vadd.f32 %v1655, %v1707
  %v1724 = vadd.f32 %v1656, %v1708
  %v1725 = vadd.f32 %v1657, %v1709
  %v1726 = vadd.f32 %v1658, %v1710
  %v1727 = vadd.f32 %v1659, %v1711
  %v1728 = vadd.f32 %v1660, %v1712
  %v1729 = vld [vmem:[%s1691 + $0x1] sm:$0x1]
  %v1730 = vlaneseq
  %v1731 = vshrl.u32 %v1730, 7
  %v1732 = vsub.s32 0, %v1731
  %v1733 = vrot.slane %v1729, %v1732
  %v1734 = vmul.f32 %v1663, %v1733
  %v1735 = vmul.f32 %v1664, %v1733
  %v1736 = vmul.f32 %v1665, %v1733
  %v1737 = vmul.f32 %v1666, %v1733
  %v1738 = vmul.f32 %v1667, %v1733
  %v1739 = vmul.f32 %v1668, %v1733
  %v1740 = vmul.f32 %v1669, %v1733
  %v1741 = vmul.f32 %v1670, %v1733
  %v1742 = vmul.f32 %v1671, %v1733
  %v1743 = vmul.f32 %v1672, %v1733
  %v1744 = vmul.f32 %v1673, %v1733
  %v1745 = vmul.f32 %v1674, %v1733
  %v1746 = vmul.f32 %v1675, %v1733
  %v1747 = vmul.f32 %v1676, %v1733
  %v1748 = vmul.f32 %v1677, %v1733
  %v1749 = vmul.f32 %v1678, %v1733
  %v1750 = vadd.f32 %v1713, %v1734
  %v1751 = vadd.f32 %v1714, %v1735
  %v1752 = vadd.f32 %v1715, %v1736
  %v1753 = vadd.f32 %v1716, %v1737
  %v1754 = vadd.f32 %v1717, %v1738
  %v1755 = vadd.f32 %v1718, %v1739
  %v1756 = vadd.f32 %v1719, %v1740
  %v1757 = vadd.f32 %v1720, %v1741
  %v1758 = vadd.f32 %v1721, %v1742
  %v1759 = vadd.f32 %v1722, %v1743
  %v1760 = vadd.f32 %v1723, %v1744
  %v1761 = vadd.f32 %v1724, %v1745
  %v1762 = vadd.f32 %v1725, %v1746
  %v1763 = vadd.f32 %v1726, %v1747
  %v1764 = vadd.f32 %v1727, %v1748
  %v1765 = vadd.f32 %v1728, %v1749
  %v1766 = vld [vmem:[%s1691 + $0x2] sm:$0x1]
  %v1767 = vlaneseq
  %v1768 = vshrl.u32 %v1767, 7
  %v1769 = vsub.s32 0, %v1768
  %v1770 = vrot.slane %v1766, %v1769
  %v1771 = vmul.f32 %v1665, %v1770
  %v1772 = vmul.f32 %v1666, %v1770
  %v1773 = vmul.f32 %v1667, %v1770
  %v1774 = vmul.f32 %v1668, %v1770
  %v1775 = vmul.f32 %v1669, %v1770
  %v1776 = vmul.f32 %v1670, %v1770
  %v1777 = vmul.f32 %v1671, %v1770
  %v1778 = vmul.f32 %v1672, %v1770
  %v1779 = vmul.f32 %v1673, %v1770
  %v1780 = vmul.f32 %v1674, %v1770
  %v1781 = vmul.f32 %v1675, %v1770
  %v1782 = vmul.f32 %v1676, %v1770
  %v1783 = vmul.f32 %v1677, %v1770
  %v1784 = vmul.f32 %v1678, %v1770
  %v1785 = vmul.f32 %v1679, %v1770
  %v1786 = vmul.f32 %v1680, %v1770
  %v1787 = vadd.f32 %v1750, %v1771
  %v1788 = vadd.f32 %v1751, %v1772
  %v1789 = vadd.f32 %v1752, %v1773
  %v1790 = vadd.f32 %v1753, %v1774
  %v1791 = vadd.f32 %v1754, %v1775
  %v1792 = vadd.f32 %v1755, %v1776
  %v1793 = vadd.f32 %v1756, %v1777
  %v1794 = vadd.f32 %v1757, %v1778
  %v1795 = vadd.f32 %v1758, %v1779
  %v1796 = vadd.f32 %v1759, %v1780
  %v1797 = vadd.f32 %v1760, %v1781
  %v1798 = vadd.f32 %v1761, %v1782
  %v1799 = vadd.f32 %v1762, %v1783
  %v1800 = vadd.f32 %v1763, %v1784
  %v1801 = vadd.f32 %v1764, %v1785
  %v1802 = vadd.f32 %v1765, %v1786
  %v1803 = vld [vmem:[%s1691 + $0x3] sm:$0x1]
  %v1804 = vlaneseq
  %v1805 = vshrl.u32 %v1804, 7
  %v1806 = vsub.s32 0, %v1805
  %v1807 = vrot.slane %v1803, %v1806
  %v1808 = vmul.f32 %v1667, %v1807
  %v1809 = vmul.f32 %v1668, %v1807
  %v1810 = vmul.f32 %v1669, %v1807
  %v1811 = vmul.f32 %v1670, %v1807
  %v1812 = vmul.f32 %v1671, %v1807
  %v1813 = vmul.f32 %v1672, %v1807
  %v1814 = vmul.f32 %v1673, %v1807
  %v1815 = vmul.f32 %v1674, %v1807
  %v1816 = vmul.f32 %v1675, %v1807
  %v1817 = vmul.f32 %v1676, %v1807
  %v1818 = vmul.f32 %v1677, %v1807
  %v1819 = vmul.f32 %v1678, %v1807
  %v1820 = vmul.f32 %v1679, %v1807
  %v1821 = vmul.f32 %v1680, %v1807
  %v1822 = vmul.f32 %v1681, %v1807
  %v1823 = vmul.f32 %v1682, %v1807
  %v1824 = vadd.f32 %v1787, %v1808
  %v1825 = vadd.f32 %v1788, %v1809
  %v1826 = vadd.f32 %v1789, %v1810
  %v1827 = vadd.f32 %v1790, %v1811
  %v1828 = vadd.f32 %v1791, %v1812
  %v1829 = vadd.f32 %v1792, %v1813
  %v1830 = vadd.f32 %v1793, %v1814
  %v1831 = vadd.f32 %v1794, %v1815
  %v1832 = vadd.f32 %v1795, %v1816
  %v1833 = vadd.f32 %v1796, %v1817
  %v1834 = vadd.f32 %v1797, %v1818
  %v1835 = vadd.f32 %v1798, %v1819
  %v1836 = vadd.f32 %v1799, %v1820
  %v1837 = vadd.f32 %v1800, %v1821
  %v1838 = vadd.f32 %v1801, %v1822
  %v1839 = vadd.f32 %v1802, %v1823
  %v1840 = vld [vmem:[%s1691 + $0x4] sm:$0x1]
  %v1841 = vlaneseq
  %v1842 = vshrl.u32 %v1841, 7
  %v1843 = vsub.s32 0, %v1842
  %v1844 = vrot.slane %v1840, %v1843
  %v1845 = vmul.f32 %v1669, %v1844
  %v1846 = vmul.f32 %v1670, %v1844
  %v1847 = vmul.f32 %v1671, %v1844
  %v1848 = vmul.f32 %v1672, %v1844
  %v1849 = vmul.f32 %v1673, %v1844
  %v1850 = vmul.f32 %v1674, %v1844
  %v1851 = vmul.f32 %v1675, %v1844
  %v1852 = vmul.f32 %v1676, %v1844
  %v1853 = vmul.f32 %v1677, %v1844
  %v1854 = vmul.f32 %v1678, %v1844
  %v1855 = vmul.f32 %v1679, %v1844
  %v1856 = vmul.f32 %v1680, %v1844
  %v1857 = vmul.f32 %v1681, %v1844
  %v1858 = vmul.f32 %v1682, %v1844
  %v1859 = vmul.f32 %v1683, %v1844
  %v1860 = vmul.f32 %v1684, %v1844
  %v1861 = vadd.f32 %v1824, %v1845
  %v1862 = vadd.f32 %v1825, %v1846
  %v1863 = vadd.f32 %v1826, %v1847
  %v1864 = vadd.f32 %v1827, %v1848
  %v1865 = vadd.f32 %v1828, %v1849
  %v1866 = vadd.f32 %v1829, %v1850
  %v1867 = vadd.f32 %v1830, %v1851
  %v1868 = vadd.f32 %v1831, %v1852
  %v1869 = vadd.f32 %v1832, %v1853
  %v1870 = vadd.f32 %v1833, %v1854
  %v1871 = vadd.f32 %v1834, %v1855
  %v1872 = vadd.f32 %v1835, %v1856
  %v1873 = vadd.f32 %v1836, %v1857
  %v1874 = vadd.f32 %v1837, %v1858
  %v1875 = vadd.f32 %v1838, %v1859
  %v1876 = vadd.f32 %v1839, %v1860
  %v1877 = vld [vmem:[%s1691 + $0x5] sm:$0x1]
  %v1878 = vlaneseq
  %v1879 = vshrl.u32 %v1878, 7
  %v1880 = vsub.s32 0, %v1879
  %v1881 = vrot.slane %v1877, %v1880
  %v1882 = vmul.f32 %v1671, %v1881
  %v1883 = vmul.f32 %v1672, %v1881
  %v1884 = vmul.f32 %v1673, %v1881
  %v1885 = vmul.f32 %v1674, %v1881
  %v1886 = vmul.f32 %v1675, %v1881
  %v1887 = vmul.f32 %v1676, %v1881
  %v1888 = vmul.f32 %v1677, %v1881
  %v1889 = vmul.f32 %v1678, %v1881
  %v1890 = vmul.f32 %v1679, %v1881
  %v1891 = vmul.f32 %v1680, %v1881
  %v1892 = vmul.f32 %v1681, %v1881
  %v1893 = vmul.f32 %v1682, %v1881
  %v1894 = vmul.f32 %v1683, %v1881
  %v1895 = vmul.f32 %v1684, %v1881
  %v1896 = vmul.f32 %v1685, %v1881
  %v1897 = vmul.f32 %v1686, %v1881
  %v1898 = vadd.f32 %v1861, %v1882
  %v1899 = vadd.f32 %v1862, %v1883
  %v1900 = vadd.f32 %v1863, %v1884
  %v1901 = vadd.f32 %v1864, %v1885
  %v1902 = vadd.f32 %v1865, %v1886
  %v1903 = vadd.f32 %v1866, %v1887
  %v1904 = vadd.f32 %v1867, %v1888
  %v1905 = vadd.f32 %v1868, %v1889
  %v1906 = vadd.f32 %v1869, %v1890
  %v1907 = vadd.f32 %v1870, %v1891
  %v1908 = vadd.f32 %v1871, %v1892
  %v1909 = vadd.f32 %v1872, %v1893
  %v1910 = vadd.f32 %v1873, %v1894
  %v1911 = vadd.f32 %v1874, %v1895
  %v1912 = vadd.f32 %v1875, %v1896
  %v1913 = vadd.f32 %v1876, %v1897
  %v1914 = vld [vmem:[%s1691 + $0x6] sm:$0x1]
  %v1915 = vlaneseq
  %v1916 = vshrl.u32 %v1915, 7
  %v1917 = vsub.s32 0, %v1916
  %v1918 = vrot.slane %v1914, %v1917
  %v1919 = vmul.f32 %v1673, %v1918
  %v1920 = vmul.f32 %v1674, %v1918
  %v1921 = vmul.f32 %v1675, %v1918
  %v1922 = vmul.f32 %v1676, %v1918
  %v1923 = vmul.f32 %v1677, %v1918
  %v1924 = vmul.f32 %v1678, %v1918
  %v1925 = vmul.f32 %v1679, %v1918
  %v1926 = vmul.f32 %v1680, %v1918
  %v1927 = vmul.f32 %v1681, %v1918
  %v1928 = vmul.f32 %v1682, %v1918
  %v1929 = vmul.f32 %v1683, %v1918
  %v1930 = vmul.f32 %v1684, %v1918
  %v1931 = vmul.f32 %v1685, %v1918
  %v1932 = vmul.f32 %v1686, %v1918
  %v1933 = vmul.f32 %v1687, %v1918
  %v1934 = vmul.f32 %v1688, %v1918
  %v1935 = vadd.f32 %v1898, %v1919
  %v1936 = vadd.f32 %v1899, %v1920
  %v1937 = vadd.f32 %v1900, %v1921
  %v1938 = vadd.f32 %v1901, %v1922
  %v1939 = vadd.f32 %v1902, %v1923
  %v1940 = vadd.f32 %v1903, %v1924
  %v1941 = vadd.f32 %v1904, %v1925
  %v1942 = vadd.f32 %v1905, %v1926
  %v1943 = vadd.f32 %v1906, %v1927
  %v1944 = vadd.f32 %v1907, %v1928
  %v1945 = vadd.f32 %v1908, %v1929
  %v1946 = vadd.f32 %v1909, %v1930
  %v1947 = vadd.f32 %v1910, %v1931
  %v1948 = vadd.f32 %v1911, %v1932
  %v1949 = vadd.f32 %v1912, %v1933
  %v1950 = vadd.f32 %v1913, %v1934
  %v1951 = vld [vmem:[%s1691 + $0x7] sm:$0x1]
  %v1952 = vlaneseq
  %v1953 = vshrl.u32 %v1952, 7
  %v1954 = vsub.s32 0, %v1953
  %v1955 = vrot.slane %v1951, %v1954
  %v1956 = vmul.f32 %v1675, %v1955
  %v1957 = vmul.f32 %v1676, %v1955
  %v1958 = vmul.f32 %v1677, %v1955
  %v1959 = vmul.f32 %v1678, %v1955
  %v1960 = vmul.f32 %v1679, %v1955
  %v1961 = vmul.f32 %v1680, %v1955
  %v1962 = vmul.f32 %v1681, %v1955
  %v1963 = vmul.f32 %v1682, %v1955
  %v1964 = vmul.f32 %v1683, %v1955
  %v1965 = vmul.f32 %v1684, %v1955
  %v1966 = vmul.f32 %v1685, %v1955
  %v1967 = vmul.f32 %v1686, %v1955
  %v1968 = vmul.f32 %v1687, %v1955
  %v1969 = vmul.f32 %v1688, %v1955
  %v1970 = vmul.f32 %v1689, %v1955
  %v1971 = vmul.f32 %v1690, %v1955
  %v1972 = vadd.f32 %v1935, %v1956
  %v1973 = vadd.f32 %v1936, %v1957
  %v1974 = vadd.f32 %v1937, %v1958
  %v1975 = vadd.f32 %v1938, %v1959
  %v1976 = vadd.f32 %v1939, %v1960
  %v1977 = vadd.f32 %v1940, %v1961
  %v1978 = vadd.f32 %v1941, %v1962
  %v1979 = vadd.f32 %v1942, %v1963
  %v1980 = vadd.f32 %v1943, %v1964
  %v1981 = vadd.f32 %v1944, %v1965
  %v1982 = vadd.f32 %v1945, %v1966
  %v1983 = vadd.f32 %v1946, %v1967
  %v1984 = vadd.f32 %v1947, %v1968
  %v1985 = vadd.f32 %v1948, %v1969
  %v1986 = vadd.f32 %v1949, %v1970
  %v1987 = vadd.f32 %v1950, %v1971
  %v1988 = vld [vmem:[%s26 + $0x7] sm:$0xff]
  %v1989 = vld [vmem:[%s26 + $0xf] sm:$0xff]
  %v1990 = vld [vmem:[%s26 + $0x1f] sm:$0xff]
  %v1991 = vld [vmem:[%s26 + $0x27] sm:$0xff]
  %v1992 = vld [vmem:[%s26 + $0x37] sm:$0xff]
  %v1993 = vld [vmem:[%s26 + $0x3f] sm:$0xff]
  %v1994 = vld [vmem:[%s26 + $0x4f] sm:$0xff]
  %v1995 = vld [vmem:[%s26 + $0x57] sm:$0xff]
  %v1996 = vld [vmem:[%s26 + $0x67] sm:$0xff]
  %v1997 = vld [vmem:[%s26 + $0x6f] sm:$0xff]
  %v1998 = vld [vmem:[%s26 + $0x7f] sm:$0xff]
  %v1999 = vld [vmem:[%s26 + $0x87] sm:$0xff]
  %v2000 = vld [vmem:[%s26 + $0x97] sm:$0xff]
  %v2001 = vld [vmem:[%s26 + $0x9f] sm:$0xff]
  %v2002 = vld [vmem:[%s26 + $0xaf] sm:$0xff]
  %v2003 = vld [vmem:[%s26 + $0xb7] sm:$0xff]
  %v2004 = vld [vmem:[%s26 + $0xc7] sm:$0xff]
  %v2005 = vld [vmem:[%s26 + $0xcf] sm:$0xff]
  %v2006 = vld [vmem:[%s26 + $0xdf] sm:$0xff]
  %v2007 = vld [vmem:[%s26 + $0xe7] sm:$0xff]
  %v2008 = vld [vmem:[%s26 + $0xf7] sm:$0xff]
  %v2009 = vld [vmem:[%s26 + $0xff] sm:$0xff]
  %v2010 = vld [vmem:[%s26 + $0x10f] sm:$0xff]
  %v2011 = vld [vmem:[%s26 + $0x117] sm:$0xff]
  %v2012 = vld [vmem:[%s26 + $0x127] sm:$0xff]
  %v2013 = vld [vmem:[%s26 + $0x12f] sm:$0xff]
  %v2014 = vld [vmem:[%s26 + $0x13f] sm:$0xff]
  %v2015 = vld [vmem:[%s26 + $0x147] sm:$0xff]
  %v2016 = vld [vmem:[%s26 + $0x157] sm:$0xff]
  %v2017 = vld [vmem:[%s26 + $0x15f] sm:$0xff]
  %s2018 = scalar_lea.vmem %s1, 56
  %v2019 = vld [vmem:[%s2018] sm:$0x1]
  %v2020 = vlaneseq
  %v2021 = vshrl.u32 %v2020, 7
  %v2022 = vsub.s32 0, %v2021
  %v2023 = vrot.slane %v2019, %v2022
  %v2024 = vmul.f32 %v1988, %v2023
  %v2025 = vmul.f32 %v1989, %v2023
  %v2026 = vmul.f32 %v1990, %v2023
  %v2027 = vmul.f32 %v1991, %v2023
  %v2028 = vmul.f32 %v1992, %v2023
  %v2029 = vmul.f32 %v1993, %v2023
  %v2030 = vmul.f32 %v1994, %v2023
  %v2031 = vmul.f32 %v1995, %v2023
  %v2032 = vmul.f32 %v1996, %v2023
  %v2033 = vmul.f32 %v1997, %v2023
  %v2034 = vmul.f32 %v1998, %v2023
  %v2035 = vmul.f32 %v1999, %v2023
  %v2036 = vmul.f32 %v2000, %v2023
  %v2037 = vmul.f32 %v2001, %v2023
  %v2038 = vmul.f32 %v2002, %v2023
  %v2039 = vmul.f32 %v2003, %v2023
  %v2040 = vadd.f32 %v1972, %v2024
  %v2041 = vadd.f32 %v1973, %v2025
  %v2042 = vadd.f32 %v1974, %v2026
  %v2043 = vadd.f32 %v1975, %v2027
  %v2044 = vadd.f32 %v1976, %v2028
  %v2045 = vadd.f32 %v1977, %v2029
  %v2046 = vadd.f32 %v1978, %v2030
  %v2047 = vadd.f32 %v1979, %v2031
  %v2048 = vadd.f32 %v1980, %v2032
  %v2049 = vadd.f32 %v1981, %v2033
  %v2050 = vadd.f32 %v1982, %v2034
  %v2051 = vadd.f32 %v1983, %v2035
  %v2052 = vadd.f32 %v1984, %v2036
  %v2053 = vadd.f32 %v1985, %v2037
  %v2054 = vadd.f32 %v1986, %v2038
  %v2055 = vadd.f32 %v1987, %v2039
  %v2056 = vld [vmem:[%s2018 + $0x1] sm:$0x1]
  %v2057 = vlaneseq
  %v2058 = vshrl.u32 %v2057, 7
  %v2059 = vsub.s32 0, %v2058
  %v2060 = vrot.slane %v2056, %v2059
  %v2061 = vmul.f32 %v1990, %v2060
  %v2062 = vmul.f32 %v1991, %v2060
  %v2063 = vmul.f32 %v1992, %v2060
  %v2064 = vmul.f32 %v1993, %v2060
  %v2065 = vmul.f32 %v1994, %v2060
  %v2066 = vmul.f32 %v1995, %v2060
  %v2067 = vmul.f32 %v1996, %v2060
  %v2068 = vmul.f32 %v1997, %v2060
  %v2069 = vmul.f32 %v1998, %v2060
  %v2070 = vmul.f32 %v1999, %v2060
  %v2071 = vmul.f32 %v2000, %v2060
  %v2072 = vmul.f32 %v2001, %v2060
  %v2073 = vmul.f32 %v2002, %v2060
  %v2074 = vmul.f32 %v2003, %v2060
  %v2075 = vmul.f32 %v2004, %v2060
  %v2076 = vmul.f32 %v2005, %v2060
  %v2077 = vadd.f32 %v2040, %v2061
  %v2078 = vadd.f32 %v2041, %v2062
  %v2079 = vadd.f32 %v2042, %v2063
  %v2080 = vadd.f32 %v2043, %v2064
  %v2081 = vadd.f32 %v2044, %v2065
  %v2082 = vadd.f32 %v2045, %v2066
  %v2083 = vadd.f32 %v2046, %v2067
  %v2084 = vadd.f32 %v2047, %v2068
  %v2085 = vadd.f32 %v2048, %v2069
  %v2086 = vadd.f32 %v2049, %v2070
  %v2087 = vadd.f32 %v2050, %v2071
  %v2088 = vadd.f32 %v2051, %v2072
  %v2089 = vadd.f32 %v2052, %v2073
  %v2090 = vadd.f32 %v2053, %v2074
  %v2091 = vadd.f32 %v2054, %v2075
  %v2092 = vadd.f32 %v2055, %v2076
  %v2093 = vld [vmem:[%s2018 + $0x2] sm:$0x1]
  %v2094 = vlaneseq
  %v2095 = vshrl.u32 %v2094, 7
  %v2096 = vsub.s32 0, %v2095
  %v2097 = vrot.slane %v2093, %v2096
  %v2098 = vmul.f32 %v1992, %v2097
  %v2099 = vmul.f32 %v1993, %v2097
  %v2100 = vmul.f32 %v1994, %v2097
  %v2101 = vmul.f32 %v1995, %v2097
  %v2102 = vmul.f32 %v1996, %v2097
  %v2103 = vmul.f32 %v1997, %v2097
  %v2104 = vmul.f32 %v1998, %v2097
  %v2105 = vmul.f32 %v1999, %v2097
  %v2106 = vmul.f32 %v2000, %v2097
  %v2107 = vmul.f32 %v2001, %v2097
  %v2108 = vmul.f32 %v2002, %v2097
  %v2109 = vmul.f32 %v2003, %v2097
  %v2110 = vmul.f32 %v2004, %v2097
  %v2111 = vmul.f32 %v2005, %v2097
  %v2112 = vmul.f32 %v2006, %v2097
  %v2113 = vmul.f32 %v2007, %v2097
  %v2114 = vadd.f32 %v2077, %v2098
  %v2115 = vadd.f32 %v2078, %v2099
  %v2116 = vadd.f32 %v2079, %v2100
  %v2117 = vadd.f32 %v2080, %v2101
  %v2118 = vadd.f32 %v2081, %v2102
  %v2119 = vadd.f32 %v2082, %v2103
  %v2120 = vadd.f32 %v2083, %v2104
  %v2121 = vadd.f32 %v2084, %v2105
  %v2122 = vadd.f32 %v2085, %v2106
  %v2123 = vadd.f32 %v2086, %v2107
  %v2124 = vadd.f32 %v2087, %v2108
  %v2125 = vadd.f32 %v2088, %v2109
  %v2126 = vadd.f32 %v2089, %v2110
  %v2127 = vadd.f32 %v2090, %v2111
  %v2128 = vadd.f32 %v2091, %v2112
  %v2129 = vadd.f32 %v2092, %v2113
  %v2130 = vld [vmem:[%s2018 + $0x3] sm:$0x1]
  %v2131 = vlaneseq
  %v2132 = vshrl.u32 %v2131, 7
  %v2133 = vsub.s32 0, %v2132
  %v2134 = vrot.slane %v2130, %v2133
  %v2135 = vmul.f32 %v1994, %v2134
  %v2136 = vmul.f32 %v1995, %v2134
  %v2137 = vmul.f32 %v1996, %v2134
  %v2138 = vmul.f32 %v1997, %v2134
  %v2139 = vmul.f32 %v1998, %v2134
  %v2140 = vmul.f32 %v1999, %v2134
  %v2141 = vmul.f32 %v2000, %v2134
  %v2142 = vmul.f32 %v2001, %v2134
  %v2143 = vmul.f32 %v2002, %v2134
  %v2144 = vmul.f32 %v2003, %v2134
  %v2145 = vmul.f32 %v2004, %v2134
  %v2146 = vmul.f32 %v2005, %v2134
  %v2147 = vmul.f32 %v2006, %v2134
  %v2148 = vmul.f32 %v2007, %v2134
  %v2149 = vmul.f32 %v2008, %v2134
  %v2150 = vmul.f32 %v2009, %v2134
  %v2151 = vadd.f32 %v2114, %v2135
  %v2152 = vadd.f32 %v2115, %v2136
  %v2153 = vadd.f32 %v2116, %v2137
  %v2154 = vadd.f32 %v2117, %v2138
  %v2155 = vadd.f32 %v2118, %v2139
  %v2156 = vadd.f32 %v2119, %v2140
  %v2157 = vadd.f32 %v2120, %v2141
  %v2158 = vadd.f32 %v2121, %v2142
  %v2159 = vadd.f32 %v2122, %v2143
  %v2160 = vadd.f32 %v2123, %v2144
  %v2161 = vadd.f32 %v2124, %v2145
  %v2162 = vadd.f32 %v2125, %v2146
  %v2163 = vadd.f32 %v2126, %v2147
  %v2164 = vadd.f32 %v2127, %v2148
  %v2165 = vadd.f32 %v2128, %v2149
  %v2166 = vadd.f32 %v2129, %v2150
  %v2167 = vld [vmem:[%s2018 + $0x4] sm:$0x1]
  %v2168 = vlaneseq
  %v2169 = vshrl.u32 %v2168, 7
  %v2170 = vsub.s32 0, %v2169
  %v2171 = vrot.slane %v2167, %v2170
  %v2172 = vmul.f32 %v1996, %v2171
  %v2173 = vmul.f32 %v1997, %v2171
  %v2174 = vmul.f32 %v1998, %v2171
  %v2175 = vmul.f32 %v1999, %v2171
  %v2176 = vmul.f32 %v2000, %v2171
  %v2177 = vmul.f32 %v2001, %v2171
  %v2178 = vmul.f32 %v2002, %v2171
  %v2179 = vmul.f32 %v2003, %v2171
  %v2180 = vmul.f32 %v2004, %v2171
  %v2181 = vmul.f32 %v2005, %v2171
  %v2182 = vmul.f32 %v2006, %v2171
  %v2183 = vmul.f32 %v2007, %v2171
  %v2184 = vmul.f32 %v2008, %v2171
  %v2185 = vmul.f32 %v2009, %v2171
  %v2186 = vmul.f32 %v2010, %v2171
  %v2187 = vmul.f32 %v2011, %v2171
  %v2188 = vadd.f32 %v2151, %v2172
  %v2189 = vadd.f32 %v2152, %v2173
  %v2190 = vadd.f32 %v2153, %v2174
  %v2191 = vadd.f32 %v2154, %v2175
  %v2192 = vadd.f32 %v2155, %v2176
  %v2193 = vadd.f32 %v2156, %v2177
  %v2194 = vadd.f32 %v2157, %v2178
  %v2195 = vadd.f32 %v2158, %v2179
  %v2196 = vadd.f32 %v2159, %v2180
  %v2197 = vadd.f32 %v2160, %v2181
  %v2198 = vadd.f32 %v2161, %v2182
  %v2199 = vadd.f32 %v2162, %v2183
  %v2200 = vadd.f32 %v2163, %v2184
  %v2201 = vadd.f32 %v2164, %v2185
  %v2202 = vadd.f32 %v2165, %v2186
  %v2203 = vadd.f32 %v2166, %v2187
  %v2204 = vld [vmem:[%s2018 + $0x5] sm:$0x1]
  %v2205 = vlaneseq
  %v2206 = vshrl.u32 %v2205, 7
  %v2207 = vsub.s32 0, %v2206
  %v2208 = vrot.slane %v2204, %v2207
  %v2209 = vmul.f32 %v1998, %v2208
  %v2210 = vmul.f32 %v1999, %v2208
  %v2211 = vmul.f32 %v2000, %v2208
  %v2212 = vmul.f32 %v2001, %v2208
  %v2213 = vmul.f32 %v2002, %v2208
  %v2214 = vmul.f32 %v2003, %v2208
  %v2215 = vmul.f32 %v2004, %v2208
  %v2216 = vmul.f32 %v2005, %v2208
  %v2217 = vmul.f32 %v2006, %v2208
  %v2218 = vmul.f32 %v2007, %v2208
  %v2219 = vmul.f32 %v2008, %v2208
  %v2220 = vmul.f32 %v2009, %v2208
  %v2221 = vmul.f32 %v2010, %v2208
  %v2222 = vmul.f32 %v2011, %v2208
  %v2223 = vmul.f32 %v2012, %v2208
  %v2224 = vmul.f32 %v2013, %v2208
  %v2225 = vadd.f32 %v2188, %v2209
  %v2226 = vadd.f32 %v2189, %v2210
  %v2227 = vadd.f32 %v2190, %v2211
  %v2228 = vadd.f32 %v2191, %v2212
  %v2229 = vadd.f32 %v2192, %v2213
  %v2230 = vadd.f32 %v2193, %v2214
  %v2231 = vadd.f32 %v2194, %v2215
  %v2232 = vadd.f32 %v2195, %v2216
  %v2233 = vadd.f32 %v2196, %v2217
  %v2234 = vadd.f32 %v2197, %v2218
  %v2235 = vadd.f32 %v2198, %v2219
  %v2236 = vadd.f32 %v2199, %v2220
  %v2237 = vadd.f32 %v2200, %v2221
  %v2238 = vadd.f32 %v2201, %v2222
  %v2239 = vadd.f32 %v2202, %v2223
  %v2240 = vadd.f32 %v2203, %v2224
  %v2241 = vld [vmem:[%s2018 + $0x6] sm:$0x1]
  %v2242 = vlaneseq
  %v2243 = vshrl.u32 %v2242, 7
  %v2244 = vsub.s32 0, %v2243
  %v2245 = vrot.slane %v2241, %v2244
  %v2246 = vmul.f32 %v2000, %v2245
  %v2247 = vmul.f32 %v2001, %v2245
  %v2248 = vmul.f32 %v2002, %v2245
  %v2249 = vmul.f32 %v2003, %v2245
  %v2250 = vmul.f32 %v2004, %v2245
  %v2251 = vmul.f32 %v2005, %v2245
  %v2252 = vmul.f32 %v2006, %v2245
  %v2253 = vmul.f32 %v2007, %v2245
  %v2254 = vmul.f32 %v2008, %v2245
  %v2255 = vmul.f32 %v2009, %v2245
  %v2256 = vmul.f32 %v2010, %v2245
  %v2257 = vmul.f32 %v2011, %v2245
  %v2258 = vmul.f32 %v2012, %v2245
  %v2259 = vmul.f32 %v2013, %v2245
  %v2260 = vmul.f32 %v2014, %v2245
  %v2261 = vmul.f32 %v2015, %v2245
  %v2262 = vadd.f32 %v2225, %v2246
  %v2263 = vadd.f32 %v2226, %v2247
  %v2264 = vadd.f32 %v2227, %v2248
  %v2265 = vadd.f32 %v2228, %v2249
  %v2266 = vadd.f32 %v2229, %v2250
  %v2267 = vadd.f32 %v2230, %v2251
  %v2268 = vadd.f32 %v2231, %v2252
  %v2269 = vadd.f32 %v2232, %v2253
  %v2270 = vadd.f32 %v2233, %v2254
  %v2271 = vadd.f32 %v2234, %v2255
  %v2272 = vadd.f32 %v2235, %v2256
  %v2273 = vadd.f32 %v2236, %v2257
  %v2274 = vadd.f32 %v2237, %v2258
  %v2275 = vadd.f32 %v2238, %v2259
  %v2276 = vadd.f32 %v2239, %v2260
  %v2277 = vadd.f32 %v2240, %v2261
  %v2278 = vld [vmem:[%s2018 + $0x7] sm:$0x1]
  %v2279 = vlaneseq
  %v2280 = vshrl.u32 %v2279, 7
  %v2281 = vsub.s32 0, %v2280
  %v2282 = vrot.slane %v2278, %v2281
  %v2283 = vmul.f32 %v2002, %v2282
  %v2284 = vmul.f32 %v2003, %v2282
  %v2285 = vmul.f32 %v2004, %v2282
  %v2286 = vmul.f32 %v2005, %v2282
  %v2287 = vmul.f32 %v2006, %v2282
  %v2288 = vmul.f32 %v2007, %v2282
  %v2289 = vmul.f32 %v2008, %v2282
  %v2290 = vmul.f32 %v2009, %v2282
  %v2291 = vmul.f32 %v2010, %v2282
  %v2292 = vmul.f32 %v2011, %v2282
  %v2293 = vmul.f32 %v2012, %v2282
  %v2294 = vmul.f32 %v2013, %v2282
  %v2295 = vmul.f32 %v2014, %v2282
  %v2296 = vmul.f32 %v2015, %v2282
  %v2297 = vmul.f32 %v2016, %v2282
  %v2298 = vmul.f32 %v2017, %v2282
  %v2299 = vadd.f32 %v2262, %v2283
  %v2300 = vadd.f32 %v2263, %v2284
  %v2301 = vadd.f32 %v2264, %v2285
  %v2302 = vadd.f32 %v2265, %v2286
  %v2303 = vadd.f32 %v2266, %v2287
  %v2304 = vadd.f32 %v2267, %v2288
  %v2305 = vadd.f32 %v2268, %v2289
  %v2306 = vadd.f32 %v2269, %v2290
  %v2307 = vadd.f32 %v2270, %v2291
  %v2308 = vadd.f32 %v2271, %v2292
  %v2309 = vadd.f32 %v2272, %v2293
  %v2310 = vadd.f32 %v2273, %v2294
  %v2311 = vadd.f32 %v2274, %v2295
  %v2312 = vadd.f32 %v2275, %v2296
  %v2313 = vadd.f32 %v2276, %v2297
  %v2314 = vadd.f32 %v2277, %v2298
  %v2315 = vld [vmem:[%s26 + $0x3] sm:$0xff]
  %v2316 = vld [vmem:[%s26 + $0xb] sm:$0xff]
  %v2317 = vld [vmem:[%s26 + $0x1b] sm:$0xff]
  %v2318 = vld [vmem:[%s26 + $0x23] sm:$0xff]
  %v2319 = vld [vmem:[%s26 + $0x33] sm:$0xff]
  %v2320 = vld [vmem:[%s26 + $0x3b] sm:$0xff]
  %v2321 = vld [vmem:[%s26 + $0x4b] sm:$0xff]
  %v2322 = vld [vmem:[%s26 + $0x53] sm:$0xff]
  %v2323 = vld [vmem:[%s26 + $0x63] sm:$0xff]
  %v2324 = vld [vmem:[%s26 + $0x6b] sm:$0xff]
  %v2325 = vld [vmem:[%s26 + $0x7b] sm:$0xff]
  %v2326 = vld [vmem:[%s26 + $0x83] sm:$0xff]
  %v2327 = vld [vmem:[%s26 + $0x93] sm:$0xff]
  %v2328 = vld [vmem:[%s26 + $0x9b] sm:$0xff]
  %v2329 = vld [vmem:[%s26 + $0xab] sm:$0xff]
  %v2330 = vld [vmem:[%s26 + $0xb3] sm:$0xff]
  %v2331 = vld [vmem:[%s26 + $0xc3] sm:$0xff]
  %v2332 = vld [vmem:[%s26 + $0xcb] sm:$0xff]
  %v2333 = vld [vmem:[%s26 + $0xdb] sm:$0xff]
  %v2334 = vld [vmem:[%s26 + $0xe3] sm:$0xff]
  %v2335 = vld [vmem:[%s26 + $0xf3] sm:$0xff]
  %v2336 = vld [vmem:[%s26 + $0xfb] sm:$0xff]
  %v2337 = vld [vmem:[%s26 + $0x10b] sm:$0xff]
  %v2338 = vld [vmem:[%s26 + $0x113] sm:$0xff]
  %v2339 = vld [vmem:[%s26 + $0x123] sm:$0xff]
  %v2340 = vld [vmem:[%s26 + $0x12b] sm:$0xff]
  %v2341 = vld [vmem:[%s26 + $0x13b] sm:$0xff]
  %v2342 = vld [vmem:[%s26 + $0x143] sm:$0xff]
  %v2343 = vld [vmem:[%s26 + $0x153] sm:$0xff]
  %v2344 = vld [vmem:[%s26 + $0x15b] sm:$0xff]
  %s2345 = scalar_lea.vmem %s1, 24
  %v2346 = vld [vmem:[%s2345] sm:$0x1]
  %v2347 = vlaneseq
  %v2348 = vshrl.u32 %v2347, 7
  %v2349 = vsub.s32 0, %v2348
  %v2350 = vrot.slane %v2346, %v2349
  %v2351 = vmul.f32 %v2315, %v2350
  %v2352 = vmul.f32 %v2316, %v2350
  %v2353 = vmul.f32 %v2317, %v2350
  %v2354 = vmul.f32 %v2318, %v2350
  %v2355 = vmul.f32 %v2319, %v2350
  %v2356 = vmul.f32 %v2320, %v2350
  %v2357 = vmul.f32 %v2321, %v2350
  %v2358 = vmul.f32 %v2322, %v2350
  %v2359 = vmul.f32 %v2323, %v2350
  %v2360 = vmul.f32 %v2324, %v2350
  %v2361 = vmul.f32 %v2325, %v2350
  %v2362 = vmul.f32 %v2326, %v2350
  %v2363 = vmul.f32 %v2327, %v2350
  %v2364 = vmul.f32 %v2328, %v2350
  %v2365 = vmul.f32 %v2329, %v2350
  %v2366 = vmul.f32 %v2330, %v2350
  %v2367 = vadd.f32 %v2299, %v2351
  %v2368 = vadd.f32 %v2300, %v2352
  %v2369 = vadd.f32 %v2301, %v2353
  %v2370 = vadd.f32 %v2302, %v2354
  %v2371 = vadd.f32 %v2303, %v2355
  %v2372 = vadd.f32 %v2304, %v2356
  %v2373 = vadd.f32 %v2305, %v2357
  %v2374 = vadd.f32 %v2306, %v2358
  %v2375 = vadd.f32 %v2307, %v2359
  %v2376 = vadd.f32 %v2308, %v2360
  %v2377 = vadd.f32 %v2309, %v2361
  %v2378 = vadd.f32 %v2310, %v2362
  %v2379 = vadd.f32 %v2311, %v2363
  %v2380 = vadd.f32 %v2312, %v2364
  %v2381 = vadd.f32 %v2313, %v2365
  %v2382 = vadd.f32 %v2314, %v2366
  %v2383 = vld [vmem:[%s2345 + $0x1] sm:$0x1]
  %v2384 = vlaneseq
  %v2385 = vshrl.u32 %v2384, 7
  %v2386 = vsub.s32 0, %v2385
  %v2387 = vrot.slane %v2383, %v2386
  %v2388 = vmul.f32 %v2317, %v2387
  %v2389 = vmul.f32 %v2318, %v2387
  %v2390 = vmul.f32 %v2319, %v2387
  %v2391 = vmul.f32 %v2320, %v2387
  %v2392 = vmul.f32 %v2321, %v2387
  %v2393 = vmul.f32 %v2322, %v2387
  %v2394 = vmul.f32 %v2323, %v2387
  %v2395 = vmul.f32 %v2324, %v2387
  %v2396 = vmul.f32 %v2325, %v2387
  %v2397 = vmul.f32 %v2326, %v2387
  %v2398 = vmul.f32 %v2327, %v2387
  %v2399 = vmul.f32 %v2328, %v2387
  %v2400 = vmul.f32 %v2329, %v2387
  %v2401 = vmul.f32 %v2330, %v2387
  %v2402 = vmul.f32 %v2331, %v2387
  %v2403 = vmul.f32 %v2332, %v2387
  %v2404 = vadd.f32 %v2367, %v2388
  %v2405 = vadd.f32 %v2368, %v2389
  %v2406 = vadd.f32 %v2369, %v2390
  %v2407 = vadd.f32 %v2370, %v2391
  %v2408 = vadd.f32 %v2371, %v2392
  %v2409 = vadd.f32 %v2372, %v2393
  %v2410 = vadd.f32 %v2373, %v2394
  %v2411 = vadd.f32 %v2374, %v2395
  %v2412 = vadd.f32 %v2375, %v2396
  %v2413 = vadd.f32 %v2376, %v2397
  %v2414 = vadd.f32 %v2377, %v2398
  %v2415 = vadd.f32 %v2378, %v2399
  %v2416 = vadd.f32 %v2379, %v2400
  %v2417 = vadd.f32 %v2380, %v2401
  %v2418 = vadd.f32 %v2381, %v2402
  %v2419 = vadd.f32 %v2382, %v2403
  %v2420 = vld [vmem:[%s2345 + $0x2] sm:$0x1]
  %v2421 = vlaneseq
  %v2422 = vshrl.u32 %v2421, 7
  %v2423 = vsub.s32 0, %v2422
  %v2424 = vrot.slane %v2420, %v2423
  %v2425 = vmul.f32 %v2319, %v2424
  %v2426 = vmul.f32 %v2320, %v2424
  %v2427 = vmul.f32 %v2321, %v2424
  %v2428 = vmul.f32 %v2322, %v2424
  %v2429 = vmul.f32 %v2323, %v2424
  %v2430 = vmul.f32 %v2324, %v2424
  %v2431 = vmul.f32 %v2325, %v2424
  %v2432 = vmul.f32 %v2326, %v2424
  %v2433 = vmul.f32 %v2327, %v2424
  %v2434 = vmul.f32 %v2328, %v2424
  %v2435 = vmul.f32 %v2329, %v2424
  %v2436 = vmul.f32 %v2330, %v2424
  %v2437 = vmul.f32 %v2331, %v2424
  %v2438 = vmul.f32 %v2332, %v2424
  %v2439 = vmul.f32 %v2333, %v2424
  %v2440 = vmul.f32 %v2334, %v2424
  %v2441 = vadd.f32 %v2404, %v2425
  %v2442 = vadd.f32 %v2405, %v2426
  %v2443 = vadd.f32 %v2406, %v2427
  %v2444 = vadd.f32 %v2407, %v2428
  %v2445 = vadd.f32 %v2408, %v2429
  %v2446 = vadd.f32 %v2409, %v2430
  %v2447 = vadd.f32 %v2410, %v2431
  %v2448 = vadd.f32 %v2411, %v2432
  %v2449 = vadd.f32 %v2412, %v2433
  %v2450 = vadd.f32 %v2413, %v2434
  %v2451 = vadd.f32 %v2414, %v2435
  %v2452 = vadd.f32 %v2415, %v2436
  %v2453 = vadd.f32 %v2416, %v2437
  %v2454 = vadd.f32 %v2417, %v2438
  %v2455 = vadd.f32 %v2418, %v2439
  %v2456 = vadd.f32 %v2419, %v2440
  %v2457 = vld [vmem:[%s2345 + $0x3] sm:$0x1]
  %v2458 = vlaneseq
  %v2459 = vshrl.u32 %v2458, 7
  %v2460 = vsub.s32 0, %v2459
  %v2461 = vrot.slane %v2457, %v2460
  %v2462 = vmul.f32 %v2321, %v2461
  %v2463 = vmul.f32 %v2322, %v2461
  %v2464 = vmul.f32 %v2323, %v2461
  %v2465 = vmul.f32 %v2324, %v2461
  %v2466 = vmul.f32 %v2325, %v2461
  %v2467 = vmul.f32 %v2326, %v2461
  %v2468 = vmul.f32 %v2327, %v2461
  %v2469 = vmul.f32 %v2328, %v2461
  %v2470 = vmul.f32 %v2329, %v2461
  %v2471 = vmul.f32 %v2330, %v2461
  %v2472 = vmul.f32 %v2331, %v2461
  %v2473 = vmul.f32 %v2332, %v2461
  %v2474 = vmul.f32 %v2333, %v2461
  %v2475 = vmul.f32 %v2334, %v2461
  %v2476 = vmul.f32 %v2335, %v2461
  %v2477 = vmul.f32 %v2336, %v2461
  %v2478 = vadd.f32 %v2441, %v2462
  %v2479 = vadd.f32 %v2442, %v2463
  %v2480 = vadd.f32 %v2443, %v2464
  %v2481 = vadd.f32 %v2444, %v2465
  %v2482 = vadd.f32 %v2445, %v2466
  %v2483 = vadd.f32 %v2446, %v2467
  %v2484 = vadd.f32 %v2447, %v2468
  %v2485 = vadd.f32 %v2448, %v2469
  %v2486 = vadd.f32 %v2449, %v2470
  %v2487 = vadd.f32 %v2450, %v2471
  %v2488 = vadd.f32 %v2451, %v2472
  %v2489 = vadd.f32 %v2452, %v2473
  %v2490 = vadd.f32 %v2453, %v2474
  %v2491 = vadd.f32 %v2454, %v2475
  %v2492 = vadd.f32 %v2455, %v2476
  %v2493 = vadd.f32 %v2456, %v2477
  %v2494 = vld [vmem:[%s2345 + $0x4] sm:$0x1]
  %v2495 = vlaneseq
  %v2496 = vshrl.u32 %v2495, 7
  %v2497 = vsub.s32 0, %v2496
  %v2498 = vrot.slane %v2494, %v2497
  %v2499 = vmul.f32 %v2323, %v2498
  %v2500 = vmul.f32 %v2324, %v2498
  %v2501 = vmul.f32 %v2325, %v2498
  %v2502 = vmul.f32 %v2326, %v2498
  %v2503 = vmul.f32 %v2327, %v2498
  %v2504 = vmul.f32 %v2328, %v2498
  %v2505 = vmul.f32 %v2329, %v2498
  %v2506 = vmul.f32 %v2330, %v2498
  %v2507 = vmul.f32 %v2331, %v2498
  %v2508 = vmul.f32 %v2332, %v2498
  %v2509 = vmul.f32 %v2333, %v2498
  %v2510 = vmul.f32 %v2334, %v2498
  %v2511 = vmul.f32 %v2335, %v2498
  %v2512 = vmul.f32 %v2336, %v2498
  %v2513 = vmul.f32 %v2337, %v2498
  %v2514 = vmul.f32 %v2338, %v2498
  %v2515 = vadd.f32 %v2478, %v2499
  %v2516 = vadd.f32 %v2479, %v2500
  %v2517 = vadd.f32 %v2480, %v2501
  %v2518 = vadd.f32 %v2481, %v2502
  %v2519 = vadd.f32 %v2482, %v2503
  %v2520 = vadd.f32 %v2483, %v2504
  %v2521 = vadd.f32 %v2484, %v2505
  %v2522 = vadd.f32 %v2485, %v2506
  %v2523 = vadd.f32 %v2486, %v2507
  %v2524 = vadd.f32 %v2487, %v2508
  %v2525 = vadd.f32 %v2488, %v2509
  %v2526 = vadd.f32 %v2489, %v2510
  %v2527 = vadd.f32 %v2490, %v2511
  %v2528 = vadd.f32 %v2491, %v2512
  %v2529 = vadd.f32 %v2492, %v2513
  %v2530 = vadd.f32 %v2493, %v2514
  %v2531 = vld [vmem:[%s2345 + $0x5] sm:$0x1]
  %v2532 = vlaneseq
  %v2533 = vshrl.u32 %v2532, 7
  %v2534 = vsub.s32 0, %v2533
  %v2535 = vrot.slane %v2531, %v2534
  %v2536 = vmul.f32 %v2325, %v2535
  %v2537 = vmul.f32 %v2326, %v2535
  %v2538 = vmul.f32 %v2327, %v2535
  %v2539 = vmul.f32 %v2328, %v2535
  %v2540 = vmul.f32 %v2329, %v2535
  %v2541 = vmul.f32 %v2330, %v2535
  %v2542 = vmul.f32 %v2331, %v2535
  %v2543 = vmul.f32 %v2332, %v2535
  %v2544 = vmul.f32 %v2333, %v2535
  %v2545 = vmul.f32 %v2334, %v2535
  %v2546 = vmul.f32 %v2335, %v2535
  %v2547 = vmul.f32 %v2336, %v2535
  %v2548 = vmul.f32 %v2337, %v2535
  %v2549 = vmul.f32 %v2338, %v2535
  %v2550 = vmul.f32 %v2339, %v2535
  %v2551 = vmul.f32 %v2340, %v2535
  %v2552 = vadd.f32 %v2515, %v2536
  %v2553 = vadd.f32 %v2516, %v2537
  %v2554 = vadd.f32 %v2517, %v2538
  %v2555 = vadd.f32 %v2518, %v2539
  %v2556 = vadd.f32 %v2519, %v2540
  %v2557 = vadd.f32 %v2520, %v2541
  %v2558 = vadd.f32 %v2521, %v2542
  %v2559 = vadd.f32 %v2522, %v2543
  %v2560 = vadd.f32 %v2523, %v2544
  %v2561 = vadd.f32 %v2524, %v2545
  %v2562 = vadd.f32 %v2525, %v2546
  %v2563 = vadd.f32 %v2526, %v2547
  %v2564 = vadd.f32 %v2527, %v2548
  %v2565 = vadd.f32 %v2528, %v2549
  %v2566 = vadd.f32 %v2529, %v2550
  %v2567 = vadd.f32 %v2530, %v2551
  %v2568 = vld [vmem:[%s2345 + $0x6] sm:$0x1]
  %v2569 = vlaneseq
  %v2570 = vshrl.u32 %v2569, 7
  %v2571 = vsub.s32 0, %v2570
  %v2572 = vrot.slane %v2568, %v2571
  %v2573 = vmul.f32 %v2327, %v2572
  %v2574 = vmul.f32 %v2328, %v2572
  %v2575 = vmul.f32 %v2329, %v2572
  %v2576 = vmul.f32 %v2330, %v2572
  %v2577 = vmul.f32 %v2331, %v2572
  %v2578 = vmul.f32 %v2332, %v2572
  %v2579 = vmul.f32 %v2333, %v2572
  %v2580 = vmul.f32 %v2334, %v2572
  %v2581 = vmul.f32 %v2335, %v2572
  %v2582 = vmul.f32 %v2336, %v2572
  %v2583 = vmul.f32 %v2337, %v2572
  %v2584 = vmul.f32 %v2338, %v2572
  %v2585 = vmul.f32 %v2339, %v2572
  %v2586 = vmul.f32 %v2340, %v2572
  %v2587 = vmul.f32 %v2341, %v2572
  %v2588 = vmul.f32 %v2342, %v2572
  %v2589 = vadd.f32 %v2552, %v2573
  %v2590 = vadd.f32 %v2553, %v2574
  %v2591 = vadd.f32 %v2554, %v2575
  %v2592 = vadd.f32 %v2555, %v2576
  %v2593 = vadd.f32 %v2556, %v2577
  %v2594 = vadd.f32 %v2557, %v2578
  %v2595 = vadd.f32 %v2558, %v2579
  %v2596 = vadd.f32 %v2559, %v2580
  %v2597 = vadd.f32 %v2560, %v2581
  %v2598 = vadd.f32 %v2561, %v2582
  %v2599 = vadd.f32 %v2562, %v2583
  %v2600 = vadd.f32 %v2563, %v2584
  %v2601 = vadd.f32 %v2564, %v2585
  %v2602 = vadd.f32 %v2565, %v2586
  %v2603 = vadd.f32 %v2566, %v2587
  %v2604 = vadd.f32 %v2567, %v2588
  %v2605 = vld [vmem:[%s2345 + $0x7] sm:$0x1]
  %v2606 = vlaneseq
  %v2607 = vshrl.u32 %v2606, 7
  %v2608 = vsub.s32 0, %v2607
  %v2609 = vrot.slane %v2605, %v2608
  %v2610 = vmul.f32 %v2329, %v2609
  %v2611 = vmul.f32 %v2330, %v2609
  %v2612 = vmul.f32 %v2331, %v2609
  %v2613 = vmul.f32 %v2332, %v2609
  %v2614 = vmul.f32 %v2333, %v2609
  %v2615 = vmul.f32 %v2334, %v2609
  %v2616 = vmul.f32 %v2335, %v2609
  %v2617 = vmul.f32 %v2336, %v2609
  %v2618 = vmul.f32 %v2337, %v2609
  %v2619 = vmul.f32 %v2338, %v2609
  %v2620 = vmul.f32 %v2339, %v2609
  %v2621 = vmul.f32 %v2340, %v2609
  %v2622 = vmul.f32 %v2341, %v2609
  %v2623 = vmul.f32 %v2342, %v2609
  %v2624 = vmul.f32 %v2343, %v2609
  %v2625 = vmul.f32 %v2344, %v2609
  %v2626 = vadd.f32 %v2589, %v2610
  %v2627 = vadd.f32 %v2590, %v2611
  %v2628 = vadd.f32 %v2591, %v2612
  %v2629 = vadd.f32 %v2592, %v2613
  %v2630 = vadd.f32 %v2593, %v2614
  %v2631 = vadd.f32 %v2594, %v2615
  %v2632 = vadd.f32 %v2595, %v2616
  %v2633 = vadd.f32 %v2596, %v2617
  %v2634 = vadd.f32 %v2597, %v2618
  %v2635 = vadd.f32 %v2598, %v2619
  %v2636 = vadd.f32 %v2599, %v2620
  %v2637 = vadd.f32 %v2600, %v2621
  %v2638 = vadd.f32 %v2601, %v2622
  %v2639 = vadd.f32 %v2602, %v2623
  %v2640 = vadd.f32 %v2603, %v2624
  %v2641 = vadd.f32 %v2604, %v2625
  %v2642 = vlaneseq
  %v2643 = vshrl.u32 %v2642, 7
  %v2644 = vsub.s32 0, %v2643
  %v2645 = vrot.slane %v19, %v2644
  %v2646 = vadd.f32 %v2626, %v2645
  %v2647 = vadd.f32 %v2627, %v2645
  %v2648 = vadd.f32 %v2628, %v2645
  %v2649 = vadd.f32 %v2629, %v2645
  %v2650 = vadd.f32 %v2630, %v2645
  %v2651 = vadd.f32 %v2631, %v2645
  %v2652 = vadd.f32 %v2632, %v2645
  %v2653 = vadd.f32 %v2633, %v2645
  %v2654 = vadd.f32 %v2634, %v2645
  %v2655 = vadd.f32 %v2635, %v2645
  %v2656 = vadd.f32 %v2636, %v2645
  %v2657 = vadd.f32 %v2637, %v2645
  %v2658 = vadd.f32 %v2638, %v2645
  %v2659 = vadd.f32 %v2639, %v2645
  %v2660 = vadd.f32 %v2640, %v2645
  %v2661 = vadd.f32 %v2641, %v2645
  %v2662 = vmul.f32 %v2646, 0.5
  %v2663 = vmul.f32 %v2647, 0.5
  %v2664 = vmul.f32 %v2648, 0.5
  %v2665 = vmul.f32 %v2649, 0.5
  %v2666 = vmul.f32 %v2650, 0.5
  %v2667 = vmul.f32 %v2651, 0.5
  %v2668 = vmul.f32 %v2652, 0.5
  %v2669 = vmul.f32 %v2653, 0.5
  %v2670 = vmul.f32 %v2654, 0.5
  %v2671 = vmul.f32 %v2655, 0.5
  %v2672 = vmul.f32 %v2656, 0.5
  %v2673 = vmul.f32 %v2657, 0.5
  %v2674 = vmul.f32 %v2658, 0.5
  %v2675 = vmul.f32 %v2659, 0.5
  %v2676 = vmul.f32 %v2660, 0.5
  %v2677 = vmul.f32 %v2661, 0.5
  %v2678 = vmul.f32 %v2646, %v2646
  %v2679 = vmul.f32 %v2647, %v2647
  %v2680 = vmul.f32 %v2648, %v2648
  %v2681 = vmul.f32 %v2649, %v2649
  %v2682 = vmul.f32 %v2650, %v2650
  %v2683 = vmul.f32 %v2651, %v2651
  %v2684 = vmul.f32 %v2652, %v2652
  %v2685 = vmul.f32 %v2653, %v2653
  %v2686 = vmul.f32 %v2654, %v2654
  %v2687 = vmul.f32 %v2655, %v2655
  %v2688 = vmul.f32 %v2656, %v2656
  %v2689 = vmul.f32 %v2657, %v2657
  %v2690 = vmul.f32 %v2658, %v2658
  %v2691 = vmul.f32 %v2659, %v2659
  %v2692 = vmul.f32 %v2660, %v2660
  %v2693 = vmul.f32 %v2661, %v2661
  %v2694 = vmul.f32 %v2678, %v2646
  %v2695 = vmul.f32 %v2679, %v2647
  %v2696 = vmul.f32 %v2680, %v2648
  %v2697 = vmul.f32 %v2681, %v2649
  %v2698 = vmul.f32 %v2682, %v2650
  %v2699 = vmul.f32 %v2683, %v2651
  %v2700 = vmul.f32 %v2684, %v2652
  %v2701 = vmul.f32 %v2685, %v2653
  %v2702 = vmul.f32 %v2686, %v2654
  %v2703 = vmul.f32 %v2687, %v2655
  %v2704 = vmul.f32 %v2688, %v2656
  %v2705 = vmul.f32 %v2689, %v2657
  %v2706 = vmul.f32 %v2690, %v2658
  %v2707 = vmul.f32 %v2691, %v2659
  %v2708 = vmul.f32 %v2692, %v2660
  %v2709 = vmul.f32 %v2693, %v2661
  %v2710 = vmul.f32 %v2694, 0.044715
  %v2711 = vmul.f32 %v2695, 0.044715
  %v2712 = vmul.f32 %v2696, 0.044715
  %v2713 = vmul.f32 %v2697, 0.044715
  %v2714 = vmul.f32 %v2698, 0.044715
  %v2715 = vmul.f32 %v2699, 0.044715
  %v2716 = vmul.f32 %v2700, 0.044715
  %v2717 = vmul.f32 %v2701, 0.044715
  %v2718 = vmul.f32 %v2702, 0.044715
  %v2719 = vmul.f32 %v2703, 0.044715
  %v2720 = vmul.f32 %v2704, 0.044715
  %v2721 = vmul.f32 %v2705, 0.044715
  %v2722 = vmul.f32 %v2706, 0.044715
  %v2723 = vmul.f32 %v2707, 0.044715
  %v2724 = vmul.f32 %v2708, 0.044715
  %v2725 = vmul.f32 %v2709, 0.044715
  %v2726 = vadd.f32 %v2646, %v2710
  %v2727 = vadd.f32 %v2647, %v2711
  %v2728 = vadd.f32 %v2648, %v2712
  %v2729 = vadd.f32 %v2649, %v2713
  %v2730 = vadd.f32 %v2650, %v2714
  %v2731 = vadd.f32 %v2651, %v2715
  %v2732 = vadd.f32 %v2652, %v2716
  %v2733 = vadd.f32 %v2653, %v2717
  %v2734 = vadd.f32 %v2654, %v2718
  %v2735 = vadd.f32 %v2655, %v2719
  %v2736 = vadd.f32 %v2656, %v2720
  %v2737 = vadd.f32 %v2657, %v2721
  %v2738 = vadd.f32 %v2658, %v2722
  %v2739 = vadd.f32 %v2659, %v2723
  %v2740 = vadd.f32 %v2660, %v2724
  %v2741 = vadd.f32 %v2661, %v2725
  %v2742 = vmul.f32 %v2726, 0.7978846
  %v2743 = vmul.f32 %v2727, 0.7978846
  %v2744 = vmul.f32 %v2728, 0.7978846
  %v2745 = vmul.f32 %v2729, 0.7978846
  %v2746 = vmul.f32 %v2730, 0.7978846
  %v2747 = vmul.f32 %v2731, 0.7978846
  %v2748 = vmul.f32 %v2732, 0.7978846
  %v2749 = vmul.f32 %v2733, 0.7978846
  %v2750 = vmul.f32 %v2734, 0.7978846
  %v2751 = vmul.f32 %v2735, 0.7978846
  %v2752 = vmul.f32 %v2736, 0.7978846
  %v2753 = vmul.f32 %v2737, 0.7978846
  %v2754 = vmul.f32 %v2738, 0.7978846
  %v2755 = vmul.f32 %v2739, 0.7978846
  %v2756 = vmul.f32 %v2740, 0.7978846
  %v2757 = vmul.f32 %v2741, 0.7978846
  %v2758 = vtanh.pop %v2742
  %v2759 = vtanh.pop %v2743
  %v2760 = vtanh.pop %v2744
  %v2761 = vtanh.pop %v2745
  %v2762 = vtanh.pop %v2746
  %v2763 = vtanh.pop %v2747
  %v2764 = vtanh.pop %v2748
  %v2765 = vtanh.pop %v2749
  %v2766 = vtanh.pop %v2750
  %v2767 = vtanh.pop %v2751
  %v2768 = vtanh.pop %v2752
  %v2769 = vtanh.pop %v2753
  %v2770 = vtanh.pop %v2754
  %v2771 = vtanh.pop %v2755
  %v2772 = vtanh.pop %v2756
  %v2773 = vtanh.pop %v2757
  %v2774 = vadd.f32 %v2758, 1.0
  %v2775 = vadd.f32 %v2759, 1.0
  %v2776 = vadd.f32 %v2760, 1.0
  %v2777 = vadd.f32 %v2761, 1.0
  %v2778 = vadd.f32 %v2762, 1.0
  %v2779 = vadd.f32 %v2763, 1.0
  %v2780 = vadd.f32 %v2764, 1.0
  %v2781 = vadd.f32 %v2765, 1.0
  %v2782 = vadd.f32 %v2766, 1.0
  %v2783 = vadd.f32 %v2767, 1.0
  %v2784 = vadd.f32 %v2768, 1.0
  %v2785 = vadd.f32 %v2769, 1.0
  %v2786 = vadd.f32 %v2770, 1.0
  %v2787 = vadd.f32 %v2771, 1.0
  %v2788 = vadd.f32 %v2772, 1.0
  %v2789 = vadd.f32 %v2773, 1.0
  %v2790 = vmul.f32 %v2662, %v2774
  %v2791 = vmul.f32 %v2663, %v2775
  %v2792 = vmul.f32 %v2664, %v2776
  %v2793 = vmul.f32 %v2665, %v2777
  %v2794 = vmul.f32 %v2666, %v2778
  %v2795 = vmul.f32 %v2667, %v2779
  %v2796 = vmul.f32 %v2668, %v2780
  %v2797 = vmul.f32 %v2669, %v2781
  %v2798 = vmul.f32 %v2670, %v2782
  %v2799 = vmul.f32 %v2671, %v2783
  %v2800 = vmul.f32 %v2672, %v2784
  %v2801 = vmul.f32 %v2673, %v2785
  %v2802 = vmul.f32 %v2674, %v2786
  %v2803 = vmul.f32 %v2675, %v2787
  %v2804 = vmul.f32 %v2676, %v2788
  %v2805 = vmul.f32 %v2677, %v2789
  %v2806 = vlaneseq
  %v2807 = vshrl.u32 %v2806, 7
  %v2808 = vsub.s32 0, %v2807
  %v2809 = vrot.slane %v20, %v2808
  %v2810 = vmul.f32 %v2790, %v2809
  %v2811 = vmul.f32 %v2791, %v2809
  %v2812 = vmul.f32 %v2792, %v2809
  %v2813 = vmul.f32 %v2793, %v2809
  %v2814 = vmul.f32 %v2794, %v2809
  %v2815 = vmul.f32 %v2795, %v2809
  %v2816 = vmul.f32 %v2796, %v2809
  %v2817 = vmul.f32 %v2797, %v2809
  %v2818 = vmul.f32 %v2798, %v2809
  %v2819 = vmul.f32 %v2799, %v2809
  %v2820 = vmul.f32 %v2800, %v2809
  %v2821 = vmul.f32 %v2801, %v2809
  %v2822 = vmul.f32 %v2802, %v2809
  %v2823 = vmul.f32 %v2803, %v2809
  %v2824 = vmul.f32 %v2804, %v2809
  %v2825 = vmul.f32 %v2805, %v2809
  %v2826 = vlaneseq
  %v2827 = vshrl.u32 %v2826, 7
  %v2828 = vsub.s32 0, %v2827
  %v2829 = vrot.slane %v21, %v2828
  %v2830 = vadd.f32 %v2810, %v2829
  %v2831 = vadd.f32 %v2811, %v2829
  %v2832 = vadd.f32 %v2812, %v2829
  %v2833 = vadd.f32 %v2813, %v2829
  %v2834 = vadd.f32 %v2814, %v2829
  %v2835 = vadd.f32 %v2815, %v2829
  %v2836 = vadd.f32 %v2816, %v2829
  %v2837 = vadd.f32 %v2817, %v2829
  %v2838 = vadd.f32 %v2818, %v2829
  %v2839 = vadd.f32 %v2819, %v2829
  %v2840 = vadd.f32 %v2820, %v2829
  %v2841 = vadd.f32 %v2821, %v2829
  %v2842 = vadd.f32 %v2822, %v2829
  %v2843 = vadd.f32 %v2823, %v2829
  %v2844 = vadd.f32 %v2824, %v2829
  %v2845 = vadd.f32 %v2825, %v2829
  %v2846 = vadd.f32 %v2830, %v2321
  %v2847 = vadd.f32 %v2831, %v2322
  %v2848 = vadd.f32 %v2832, %v2323
  %v2849 = vadd.f32 %v2833, %v2324
  %v2850 = vadd.f32 %v2834, %v2325
  %v2851 = vadd.f32 %v2835, %v2326
  %v2852 = vadd.f32 %v2836, %v2327
  %v2853 = vadd.f32 %v2837, %v2328
  %v2854 = vadd.f32 %v2838, %v2329
  %v2855 = vadd.f32 %v2839, %v2330
  %v2856 = vadd.f32 %v2840, %v2331
  %v2857 = vadd.f32 %v2841, %v2332
  %v2858 = vadd.f32 %v2842, %v2333
  %v2859 = vadd.f32 %v2843, %v2334
  %v2860 = vadd.f32 %v2844, %v2335
  %v2861 = vadd.f32 %v2845, %v2336
  %v2862 = vpack.c.bf16 %v2847, %v2846
  %v2863 = vpack.c.bf16 %v2849, %v2848
  %v2864 = vpack.c.bf16 %v2851, %v2850
  %v2865 = vpack.c.bf16 %v2853, %v2852
  %v2866 = vpack.c.bf16 %v2855, %v2854
  %v2867 = vpack.c.bf16 %v2857, %v2856
  %v2868 = vpack.c.bf16 %v2859, %v2858
  %v2869 = vpack.c.bf16 %v2861, %v2860
  %2870 = vst [vmem:[#allocation2] sm:$0xff] %v2862
  %2871 = vst [vmem:[#allocation2 + $0x8] sm:$0xff] %v2863
  %2872 = vst [vmem:[#allocation2 + $0x10] sm:$0xff] %v2864
  %2873 = vst [vmem:[#allocation2 + $0x18] sm:$0xff] %v2865
  %2874 = vst [vmem:[#allocation2 + $0x20] sm:$0xff] %v2866
  %2875 = vst [vmem:[#allocation2 + $0x28] sm:$0xff] %v2867
  %2876 = vst [vmem:[#allocation2 + $0x30] sm:$0xff] %v2868
  %2877 = vst [vmem:[#allocation2 + $0x38] sm:$0xff] %v2869
  %s2878 = sadd.s32 %s18, 8
  %s2879 = smul.u32 %s2878, 24
  %s2880 = scalar_lea.vmem %s0, %s2879
  %v2881 = vld [vmem:[%s2880] sm:$0xff]
  %v2882 = vld [vmem:[%s2880 + $0x8] sm:$0xff]
  %v2883 = vld [vmem:[%s2880 + $0x18] sm:$0xff]
  %v2884 = vld [vmem:[%s2880 + $0x20] sm:$0xff]
  %v2885 = vld [vmem:[%s2880 + $0x30] sm:$0xff]
  %v2886 = vld [vmem:[%s2880 + $0x38] sm:$0xff]
  %v2887 = vld [vmem:[%s2880 + $0x48] sm:$0xff]
  %v2888 = vld [vmem:[%s2880 + $0x50] sm:$0xff]
  %v2889 = vld [vmem:[%s2880 + $0x60] sm:$0xff]
  %v2890 = vld [vmem:[%s2880 + $0x68] sm:$0xff]
  %v2891 = vld [vmem:[%s2880 + $0x78] sm:$0xff]
  %v2892 = vld [vmem:[%s2880 + $0x80] sm:$0xff]
  %v2893 = vld [vmem:[%s2880 + $0x90] sm:$0xff]
  %v2894 = vld [vmem:[%s2880 + $0x98] sm:$0xff]
  %v2895 = vld [vmem:[%s2880 + $0xa8] sm:$0xff]
  %v2896 = vld [vmem:[%s2880 + $0xb0] sm:$0xff]
  %v2897 = vld [vmem:[%s2880 + $0xc0] sm:$0xff]
  %v2898 = vld [vmem:[%s2880 + $0xc8] sm:$0xff]
  %v2899 = vld [vmem:[%s2880 + $0xd8] sm:$0xff]
  %v2900 = vld [vmem:[%s2880 + $0xe0] sm:$0xff]
  %v2901 = vld [vmem:[%s2880 + $0xf0] sm:$0xff]
  %v2902 = vld [vmem:[%s2880 + $0xf8] sm:$0xff]
  %v2903 = vld [vmem:[%s2880 + $0x108] sm:$0xff]
  %v2904 = vld [vmem:[%s2880 + $0x110] sm:$0xff]
  %v2905 = vld [vmem:[%s2880 + $0x120] sm:$0xff]
  %v2906 = vld [vmem:[%s2880 + $0x128] sm:$0xff]
  %v2907 = vld [vmem:[%s2880 + $0x138] sm:$0xff]
  %v2908 = vld [vmem:[%s2880 + $0x140] sm:$0xff]
  %v2909 = vld [vmem:[%s2880 + $0x150] sm:$0xff]
  %v2910 = vld [vmem:[%s2880 + $0x158] sm:$0xff]
  %v2911 = vld [vmem:[%s1] sm:$0x1]
  %v2912 = vlaneseq
  %v2913 = vshrl.u32 %v2912, 7
  %v2914 = vsub.s32 0, %v2913
  %v2915 = vrot.slane %v2911, %v2914
  %v2916 = vmul.f32 %v2881, %v2915
  %v2917 = vmul.f32 %v2882, %v2915
  %v2918 = vmul.f32 %v2883, %v2915
  %v2919 = vmul.f32 %v2884, %v2915
  %v2920 = vmul.f32 %v2885, %v2915
  %v2921 = vmul.f32 %v2886, %v2915
  %v2922 = vmul.f32 %v2887, %v2915
  %v2923 = vmul.f32 %v2888, %v2915
  %v2924 = vmul.f32 %v2889, %v2915
  %v2925 = vmul.f32 %v2890, %v2915
  %v2926 = vmul.f32 %v2891, %v2915
  %v2927 = vmul.f32 %v2892, %v2915
  %v2928 = vmul.f32 %v2893, %v2915
  %v2929 = vmul.f32 %v2894, %v2915
  %v2930 = vmul.f32 %v2895, %v2915
  %v2931 = vmul.f32 %v2896, %v2915
  %v2932 = vadd.f32 %v2916, 0.0
  %v2933 = vadd.f32 %v2917, 0.0
  %v2934 = vadd.f32 %v2918, 0.0
  %v2935 = vadd.f32 %v2919, 0.0
  %v2936 = vadd.f32 %v2920, 0.0
  %v2937 = vadd.f32 %v2921, 0.0
  %v2938 = vadd.f32 %v2922, 0.0
  %v2939 = vadd.f32 %v2923, 0.0
  %v2940 = vadd.f32 %v2924, 0.0
  %v2941 = vadd.f32 %v2925, 0.0
  %v2942 = vadd.f32 %v2926, 0.0
  %v2943 = vadd.f32 %v2927, 0.0
  %v2944 = vadd.f32 %v2928, 0.0
  %v2945 = vadd.f32 %v2929, 0.0
  %v2946 = vadd.f32 %v2930, 0.0
  %v2947 = vadd.f32 %v2931, 0.0
  %v2948 = vld [vmem:[%s1 + $0x1] sm:$0x1]
  %v2949 = vlaneseq
  %v2950 = vshrl.u32 %v2949, 7
  %v2951 = vsub.s32 0, %v2950
  %v2952 = vrot.slane %v2948, %v2951
  %v2953 = vmul.f32 %v2883, %v2952
  %v2954 = vmul.f32 %v2884, %v2952
  %v2955 = vmul.f32 %v2885, %v2952
  %v2956 = vmul.f32 %v2886, %v2952
  %v2957 = vmul.f32 %v2887, %v2952
  %v2958 = vmul.f32 %v2888, %v2952
  %v2959 = vmul.f32 %v2889, %v2952
  %v2960 = vmul.f32 %v2890, %v2952
  %v2961 = vmul.f32 %v2891, %v2952
  %v2962 = vmul.f32 %v2892, %v2952
  %v2963 = vmul.f32 %v2893, %v2952
  %v2964 = vmul.f32 %v2894, %v2952
  %v2965 = vmul.f32 %v2895, %v2952
  %v2966 = vmul.f32 %v2896, %v2952
  %v2967 = vmul.f32 %v2897, %v2952
  %v2968 = vmul.f32 %v2898, %v2952
  %v2969 = vadd.f32 %v2932, %v2953
  %v2970 = vadd.f32 %v2933, %v2954
  %v2971 = vadd.f32 %v2934, %v2955
  %v2972 = vadd.f32 %v2935, %v2956
  %v2973 = vadd.f32 %v2936, %v2957
  %v2974 = vadd.f32 %v2937, %v2958
  %v2975 = vadd.f32 %v2938, %v2959
  %v2976 = vadd.f32 %v2939, %v2960
  %v2977 = vadd.f32 %v2940, %v2961
  %v2978 = vadd.f32 %v2941, %v2962
  %v2979 = vadd.f32 %v2942, %v2963
  %v2980 = vadd.f32 %v2943, %v2964
  %v2981 = vadd.f32 %v2944, %v2965
  %v2982 = vadd.f32 %v2945, %v2966
  %v2983 = vadd.f32 %v2946, %v2967
  %v2984 = vadd.f32 %v2947, %v2968
  %v2985 = vld [vmem:[%s1 + $0x2] sm:$0x1]
  %v2986 = vlaneseq
  %v2987 = vshrl.u32 %v2986, 7
  %v2988 = vsub.s32 0, %v2987
  %v2989 = vrot.slane %v2985, %v2988
  %v2990 = vmul.f32 %v2885, %v2989
  %v2991 = vmul.f32 %v2886, %v2989
  %v2992 = vmul.f32 %v2887, %v2989
  %v2993 = vmul.f32 %v2888, %v2989
  %v2994 = vmul.f32 %v2889, %v2989
  %v2995 = vmul.f32 %v2890, %v2989
  %v2996 = vmul.f32 %v2891, %v2989
  %v2997 = vmul.f32 %v2892, %v2989
  %v2998 = vmul.f32 %v2893, %v2989
  %v2999 = vmul.f32 %v2894, %v2989
  %v3000 = vmul.f32 %v2895, %v2989
  %v3001 = vmul.f32 %v2896, %v2989
  %v3002 = vmul.f32 %v2897, %v2989
  %v3003 = vmul.f32 %v2898, %v2989
  %v3004 = vmul.f32 %v2899, %v2989
  %v3005 = vmul.f32 %v2900, %v2989
  %v3006 = vadd.f32 %v2969, %v2990
  %v3007 = vadd.f32 %v2970, %v2991
  %v3008 = vadd.f32 %v2971, %v2992
  %v3009 = vadd.f32 %v2972, %v2993
  %v3010 = vadd.f32 %v2973, %v2994
  %v3011 = vadd.f32 %v2974, %v2995
  %v3012 = vadd.f32 %v2975, %v2996
  %v3013 = vadd.f32 %v2976, %v2997
  %v3014 = vadd.f32 %v2977, %v2998
  %v3015 = vadd.f32 %v2978, %v2999
  %v3016 = vadd.f32 %v2979, %v3000
  %v3017 = vadd.f32 %v2980, %v3001
  %v3018 = vadd.f32 %v2981, %v3002
  %v3019 = vadd.f32 %v2982, %v3003
  %v3020 = vadd.f32 %v2983, %v3004
  %v3021 = vadd.f32 %v2984, %v3005
  %v3022 = vld [vmem:[%s1 + $0x3] sm:$0x1]
  %v3023 = vlaneseq
  %v3024 = vshrl.u32 %v3023, 7
  %v3025 = vsub.s32 0, %v3024
  %v3026 = vrot.slane %v3022, %v3025
  %v3027 = vmul.f32 %v2887, %v3026
  %v3028 = vmul.f32 %v2888, %v3026
  %v3029 = vmul.f32 %v2889, %v3026
  %v3030 = vmul.f32 %v2890, %v3026
  %v3031 = vmul.f32 %v2891, %v3026
  %v3032 = vmul.f32 %v2892, %v3026
  %v3033 = vmul.f32 %v2893, %v3026
  %v3034 = vmul.f32 %v2894, %v3026
  %v3035 = vmul.f32 %v2895, %v3026
  %v3036 = vmul.f32 %v2896, %v3026
  %v3037 = vmul.f32 %v2897, %v3026
  %v3038 = vmul.f32 %v2898, %v3026
  %v3039 = vmul.f32 %v2899, %v3026
  %v3040 = vmul.f32 %v2900, %v3026
  %v3041 = vmul.f32 %v2901, %v3026
  %v3042 = vmul.f32 %v2902, %v3026
  %v3043 = vadd.f32 %v3006, %v3027
  %v3044 = vadd.f32 %v3007, %v3028
  %v3045 = vadd.f32 %v3008, %v3029
  %v3046 = vadd.f32 %v3009, %v3030
  %v3047 = vadd.f32 %v3010, %v3031
  %v3048 = vadd.f32 %v3011, %v3032
  %v3049 = vadd.f32 %v3012, %v3033
  %v3050 = vadd.f32 %v3013, %v3034
  %v3051 = vadd.f32 %v3014, %v3035
  %v3052 = vadd.f32 %v3015, %v3036
  %v3053 = vadd.f32 %v3016, %v3037
  %v3054 = vadd.f32 %v3017, %v3038
  %v3055 = vadd.f32 %v3018, %v3039
  %v3056 = vadd.f32 %v3019, %v3040
  %v3057 = vadd.f32 %v3020, %v3041
  %v3058 = vadd.f32 %v3021, %v3042
  %v3059 = vld [vmem:[%s1 + $0x4] sm:$0x1]
  %v3060 = vlaneseq
  %v3061 = vshrl.u32 %v3060, 7
  %v3062 = vsub.s32 0, %v3061
  %v3063 = vrot.slane %v3059, %v3062
  %v3064 = vmul.f32 %v2889, %v3063
  %v3065 = vmul.f32 %v2890, %v3063
  %v3066 = vmul.f32 %v2891, %v3063
  %v3067 = vmul.f32 %v2892, %v3063
  %v3068 = vmul.f32 %v2893, %v3063
  %v3069 = vmul.f32 %v2894, %v3063
  %v3070 = vmul.f32 %v2895, %v3063
  %v3071 = vmul.f32 %v2896, %v3063
  %v3072 = vmul.f32 %v2897, %v3063
  %v3073 = vmul.f32 %v2898, %v3063
  %v3074 = vmul.f32 %v2899, %v3063
  %v3075 = vmul.f32 %v2900, %v3063
  %v3076 = vmul.f32 %v2901, %v3063
  %v3077 = vmul.f32 %v2902, %v3063
  %v3078 = vmul.f32 %v2903, %v3063
  %v3079 = vmul.f32 %v2904, %v3063
  %v3080 = vadd.f32 %v3043, %v3064
  %v3081 = vadd.f32 %v3044, %v3065
  %v3082 = vadd.f32 %v3045, %v3066
  %v3083 = vadd.f32 %v3046, %v3067
  %v3084 = vadd.f32 %v3047, %v3068
  %v3085 = vadd.f32 %v3048, %v3069
  %v3086 = vadd.f32 %v3049, %v3070
  %v3087 = vadd.f32 %v3050, %v3071
  %v3088 = vadd.f32 %v3051, %v3072
  %v3089 = vadd.f32 %v3052, %v3073
  %v3090 = vadd.f32 %v3053, %v3074
  %v3091 = vadd.f32 %v3054, %v3075
  %v3092 = vadd.f32 %v3055, %v3076
  %v3093 = vadd.f32 %v3056, %v3077
  %v3094 = vadd.f32 %v3057, %v3078
  %v3095 = vadd.f32 %v3058, %v3079
  %v3096 = vld [vmem:[%s1 + $0x5] sm:$0x1]
  %v3097 = vlaneseq
  %v3098 = vshrl.u32 %v3097, 7
  %v3099 = vsub.s32 0, %v3098
  %v3100 = vrot.slane %v3096, %v3099
  %v3101 = vmul.f32 %v2891, %v3100
  %v3102 = vmul.f32 %v2892, %v3100
  %v3103 = vmul.f32 %v2893, %v3100
  %v3104 = vmul.f32 %v2894, %v3100
  %v3105 = vmul.f32 %v2895, %v3100
  %v3106 = vmul.f32 %v2896, %v3100
  %v3107 = vmul.f32 %v2897, %v3100
  %v3108 = vmul.f32 %v2898, %v3100
  %v3109 = vmul.f32 %v2899, %v3100
  %v3110 = vmul.f32 %v2900, %v3100
  %v3111 = vmul.f32 %v2901, %v3100
  %v3112 = vmul.f32 %v2902, %v3100
  %v3113 = vmul.f32 %v2903, %v3100
  %v3114 = vmul.f32 %v2904, %v3100
  %v3115 = vmul.f32 %v2905, %v3100
  %v3116 = vmul.f32 %v2906, %v3100
  %v3117 = vadd.f32 %v3080, %v3101
  %v3118 = vadd.f32 %v3081, %v3102
  %v3119 = vadd.f32 %v3082, %v3103
  %v3120 = vadd.f32 %v3083, %v3104
  %v3121 = vadd.f32 %v3084, %v3105
  %v3122 = vadd.f32 %v3085, %v3106
  %v3123 = vadd.f32 %v3086, %v3107
  %v3124 = vadd.f32 %v3087, %v3108
  %v3125 = vadd.f32 %v3088, %v3109
  %v3126 = vadd.f32 %v3089, %v3110
  %v3127 = vadd.f32 %v3090, %v3111
  %v3128 = vadd.f32 %v3091, %v3112
  %v3129 = vadd.f32 %v3092, %v3113
  %v3130 = vadd.f32 %v3093, %v3114
  %v3131 = vadd.f32 %v3094, %v3115
  %v3132 = vadd.f32 %v3095, %v3116
  %v3133 = vld [vmem:[%s1 + $0x6] sm:$0x1]
  %v3134 = vlaneseq
  %v3135 = vshrl.u32 %v3134, 7
  %v3136 = vsub.s32 0, %v3135
  %v3137 = vrot.slane %v3133, %v3136
  %v3138 = vmul.f32 %v2893, %v3137
  %v3139 = vmul.f32 %v2894, %v3137
  %v3140 = vmul.f32 %v2895, %v3137
  %v3141 = vmul.f32 %v2896, %v3137
  %v3142 = vmul.f32 %v2897, %v3137
  %v3143 = vmul.f32 %v2898, %v3137
  %v3144 = vmul.f32 %v2899, %v3137
  %v3145 = vmul.f32 %v2900, %v3137
  %v3146 = vmul.f32 %v2901, %v3137
  %v3147 = vmul.f32 %v2902, %v3137
  %v3148 = vmul.f32 %v2903, %v3137
  %v3149 = vmul.f32 %v2904, %v3137
  %v3150 = vmul.f32 %v2905, %v3137
  %v3151 = vmul.f32 %v2906, %v3137
  %v3152 = vmul.f32 %v2907, %v3137
  %v3153 = vmul.f32 %v2908, %v3137
  %v3154 = vadd.f32 %v3117, %v3138
  %v3155 = vadd.f32 %v3118, %v3139
  %v3156 = vadd.f32 %v3119, %v3140
  %v3157 = vadd.f32 %v3120, %v3141
  %v3158 = vadd.f32 %v3121, %v3142
  %v3159 = vadd.f32 %v3122, %v3143
  %v3160 = vadd.f32 %v3123, %v3144
  %v3161 = vadd.f32 %v3124, %v3145
  %v3162 = vadd.f32 %v3125, %v3146
  %v3163 = vadd.f32 %v3126, %v3147
  %v3164 = vadd.f32 %v3127, %v3148
  %v3165 = vadd.f32 %v3128, %v3149
  %v3166 = vadd.f32 %v3129, %v3150
  %v3167 = vadd.f32 %v3130, %v3151
  %v3168 = vadd.f32 %v3131, %v3152
  %v3169 = vadd.f32 %v3132, %v3153
  %v3170 = vld [vmem:[%s1 + $0x7] sm:$0x1]
  %v3171 = vlaneseq
  %v3172 = vshrl.u32 %v3171, 7
  %v3173 = vsub.s32 0, %v3172
  %v3174 = vrot.slane %v3170, %v3173
  %v3175 = vmul.f32 %v2895, %v3174
  %v3176 = vmul.f32 %v2896, %v3174
  %v3177 = vmul.f32 %v2897, %v3174
  %v3178 = vmul.f32 %v2898, %v3174
  %v3179 = vmul.f32 %v2899, %v3174
  %v3180 = vmul.f32 %v2900, %v3174
  %v3181 = vmul.f32 %v2901, %v3174
  %v3182 = vmul.f32 %v2902, %v3174
  %v3183 = vmul.f32 %v2903, %v3174
  %v3184 = vmul.f32 %v2904, %v3174
  %v3185 = vmul.f32 %v2905, %v3174
  %v3186 = vmul.f32 %v2906, %v3174
  %v3187 = vmul.f32 %v2907, %v3174
  %v3188 = vmul.f32 %v2908, %v3174
  %v3189 = vmul.f32 %v2909, %v3174
  %v3190 = vmul.f32 %v2910, %v3174
  %v3191 = vadd.f32 %v3154, %v3175
  %v3192 = vadd.f32 %v3155, %v3176
  %v3193 = vadd.f32 %v3156, %v3177
  %v3194 = vadd.f32 %v3157, %v3178
  %v3195 = vadd.f32 %v3158, %v3179
  %v3196 = vadd.f32 %v3159, %v3180
  %v3197 = vadd.f32 %v3160, %v3181
  %v3198 = vadd.f32 %v3161, %v3182
  %v3199 = vadd.f32 %v3162, %v3183
  %v3200 = vadd.f32 %v3163, %v3184
  %v3201 = vadd.f32 %v3164, %v3185
  %v3202 = vadd.f32 %v3165, %v3186
  %v3203 = vadd.f32 %v3166, %v3187
  %v3204 = vadd.f32 %v3167, %v3188
  %v3205 = vadd.f32 %v3168, %v3189
  %v3206 = vadd.f32 %v3169, %v3190
  %v3207 = vld [vmem:[%s2880 + $0x1] sm:$0xff]
  %v3208 = vld [vmem:[%s2880 + $0x9] sm:$0xff]
  %v3209 = vld [vmem:[%s2880 + $0x19] sm:$0xff]
  %v3210 = vld [vmem:[%s2880 + $0x21] sm:$0xff]
  %v3211 = vld [vmem:[%s2880 + $0x31] sm:$0xff]
  %v3212 = vld [vmem:[%s2880 + $0x39] sm:$0xff]
  %v3213 = vld [vmem:[%s2880 + $0x49] sm:$0xff]
  %v3214 = vld [vmem:[%s2880 + $0x51] sm:$0xff]
  %v3215 = vld [vmem:[%s2880 + $0x61] sm:$0xff]
  %v3216 = vld [vmem:[%s2880 + $0x69] sm:$0xff]
  %v3217 = vld [vmem:[%s2880 + $0x79] sm:$0xff]
  %v3218 = vld [vmem:[%s2880 + $0x81] sm:$0xff]
  %v3219 = vld [vmem:[%s2880 + $0x91] sm:$0xff]
  %v3220 = vld [vmem:[%s2880 + $0x99] sm:$0xff]
  %v3221 = vld [vmem:[%s2880 + $0xa9] sm:$0xff]
  %v3222 = vld [vmem:[%s2880 + $0xb1] sm:$0xff]
  %v3223 = vld [vmem:[%s2880 + $0xc1] sm:$0xff]
  %v3224 = vld [vmem:[%s2880 + $0xc9] sm:$0xff]
  %v3225 = vld [vmem:[%s2880 + $0xd9] sm:$0xff]
  %v3226 = vld [vmem:[%s2880 + $0xe1] sm:$0xff]
  %v3227 = vld [vmem:[%s2880 + $0xf1] sm:$0xff]
  %v3228 = vld [vmem:[%s2880 + $0xf9] sm:$0xff]
  %v3229 = vld [vmem:[%s2880 + $0x109] sm:$0xff]
  %v3230 = vld [vmem:[%s2880 + $0x111] sm:$0xff]
  %v3231 = vld [vmem:[%s2880 + $0x121] sm:$0xff]
  %v3232 = vld [vmem:[%s2880 + $0x129] sm:$0xff]
  %v3233 = vld [vmem:[%s2880 + $0x139] sm:$0xff]
  %v3234 = vld [vmem:[%s2880 + $0x141] sm:$0xff]
  %v3235 = vld [vmem:[%s2880 + $0x151] sm:$0xff]
  %v3236 = vld [vmem:[%s2880 + $0x159] sm:$0xff]
  %v3237 = vld [vmem:[%s383] sm:$0x1]
  %v3238 = vlaneseq
  %v3239 = vshrl.u32 %v3238, 7
  %v3240 = vsub.s32 0, %v3239
  %v3241 = vrot.slane %v3237, %v3240
  %v3242 = vmul.f32 %v3207, %v3241
  %v3243 = vmul.f32 %v3208, %v3241
  %v3244 = vmul.f32 %v3209, %v3241
  %v3245 = vmul.f32 %v3210, %v3241
  %v3246 = vmul.f32 %v3211, %v3241
  %v3247 = vmul.f32 %v3212, %v3241
  %v3248 = vmul.f32 %v3213, %v3241
  %v3249 = vmul.f32 %v3214, %v3241
  %v3250 = vmul.f32 %v3215, %v3241
  %v3251 = vmul.f32 %v3216, %v3241
  %v3252 = vmul.f32 %v3217, %v3241
  %v3253 = vmul.f32 %v3218, %v3241
  %v3254 = vmul.f32 %v3219, %v3241
  %v3255 = vmul.f32 %v3220, %v3241
  %v3256 = vmul.f32 %v3221, %v3241
  %v3257 = vmul.f32 %v3222, %v3241
  %v3258 = vadd.f32 %v3191, %v3242
  %v3259 = vadd.f32 %v3192, %v3243
  %v3260 = vadd.f32 %v3193, %v3244
  %v3261 = vadd.f32 %v3194, %v3245
  %v3262 = vadd.f32 %v3195, %v3246
  %v3263 = vadd.f32 %v3196, %v3247
  %v3264 = vadd.f32 %v3197, %v3248
  %v3265 = vadd.f32 %v3198, %v3249
  %v3266 = vadd.f32 %v3199, %v3250
  %v3267 = vadd.f32 %v3200, %v3251
  %v3268 = vadd.f32 %v3201, %v3252
  %v3269 = vadd.f32 %v3202, %v3253
  %v3270 = vadd.f32 %v3203, %v3254
  %v3271 = vadd.f32 %v3204, %v3255
  %v3272 = vadd.f32 %v3205, %v3256
  %v3273 = vadd.f32 %v3206, %v3257
  %v3274 = vld [vmem:[%s383 + $0x1] sm:$0x1]
  %v3275 = vlaneseq
  %v3276 = vshrl.u32 %v3275, 7
  %v3277 = vsub.s32 0, %v3276
  %v3278 = vrot.slane %v3274, %v3277
  %v3279 = vmul.f32 %v3209, %v3278
  %v3280 = vmul.f32 %v3210, %v3278
  %v3281 = vmul.f32 %v3211, %v3278
  %v3282 = vmul.f32 %v3212, %v3278
  %v3283 = vmul.f32 %v3213, %v3278
  %v3284 = vmul.f32 %v3214, %v3278
  %v3285 = vmul.f32 %v3215, %v3278
  %v3286 = vmul.f32 %v3216, %v3278
  %v3287 = vmul.f32 %v3217, %v3278
  %v3288 = vmul.f32 %v3218, %v3278
  %v3289 = vmul.f32 %v3219, %v3278
  %v3290 = vmul.f32 %v3220, %v3278
  %v3291 = vmul.f32 %v3221, %v3278
  %v3292 = vmul.f32 %v3222, %v3278
  %v3293 = vmul.f32 %v3223, %v3278
  %v3294 = vmul.f32 %v3224, %v3278
  %v3295 = vadd.f32 %v3258, %v3279
  %v3296 = vadd.f32 %v3259, %v3280
  %v3297 = vadd.f32 %v3260, %v3281
  %v3298 = vadd.f32 %v3261, %v3282
  %v3299 = vadd.f32 %v3262, %v3283
  %v3300 = vadd.f32 %v3263, %v3284
  %v3301 = vadd.f32 %v3264, %v3285
  %v3302 = vadd.f32 %v3265, %v3286
  %v3303 = vadd.f32 %v3266, %v3287
  %v3304 = vadd.f32 %v3267, %v3288
  %v3305 = vadd.f32 %v3268, %v3289
  %v3306 = vadd.f32 %v3269, %v3290
  %v3307 = vadd.f32 %v3270, %v3291
  %v3308 = vadd.f32 %v3271, %v3292
  %v3309 = vadd.f32 %v3272, %v3293
  %v3310 = vadd.f32 %v3273, %v3294
  %v3311 = vld [vmem:[%s383 + $0x2] sm:$0x1]
  %v3312 = vlaneseq
  %v3313 = vshrl.u32 %v3312, 7
  %v3314 = vsub.s32 0, %v3313
  %v3315 = vrot.slane %v3311, %v3314
  %v3316 = vmul.f32 %v3211, %v3315
  %v3317 = vmul.f32 %v3212, %v3315
  %v3318 = vmul.f32 %v3213, %v3315
  %v3319 = vmul.f32 %v3214, %v3315
  %v3320 = vmul.f32 %v3215, %v3315
  %v3321 = vmul.f32 %v3216, %v3315
  %v3322 = vmul.f32 %v3217, %v3315
  %v3323 = vmul.f32 %v3218, %v3315
  %v3324 = vmul.f32 %v3219, %v3315
  %v3325 = vmul.f32 %v3220, %v3315
  %v3326 = vmul.f32 %v3221, %v3315
  %v3327 = vmul.f32 %v3222, %v3315
  %v3328 = vmul.f32 %v3223, %v3315
  %v3329 = vmul.f32 %v3224, %v3315
  %v3330 = vmul.f32 %v3225, %v3315
  %v3331 = vmul.f32 %v3226, %v3315
  %v3332 = vadd.f32 %v3295, %v3316
  %v3333 = vadd.f32 %v3296, %v3317
  %v3334 = vadd.f32 %v3297, %v3318
  %v3335 = vadd.f32 %v3298, %v3319
  %v3336 = vadd.f32 %v3299, %v3320
  %v3337 = vadd.f32 %v3300, %v3321
  %v3338 = vadd.f32 %v3301, %v3322
  %v3339 = vadd.f32 %v3302, %v3323
  %v3340 = vadd.f32 %v3303, %v3324
  %v3341 = vadd.f32 %v3304, %v3325
  %v3342 = vadd.f32 %v3305, %v3326
  %v3343 = vadd.f32 %v3306, %v3327
  %v3344 = vadd.f32 %v3307, %v3328
  %v3345 = vadd.f32 %v3308, %v3329
  %v3346 = vadd.f32 %v3309, %v3330
  %v3347 = vadd.f32 %v3310, %v3331
  %v3348 = vld [vmem:[%s383 + $0x3] sm:$0x1]
  %v3349 = vlaneseq
  %v3350 = vshrl.u32 %v3349, 7
  %v3351 = vsub.s32 0, %v3350
  %v3352 = vrot.slane %v3348, %v3351
  %v3353 = vmul.f32 %v3213, %v3352
  %v3354 = vmul.f32 %v3214, %v3352
  %v3355 = vmul.f32 %v3215, %v3352
  %v3356 = vmul.f32 %v3216, %v3352
  %v3357 = vmul.f32 %v3217, %v3352
  %v3358 = vmul.f32 %v3218, %v3352
  %v3359 = vmul.f32 %v3219, %v3352
  %v3360 = vmul.f32 %v3220, %v3352
  %v3361 = vmul.f32 %v3221, %v3352
  %v3362 = vmul.f32 %v3222, %v3352
  %v3363 = vmul.f32 %v3223, %v3352
  %v3364 = vmul.f32 %v3224, %v3352
  %v3365 = vmul.f32 %v3225, %v3352
  %v3366 = vmul.f32 %v3226, %v3352
  %v3367 = vmul.f32 %v3227, %v3352
  %v3368 = vmul.f32 %v3228, %v3352
  %v3369 = vadd.f32 %v3332, %v3353
  %v3370 = vadd.f32 %v3333, %v3354
  %v3371 = vadd.f32 %v3334, %v3355
  %v3372 = vadd.f32 %v3335, %v3356
  %v3373 = vadd.f32 %v3336, %v3357
  %v3374 = vadd.f32 %v3337, %v3358
  %v3375 = vadd.f32 %v3338, %v3359
  %v3376 = vadd.f32 %v3339, %v3360
  %v3377 = vadd.f32 %v3340, %v3361
  %v3378 = vadd.f32 %v3341, %v3362
  %v3379 = vadd.f32 %v3342, %v3363
  %v3380 = vadd.f32 %v3343, %v3364
  %v3381 = vadd.f32 %v3344, %v3365
  %v3382 = vadd.f32 %v3345, %v3366
  %v3383 = vadd.f32 %v3346, %v3367
  %v3384 = vadd.f32 %v3347, %v3368
  %v3385 = vld [vmem:[%s383 + $0x4] sm:$0x1]
  %v3386 = vlaneseq
  %v3387 = vshrl.u32 %v3386, 7
  %v3388 = vsub.s32 0, %v3387
  %v3389 = vrot.slane %v3385, %v3388
  %v3390 = vmul.f32 %v3215, %v3389
  %v3391 = vmul.f32 %v3216, %v3389
  %v3392 = vmul.f32 %v3217, %v3389
  %v3393 = vmul.f32 %v3218, %v3389
  %v3394 = vmul.f32 %v3219, %v3389
  %v3395 = vmul.f32 %v3220, %v3389
  %v3396 = vmul.f32 %v3221, %v3389
  %v3397 = vmul.f32 %v3222, %v3389
  %v3398 = vmul.f32 %v3223, %v3389
  %v3399 = vmul.f32 %v3224, %v3389
  %v3400 = vmul.f32 %v3225, %v3389
  %v3401 = vmul.f32 %v3226, %v3389
  %v3402 = vmul.f32 %v3227, %v3389
  %v3403 = vmul.f32 %v3228, %v3389
  %v3404 = vmul.f32 %v3229, %v3389
  %v3405 = vmul.f32 %v3230, %v3389
  %v3406 = vadd.f32 %v3369, %v3390
  %v3407 = vadd.f32 %v3370, %v3391
  %v3408 = vadd.f32 %v3371, %v3392
  %v3409 = vadd.f32 %v3372, %v3393
  %v3410 = vadd.f32 %v3373, %v3394
  %v3411 = vadd.f32 %v3374, %v3395
  %v3412 = vadd.f32 %v3375, %v3396
  %v3413 = vadd.f32 %v3376, %v3397
  %v3414 = vadd.f32 %v3377, %v3398
  %v3415 = vadd.f32 %v3378, %v3399
  %v3416 = vadd.f32 %v3379, %v3400
  %v3417 = vadd.f32 %v3380, %v3401
  %v3418 = vadd.f32 %v3381, %v3402
  %v3419 = vadd.f32 %v3382, %v3403
  %v3420 = vadd.f32 %v3383, %v3404
  %v3421 = vadd.f32 %v3384, %v3405
  %v3422 = vld [vmem:[%s383 + $0x5] sm:$0x1]
  %v3423 = vlaneseq
  %v3424 = vshrl.u32 %v3423, 7
  %v3425 = vsub.s32 0, %v3424
  %v3426 = vrot.slane %v3422, %v3425
  %v3427 = vmul.f32 %v3217, %v3426
  %v3428 = vmul.f32 %v3218, %v3426
  %v3429 = vmul.f32 %v3219, %v3426
  %v3430 = vmul.f32 %v3220, %v3426
  %v3431 = vmul.f32 %v3221, %v3426
  %v3432 = vmul.f32 %v3222, %v3426
  %v3433 = vmul.f32 %v3223, %v3426
  %v3434 = vmul.f32 %v3224, %v3426
  %v3435 = vmul.f32 %v3225, %v3426
  %v3436 = vmul.f32 %v3226, %v3426
  %v3437 = vmul.f32 %v3227, %v3426
  %v3438 = vmul.f32 %v3228, %v3426
  %v3439 = vmul.f32 %v3229, %v3426
  %v3440 = vmul.f32 %v3230, %v3426
  %v3441 = vmul.f32 %v3231, %v3426
  %v3442 = vmul.f32 %v3232, %v3426
  %v3443 = vadd.f32 %v3406, %v3427
  %v3444 = vadd.f32 %v3407, %v3428
  %v3445 = vadd.f32 %v3408, %v3429
  %v3446 = vadd.f32 %v3409, %v3430
  %v3447 = vadd.f32 %v3410, %v3431
  %v3448 = vadd.f32 %v3411, %v3432
  %v3449 = vadd.f32 %v3412, %v3433
  %v3450 = vadd.f32 %v3413, %v3434
  %v3451 = vadd.f32 %v3414, %v3435
  %v3452 = vadd.f32 %v3415, %v3436
  %v3453 = vadd.f32 %v3416, %v3437
  %v3454 = vadd.f32 %v3417, %v3438
  %v3455 = vadd.f32 %v3418, %v3439
  %v3456 = vadd.f32 %v3419, %v3440
  %v3457 = vadd.f32 %v3420, %v3441
  %v3458 = vadd.f32 %v3421, %v3442
  %v3459 = vld [vmem:[%s383 + $0x6] sm:$0x1]
  %v3460 = vlaneseq
  %v3461 = vshrl.u32 %v3460, 7
  %v3462 = vsub.s32 0, %v3461
  %v3463 = vrot.slane %v3459, %v3462
  %v3464 = vmul.f32 %v3219, %v3463
  %v3465 = vmul.f32 %v3220, %v3463
  %v3466 = vmul.f32 %v3221, %v3463
  %v3467 = vmul.f32 %v3222, %v3463
  %v3468 = vmul.f32 %v3223, %v3463
  %v3469 = vmul.f32 %v3224, %v3463
  %v3470 = vmul.f32 %v3225, %v3463
  %v3471 = vmul.f32 %v3226, %v3463
  %v3472 = vmul.f32 %v3227, %v3463
  %v3473 = vmul.f32 %v3228, %v3463
  %v3474 = vmul.f32 %v3229, %v3463
  %v3475 = vmul.f32 %v3230, %v3463
  %v3476 = vmul.f32 %v3231, %v3463
  %v3477 = vmul.f32 %v3232, %v3463
  %v3478 = vmul.f32 %v3233, %v3463
  %v3479 = vmul.f32 %v3234, %v3463
  %v3480 = vadd.f32 %v3443, %v3464
  %v3481 = vadd.f32 %v3444, %v3465
  %v3482 = vadd.f32 %v3445, %v3466
  %v3483 = vadd.f32 %v3446, %v3467
  %v3484 = vadd.f32 %v3447, %v3468
  %v3485 = vadd.f32 %v3448, %v3469
  %v3486 = vadd.f32 %v3449, %v3470
  %v3487 = vadd.f32 %v3450, %v3471
  %v3488 = vadd.f32 %v3451, %v3472
  %v3489 = vadd.f32 %v3452, %v3473
  %v3490 = vadd.f32 %v3453, %v3474
  %v3491 = vadd.f32 %v3454, %v3475
  %v3492 = vadd.f32 %v3455, %v3476
  %v3493 = vadd.f32 %v3456, %v3477
  %v3494 = vadd.f32 %v3457, %v3478
  %v3495 = vadd.f32 %v3458, %v3479
  %v3496 = vld [vmem:[%s383 + $0x7] sm:$0x1]
  %v3497 = vlaneseq
  %v3498 = vshrl.u32 %v3497, 7
  %v3499 = vsub.s32 0, %v3498
  %v3500 = vrot.slane %v3496, %v3499
  %v3501 = vmul.f32 %v3221, %v3500
  %v3502 = vmul.f32 %v3222, %v3500
  %v3503 = vmul.f32 %v3223, %v3500
  %v3504 = vmul.f32 %v3224, %v3500
  %v3505 = vmul.f32 %v3225, %v3500
  %v3506 = vmul.f32 %v3226, %v3500
  %v3507 = vmul.f32 %v3227, %v3500
  %v3508 = vmul.f32 %v3228, %v3500
  %v3509 = vmul.f32 %v3229, %v3500
  %v3510 = vmul.f32 %v3230, %v3500
  %v3511 = vmul.f32 %v3231, %v3500
  %v3512 = vmul.f32 %v3232, %v3500
  %v3513 = vmul.f32 %v3233, %v3500
  %v3514 = vmul.f32 %v3234, %v3500
  %v3515 = vmul.f32 %v3235, %v3500
  %v3516 = vmul.f32 %v3236, %v3500
  %v3517 = vadd.f32 %v3480, %v3501
  %v3518 = vadd.f32 %v3481, %v3502
  %v3519 = vadd.f32 %v3482, %v3503
  %v3520 = vadd.f32 %v3483, %v3504
  %v3521 = vadd.f32 %v3484, %v3505
  %v3522 = vadd.f32 %v3485, %v3506
  %v3523 = vadd.f32 %v3486, %v3507
  %v3524 = vadd.f32 %v3487, %v3508
  %v3525 = vadd.f32 %v3488, %v3509
  %v3526 = vadd.f32 %v3489, %v3510
  %v3527 = vadd.f32 %v3490, %v3511
  %v3528 = vadd.f32 %v3491, %v3512
  %v3529 = vadd.f32 %v3492, %v3513
  %v3530 = vadd.f32 %v3493, %v3514
  %v3531 = vadd.f32 %v3494, %v3515
  %v3532 = vadd.f32 %v3495, %v3516
  %v3533 = vld [vmem:[%s2880 + $0x2] sm:$0xff]
  %v3534 = vld [vmem:[%s2880 + $0xa] sm:$0xff]
  %v3535 = vld [vmem:[%s2880 + $0x1a] sm:$0xff]
  %v3536 = vld [vmem:[%s2880 + $0x22] sm:$0xff]
  %v3537 = vld [vmem:[%s2880 + $0x32] sm:$0xff]
  %v3538 = vld [vmem:[%s2880 + $0x3a] sm:$0xff]
  %v3539 = vld [vmem:[%s2880 + $0x4a] sm:$0xff]
  %v3540 = vld [vmem:[%s2880 + $0x52] sm:$0xff]
  %v3541 = vld [vmem:[%s2880 + $0x62] sm:$0xff]
  %v3542 = vld [vmem:[%s2880 + $0x6a] sm:$0xff]
  %v3543 = vld [vmem:[%s2880 + $0x7a] sm:$0xff]
  %v3544 = vld [vmem:[%s2880 + $0x82] sm:$0xff]
  %v3545 = vld [vmem:[%s2880 + $0x92] sm:$0xff]
  %v3546 = vld [vmem:[%s2880 + $0x9a] sm:$0xff]
  %v3547 = vld [vmem:[%s2880 + $0xaa] sm:$0xff]
  %v3548 = vld [vmem:[%s2880 + $0xb2] sm:$0xff]
  %v3549 = vld [vmem:[%s2880 + $0xc2] sm:$0xff]
  %v3550 = vld [vmem:[%s2880 + $0xca] sm:$0xff]
  %v3551 = vld [vmem:[%s2880 + $0xda] sm:$0xff]
  %v3552 = vld [vmem:[%s2880 + $0xe2] sm:$0xff]
  %v3553 = vld [vmem:[%s2880 + $0xf2] sm:$0xff]
  %v3554 = vld [vmem:[%s2880 + $0xfa] sm:$0xff]
  %v3555 = vld [vmem:[%s2880 + $0x10a] sm:$0xff]
  %v3556 = vld [vmem:[%s2880 + $0x112] sm:$0xff]
  %v3557 = vld [vmem:[%s2880 + $0x122] sm:$0xff]
  %v3558 = vld [vmem:[%s2880 + $0x12a] sm:$0xff]
  %v3559 = vld [vmem:[%s2880 + $0x13a] sm:$0xff]
  %v3560 = vld [vmem:[%s2880 + $0x142] sm:$0xff]
  %v3561 = vld [vmem:[%s2880 + $0x152] sm:$0xff]
  %v3562 = vld [vmem:[%s2880 + $0x15a] sm:$0xff]
  %v3563 = vld [vmem:[%s710] sm:$0x1]
  %v3564 = vlaneseq
  %v3565 = vshrl.u32 %v3564, 7
  %v3566 = vsub.s32 0, %v3565
  %v3567 = vrot.slane %v3563, %v3566
  %v3568 = vmul.f32 %v3533, %v3567
  %v3569 = vmul.f32 %v3534, %v3567
  %v3570 = vmul.f32 %v3535, %v3567
  %v3571 = vmul.f32 %v3536, %v3567
  %v3572 = vmul.f32 %v3537, %v3567
  %v3573 = vmul.f32 %v3538, %v3567
  %v3574 = vmul.f32 %v3539, %v3567
  %v3575 = vmul.f32 %v3540, %v3567
  %v3576 = vmul.f32 %v3541, %v3567
  %v3577 = vmul.f32 %v3542, %v3567
  %v3578 = vmul.f32 %v3543, %v3567
  %v3579 = vmul.f32 %v3544, %v3567
  %v3580 = vmul.f32 %v3545, %v3567
  %v3581 = vmul.f32 %v3546, %v3567
  %v3582 = vmul.f32 %v3547, %v3567
  %v3583 = vmul.f32 %v3548, %v3567
  %v3584 = vadd.f32 %v3517, %v3568
  %v3585 = vadd.f32 %v3518, %v3569
  %v3586 = vadd.f32 %v3519, %v3570
  %v3587 = vadd.f32 %v3520, %v3571
  %v3588 = vadd.f32 %v3521, %v3572
  %v3589 = vadd.f32 %v3522, %v3573
  %v3590 = vadd.f32 %v3523, %v3574
  %v3591 = vadd.f32 %v3524, %v3575
  %v3592 = vadd.f32 %v3525, %v3576
  %v3593 = vadd.f32 %v3526, %v3577
  %v3594 = vadd.f32 %v3527, %v3578
  %v3595 = vadd.f32 %v3528, %v3579
  %v3596 = vadd.f32 %v3529, %v3580
  %v3597 = vadd.f32 %v3530, %v3581
  %v3598 = vadd.f32 %v3531, %v3582
  %v3599 = vadd.f32 %v3532, %v3583
  %v3600 = vld [vmem:[%s710 + $0x1] sm:$0x1]
  %v3601 = vlaneseq
  %v3602 = vshrl.u32 %v3601, 7
  %v3603 = vsub.s32 0, %v3602
  %v3604 = vrot.slane %v3600, %v3603
  %v3605 = vmul.f32 %v3535, %v3604
  %v3606 = vmul.f32 %v3536, %v3604
  %v3607 = vmul.f32 %v3537, %v3604
  %v3608 = vmul.f32 %v3538, %v3604
  %v3609 = vmul.f32 %v3539, %v3604
  %v3610 = vmul.f32 %v3540, %v3604
  %v3611 = vmul.f32 %v3541, %v3604
  %v3612 = vmul.f32 %v3542, %v3604
  %v3613 = vmul.f32 %v3543, %v3604
  %v3614 = vmul.f32 %v3544, %v3604
  %v3615 = vmul.f32 %v3545, %v3604
  %v3616 = vmul.f32 %v3546, %v3604
  %v3617 = vmul.f32 %v3547, %v3604
  %v3618 = vmul.f32 %v3548, %v3604
  %v3619 = vmul.f32 %v3549, %v3604
  %v3620 = vmul.f32 %v3550, %v3604
  %v3621 = vadd.f32 %v3584, %v3605
  %v3622 = vadd.f32 %v3585, %v3606
  %v3623 = vadd.f32 %v3586, %v3607
  %v3624 = vadd.f32 %v3587, %v3608
  %v3625 = vadd.f32 %v3588, %v3609
  %v3626 = vadd.f32 %v3589, %v3610
  %v3627 = vadd.f32 %v3590, %v3611
  %v3628 = vadd.f32 %v3591, %v3612
  %v3629 = vadd.f32 %v3592, %v3613
  %v3630 = vadd.f32 %v3593, %v3614
  %v3631 = vadd.f32 %v3594, %v3615
  %v3632 = vadd.f32 %v3595, %v3616
  %v3633 = vadd.f32 %v3596, %v3617
  %v3634 = vadd.f32 %v3597, %v3618
  %v3635 = vadd.f32 %v3598, %v3619
  %v3636 = vadd.f32 %v3599, %v3620
  %v3637 = vld [vmem:[%s710 + $0x2] sm:$0x1]
  %v3638 = vlaneseq
  %v3639 = vshrl.u32 %v3638, 7
  %v3640 = vsub.s32 0, %v3639
  %v3641 = vrot.slane %v3637, %v3640
  %v3642 = vmul.f32 %v3537, %v3641
  %v3643 = vmul.f32 %v3538, %v3641
  %v3644 = vmul.f32 %v3539, %v3641
  %v3645 = vmul.f32 %v3540, %v3641
  %v3646 = vmul.f32 %v3541, %v3641
  %v3647 = vmul.f32 %v3542, %v3641
  %v3648 = vmul.f32 %v3543, %v3641
  %v3649 = vmul.f32 %v3544, %v3641
  %v3650 = vmul.f32 %v3545, %v3641
  %v3651 = vmul.f32 %v3546, %v3641
  %v3652 = vmul.f32 %v3547, %v3641
  %v3653 = vmul.f32 %v3548, %v3641
  %v3654 = vmul.f32 %v3549, %v3641
  %v3655 = vmul.f32 %v3550, %v3641
  %v3656 = vmul.f32 %v3551, %v3641
  %v3657 = vmul.f32 %v3552, %v3641
  %v3658 = vadd.f32 %v3621, %v3642
  %v3659 = vadd.f32 %v3622, %v3643
  %v3660 = vadd.f32 %v3623, %v3644
  %v3661 = vadd.f32 %v3624, %v3645
  %v3662 = vadd.f32 %v3625, %v3646
  %v3663 = vadd.f32 %v3626, %v3647
  %v3664 = vadd.f32 %v3627, %v3648
  %v3665 = vadd.f32 %v3628, %v3649
  %v3666 = vadd.f32 %v3629, %v3650
  %v3667 = vadd.f32 %v3630, %v3651
  %v3668 = vadd.f32 %v3631, %v3652
  %v3669 = vadd.f32 %v3632, %v3653
  %v3670 = vadd.f32 %v3633, %v3654
  %v3671 = vadd.f32 %v3634, %v3655
  %v3672 = vadd.f32 %v3635, %v3656
  %v3673 = vadd.f32 %v3636, %v3657
  %v3674 = vld [vmem:[%s710 + $0x3] sm:$0x1]
  %v3675 = vlaneseq
  %v3676 = vshrl.u32 %v3675, 7
  %v3677 = vsub.s32 0, %v3676
  %v3678 = vrot.slane %v3674, %v3677
  %v3679 = vmul.f32 %v3539, %v3678
  %v3680 = vmul.f32 %v3540, %v3678
  %v3681 = vmul.f32 %v3541, %v3678
  %v3682 = vmul.f32 %v3542, %v3678
  %v3683 = vmul.f32 %v3543, %v3678
  %v3684 = vmul.f32 %v3544, %v3678
  %v3685 = vmul.f32 %v3545, %v3678
  %v3686 = vmul.f32 %v3546, %v3678
  %v3687 = vmul.f32 %v3547, %v3678
  %v3688 = vmul.f32 %v3548, %v3678
  %v3689 = vmul.f32 %v3549, %v3678
  %v3690 = vmul.f32 %v3550, %v3678
  %v3691 = vmul.f32 %v3551, %v3678
  %v3692 = vmul.f32 %v3552, %v3678
  %v3693 = vmul.f32 %v3553, %v3678
  %v3694 = vmul.f32 %v3554, %v3678
  %v3695 = vadd.f32 %v3658, %v3679
  %v3696 = vadd.f32 %v3659, %v3680
  %v3697 = vadd.f32 %v3660, %v3681
  %v3698 = vadd.f32 %v3661, %v3682
  %v3699 = vadd.f32 %v3662, %v3683
  %v3700 = vadd.f32 %v3663, %v3684
  %v3701 = vadd.f32 %v3664, %v3685
  %v3702 = vadd.f32 %v3665, %v3686
  %v3703 = vadd.f32 %v3666, %v3687
  %v3704 = vadd.f32 %v3667, %v3688
  %v3705 = vadd.f32 %v3668, %v3689
  %v3706 = vadd.f32 %v3669, %v3690
  %v3707 = vadd.f32 %v3670, %v3691
  %v3708 = vadd.f32 %v3671, %v3692
  %v3709 = vadd.f32 %v3672, %v3693
  %v3710 = vadd.f32 %v3673, %v3694
  %v3711 = vld [vmem:[%s710 + $0x4] sm:$0x1]
  %v3712 = vlaneseq
  %v3713 = vshrl.u32 %v3712, 7
  %v3714 = vsub.s32 0, %v3713
  %v3715 = vrot.slane %v3711, %v3714
  %v3716 = vmul.f32 %v3541, %v3715
  %v3717 = vmul.f32 %v3542, %v3715
  %v3718 = vmul.f32 %v3543, %v3715
  %v3719 = vmul.f32 %v3544, %v3715
  %v3720 = vmul.f32 %v3545, %v3715
  %v3721 = vmul.f32 %v3546, %v3715
  %v3722 = vmul.f32 %v3547, %v3715
  %v3723 = vmul.f32 %v3548, %v3715
  %v3724 = vmul.f32 %v3549, %v3715
  %v3725 = vmul.f32 %v3550, %v3715
  %v3726 = vmul.f32 %v3551, %v3715
  %v3727 = vmul.f32 %v3552, %v3715
  %v3728 = vmul.f32 %v3553, %v3715
  %v3729 = vmul.f32 %v3554, %v3715
  %v3730 = vmul.f32 %v3555, %v3715
  %v3731 = vmul.f32 %v3556, %v3715
  %v3732 = vadd.f32 %v3695, %v3716
  %v3733 = vadd.f32 %v3696, %v3717
  %v3734 = vadd.f32 %v3697, %v3718
  %v3735 = vadd.f32 %v3698, %v3719
  %v3736 = vadd.f32 %v3699, %v3720
  %v3737 = vadd.f32 %v3700, %v3721
  %v3738 = vadd.f32 %v3701, %v3722
  %v3739 = vadd.f32 %v3702, %v3723
  %v3740 = vadd.f32 %v3703, %v3724
  %v3741 = vadd.f32 %v3704, %v3725
  %v3742 = vadd.f32 %v3705, %v3726
  %v3743 = vadd.f32 %v3706, %v3727
  %v3744 = vadd.f32 %v3707, %v3728
  %v3745 = vadd.f32 %v3708, %v3729
  %v3746 = vadd.f32 %v3709, %v3730
  %v3747 = vadd.f32 %v3710, %v3731
  %v3748 = vld [vmem:[%s710 + $0x5] sm:$0x1]
  %v3749 = vlaneseq
  %v3750 = vshrl.u32 %v3749, 7
  %v3751 = vsub.s32 0, %v3750
  %v3752 = vrot.slane %v3748, %v3751
  %v3753 = vmul.f32 %v3543, %v3752
  %v3754 = vmul.f32 %v3544, %v3752
  %v3755 = vmul.f32 %v3545, %v3752
  %v3756 = vmul.f32 %v3546, %v3752
  %v3757 = vmul.f32 %v3547, %v3752
  %v3758 = vmul.f32 %v3548, %v3752
  %v3759 = vmul.f32 %v3549, %v3752
  %v3760 = vmul.f32 %v3550, %v3752
  %v3761 = vmul.f32 %v3551, %v3752
  %v3762 = vmul.f32 %v3552, %v3752
  %v3763 = vmul.f32 %v3553, %v3752
  %v3764 = vmul.f32 %v3554, %v3752
  %v3765 = vmul.f32 %v3555, %v3752
  %v3766 = vmul.f32 %v3556, %v3752
  %v3767 = vmul.f32 %v3557, %v3752
  %v3768 = vmul.f32 %v3558, %v3752
  %v3769 = vadd.f32 %v3732, %v3753
  %v3770 = vadd.f32 %v3733, %v3754
  %v3771 = vadd.f32 %v3734, %v3755
  %v3772 = vadd.f32 %v3735, %v3756
  %v3773 = vadd.f32 %v3736, %v3757
  %v3774 = vadd.f32 %v3737, %v3758
  %v3775 = vadd.f32 %v3738, %v3759
  %v3776 = vadd.f32 %v3739, %v3760
  %v3777 = vadd.f32 %v3740, %v3761
  %v3778 = vadd.f32 %v3741, %v3762
  %v3779 = vadd.f32 %v3742, %v3763
  %v3780 = vadd.f32 %v3743, %v3764
  %v3781 = vadd.f32 %v3744, %v3765
  %v3782 = vadd.f32 %v3745, %v3766
  %v3783 = vadd.f32 %v3746, %v3767
  %v3784 = vadd.f32 %v3747, %v3768
  %v3785 = vld [vmem:[%s710 + $0x6] sm:$0x1]
  %v3786 = vlaneseq
  %v3787 = vshrl.u32 %v3786, 7
  %v3788 = vsub.s32 0, %v3787
  %v3789 = vrot.slane %v3785, %v3788
  %v3790 = vmul.f32 %v3545, %v3789
  %v3791 = vmul.f32 %v3546, %v3789
  %v3792 = vmul.f32 %v3547, %v3789
  %v3793 = vmul.f32 %v3548, %v3789
  %v3794 = vmul.f32 %v3549, %v3789
  %v3795 = vmul.f32 %v3550, %v3789
  %v3796 = vmul.f32 %v3551, %v3789
  %v3797 = vmul.f32 %v3552, %v3789
  %v3798 = vmul.f32 %v3553, %v3789
  %v3799 = vmul.f32 %v3554, %v3789
  %v3800 = vmul.f32 %v3555, %v3789
  %v3801 = vmul.f32 %v3556, %v3789
  %v3802 = vmul.f32 %v3557, %v3789
  %v3803 = vmul.f32 %v3558, %v3789
  %v3804 = vmul.f32 %v3559, %v3789
  %v3805 = vmul.f32 %v3560, %v3789
  %v3806 = vadd.f32 %v3769, %v3790
  %v3807 = vadd.f32 %v3770, %v3791
  %v3808 = vadd.f32 %v3771, %v3792
  %v3809 = vadd.f32 %v3772, %v3793
  %v3810 = vadd.f32 %v3773, %v3794
  %v3811 = vadd.f32 %v3774, %v3795
  %v3812 = vadd.f32 %v3775, %v3796
  %v3813 = vadd.f32 %v3776, %v3797
  %v3814 = vadd.f32 %v3777, %v3798
  %v3815 = vadd.f32 %v3778, %v3799
  %v3816 = vadd.f32 %v3779, %v3800
  %v3817 = vadd.f32 %v3780, %v3801
  %v3818 = vadd.f32 %v3781, %v3802
  %v3819 = vadd.f32 %v3782, %v3803
  %v3820 = vadd.f32 %v3783, %v3804
  %v3821 = vadd.f32 %v3784, %v3805
  %v3822 = vld [vmem:[%s710 + $0x7] sm:$0x1]
  %v3823 = vlaneseq
  %v3824 = vshrl.u32 %v3823, 7
  %v3825 = vsub.s32 0, %v3824
  %v3826 = vrot.slane %v3822, %v3825
  %v3827 = vmul.f32 %v3547, %v3826
  %v3828 = vmul.f32 %v3548, %v3826
  %v3829 = vmul.f32 %v3549, %v3826
  %v3830 = vmul.f32 %v3550, %v3826
  %v3831 = vmul.f32 %v3551, %v3826
  %v3832 = vmul.f32 %v3552, %v3826
  %v3833 = vmul.f32 %v3553, %v3826
  %v3834 = vmul.f32 %v3554, %v3826
  %v3835 = vmul.f32 %v3555, %v3826
  %v3836 = vmul.f32 %v3556, %v3826
  %v3837 = vmul.f32 %v3557, %v3826
  %v3838 = vmul.f32 %v3558, %v3826
  %v3839 = vmul.f32 %v3559, %v3826
  %v3840 = vmul.f32 %v3560, %v3826
  %v3841 = vmul.f32 %v3561, %v3826
  %v3842 = vmul.f32 %v3562, %v3826
  %v3843 = vadd.f32 %v3806, %v3827
  %v3844 = vadd.f32 %v3807, %v3828
  %v3845 = vadd.f32 %v3808, %v3829
  %v3846 = vadd.f32 %v3809, %v3830
  %v3847 = vadd.f32 %v3810, %v3831
  %v3848 = vadd.f32 %v3811, %v3832
  %v3849 = vadd.f32 %v3812, %v3833
  %v3850 = vadd.f32 %v3813, %v3834
  %v3851 = vadd.f32 %v3814, %v3835
  %v3852 = vadd.f32 %v3815, %v3836
  %v3853 = vadd.f32 %v3816, %v3837
  %v3854 = vadd.f32 %v3817, %v3838
  %v3855 = vadd.f32 %v3818, %v3839
  %v3856 = vadd.f32 %v3819, %v3840
  %v3857 = vadd.f32 %v3820, %v3841
  %v3858 = vadd.f32 %v3821, %v3842
  %v3859 = vld [vmem:[%s2880 + $0x4] sm:$0xff]
  %v3860 = vld [vmem:[%s2880 + $0xc] sm:$0xff]
  %v3861 = vld [vmem:[%s2880 + $0x1c] sm:$0xff]
  %v3862 = vld [vmem:[%s2880 + $0x24] sm:$0xff]
  %v3863 = vld [vmem:[%s2880 + $0x34] sm:$0xff]
  %v3864 = vld [vmem:[%s2880 + $0x3c] sm:$0xff]
  %v3865 = vld [vmem:[%s2880 + $0x4c] sm:$0xff]
  %v3866 = vld [vmem:[%s2880 + $0x54] sm:$0xff]
  %v3867 = vld [vmem:[%s2880 + $0x64] sm:$0xff]
  %v3868 = vld [vmem:[%s2880 + $0x6c] sm:$0xff]
  %v3869 = vld [vmem:[%s2880 + $0x7c] sm:$0xff]
  %v3870 = vld [vmem:[%s2880 + $0x84] sm:$0xff]
  %v3871 = vld [vmem:[%s2880 + $0x94] sm:$0xff]
  %v3872 = vld [vmem:[%s2880 + $0x9c] sm:$0xff]
  %v3873 = vld [vmem:[%s2880 + $0xac] sm:$0xff]
  %v3874 = vld [vmem:[%s2880 + $0xb4] sm:$0xff]
  %v3875 = vld [vmem:[%s2880 + $0xc4] sm:$0xff]
  %v3876 = vld [vmem:[%s2880 + $0xcc] sm:$0xff]
  %v3877 = vld [vmem:[%s2880 + $0xdc] sm:$0xff]
  %v3878 = vld [vmem:[%s2880 + $0xe4] sm:$0xff]
  %v3879 = vld [vmem:[%s2880 + $0xf4] sm:$0xff]
  %v3880 = vld [vmem:[%s2880 + $0xfc] sm:$0xff]
  %v3881 = vld [vmem:[%s2880 + $0x10c] sm:$0xff]
  %v3882 = vld [vmem:[%s2880 + $0x114] sm:$0xff]
  %v3883 = vld [vmem:[%s2880 + $0x124] sm:$0xff]
  %v3884 = vld [vmem:[%s2880 + $0x12c] sm:$0xff]
  %v3885 = vld [vmem:[%s2880 + $0x13c] sm:$0xff]
  %v3886 = vld [vmem:[%s2880 + $0x144] sm:$0xff]
  %v3887 = vld [vmem:[%s2880 + $0x154] sm:$0xff]
  %v3888 = vld [vmem:[%s2880 + $0x15c] sm:$0xff]
  %v3889 = vld [vmem:[%s1037] sm:$0x1]
  %v3890 = vlaneseq
  %v3891 = vshrl.u32 %v3890, 7
  %v3892 = vsub.s32 0, %v3891
  %v3893 = vrot.slane %v3889, %v3892
  %v3894 = vmul.f32 %v3859, %v3893
  %v3895 = vmul.f32 %v3860, %v3893
  %v3896 = vmul.f32 %v3861, %v3893
  %v3897 = vmul.f32 %v3862, %v3893
  %v3898 = vmul.f32 %v3863, %v3893
  %v3899 = vmul.f32 %v3864, %v3893
  %v3900 = vmul.f32 %v3865, %v3893
  %v3901 = vmul.f32 %v3866, %v3893
  %v3902 = vmul.f32 %v3867, %v3893
  %v3903 = vmul.f32 %v3868, %v3893
  %v3904 = vmul.f32 %v3869, %v3893
  %v3905 = vmul.f32 %v3870, %v3893
  %v3906 = vmul.f32 %v3871, %v3893
  %v3907 = vmul.f32 %v3872, %v3893
  %v3908 = vmul.f32 %v3873, %v3893
  %v3909 = vmul.f32 %v3874, %v3893
  %v3910 = vadd.f32 %v3843, %v3894
  %v3911 = vadd.f32 %v3844, %v3895
  %v3912 = vadd.f32 %v3845, %v3896
  %v3913 = vadd.f32 %v3846, %v3897
  %v3914 = vadd.f32 %v3847, %v3898
  %v3915 = vadd.f32 %v3848, %v3899
  %v3916 = vadd.f32 %v3849, %v3900
  %v3917 = vadd.f32 %v3850, %v3901
  %v3918 = vadd.f32 %v3851, %v3902
  %v3919 = vadd.f32 %v3852, %v3903
  %v3920 = vadd.f32 %v3853, %v3904
  %v3921 = vadd.f32 %v3854, %v3905
  %v3922 = vadd.f32 %v3855, %v3906
  %v3923 = vadd.f32 %v3856, %v3907
  %v3924 = vadd.f32 %v3857, %v3908
  %v3925 = vadd.f32 %v3858, %v3909
  %v3926 = vld [vmem:[%s1037 + $0x1] sm:$0x1]
  %v3927 = vlaneseq
  %v3928 = vshrl.u32 %v3927, 7
  %v3929 = vsub.s32 0, %v3928
  %v3930 = vrot.slane %v3926, %v3929
  %v3931 = vmul.f32 %v3861, %v3930
  %v3932 = vmul.f32 %v3862, %v3930
  %v3933 = vmul.f32 %v3863, %v3930
  %v3934 = vmul.f32 %v3864, %v3930
  %v3935 = vmul.f32 %v3865, %v3930
  %v3936 = vmul.f32 %v3866, %v3930
  %v3937 = vmul.f32 %v3867, %v3930
  %v3938 = vmul.f32 %v3868, %v3930
  %v3939 = vmul.f32 %v3869, %v3930
  %v3940 = vmul.f32 %v3870, %v3930
  %v3941 = vmul.f32 %v3871, %v3930
  %v3942 = vmul.f32 %v3872, %v3930
  %v3943 = vmul.f32 %v3873, %v3930
  %v3944 = vmul.f32 %v3874, %v3930
  %v3945 = vmul.f32 %v3875, %v3930
  %v3946 = vmul.f32 %v3876, %v3930
  %v3947 = vadd.f32 %v3910, %v3931
  %v3948 = vadd.f32 %v3911, %v3932
  %v3949 = vadd.f32 %v3912, %v3933
  %v3950 = vadd.f32 %v3913, %v3934
  %v3951 = vadd.f32 %v3914, %v3935
  %v3952 = vadd.f32 %v3915, %v3936
  %v3953 = vadd.f32 %v3916, %v3937
  %v3954 = vadd.f32 %v3917, %v3938
  %v3955 = vadd.f32 %v3918, %v3939
  %v3956 = vadd.f32 %v3919, %v3940
  %v3957 = vadd.f32 %v3920, %v3941
  %v3958 = vadd.f32 %v3921, %v3942
  %v3959 = vadd.f32 %v3922, %v3943
  %v3960 = vadd.f32 %v3923, %v3944
  %v3961 = vadd.f32 %v3924, %v3945
  %v3962 = vadd.f32 %v3925, %v3946
  %v3963 = vld [vmem:[%s1037 + $0x2] sm:$0x1]
  %v3964 = vlaneseq
  %v3965 = vshrl.u32 %v3964, 7
  %v3966 = vsub.s32 0, %v3965
  %v3967 = vrot.slane %v3963, %v3966
  %v3968 = vmul.f32 %v3863, %v3967
  %v3969 = vmul.f32 %v3864, %v3967
  %v3970 = vmul.f32 %v3865, %v3967
  %v3971 = vmul.f32 %v3866, %v3967
  %v3972 = vmul.f32 %v3867, %v3967
  %v3973 = vmul.f32 %v3868, %v3967
  %v3974 = vmul.f32 %v3869, %v3967
  %v3975 = vmul.f32 %v3870, %v3967
  %v3976 = vmul.f32 %v3871, %v3967
  %v3977 = vmul.f32 %v3872, %v3967
  %v3978 = vmul.f32 %v3873, %v3967
  %v3979 = vmul.f32 %v3874, %v3967
  %v3980 = vmul.f32 %v3875, %v3967
  %v3981 = vmul.f32 %v3876, %v3967
  %v3982 = vmul.f32 %v3877, %v3967
  %v3983 = vmul.f32 %v3878, %v3967
  %v3984 = vadd.f32 %v3947, %v3968
  %v3985 = vadd.f32 %v3948, %v3969
  %v3986 = vadd.f32 %v3949, %v3970
  %v3987 = vadd.f32 %v3950, %v3971
  %v3988 = vadd.f32 %v3951, %v3972
  %v3989 = vadd.f32 %v3952, %v3973
  %v3990 = vadd.f32 %v3953, %v3974
  %v3991 = vadd.f32 %v3954, %v3975
  %v3992 = vadd.f32 %v3955, %v3976
  %v3993 = vadd.f32 %v3956, %v3977
  %v3994 = vadd.f32 %v3957, %v3978
  %v3995 = vadd.f32 %v3958, %v3979
  %v3996 = vadd.f32 %v3959, %v3980
  %v3997 = vadd.f32 %v3960, %v3981
  %v3998 = vadd.f32 %v3961, %v3982
  %v3999 = vadd.f32 %v3962, %v3983
  %v4000 = vld [vmem:[%s1037 + $0x3] sm:$0x1]
  %v4001 = vlaneseq
  %v4002 = vshrl.u32 %v4001, 7
  %v4003 = vsub.s32 0, %v4002
  %v4004 = vrot.slane %v4000, %v4003
  %v4005 = vmul.f32 %v3865, %v4004
  %v4006 = vmul.f32 %v3866, %v4004
  %v4007 = vmul.f32 %v3867, %v4004
  %v4008 = vmul.f32 %v3868, %v4004
  %v4009 = vmul.f32 %v3869, %v4004
  %v4010 = vmul.f32 %v3870, %v4004
  %v4011 = vmul.f32 %v3871, %v4004
  %v4012 = vmul.f32 %v3872, %v4004
  %v4013 = vmul.f32 %v3873, %v4004
  %v4014 = vmul.f32 %v3874, %v4004
  %v4015 = vmul.f32 %v3875, %v4004
  %v4016 = vmul.f32 %v3876, %v4004
  %v4017 = vmul.f32 %v3877, %v4004
  %v4018 = vmul.f32 %v3878, %v4004
  %v4019 = vmul.f32 %v3879, %v4004
  %v4020 = vmul.f32 %v3880, %v4004
  %v4021 = vadd.f32 %v3984, %v4005
  %v4022 = vadd.f32 %v3985, %v4006
  %v4023 = vadd.f32 %v3986, %v4007
  %v4024 = vadd.f32 %v3987, %v4008
  %v4025 = vadd.f32 %v3988, %v4009
  %v4026 = vadd.f32 %v3989, %v4010
  %v4027 = vadd.f32 %v3990, %v4011
  %v4028 = vadd.f32 %v3991, %v4012
  %v4029 = vadd.f32 %v3992, %v4013
  %v4030 = vadd.f32 %v3993, %v4014
  %v4031 = vadd.f32 %v3994, %v4015
  %v4032 = vadd.f32 %v3995, %v4016
  %v4033 = vadd.f32 %v3996, %v4017
  %v4034 = vadd.f32 %v3997, %v4018
  %v4035 = vadd.f32 %v3998, %v4019
  %v4036 = vadd.f32 %v3999, %v4020
  %v4037 = vld [vmem:[%s1037 + $0x4] sm:$0x1]
  %v4038 = vlaneseq
  %v4039 = vshrl.u32 %v4038, 7
  %v4040 = vsub.s32 0, %v4039
  %v4041 = vrot.slane %v4037, %v4040
  %v4042 = vmul.f32 %v3867, %v4041
  %v4043 = vmul.f32 %v3868, %v4041
  %v4044 = vmul.f32 %v3869, %v4041
  %v4045 = vmul.f32 %v3870, %v4041
  %v4046 = vmul.f32 %v3871, %v4041
  %v4047 = vmul.f32 %v3872, %v4041
  %v4048 = vmul.f32 %v3873, %v4041
  %v4049 = vmul.f32 %v3874, %v4041
  %v4050 = vmul.f32 %v3875, %v4041
  %v4051 = vmul.f32 %v3876, %v4041
  %v4052 = vmul.f32 %v3877, %v4041
  %v4053 = vmul.f32 %v3878, %v4041
  %v4054 = vmul.f32 %v3879, %v4041
  %v4055 = vmul.f32 %v3880, %v4041
  %v4056 = vmul.f32 %v3881, %v4041
  %v4057 = vmul.f32 %v3882, %v4041
  %v4058 = vadd.f32 %v4021, %v4042
  %v4059 = vadd.f32 %v4022, %v4043
  %v4060 = vadd.f32 %v4023, %v4044
  %v4061 = vadd.f32 %v4024, %v4045
  %v4062 = vadd.f32 %v4025, %v4046
  %v4063 = vadd.f32 %v4026, %v4047
  %v4064 = vadd.f32 %v4027, %v4048
  %v4065 = vadd.f32 %v4028, %v4049
  %v4066 = vadd.f32 %v4029, %v4050
  %v4067 = vadd.f32 %v4030, %v4051
  %v4068 = vadd.f32 %v4031, %v4052
  %v4069 = vadd.f32 %v4032, %v4053
  %v4070 = vadd.f32 %v4033, %v4054
  %v4071 = vadd.f32 %v4034, %v4055
  %v4072 = vadd.f32 %v4035, %v4056
  %v4073 = vadd.f32 %v4036, %v4057
  %v4074 = vld [vmem:[%s1037 + $0x5] sm:$0x1]
  %v4075 = vlaneseq
  %v4076 = vshrl.u32 %v4075, 7
  %v4077 = vsub.s32 0, %v4076
  %v4078 = vrot.slane %v4074, %v4077
  %v4079 = vmul.f32 %v3869, %v4078
  %v4080 = vmul.f32 %v3870, %v4078
  %v4081 = vmul.f32 %v3871, %v4078
  %v4082 = vmul.f32 %v3872, %v4078
  %v4083 = vmul.f32 %v3873, %v4078
  %v4084 = vmul.f32 %v3874, %v4078
  %v4085 = vmul.f32 %v3875, %v4078
  %v4086 = vmul.f32 %v3876, %v4078
  %v4087 = vmul.f32 %v3877, %v4078
  %v4088 = vmul.f32 %v3878, %v4078
  %v4089 = vmul.f32 %v3879, %v4078
  %v4090 = vmul.f32 %v3880, %v4078
  %v4091 = vmul.f32 %v3881, %v4078
  %v4092 = vmul.f32 %v3882, %v4078
  %v4093 = vmul.f32 %v3883, %v4078
  %v4094 = vmul.f32 %v3884, %v4078
  %v4095 = vadd.f32 %v4058, %v4079
  %v4096 = vadd.f32 %v4059, %v4080
  %v4097 = vadd.f32 %v4060, %v4081
  %v4098 = vadd.f32 %v4061, %v4082
  %v4099 = vadd.f32 %v4062, %v4083
  %v4100 = vadd.f32 %v4063, %v4084
  %v4101 = vadd.f32 %v4064, %v4085
  %v4102 = vadd.f32 %v4065, %v4086
  %v4103 = vadd.f32 %v4066, %v4087
  %v4104 = vadd.f32 %v4067, %v4088
  %v4105 = vadd.f32 %v4068, %v4089
  %v4106 = vadd.f32 %v4069, %v4090
  %v4107 = vadd.f32 %v4070, %v4091
  %v4108 = vadd.f32 %v4071, %v4092
  %v4109 = vadd.f32 %v4072, %v4093
  %v4110 = vadd.f32 %v4073, %v4094
  %v4111 = vld [vmem:[%s1037 + $0x6] sm:$0x1]
  %v4112 = vlaneseq
  %v4113 = vshrl.u32 %v4112, 7
  %v4114 = vsub.s32 0, %v4113
  %v4115 = vrot.slane %v4111, %v4114
  %v4116 = vmul.f32 %v3871, %v4115
  %v4117 = vmul.f32 %v3872, %v4115
  %v4118 = vmul.f32 %v3873, %v4115
  %v4119 = vmul.f32 %v3874, %v4115
  %v4120 = vmul.f32 %v3875, %v4115
  %v4121 = vmul.f32 %v3876, %v4115
  %v4122 = vmul.f32 %v3877, %v4115
  %v4123 = vmul.f32 %v3878, %v4115
  %v4124 = vmul.f32 %v3879, %v4115
  %v4125 = vmul.f32 %v3880, %v4115
  %v4126 = vmul.f32 %v3881, %v4115
  %v4127 = vmul.f32 %v3882, %v4115
  %v4128 = vmul.f32 %v3883, %v4115
  %v4129 = vmul.f32 %v3884, %v4115
  %v4130 = vmul.f32 %v3885, %v4115
  %v4131 = vmul.f32 %v3886, %v4115
  %v4132 = vadd.f32 %v4095, %v4116
  %v4133 = vadd.f32 %v4096, %v4117
  %v4134 = vadd.f32 %v4097, %v4118
  %v4135 = vadd.f32 %v4098, %v4119
  %v4136 = vadd.f32 %v4099, %v4120
  %v4137 = vadd.f32 %v4100, %v4121
  %v4138 = vadd.f32 %v4101, %v4122
  %v4139 = vadd.f32 %v4102, %v4123
  %v4140 = vadd.f32 %v4103, %v4124
  %v4141 = vadd.f32 %v4104, %v4125
  %v4142 = vadd.f32 %v4105, %v4126
  %v4143 = vadd.f32 %v4106, %v4127
  %v4144 = vadd.f32 %v4107, %v4128
  %v4145 = vadd.f32 %v4108, %v4129
  %v4146 = vadd.f32 %v4109, %v4130
  %v4147 = vadd.f32 %v4110, %v4131
  %v4148 = vld [vmem:[%s1037 + $0x7] sm:$0x1]
  %v4149 = vlaneseq
  %v4150 = vshrl.u32 %v4149, 7
  %v4151 = vsub.s32 0, %v4150
  %v4152 = vrot.slane %v4148, %v4151
  %v4153 = vmul.f32 %v3873, %v4152
  %v4154 = vmul.f32 %v3874, %v4152
  %v4155 = vmul.f32 %v3875, %v4152
  %v4156 = vmul.f32 %v3876, %v4152
  %v4157 = vmul.f32 %v3877, %v4152
  %v4158 = vmul.f32 %v3878, %v4152
  %v4159 = vmul.f32 %v3879, %v4152
  %v4160 = vmul.f32 %v3880, %v4152
  %v4161 = vmul.f32 %v3881, %v4152
  %v4162 = vmul.f32 %v3882, %v4152
  %v4163 = vmul.f32 %v3883, %v4152
  %v4164 = vmul.f32 %v3884, %v4152
  %v4165 = vmul.f32 %v3885, %v4152
  %v4166 = vmul.f32 %v3886, %v4152
  %v4167 = vmul.f32 %v3887, %v4152
  %v4168 = vmul.f32 %v3888, %v4152
  %v4169 = vadd.f32 %v4132, %v4153
  %v4170 = vadd.f32 %v4133, %v4154
  %v4171 = vadd.f32 %v4134, %v4155
  %v4172 = vadd.f32 %v4135, %v4156
  %v4173 = vadd.f32 %v4136, %v4157
  %v4174 = vadd.f32 %v4137, %v4158
  %v4175 = vadd.f32 %v4138, %v4159
  %v4176 = vadd.f32 %v4139, %v4160
  %v4177 = vadd.f32 %v4140, %v4161
  %v4178 = vadd.f32 %v4141, %v4162
  %v4179 = vadd.f32 %v4142, %v4163
  %v4180 = vadd.f32 %v4143, %v4164
  %v4181 = vadd.f32 %v4144, %v4165
  %v4182 = vadd.f32 %v4145, %v4166
  %v4183 = vadd.f32 %v4146, %v4167
  %v4184 = vadd.f32 %v4147, %v4168
  %v4185 = vld [vmem:[%s2880 + $0x5] sm:$0xff]
  %v4186 = vld [vmem:[%s2880 + $0xd] sm:$0xff]
  %v4187 = vld [vmem:[%s2880 + $0x1d] sm:$0xff]
  %v4188 = vld [vmem:[%s2880 + $0x25] sm:$0xff]
  %v4189 = vld [vmem:[%s2880 + $0x35] sm:$0xff]
  %v4190 = vld [vmem:[%s2880 + $0x3d] sm:$0xff]
  %v4191 = vld [vmem:[%s2880 + $0x4d] sm:$0xff]
  %v4192 = vld [vmem:[%s2880 + $0x55] sm:$0xff]
  %v4193 = vld [vmem:[%s2880 + $0x65] sm:$0xff]
  %v4194 = vld [vmem:[%s2880 + $0x6d] sm:$0xff]
  %v4195 = vld [vmem:[%s2880 + $0x7d] sm:$0xff]
  %v4196 = vld [vmem:[%s2880 + $0x85] sm:$0xff]
  %v4197 = vld [vmem:[%s2880 + $0x95] sm:$0xff]
  %v4198 = vld [vmem:[%s2880 + $0x9d] sm:$0xff]
  %v4199 = vld [vmem:[%s2880 + $0xad] sm:$0xff]
  %v4200 = vld [vmem:[%s2880 + $0xb5] sm:$0xff]
  %v4201 = vld [vmem:[%s2880 + $0xc5] sm:$0xff]
  %v4202 = vld [vmem:[%s2880 + $0xcd] sm:$0xff]
  %v4203 = vld [vmem:[%s2880 + $0xdd] sm:$0xff]
  %v4204 = vld [vmem:[%s2880 + $0xe5] sm:$0xff]
  %v4205 = vld [vmem:[%s2880 + $0xf5] sm:$0xff]
  %v4206 = vld [vmem:[%s2880 + $0xfd] sm:$0xff]
  %v4207 = vld [vmem:[%s2880 + $0x10d] sm:$0xff]
  %v4208 = vld [vmem:[%s2880 + $0x115] sm:$0xff]
  %v4209 = vld [vmem:[%s2880 + $0x125] sm:$0xff]
  %v4210 = vld [vmem:[%s2880 + $0x12d] sm:$0xff]
  %v4211 = vld [vmem:[%s2880 + $0x13d] sm:$0xff]
  %v4212 = vld [vmem:[%s2880 + $0x145] sm:$0xff]
  %v4213 = vld [vmem:[%s2880 + $0x155] sm:$0xff]
  %v4214 = vld [vmem:[%s2880 + $0x15d] sm:$0xff]
  %v4215 = vld [vmem:[%s1364] sm:$0x1]
  %v4216 = vlaneseq
  %v4217 = vshrl.u32 %v4216, 7
  %v4218 = vsub.s32 0, %v4217
  %v4219 = vrot.slane %v4215, %v4218
  %v4220 = vmul.f32 %v4185, %v4219
  %v4221 = vmul.f32 %v4186, %v4219
  %v4222 = vmul.f32 %v4187, %v4219
  %v4223 = vmul.f32 %v4188, %v4219
  %v4224 = vmul.f32 %v4189, %v4219
  %v4225 = vmul.f32 %v4190, %v4219
  %v4226 = vmul.f32 %v4191, %v4219
  %v4227 = vmul.f32 %v4192, %v4219
  %v4228 = vmul.f32 %v4193, %v4219
  %v4229 = vmul.f32 %v4194, %v4219
  %v4230 = vmul.f32 %v4195, %v4219
  %v4231 = vmul.f32 %v4196, %v4219
  %v4232 = vmul.f32 %v4197, %v4219
  %v4233 = vmul.f32 %v4198, %v4219
  %v4234 = vmul.f32 %v4199, %v4219
  %v4235 = vmul.f32 %v4200, %v4219
  %v4236 = vadd.f32 %v4169, %v4220
  %v4237 = vadd.f32 %v4170, %v4221
  %v4238 = vadd.f32 %v4171, %v4222
  %v4239 = vadd.f32 %v4172, %v4223
  %v4240 = vadd.f32 %v4173, %v4224
  %v4241 = vadd.f32 %v4174, %v4225
  %v4242 = vadd.f32 %v4175, %v4226
  %v4243 = vadd.f32 %v4176, %v4227
  %v4244 = vadd.f32 %v4177, %v4228
  %v4245 = vadd.f32 %v4178, %v4229
  %v4246 = vadd.f32 %v4179, %v4230
  %v4247 = vadd.f32 %v4180, %v4231
  %v4248 = vadd.f32 %v4181, %v4232
  %v4249 = vadd.f32 %v4182, %v4233
  %v4250 = vadd.f32 %v4183, %v4234
  %v4251 = vadd.f32 %v4184, %v4235
  %v4252 = vld [vmem:[%s1364 + $0x1] sm:$0x1]
  %v4253 = vlaneseq
  %v4254 = vshrl.u32 %v4253, 7
  %v4255 = vsub.s32 0, %v4254
  %v4256 = vrot.slane %v4252, %v4255
  %v4257 = vmul.f32 %v4187, %v4256
  %v4258 = vmul.f32 %v4188, %v4256
  %v4259 = vmul.f32 %v4189, %v4256
  %v4260 = vmul.f32 %v4190, %v4256
  %v4261 = vmul.f32 %v4191, %v4256
  %v4262 = vmul.f32 %v4192, %v4256
  %v4263 = vmul.f32 %v4193, %v4256
  %v4264 = vmul.f32 %v4194, %v4256
  %v4265 = vmul.f32 %v4195, %v4256
  %v4266 = vmul.f32 %v4196, %v4256
  %v4267 = vmul.f32 %v4197, %v4256
  %v4268 = vmul.f32 %v4198, %v4256
  %v4269 = vmul.f32 %v4199, %v4256
  %v4270 = vmul.f32 %v4200, %v4256
  %v4271 = vmul.f32 %v4201, %v4256
  %v4272 = vmul.f32 %v4202, %v4256
  %v4273 = vadd.f32 %v4236, %v4257
  %v4274 = vadd.f32 %v4237, %v4258
  %v4275 = vadd.f32 %v4238, %v4259
  %v4276 = vadd.f32 %v4239, %v4260
  %v4277 = vadd.f32 %v4240, %v4261
  %v4278 = vadd.f32 %v4241, %v4262
  %v4279 = vadd.f32 %v4242, %v4263
  %v4280 = vadd.f32 %v4243, %v4264
  %v4281 = vadd.f32 %v4244, %v4265
  %v4282 = vadd.f32 %v4245, %v4266
  %v4283 = vadd.f32 %v4246, %v4267
  %v4284 = vadd.f32 %v4247, %v4268
  %v4285 = vadd.f32 %v4248, %v4269
  %v4286 = vadd.f32 %v4249, %v4270
  %v4287 = vadd.f32 %v4250, %v4271
  %v4288 = vadd.f32 %v4251, %v4272
  %v4289 = vld [vmem:[%s1364 + $0x2] sm:$0x1]
  %v4290 = vlaneseq
  %v4291 = vshrl.u32 %v4290, 7
  %v4292 = vsub.s32 0, %v4291
  %v4293 = vrot.slane %v4289, %v4292
  %v4294 = vmul.f32 %v4189, %v4293
  %v4295 = vmul.f32 %v4190, %v4293
  %v4296 = vmul.f32 %v4191, %v4293
  %v4297 = vmul.f32 %v4192, %v4293
  %v4298 = vmul.f32 %v4193, %v4293
  %v4299 = vmul.f32 %v4194, %v4293
  %v4300 = vmul.f32 %v4195, %v4293
  %v4301 = vmul.f32 %v4196, %v4293
  %v4302 = vmul.f32 %v4197, %v4293
  %v4303 = vmul.f32 %v4198, %v4293
  %v4304 = vmul.f32 %v4199, %v4293
  %v4305 = vmul.f32 %v4200, %v4293
  %v4306 = vmul.f32 %v4201, %v4293
  %v4307 = vmul.f32 %v4202, %v4293
  %v4308 = vmul.f32 %v4203, %v4293
  %v4309 = vmul.f32 %v4204, %v4293
  %v4310 = vadd.f32 %v4273, %v4294
  %v4311 = vadd.f32 %v4274, %v4295
  %v4312 = vadd.f32 %v4275, %v4296
  %v4313 = vadd.f32 %v4276, %v4297
  %v4314 = vadd.f32 %v4277, %v4298
  %v4315 = vadd.f32 %v4278, %v4299
  %v4316 = vadd.f32 %v4279, %v4300
  %v4317 = vadd.f32 %v4280, %v4301
  %v4318 = vadd.f32 %v4281, %v4302
  %v4319 = vadd.f32 %v4282, %v4303
  %v4320 = vadd.f32 %v4283, %v4304
  %v4321 = vadd.f32 %v4284, %v4305
  %v4322 = vadd.f32 %v4285, %v4306
  %v4323 = vadd.f32 %v4286, %v4307
  %v4324 = vadd.f32 %v4287, %v4308
  %v4325 = vadd.f32 %v4288, %v4309
  %v4326 = vld [vmem:[%s1364 + $0x3] sm:$0x1]
  %v4327 = vlaneseq
  %v4328 = vshrl.u32 %v4327, 7
  %v4329 = vsub.s32 0, %v4328
  %v4330 = vrot.slane %v4326, %v4329
  %v4331 = vmul.f32 %v4191, %v4330
  %v4332 = vmul.f32 %v4192, %v4330
  %v4333 = vmul.f32 %v4193, %v4330
  %v4334 = vmul.f32 %v4194, %v4330
  %v4335 = vmul.f32 %v4195, %v4330
  %v4336 = vmul.f32 %v4196, %v4330
  %v4337 = vmul.f32 %v4197, %v4330
  %v4338 = vmul.f32 %v4198, %v4330
  %v4339 = vmul.f32 %v4199, %v4330
  %v4340 = vmul.f32 %v4200, %v4330
  %v4341 = vmul.f32 %v4201, %v4330
  %v4342 = vmul.f32 %v4202, %v4330
  %v4343 = vmul.f32 %v4203, %v4330
  %v4344 = vmul.f32 %v4204, %v4330
  %v4345 = vmul.f32 %v4205, %v4330
  %v4346 = vmul.f32 %v4206, %v4330
  %v4347 = vadd.f32 %v4310, %v4331
  %v4348 = vadd.f32 %v4311, %v4332
  %v4349 = vadd.f32 %v4312, %v4333
  %v4350 = vadd.f32 %v4313, %v4334
  %v4351 = vadd.f32 %v4314, %v4335
  %v4352 = vadd.f32 %v4315, %v4336
  %v4353 = vadd.f32 %v4316, %v4337
  %v4354 = vadd.f32 %v4317, %v4338
  %v4355 = vadd.f32 %v4318, %v4339
  %v4356 = vadd.f32 %v4319, %v4340
  %v4357 = vadd.f32 %v4320, %v4341
  %v4358 = vadd.f32 %v4321, %v4342
  %v4359 = vadd.f32 %v4322, %v4343
  %v4360 = vadd.f32 %v4323, %v4344
  %v4361 = vadd.f32 %v4324, %v4345
  %v4362 = vadd.f32 %v4325, %v4346
  %v4363 = vld [vmem:[%s1364 + $0x4] sm:$0x1]
  %v4364 = vlaneseq
  %v4365 = vshrl.u32 %v4364, 7
  %v4366 = vsub.s32 0, %v4365
  %v4367 = vrot.slane %v4363, %v4366
  %v4368 = vmul.f32 %v4193, %v4367
  %v4369 = vmul.f32 %v4194, %v4367
  %v4370 = vmul.f32 %v4195, %v4367
  %v4371 = vmul.f32 %v4196, %v4367
  %v4372 = vmul.f32 %v4197, %v4367
  %v4373 = vmul.f32 %v4198, %v4367
  %v4374 = vmul.f32 %v4199, %v4367
  %v4375 = vmul.f32 %v4200, %v4367
  %v4376 = vmul.f32 %v4201, %v4367
  %v4377 = vmul.f32 %v4202, %v4367
  %v4378 = vmul.f32 %v4203, %v4367
  %v4379 = vmul.f32 %v4204, %v4367
  %v4380 = vmul.f32 %v4205, %v4367
  %v4381 = vmul.f32 %v4206, %v4367
  %v4382 = vmul.f32 %v4207, %v4367
  %v4383 = vmul.f32 %v4208, %v4367
  %v4384 = vadd.f32 %v4347, %v4368
  %v4385 = vadd.f32 %v4348, %v4369
  %v4386 = vadd.f32 %v4349, %v4370
  %v4387 = vadd.f32 %v4350, %v4371
  %v4388 = vadd.f32 %v4351, %v4372
  %v4389 = vadd.f32 %v4352, %v4373
  %v4390 = vadd.f32 %v4353, %v4374
  %v4391 = vadd.f32 %v4354, %v4375
  %v4392 = vadd.f32 %v4355, %v4376
  %v4393 = vadd.f32 %v4356, %v4377
  %v4394 = vadd.f32 %v4357, %v4378
  %v4395 = vadd.f32 %v4358, %v4379
  %v4396 = vadd.f32 %v4359, %v4380
  %v4397 = vadd.f32 %v4360, %v4381
  %v4398 = vadd.f32 %v4361, %v4382
  %v4399 = vadd.f32 %v4362, %v4383
  %v4400 = vld [vmem:[%s1364 + $0x5] sm:$0x1]
  %v4401 = vlaneseq
  %v4402 = vshrl.u32 %v4401, 7
  %v4403 = vsub.s32 0, %v4402
  %v4404 = vrot.slane %v4400, %v4403
  %v4405 = vmul.f32 %v4195, %v4404
  %v4406 = vmul.f32 %v4196, %v4404
  %v4407 = vmul.f32 %v4197, %v4404
  %v4408 = vmul.f32 %v4198, %v4404
  %v4409 = vmul.f32 %v4199, %v4404
  %v4410 = vmul.f32 %v4200, %v4404
  %v4411 = vmul.f32 %v4201, %v4404
  %v4412 = vmul.f32 %v4202, %v4404
  %v4413 = vmul.f32 %v4203, %v4404
  %v4414 = vmul.f32 %v4204, %v4404
  %v4415 = vmul.f32 %v4205, %v4404
  %v4416 = vmul.f32 %v4206, %v4404
  %v4417 = vmul.f32 %v4207, %v4404
  %v4418 = vmul.f32 %v4208, %v4404
  %v4419 = vmul.f32 %v4209, %v4404
  %v4420 = vmul.f32 %v4210, %v4404
  %v4421 = vadd.f32 %v4384, %v4405
  %v4422 = vadd.f32 %v4385, %v4406
  %v4423 = vadd.f32 %v4386, %v4407
  %v4424 = vadd.f32 %v4387, %v4408
  %v4425 = vadd.f32 %v4388, %v4409
  %v4426 = vadd.f32 %v4389, %v4410
  %v4427 = vadd.f32 %v4390, %v4411
  %v4428 = vadd.f32 %v4391, %v4412
  %v4429 = vadd.f32 %v4392, %v4413
  %v4430 = vadd.f32 %v4393, %v4414
  %v4431 = vadd.f32 %v4394, %v4415
  %v4432 = vadd.f32 %v4395, %v4416
  %v4433 = vadd.f32 %v4396, %v4417
  %v4434 = vadd.f32 %v4397, %v4418
  %v4435 = vadd.f32 %v4398, %v4419
  %v4436 = vadd.f32 %v4399, %v4420
  %v4437 = vld [vmem:[%s1364 + $0x6] sm:$0x1]
  %v4438 = vlaneseq
  %v4439 = vshrl.u32 %v4438, 7
  %v4440 = vsub.s32 0, %v4439
  %v4441 = vrot.slane %v4437, %v4440
  %v4442 = vmul.f32 %v4197, %v4441
  %v4443 = vmul.f32 %v4198, %v4441
  %v4444 = vmul.f32 %v4199, %v4441
  %v4445 = vmul.f32 %v4200, %v4441
  %v4446 = vmul.f32 %v4201, %v4441
  %v4447 = vmul.f32 %v4202, %v4441
  %v4448 = vmul.f32 %v4203, %v4441
  %v4449 = vmul.f32 %v4204, %v4441
  %v4450 = vmul.f32 %v4205, %v4441
  %v4451 = vmul.f32 %v4206, %v4441
  %v4452 = vmul.f32 %v4207, %v4441
  %v4453 = vmul.f32 %v4208, %v4441
  %v4454 = vmul.f32 %v4209, %v4441
  %v4455 = vmul.f32 %v4210, %v4441
  %v4456 = vmul.f32 %v4211, %v4441
  %v4457 = vmul.f32 %v4212, %v4441
  %v4458 = vadd.f32 %v4421, %v4442
  %v4459 = vadd.f32 %v4422, %v4443
  %v4460 = vadd.f32 %v4423, %v4444
  %v4461 = vadd.f32 %v4424, %v4445
  %v4462 = vadd.f32 %v4425, %v4446
  %v4463 = vadd.f32 %v4426, %v4447
  %v4464 = vadd.f32 %v4427, %v4448
  %v4465 = vadd.f32 %v4428, %v4449
  %v4466 = vadd.f32 %v4429, %v4450
  %v4467 = vadd.f32 %v4430, %v4451
  %v4468 = vadd.f32 %v4431, %v4452
  %v4469 = vadd.f32 %v4432, %v4453
  %v4470 = vadd.f32 %v4433, %v4454
  %v4471 = vadd.f32 %v4434, %v4455
  %v4472 = vadd.f32 %v4435, %v4456
  %v4473 = vadd.f32 %v4436, %v4457
  %v4474 = vld [vmem:[%s1364 + $0x7] sm:$0x1]
  %v4475 = vlaneseq
  %v4476 = vshrl.u32 %v4475, 7
  %v4477 = vsub.s32 0, %v4476
  %v4478 = vrot.slane %v4474, %v4477
  %v4479 = vmul.f32 %v4199, %v4478
  %v4480 = vmul.f32 %v4200, %v4478
  %v4481 = vmul.f32 %v4201, %v4478
  %v4482 = vmul.f32 %v4202, %v4478
  %v4483 = vmul.f32 %v4203, %v4478
  %v4484 = vmul.f32 %v4204, %v4478
  %v4485 = vmul.f32 %v4205, %v4478
  %v4486 = vmul.f32 %v4206, %v4478
  %v4487 = vmul.f32 %v4207, %v4478
  %v4488 = vmul.f32 %v4208, %v4478
  %v4489 = vmul.f32 %v4209, %v4478
  %v4490 = vmul.f32 %v4210, %v4478
  %v4491 = vmul.f32 %v4211, %v4478
  %v4492 = vmul.f32 %v4212, %v4478
  %v4493 = vmul.f32 %v4213, %v4478
  %v4494 = vmul.f32 %v4214, %v4478
  %v4495 = vadd.f32 %v4458, %v4479
  %v4496 = vadd.f32 %v4459, %v4480
  %v4497 = vadd.f32 %v4460, %v4481
  %v4498 = vadd.f32 %v4461, %v4482
  %v4499 = vadd.f32 %v4462, %v4483
  %v4500 = vadd.f32 %v4463, %v4484
  %v4501 = vadd.f32 %v4464, %v4485
  %v4502 = vadd.f32 %v4465, %v4486
  %v4503 = vadd.f32 %v4466, %v4487
  %v4504 = vadd.f32 %v4467, %v4488
  %v4505 = vadd.f32 %v4468, %v4489
  %v4506 = vadd.f32 %v4469, %v4490
  %v4507 = vadd.f32 %v4470, %v4491
  %v4508 = vadd.f32 %v4471, %v4492
  %v4509 = vadd.f32 %v4472, %v4493
  %v4510 = vadd.f32 %v4473, %v4494
  %v4511 = vld [vmem:[%s2880 + $0x6] sm:$0xff]
  %v4512 = vld [vmem:[%s2880 + $0xe] sm:$0xff]
  %v4513 = vld [vmem:[%s2880 + $0x1e] sm:$0xff]
  %v4514 = vld [vmem:[%s2880 + $0x26] sm:$0xff]
  %v4515 = vld [vmem:[%s2880 + $0x36] sm:$0xff]
  %v4516 = vld [vmem:[%s2880 + $0x3e] sm:$0xff]
  %v4517 = vld [vmem:[%s2880 + $0x4e] sm:$0xff]
  %v4518 = vld [vmem:[%s2880 + $0x56] sm:$0xff]
  %v4519 = vld [vmem:[%s2880 + $0x66] sm:$0xff]
  %v4520 = vld [vmem:[%s2880 + $0x6e] sm:$0xff]
  %v4521 = vld [vmem:[%s2880 + $0x7e] sm:$0xff]
  %v4522 = vld [vmem:[%s2880 + $0x86] sm:$0xff]
  %v4523 = vld [vmem:[%s2880 + $0x96] sm:$0xff]
  %v4524 = vld [vmem:[%s2880 + $0x9e] sm:$0xff]
  %v4525 = vld [vmem:[%s2880 + $0xae] sm:$0xff]
  %v4526 = vld [vmem:[%s2880 + $0xb6] sm:$0xff]
  %v4527 = vld [vmem:[%s2880 + $0xc6] sm:$0xff]
  %v4528 = vld [vmem:[%s2880 + $0xce] sm:$0xff]
  %v4529 = vld [vmem:[%s2880 + $0xde] sm:$0xff]
  %v4530 = vld [vmem:[%s2880 + $0xe6] sm:$0xff]
  %v4531 = vld [vmem:[%s2880 + $0xf6] sm:$0xff]
  %v4532 = vld [vmem:[%s2880 + $0xfe] sm:$0xff]
  %v4533 = vld [vmem:[%s2880 + $0x10e] sm:$0xff]
  %v4534 = vld [vmem:[%s2880 + $0x116] sm:$0xff]
  %v4535 = vld [vmem:[%s2880 + $0x126] sm:$0xff]
  %v4536 = vld [vmem:[%s2880 + $0x12e] sm:$0xff]
  %v4537 = vld [vmem:[%s2880 + $0x13e] sm:$0xff]
  %v4538 = vld [vmem:[%s2880 + $0x146] sm:$0xff]
  %v4539 = vld [vmem:[%s2880 + $0x156] sm:$0xff]
  %v4540 = vld [vmem:[%s2880 + $0x15e] sm:$0xff]
  %v4541 = vld [vmem:[%s1691] sm:$0x1]
  %v4542 = vlaneseq
  %v4543 = vshrl.u32 %v4542, 7
  %v4544 = vsub.s32 0, %v4543
  %v4545 = vrot.slane %v4541, %v4544
  %v4546 = vmul.f32 %v4511, %v4545
  %v4547 = vmul.f32 %v4512, %v4545
  %v4548 = vmul.f32 %v4513, %v4545
  %v4549 = vmul.f32 %v4514, %v4545
  %v4550 = vmul.f32 %v4515, %v4545
  %v4551 = vmul.f32 %v4516, %v4545
  %v4552 = vmul.f32 %v4517, %v4545
  %v4553 = vmul.f32 %v4518, %v4545
  %v4554 = vmul.f32 %v4519, %v4545
  %v4555 = vmul.f32 %v4520, %v4545
  %v4556 = vmul.f32 %v4521, %v4545
  %v4557 = vmul.f32 %v4522, %v4545
  %v4558 = vmul.f32 %v4523, %v4545
  %v4559 = vmul.f32 %v4524, %v4545
  %v4560 = vmul.f32 %v4525, %v4545
  %v4561 = vmul.f32 %v4526, %v4545
  %v4562 = vadd.f32 %v4495, %v4546
  %v4563 = vadd.f32 %v4496, %v4547
  %v4564 = vadd.f32 %v4497, %v4548
  %v4565 = vadd.f32 %v4498, %v4549
  %v4566 = vadd.f32 %v4499, %v4550
  %v4567 = vadd.f32 %v4500, %v4551
  %v4568 = vadd.f32 %v4501, %v4552
  %v4569 = vadd.f32 %v4502, %v4553
  %v4570 = vadd.f32 %v4503, %v4554
  %v4571 = vadd.f32 %v4504, %v4555
  %v4572 = vadd.f32 %v4505, %v4556
  %v4573 = vadd.f32 %v4506, %v4557
  %v4574 = vadd.f32 %v4507, %v4558
  %v4575 = vadd.f32 %v4508, %v4559
  %v4576 = vadd.f32 %v4509, %v4560
  %v4577 = vadd.f32 %v4510, %v4561
  %v4578 = vld [vmem:[%s1691 + $0x1] sm:$0x1]
  %v4579 = vlaneseq
  %v4580 = vshrl.u32 %v4579, 7
  %v4581 = vsub.s32 0, %v4580
  %v4582 = vrot.slane %v4578, %v4581
  %v4583 = vmul.f32 %v4513, %v4582
  %v4584 = vmul.f32 %v4514, %v4582
  %v4585 = vmul.f32 %v4515, %v4582
  %v4586 = vmul.f32 %v4516, %v4582
  %v4587 = vmul.f32 %v4517, %v4582
  %v4588 = vmul.f32 %v4518, %v4582
  %v4589 = vmul.f32 %v4519, %v4582
  %v4590 = vmul.f32 %v4520, %v4582
  %v4591 = vmul.f32 %v4521, %v4582
  %v4592 = vmul.f32 %v4522, %v4582
  %v4593 = vmul.f32 %v4523, %v4582
  %v4594 = vmul.f32 %v4524, %v4582
  %v4595 = vmul.f32 %v4525, %v4582
  %v4596 = vmul.f32 %v4526, %v4582
  %v4597 = vmul.f32 %v4527, %v4582
  %v4598 = vmul.f32 %v4528, %v4582
  %v4599 = vadd.f32 %v4562, %v4583
  %v4600 = vadd.f32 %v4563, %v4584
  %v4601 = vadd.f32 %v4564, %v4585
  %v4602 = vadd.f32 %v4565, %v4586
  %v4603 = vadd.f32 %v4566, %v4587
  %v4604 = vadd.f32 %v4567, %v4588
  %v4605 = vadd.f32 %v4568, %v4589
  %v4606 = vadd.f32 %v4569, %v4590
  %v4607 = vadd.f32 %v4570, %v4591
  %v4608 = vadd.f32 %v4571, %v4592
  %v4609 = vadd.f32 %v4572, %v4593
  %v4610 = vadd.f32 %v4573, %v4594
  %v4611 = vadd.f32 %v4574, %v4595
  %v4612 = vadd.f32 %v4575, %v4596
  %v4613 = vadd.f32 %v4576, %v4597
  %v4614 = vadd.f32 %v4577, %v4598
  %v4615 = vld [vmem:[%s1691 + $0x2] sm:$0x1]
  %v4616 = vlaneseq
  %v4617 = vshrl.u32 %v4616, 7
  %v4618 = vsub.s32 0, %v4617
  %v4619 = vrot.slane %v4615, %v4618
  %v4620 = vmul.f32 %v4515, %v4619
  %v4621 = vmul.f32 %v4516, %v4619
  %v4622 = vmul.f32 %v4517, %v4619
  %v4623 = vmul.f32 %v4518, %v4619
  %v4624 = vmul.f32 %v4519, %v4619
  %v4625 = vmul.f32 %v4520, %v4619
  %v4626 = vmul.f32 %v4521, %v4619
  %v4627 = vmul.f32 %v4522, %v4619
  %v4628 = vmul.f32 %v4523, %v4619
  %v4629 = vmul.f32 %v4524, %v4619
  %v4630 = vmul.f32 %v4525, %v4619
  %v4631 = vmul.f32 %v4526, %v4619
  %v4632 = vmul.f32 %v4527, %v4619
  %v4633 = vmul.f32 %v4528, %v4619
  %v4634 = vmul.f32 %v4529, %v4619
  %v4635 = vmul.f32 %v4530, %v4619
  %v4636 = vadd.f32 %v4599, %v4620
  %v4637 = vadd.f32 %v4600, %v4621
  %v4638 = vadd.f32 %v4601, %v4622
  %v4639 = vadd.f32 %v4602, %v4623
  %v4640 = vadd.f32 %v4603, %v4624
  %v4641 = vadd.f32 %v4604, %v4625
  %v4642 = vadd.f32 %v4605, %v4626
  %v4643 = vadd.f32 %v4606, %v4627
  %v4644 = vadd.f32 %v4607, %v4628
  %v4645 = vadd.f32 %v4608, %v4629
  %v4646 = vadd.f32 %v4609, %v4630
  %v4647 = vadd.f32 %v4610, %v4631
  %v4648 = vadd.f32 %v4611, %v4632
  %v4649 = vadd.f32 %v4612, %v4633
  %v4650 = vadd.f32 %v4613, %v4634
  %v4651 = vadd.f32 %v4614, %v4635
  %v4652 = vld [vmem:[%s1691 + $0x3] sm:$0x1]
  %v4653 = vlaneseq
  %v4654 = vshrl.u32 %v4653, 7
  %v4655 = vsub.s32 0, %v4654
  %v4656 = vrot.slane %v4652, %v4655
  %v4657 = vmul.f32 %v4517, %v4656
  %v4658 = vmul.f32 %v4518, %v4656
  %v4659 = vmul.f32 %v4519, %v4656
  %v4660 = vmul.f32 %v4520, %v4656
  %v4661 = vmul.f32 %v4521, %v4656
  %v4662 = vmul.f32 %v4522, %v4656
  %v4663 = vmul.f32 %v4523, %v4656
  %v4664 = vmul.f32 %v4524, %v4656
  %v4665 = vmul.f32 %v4525, %v4656
  %v4666 = vmul.f32 %v4526, %v4656
  %v4667 = vmul.f32 %v4527, %v4656
  %v4668 = vmul.f32 %v4528, %v4656
  %v4669 = vmul.f32 %v4529, %v4656
  %v4670 = vmul.f32 %v4530, %v4656
  %v4671 = vmul.f32 %v4531, %v4656
  %v4672 = vmul.f32 %v4532, %v4656
  %v4673 = vadd.f32 %v4636, %v4657
  %v4674 = vadd.f32 %v4637, %v4658
  %v4675 = vadd.f32 %v4638, %v4659
  %v4676 = vadd.f32 %v4639, %v4660
  %v4677 = vadd.f32 %v4640, %v4661
  %v4678 = vadd.f32 %v4641, %v4662
  %v4679 = vadd.f32 %v4642, %v4663
  %v4680 = vadd.f32 %v4643, %v4664
  %v4681 = vadd.f32 %v4644, %v4665
  %v4682 = vadd.f32 %v4645, %v4666
  %v4683 = vadd.f32 %v4646, %v4667
  %v4684 = vadd.f32 %v4647, %v4668
  %v4685 = vadd.f32 %v4648, %v4669
  %v4686 = vadd.f32 %v4649, %v4670
  %v4687 = vadd.f32 %v4650, %v4671
  %v4688 = vadd.f32 %v4651, %v4672
  %v4689 = vld [vmem:[%s1691 + $0x4] sm:$0x1]
  %v4690 = vlaneseq
  %v4691 = vshrl.u32 %v4690, 7
  %v4692 = vsub.s32 0, %v4691
  %v4693 = vrot.slane %v4689, %v4692
  %v4694 = vmul.f32 %v4519, %v4693
  %v4695 = vmul.f32 %v4520, %v4693
  %v4696 = vmul.f32 %v4521, %v4693
  %v4697 = vmul.f32 %v4522, %v4693
  %v4698 = vmul.f32 %v4523, %v4693
  %v4699 = vmul.f32 %v4524, %v4693
  %v4700 = vmul.f32 %v4525, %v4693
  %v4701 = vmul.f32 %v4526, %v4693
  %v4702 = vmul.f32 %v4527, %v4693
  %v4703 = vmul.f32 %v4528, %v4693
  %v4704 = vmul.f32 %v4529, %v4693
  %v4705 = vmul.f32 %v4530, %v4693
  %v4706 = vmul.f32 %v4531, %v4693
  %v4707 = vmul.f32 %v4532, %v4693
  %v4708 = vmul.f32 %v4533, %v4693
  %v4709 = vmul.f32 %v4534, %v4693
  %v4710 = vadd.f32 %v4673, %v4694
  %v4711 = vadd.f32 %v4674, %v4695
  %v4712 = vadd.f32 %v4675, %v4696
  %v4713 = vadd.f32 %v4676, %v4697
  %v4714 = vadd.f32 %v4677, %v4698
  %v4715 = vadd.f32 %v4678, %v4699
  %v4716 = vadd.f32 %v4679, %v4700
  %v4717 = vadd.f32 %v4680, %v4701
  %v4718 = vadd.f32 %v4681, %v4702
  %v4719 = vadd.f32 %v4682, %v4703
  %v4720 = vadd.f32 %v4683, %v4704
  %v4721 = vadd.f32 %v4684, %v4705
  %v4722 = vadd.f32 %v4685, %v4706
  %v4723 = vadd.f32 %v4686, %v4707
  %v4724 = vadd.f32 %v4687, %v4708
  %v4725 = vadd.f32 %v4688, %v4709
  %v4726 = vld [vmem:[%s1691 + $0x5] sm:$0x1]
  %v4727 = vlaneseq
  %v4728 = vshrl.u32 %v4727, 7
  %v4729 = vsub.s32 0, %v4728
  %v4730 = vrot.slane %v4726, %v4729
  %v4731 = vmul.f32 %v4521, %v4730
  %v4732 = vmul.f32 %v4522, %v4730
  %v4733 = vmul.f32 %v4523, %v4730
  %v4734 = vmul.f32 %v4524, %v4730
  %v4735 = vmul.f32 %v4525, %v4730
  %v4736 = vmul.f32 %v4526, %v4730
  %v4737 = vmul.f32 %v4527, %v4730
  %v4738 = vmul.f32 %v4528, %v4730
  %v4739 = vmul.f32 %v4529, %v4730
  %v4740 = vmul.f32 %v4530, %v4730
  %v4741 = vmul.f32 %v4531, %v4730
  %v4742 = vmul.f32 %v4532, %v4730
  %v4743 = vmul.f32 %v4533, %v4730
  %v4744 = vmul.f32 %v4534, %v4730
  %v4745 = vmul.f32 %v4535, %v4730
  %v4746 = vmul.f32 %v4536, %v4730
  %v4747 = vadd.f32 %v4710, %v4731
  %v4748 = vadd.f32 %v4711, %v4732
  %v4749 = vadd.f32 %v4712, %v4733
  %v4750 = vadd.f32 %v4713, %v4734
  %v4751 = vadd.f32 %v4714, %v4735
  %v4752 = vadd.f32 %v4715, %v4736
  %v4753 = vadd.f32 %v4716, %v4737
  %v4754 = vadd.f32 %v4717, %v4738
  %v4755 = vadd.f32 %v4718, %v4739
  %v4756 = vadd.f32 %v4719, %v4740
  %v4757 = vadd.f32 %v4720, %v4741
  %v4758 = vadd.f32 %v4721, %v4742
  %v4759 = vadd.f32 %v4722, %v4743
  %v4760 = vadd.f32 %v4723, %v4744
  %v4761 = vadd.f32 %v4724, %v4745
  %v4762 = vadd.f32 %v4725, %v4746
  %v4763 = vld [vmem:[%s1691 + $0x6] sm:$0x1]
  %v4764 = vlaneseq
  %v4765 = vshrl.u32 %v4764, 7
  %v4766 = vsub.s32 0, %v4765
  %v4767 = vrot.slane %v4763, %v4766
  %v4768 = vmul.f32 %v4523, %v4767
  %v4769 = vmul.f32 %v4524, %v4767
  %v4770 = vmul.f32 %v4525, %v4767
  %v4771 = vmul.f32 %v4526, %v4767
  %v4772 = vmul.f32 %v4527, %v4767
  %v4773 = vmul.f32 %v4528, %v4767
  %v4774 = vmul.f32 %v4529, %v4767
  %v4775 = vmul.f32 %v4530, %v4767
  %v4776 = vmul.f32 %v4531, %v4767
  %v4777 = vmul.f32 %v4532, %v4767
  %v4778 = vmul.f32 %v4533, %v4767
  %v4779 = vmul.f32 %v4534, %v4767
  %v4780 = vmul.f32 %v4535, %v4767
  %v4781 = vmul.f32 %v4536, %v4767
  %v4782 = vmul.f32 %v4537, %v4767
  %v4783 = vmul.f32 %v4538, %v4767
  %v4784 = vadd.f32 %v4747, %v4768
  %v4785 = vadd.f32 %v4748, %v4769
  %v4786 = vadd.f32 %v4749, %v4770
  %v4787 = vadd.f32 %v4750, %v4771
  %v4788 = vadd.f32 %v4751, %v4772
  %v4789 = vadd.f32 %v4752, %v4773
  %v4790 = vadd.f32 %v4753, %v4774
  %v4791 = vadd.f32 %v4754, %v4775
  %v4792 = vadd.f32 %v4755, %v4776
  %v4793 = vadd.f32 %v4756, %v4777
  %v4794 = vadd.f32 %v4757, %v4778
  %v4795 = vadd.f32 %v4758, %v4779
  %v4796 = vadd.f32 %v4759, %v4780
  %v4797 = vadd.f32 %v4760, %v4781
  %v4798 = vadd.f32 %v4761, %v4782
  %v4799 = vadd.f32 %v4762, %v4783
  %v4800 = vld [vmem:[%s1691 + $0x7] sm:$0x1]
  %v4801 = vlaneseq
  %v4802 = vshrl.u32 %v4801, 7
  %v4803 = vsub.s32 0, %v4802
  %v4804 = vrot.slane %v4800, %v4803
  %v4805 = vmul.f32 %v4525, %v4804
  %v4806 = vmul.f32 %v4526, %v4804
  %v4807 = vmul.f32 %v4527, %v4804
  %v4808 = vmul.f32 %v4528, %v4804
  %v4809 = vmul.f32 %v4529, %v4804
  %v4810 = vmul.f32 %v4530, %v4804
  %v4811 = vmul.f32 %v4531, %v4804
  %v4812 = vmul.f32 %v4532, %v4804
  %v4813 = vmul.f32 %v4533, %v4804
  %v4814 = vmul.f32 %v4534, %v4804
  %v4815 = vmul.f32 %v4535, %v4804
  %v4816 = vmul.f32 %v4536, %v4804
  %v4817 = vmul.f32 %v4537, %v4804
  %v4818 = vmul.f32 %v4538, %v4804
  %v4819 = vmul.f32 %v4539, %v4804
  %v4820 = vmul.f32 %v4540, %v4804
  %v4821 = vadd.f32 %v4784, %v4805
  %v4822 = vadd.f32 %v4785, %v4806
  %v4823 = vadd.f32 %v4786, %v4807
  %v4824 = vadd.f32 %v4787, %v4808
  %v4825 = vadd.f32 %v4788, %v4809
  %v4826 = vadd.f32 %v4789, %v4810
  %v4827 = vadd.f32 %v4790, %v4811
  %v4828 = vadd.f32 %v4791, %v4812
  %v4829 = vadd.f32 %v4792, %v4813
  %v4830 = vadd.f32 %v4793, %v4814
  %v4831 = vadd.f32 %v4794, %v4815
  %v4832 = vadd.f32 %v4795, %v4816
  %v4833 = vadd.f32 %v4796, %v4817
  %v4834 = vadd.f32 %v4797, %v4818
  %v4835 = vadd.f32 %v4798, %v4819
  %v4836 = vadd.f32 %v4799, %v4820
  %v4837 = vld [vmem:[%s2880 + $0x7] sm:$0xff]
  %v4838 = vld [vmem:[%s2880 + $0xf] sm:$0xff]
  %v4839 = vld [vmem:[%s2880 + $0x1f] sm:$0xff]
  %v4840 = vld [vmem:[%s2880 + $0x27] sm:$0xff]
  %v4841 = vld [vmem:[%s2880 + $0x37] sm:$0xff]
  %v4842 = vld [vmem:[%s2880 + $0x3f] sm:$0xff]
  %v4843 = vld [vmem:[%s2880 + $0x4f] sm:$0xff]
  %v4844 = vld [vmem:[%s2880 + $0x57] sm:$0xff]
  %v4845 = vld [vmem:[%s2880 + $0x67] sm:$0xff]
  %v4846 = vld [vmem:[%s2880 + $0x6f] sm:$0xff]
  %v4847 = vld [vmem:[%s2880 + $0x7f] sm:$0xff]
  %v4848 = vld [vmem:[%s2880 + $0x87] sm:$0xff]
  %v4849 = vld [vmem:[%s2880 + $0x97] sm:$0xff]
  %v4850 = vld [vmem:[%s2880 + $0x9f] sm:$0xff]
  %v4851 = vld [vmem:[%s2880 + $0xaf] sm:$0xff]
  %v4852 = vld [vmem:[%s2880 + $0xb7] sm:$0xff]
  %v4853 = vld [vmem:[%s2880 + $0xc7] sm:$0xff]
  %v4854 = vld [vmem:[%s2880 + $0xcf] sm:$0xff]
  %v4855 = vld [vmem:[%s2880 + $0xdf] sm:$0xff]
  %v4856 = vld [vmem:[%s2880 + $0xe7] sm:$0xff]
  %v4857 = vld [vmem:[%s2880 + $0xf7] sm:$0xff]
  %v4858 = vld [vmem:[%s2880 + $0xff] sm:$0xff]
  %v4859 = vld [vmem:[%s2880 + $0x10f] sm:$0xff]
  %v4860 = vld [vmem:[%s2880 + $0x117] sm:$0xff]
  %v4861 = vld [vmem:[%s2880 + $0x127] sm:$0xff]
  %v4862 = vld [vmem:[%s2880 + $0x12f] sm:$0xff]
  %v4863 = vld [vmem:[%s2880 + $0x13f] sm:$0xff]
  %v4864 = vld [vmem:[%s2880 + $0x147] sm:$0xff]
  %v4865 = vld [vmem:[%s2880 + $0x157] sm:$0xff]
  %v4866 = vld [vmem:[%s2880 + $0x15f] sm:$0xff]
  %v4867 = vld [vmem:[%s2018] sm:$0x1]
  %v4868 = vlaneseq
  %v4869 = vshrl.u32 %v4868, 7
  %v4870 = vsub.s32 0, %v4869
  %v4871 = vrot.slane %v4867, %v4870
  %v4872 = vmul.f32 %v4837, %v4871
  %v4873 = vmul.f32 %v4838, %v4871
  %v4874 = vmul.f32 %v4839, %v4871
  %v4875 = vmul.f32 %v4840, %v4871
  %v4876 = vmul.f32 %v4841, %v4871
  %v4877 = vmul.f32 %v4842, %v4871
  %v4878 = vmul.f32 %v4843, %v4871
  %v4879 = vmul.f32 %v4844, %v4871
  %v4880 = vmul.f32 %v4845, %v4871
  %v4881 = vmul.f32 %v4846, %v4871
  %v4882 = vmul.f32 %v4847, %v4871
  %v4883 = vmul.f32 %v4848, %v4871
  %v4884 = vmul.f32 %v4849, %v4871
  %v4885 = vmul.f32 %v4850, %v4871
  %v4886 = vmul.f32 %v4851, %v4871
  %v4887 = vmul.f32 %v4852, %v4871
  %v4888 = vadd.f32 %v4821, %v4872
  %v4889 = vadd.f32 %v4822, %v4873
  %v4890 = vadd.f32 %v4823, %v4874
  %v4891 = vadd.f32 %v4824, %v4875
  %v4892 = vadd.f32 %v4825, %v4876
  %v4893 = vadd.f32 %v4826, %v4877
  %v4894 = vadd.f32 %v4827, %v4878
  %v4895 = vadd.f32 %v4828, %v4879
  %v4896 = vadd.f32 %v4829, %v4880
  %v4897 = vadd.f32 %v4830, %v4881
  %v4898 = vadd.f32 %v4831, %v4882
  %v4899 = vadd.f32 %v4832, %v4883
  %v4900 = vadd.f32 %v4833, %v4884
  %v4901 = vadd.f32 %v4834, %v4885
  %v4902 = vadd.f32 %v4835, %v4886
  %v4903 = vadd.f32 %v4836, %v4887
  %v4904 = vld [vmem:[%s2018 + $0x1] sm:$0x1]
  %v4905 = vlaneseq
  %v4906 = vshrl.u32 %v4905, 7
  %v4907 = vsub.s32 0, %v4906
  %v4908 = vrot.slane %v4904, %v4907
  %v4909 = vmul.f32 %v4839, %v4908
  %v4910 = vmul.f32 %v4840, %v4908
  %v4911 = vmul.f32 %v4841, %v4908
  %v4912 = vmul.f32 %v4842, %v4908
  %v4913 = vmul.f32 %v4843, %v4908
  %v4914 = vmul.f32 %v4844, %v4908
  %v4915 = vmul.f32 %v4845, %v4908
  %v4916 = vmul.f32 %v4846, %v4908
  %v4917 = vmul.f32 %v4847, %v4908
  %v4918 = vmul.f32 %v4848, %v4908
  %v4919 = vmul.f32 %v4849, %v4908
  %v4920 = vmul.f32 %v4850, %v4908
  %v4921 = vmul.f32 %v4851, %v4908
  %v4922 = vmul.f32 %v4852, %v4908
  %v4923 = vmul.f32 %v4853, %v4908
  %v4924 = vmul.f32 %v4854, %v4908
  %v4925 = vadd.f32 %v4888, %v4909
  %v4926 = vadd.f32 %v4889, %v4910
  %v4927 = vadd.f32 %v4890, %v4911
  %v4928 = vadd.f32 %v4891, %v4912
  %v4929 = vadd.f32 %v4892, %v4913
  %v4930 = vadd.f32 %v4893, %v4914
  %v4931 = vadd.f32 %v4894, %v4915
  %v4932 = vadd.f32 %v4895, %v4916
  %v4933 = vadd.f32 %v4896, %v4917
  %v4934 = vadd.f32 %v4897, %v4918
  %v4935 = vadd.f32 %v4898, %v4919
  %v4936 = vadd.f32 %v4899, %v4920
  %v4937 = vadd.f32 %v4900, %v4921
  %v4938 = vadd.f32 %v4901, %v4922
  %v4939 = vadd.f32 %v4902, %v4923
  %v4940 = vadd.f32 %v4903, %v4924
  %v4941 = vld [vmem:[%s2018 + $0x2] sm:$0x1]
  %v4942 = vlaneseq
  %v4943 = vshrl.u32 %v4942, 7
  %v4944 = vsub.s32 0, %v4943
  %v4945 = vrot.slane %v4941, %v4944
  %v4946 = vmul.f32 %v4841, %v4945
  %v4947 = vmul.f32 %v4842, %v4945
  %v4948 = vmul.f32 %v4843, %v4945
  %v4949 = vmul.f32 %v4844, %v4945
  %v4950 = vmul.f32 %v4845, %v4945
  %v4951 = vmul.f32 %v4846, %v4945
  %v4952 = vmul.f32 %v4847, %v4945
  %v4953 = vmul.f32 %v4848, %v4945
  %v4954 = vmul.f32 %v4849, %v4945
  %v4955 = vmul.f32 %v4850, %v4945
  %v4956 = vmul.f32 %v4851, %v4945
  %v4957 = vmul.f32 %v4852, %v4945
  %v4958 = vmul.f32 %v4853, %v4945
  %v4959 = vmul.f32 %v4854, %v4945
  %v4960 = vmul.f32 %v4855, %v4945
  %v4961 = vmul.f32 %v4856, %v4945
  %v4962 = vadd.f32 %v4925, %v4946
  %v4963 = vadd.f32 %v4926, %v4947
  %v4964 = vadd.f32 %v4927, %v4948
  %v4965 = vadd.f32 %v4928, %v4949
  %v4966 = vadd.f32 %v4929, %v4950
  %v4967 = vadd.f32 %v4930, %v4951
  %v4968 = vadd.f32 %v4931, %v4952
  %v4969 = vadd.f32 %v4932, %v4953
  %v4970 = vadd.f32 %v4933, %v4954
  %v4971 = vadd.f32 %v4934, %v4955
  %v4972 = vadd.f32 %v4935, %v4956
  %v4973 = vadd.f32 %v4936, %v4957
  %v4974 = vadd.f32 %v4937, %v4958
  %v4975 = vadd.f32 %v4938, %v4959
  %v4976 = vadd.f32 %v4939, %v4960
  %v4977 = vadd.f32 %v4940, %v4961
  %v4978 = vld [vmem:[%s2018 + $0x3] sm:$0x1]
  %v4979 = vlaneseq
  %v4980 = vshrl.u32 %v4979, 7
  %v4981 = vsub.s32 0, %v4980
  %v4982 = vrot.slane %v4978, %v4981
  %v4983 = vmul.f32 %v4843, %v4982
  %v4984 = vmul.f32 %v4844, %v4982
  %v4985 = vmul.f32 %v4845, %v4982
  %v4986 = vmul.f32 %v4846, %v4982
  %v4987 = vmul.f32 %v4847, %v4982
  %v4988 = vmul.f32 %v4848, %v4982
  %v4989 = vmul.f32 %v4849, %v4982
  %v4990 = vmul.f32 %v4850, %v4982
  %v4991 = vmul.f32 %v4851, %v4982
  %v4992 = vmul.f32 %v4852, %v4982
  %v4993 = vmul.f32 %v4853, %v4982
  %v4994 = vmul.f32 %v4854, %v4982
  %v4995 = vmul.f32 %v4855, %v4982
  %v4996 = vmul.f32 %v4856, %v4982
  %v4997 = vmul.f32 %v4857, %v4982
  %v4998 = vmul.f32 %v4858, %v4982
  %v4999 = vadd.f32 %v4962, %v4983
  %v5000 = vadd.f32 %v4963, %v4984
  %v5001 = vadd.f32 %v4964, %v4985
  %v5002 = vadd.f32 %v4965, %v4986
  %v5003 = vadd.f32 %v4966, %v4987
  %v5004 = vadd.f32 %v4967, %v4988
  %v5005 = vadd.f32 %v4968, %v4989
  %v5006 = vadd.f32 %v4969, %v4990
  %v5007 = vadd.f32 %v4970, %v4991
  %v5008 = vadd.f32 %v4971, %v4992
  %v5009 = vadd.f32 %v4972, %v4993
  %v5010 = vadd.f32 %v4973, %v4994
  %v5011 = vadd.f32 %v4974, %v4995
  %v5012 = vadd.f32 %v4975, %v4996
  %v5013 = vadd.f32 %v4976, %v4997
  %v5014 = vadd.f32 %v4977, %v4998
  %v5015 = vld [vmem:[%s2018 + $0x4] sm:$0x1]
  %v5016 = vlaneseq
  %v5017 = vshrl.u32 %v5016, 7
  %v5018 = vsub.s32 0, %v5017
  %v5019 = vrot.slane %v5015, %v5018
  %v5020 = vmul.f32 %v4845, %v5019
  %v5021 = vmul.f32 %v4846, %v5019
  %v5022 = vmul.f32 %v4847, %v5019
  %v5023 = vmul.f32 %v4848, %v5019
  %v5024 = vmul.f32 %v4849, %v5019
  %v5025 = vmul.f32 %v4850, %v5019
  %v5026 = vmul.f32 %v4851, %v5019
  %v5027 = vmul.f32 %v4852, %v5019
  %v5028 = vmul.f32 %v4853, %v5019
  %v5029 = vmul.f32 %v4854, %v5019
  %v5030 = vmul.f32 %v4855, %v5019
  %v5031 = vmul.f32 %v4856, %v5019
  %v5032 = vmul.f32 %v4857, %v5019
  %v5033 = vmul.f32 %v4858, %v5019
  %v5034 = vmul.f32 %v4859, %v5019
  %v5035 = vmul.f32 %v4860, %v5019
  %v5036 = vadd.f32 %v4999, %v5020
  %v5037 = vadd.f32 %v5000, %v5021
  %v5038 = vadd.f32 %v5001, %v5022
  %v5039 = vadd.f32 %v5002, %v5023
  %v5040 = vadd.f32 %v5003, %v5024
  %v5041 = vadd.f32 %v5004, %v5025
  %v5042 = vadd.f32 %v5005, %v5026
  %v5043 = vadd.f32 %v5006, %v5027
  %v5044 = vadd.f32 %v5007, %v5028
  %v5045 = vadd.f32 %v5008, %v5029
  %v5046 = vadd.f32 %v5009, %v5030
  %v5047 = vadd.f32 %v5010, %v5031
  %v5048 = vadd.f32 %v5011, %v5032
  %v5049 = vadd.f32 %v5012, %v5033
  %v5050 = vadd.f32 %v5013, %v5034
  %v5051 = vadd.f32 %v5014, %v5035
  %v5052 = vld [vmem:[%s2018 + $0x5] sm:$0x1]
  %v5053 = vlaneseq
  %v5054 = vshrl.u32 %v5053, 7
  %v5055 = vsub.s32 0, %v5054
  %v5056 = vrot.slane %v5052, %v5055
  %v5057 = vmul.f32 %v4847, %v5056
  %v5058 = vmul.f32 %v4848, %v5056
  %v5059 = vmul.f32 %v4849, %v5056
  %v5060 = vmul.f32 %v4850, %v5056
  %v5061 = vmul.f32 %v4851, %v5056
  %v5062 = vmul.f32 %v4852, %v5056
  %v5063 = vmul.f32 %v4853, %v5056
  %v5064 = vmul.f32 %v4854, %v5056
  %v5065 = vmul.f32 %v4855, %v5056
  %v5066 = vmul.f32 %v4856, %v5056
  %v5067 = vmul.f32 %v4857, %v5056
  %v5068 = vmul.f32 %v4858, %v5056
  %v5069 = vmul.f32 %v4859, %v5056
  %v5070 = vmul.f32 %v4860, %v5056
  %v5071 = vmul.f32 %v4861, %v5056
  %v5072 = vmul.f32 %v4862, %v5056
  %v5073 = vadd.f32 %v5036, %v5057
  %v5074 = vadd.f32 %v5037, %v5058
  %v5075 = vadd.f32 %v5038, %v5059
  %v5076 = vadd.f32 %v5039, %v5060
  %v5077 = vadd.f32 %v5040, %v5061
  %v5078 = vadd.f32 %v5041, %v5062
  %v5079 = vadd.f32 %v5042, %v5063
  %v5080 = vadd.f32 %v5043, %v5064
  %v5081 = vadd.f32 %v5044, %v5065
  %v5082 = vadd.f32 %v5045, %v5066
  %v5083 = vadd.f32 %v5046, %v5067
  %v5084 = vadd.f32 %v5047, %v5068
  %v5085 = vadd.f32 %v5048, %v5069
  %v5086 = vadd.f32 %v5049, %v5070
  %v5087 = vadd.f32 %v5050, %v5071
  %v5088 = vadd.f32 %v5051, %v5072
  %v5089 = vld [vmem:[%s2018 + $0x6] sm:$0x1]
  %v5090 = vlaneseq
  %v5091 = vshrl.u32 %v5090, 7
  %v5092 = vsub.s32 0, %v5091
  %v5093 = vrot.slane %v5089, %v5092
  %v5094 = vmul.f32 %v4849, %v5093
  %v5095 = vmul.f32 %v4850, %v5093
  %v5096 = vmul.f32 %v4851, %v5093
  %v5097 = vmul.f32 %v4852, %v5093
  %v5098 = vmul.f32 %v4853, %v5093
  %v5099 = vmul.f32 %v4854, %v5093
  %v5100 = vmul.f32 %v4855, %v5093
  %v5101 = vmul.f32 %v4856, %v5093
  %v5102 = vmul.f32 %v4857, %v5093
  %v5103 = vmul.f32 %v4858, %v5093
  %v5104 = vmul.f32 %v4859, %v5093
  %v5105 = vmul.f32 %v4860, %v5093
  %v5106 = vmul.f32 %v4861, %v5093
  %v5107 = vmul.f32 %v4862, %v5093
  %v5108 = vmul.f32 %v4863, %v5093
  %v5109 = vmul.f32 %v4864, %v5093
  %v5110 = vadd.f32 %v5073, %v5094
  %v5111 = vadd.f32 %v5074, %v5095
  %v5112 = vadd.f32 %v5075, %v5096
  %v5113 = vadd.f32 %v5076, %v5097
  %v5114 = vadd.f32 %v5077, %v5098
  %v5115 = vadd.f32 %v5078, %v5099
  %v5116 = vadd.f32 %v5079, %v5100
  %v5117 = vadd.f32 %v5080, %v5101
  %v5118 = vadd.f32 %v5081, %v5102
  %v5119 = vadd.f32 %v5082, %v5103
  %v5120 = vadd.f32 %v5083, %v5104
  %v5121 = vadd.f32 %v5084, %v5105
  %v5122 = vadd.f32 %v5085, %v5106
  %v5123 = vadd.f32 %v5086, %v5107
  %v5124 = vadd.f32 %v5087, %v5108
  %v5125 = vadd.f32 %v5088, %v5109
  %v5126 = vld [vmem:[%s2018 + $0x7] sm:$0x1]
  %v5127 = vlaneseq
  %v5128 = vshrl.u32 %v5127, 7
  %v5129 = vsub.s32 0, %v5128
  %v5130 = vrot.slane %v5126, %v5129
  %v5131 = vmul.f32 %v4851, %v5130
  %v5132 = vmul.f32 %v4852, %v5130
  %v5133 = vmul.f32 %v4853, %v5130
  %v5134 = vmul.f32 %v4854, %v5130
  %v5135 = vmul.f32 %v4855, %v5130
  %v5136 = vmul.f32 %v4856, %v5130
  %v5137 = vmul.f32 %v4857, %v5130
  %v5138 = vmul.f32 %v4858, %v5130
  %v5139 = vmul.f32 %v4859, %v5130
  %v5140 = vmul.f32 %v4860, %v5130
  %v5141 = vmul.f32 %v4861, %v5130
  %v5142 = vmul.f32 %v4862, %v5130
  %v5143 = vmul.f32 %v4863, %v5130
  %v5144 = vmul.f32 %v4864, %v5130
  %v5145 = vmul.f32 %v4865, %v5130
  %v5146 = vmul.f32 %v4866, %v5130
  %v5147 = vadd.f32 %v5110, %v5131
  %v5148 = vadd.f32 %v5111, %v5132
  %v5149 = vadd.f32 %v5112, %v5133
  %v5150 = vadd.f32 %v5113, %v5134
  %v5151 = vadd.f32 %v5114, %v5135
  %v5152 = vadd.f32 %v5115, %v5136
  %v5153 = vadd.f32 %v5116, %v5137
  %v5154 = vadd.f32 %v5117, %v5138
  %v5155 = vadd.f32 %v5118, %v5139
  %v5156 = vadd.f32 %v5119, %v5140
  %v5157 = vadd.f32 %v5120, %v5141
  %v5158 = vadd.f32 %v5121, %v5142
  %v5159 = vadd.f32 %v5122, %v5143
  %v5160 = vadd.f32 %v5123, %v5144
  %v5161 = vadd.f32 %v5124, %v5145
  %v5162 = vadd.f32 %v5125, %v5146
  %v5163 = vld [vmem:[%s2880 + $0x3] sm:$0xff]
  %v5164 = vld [vmem:[%s2880 + $0xb] sm:$0xff]
  %v5165 = vld [vmem:[%s2880 + $0x1b] sm:$0xff]
  %v5166 = vld [vmem:[%s2880 + $0x23] sm:$0xff]
  %v5167 = vld [vmem:[%s2880 + $0x33] sm:$0xff]
  %v5168 = vld [vmem:[%s2880 + $0x3b] sm:$0xff]
  %v5169 = vld [vmem:[%s2880 + $0x4b] sm:$0xff]
  %v5170 = vld [vmem:[%s2880 + $0x53] sm:$0xff]
  %v5171 = vld [vmem:[%s2880 + $0x63] sm:$0xff]
  %v5172 = vld [vmem:[%s2880 + $0x6b] sm:$0xff]
  %v5173 = vld [vmem:[%s2880 + $0x7b] sm:$0xff]
  %v5174 = vld [vmem:[%s2880 + $0x83] sm:$0xff]
  %v5175 = vld [vmem:[%s2880 + $0x93] sm:$0xff]
  %v5176 = vld [vmem:[%s2880 + $0x9b] sm:$0xff]
  %v5177 = vld [vmem:[%s2880 + $0xab] sm:$0xff]
  %v5178 = vld [vmem:[%s2880 + $0xb3] sm:$0xff]
  %v5179 = vld [vmem:[%s2880 + $0xc3] sm:$0xff]
  %v5180 = vld [vmem:[%s2880 + $0xcb] sm:$0xff]
  %v5181 = vld [vmem:[%s2880 + $0xdb] sm:$0xff]
  %v5182 = vld [vmem:[%s2880 + $0xe3] sm:$0xff]
  %v5183 = vld [vmem:[%s2880 + $0xf3] sm:$0xff]
  %v5184 = vld [vmem:[%s2880 + $0xfb] sm:$0xff]
  %v5185 = vld [vmem:[%s2880 + $0x10b] sm:$0xff]
  %v5186 = vld [vmem:[%s2880 + $0x113] sm:$0xff]
  %v5187 = vld [vmem:[%s2880 + $0x123] sm:$0xff]
  %v5188 = vld [vmem:[%s2880 + $0x12b] sm:$0xff]
  %v5189 = vld [vmem:[%s2880 + $0x13b] sm:$0xff]
  %v5190 = vld [vmem:[%s2880 + $0x143] sm:$0xff]
  %v5191 = vld [vmem:[%s2880 + $0x153] sm:$0xff]
  %v5192 = vld [vmem:[%s2880 + $0x15b] sm:$0xff]
  %v5193 = vld [vmem:[%s2345] sm:$0x1]
  %v5194 = vlaneseq
  %v5195 = vshrl.u32 %v5194, 7
  %v5196 = vsub.s32 0, %v5195
  %v5197 = vrot.slane %v5193, %v5196
  %v5198 = vmul.f32 %v5163, %v5197
  %v5199 = vmul.f32 %v5164, %v5197
  %v5200 = vmul.f32 %v5165, %v5197
  %v5201 = vmul.f32 %v5166, %v5197
  %v5202 = vmul.f32 %v5167, %v5197
  %v5203 = vmul.f32 %v5168, %v5197
  %v5204 = vmul.f32 %v5169, %v5197
  %v5205 = vmul.f32 %v5170, %v5197
  %v5206 = vmul.f32 %v5171, %v5197
  %v5207 = vmul.f32 %v5172, %v5197
  %v5208 = vmul.f32 %v5173, %v5197
  %v5209 = vmul.f32 %v5174, %v5197
  %v5210 = vmul.f32 %v5175, %v5197
  %v5211 = vmul.f32 %v5176, %v5197
  %v5212 = vmul.f32 %v5177, %v5197
  %v5213 = vmul.f32 %v5178, %v5197
  %v5214 = vadd.f32 %v5147, %v5198
  %v5215 = vadd.f32 %v5148, %v5199
  %v5216 = vadd.f32 %v5149, %v5200
  %v5217 = vadd.f32 %v5150, %v5201
  %v5218 = vadd.f32 %v5151, %v5202
  %v5219 = vadd.f32 %v5152, %v5203
  %v5220 = vadd.f32 %v5153, %v5204
  %v5221 = vadd.f32 %v5154, %v5205
  %v5222 = vadd.f32 %v5155, %v5206
  %v5223 = vadd.f32 %v5156, %v5207
  %v5224 = vadd.f32 %v5157, %v5208
  %v5225 = vadd.f32 %v5158, %v5209
  %v5226 = vadd.f32 %v5159, %v5210
  %v5227 = vadd.f32 %v5160, %v5211
  %v5228 = vadd.f32 %v5161, %v5212
  %v5229 = vadd.f32 %v5162, %v5213
  %v5230 = vld [vmem:[%s2345 + $0x1] sm:$0x1]
  %v5231 = vlaneseq
  %v5232 = vshrl.u32 %v5231, 7
  %v5233 = vsub.s32 0, %v5232
  %v5234 = vrot.slane %v5230, %v5233
  %v5235 = vmul.f32 %v5165, %v5234
  %v5236 = vmul.f32 %v5166, %v5234
  %v5237 = vmul.f32 %v5167, %v5234
  %v5238 = vmul.f32 %v5168, %v5234
  %v5239 = vmul.f32 %v5169, %v5234
  %v5240 = vmul.f32 %v5170, %v5234
  %v5241 = vmul.f32 %v5171, %v5234
  %v5242 = vmul.f32 %v5172, %v5234
  %v5243 = vmul.f32 %v5173, %v5234
  %v5244 = vmul.f32 %v5174, %v5234
  %v5245 = vmul.f32 %v5175, %v5234
  %v5246 = vmul.f32 %v5176, %v5234
  %v5247 = vmul.f32 %v5177, %v5234
  %v5248 = vmul.f32 %v5178, %v5234
  %v5249 = vmul.f32 %v5179, %v5234
  %v5250 = vmul.f32 %v5180, %v5234
  %v5251 = vadd.f32 %v5214, %v5235
  %v5252 = vadd.f32 %v5215, %v5236
  %v5253 = vadd.f32 %v5216, %v5237
  %v5254 = vadd.f32 %v5217, %v5238
  %v5255 = vadd.f32 %v5218, %v5239
  %v5256 = vadd.f32 %v5219, %v5240
  %v5257 = vadd.f32 %v5220, %v5241
  %v5258 = vadd.f32 %v5221, %v5242
  %v5259 = vadd.f32 %v5222, %v5243
  %v5260 = vadd.f32 %v5223, %v5244
  %v5261 = vadd.f32 %v5224, %v5245
  %v5262 = vadd.f32 %v5225, %v5246
  %v5263 = vadd.f32 %v5226, %v5247
  %v5264 = vadd.f32 %v5227, %v5248
  %v5265 = vadd.f32 %v5228, %v5249
  %v5266 = vadd.f32 %v5229, %v5250
  %v5267 = vld [vmem:[%s2345 + $0x2] sm:$0x1]
  %v5268 = vlaneseq
  %v5269 = vshrl.u32 %v5268, 7
  %v5270 = vsub.s32 0, %v5269
  %v5271 = vrot.slane %v5267, %v5270
  %v5272 = vmul.f32 %v5167, %v5271
  %v5273 = vmul.f32 %v5168, %v5271
  %v5274 = vmul.f32 %v5169, %v5271
  %v5275 = vmul.f32 %v5170, %v5271
  %v5276 = vmul.f32 %v5171, %v5271
  %v5277 = vmul.f32 %v5172, %v5271
  %v5278 = vmul.f32 %v5173, %v5271
  %v5279 = vmul.f32 %v5174, %v5271
  %v5280 = vmul.f32 %v5175, %v5271
  %v5281 = vmul.f32 %v5176, %v5271
  %v5282 = vmul.f32 %v5177, %v5271
  %v5283 = vmul.f32 %v5178, %v5271
  %v5284 = vmul.f32 %v5179, %v5271
  %v5285 = vmul.f32 %v5180, %v5271
  %v5286 = vmul.f32 %v5181, %v5271
  %v5287 = vmul.f32 %v5182, %v5271
  %v5288 = vadd.f32 %v5251, %v5272
  %v5289 = vadd.f32 %v5252, %v5273
  %v5290 = vadd.f32 %v5253, %v5274
  %v5291 = vadd.f32 %v5254, %v5275
  %v5292 = vadd.f32 %v5255, %v5276
  %v5293 = vadd.f32 %v5256, %v5277
  %v5294 = vadd.f32 %v5257, %v5278
  %v5295 = vadd.f32 %v5258, %v5279
  %v5296 = vadd.f32 %v5259, %v5280
  %v5297 = vadd.f32 %v5260, %v5281
  %v5298 = vadd.f32 %v5261, %v5282
  %v5299 = vadd.f32 %v5262, %v5283
  %v5300 = vadd.f32 %v5263, %v5284
  %v5301 = vadd.f32 %v5264, %v5285
  %v5302 = vadd.f32 %v5265, %v5286
  %v5303 = vadd.f32 %v5266, %v5287
  %v5304 = vld [vmem:[%s2345 + $0x3] sm:$0x1]
  %v5305 = vlaneseq
  %v5306 = vshrl.u32 %v5305, 7
  %v5307 = vsub.s32 0, %v5306
  %v5308 = vrot.slane %v5304, %v5307
  %v5309 = vmul.f32 %v5169, %v5308
  %v5310 = vmul.f32 %v5170, %v5308
  %v5311 = vmul.f32 %v5171, %v5308
  %v5312 = vmul.f32 %v5172, %v5308
  %v5313 = vmul.f32 %v5173, %v5308
  %v5314 = vmul.f32 %v5174, %v5308
  %v5315 = vmul.f32 %v5175, %v5308
  %v5316 = vmul.f32 %v5176, %v5308
  %v5317 = vmul.f32 %v5177, %v5308
  %v5318 = vmul.f32 %v5178, %v5308
  %v5319 = vmul.f32 %v5179, %v5308
  %v5320 = vmul.f32 %v5180, %v5308
  %v5321 = vmul.f32 %v5181, %v5308
  %v5322 = vmul.f32 %v5182, %v5308
  %v5323 = vmul.f32 %v5183, %v5308
  %v5324 = vmul.f32 %v5184, %v5308
  %v5325 = vadd.f32 %v5288, %v5309
  %v5326 = vadd.f32 %v5289, %v5310
  %v5327 = vadd.f32 %v5290, %v5311
  %v5328 = vadd.f32 %v5291, %v5312
  %v5329 = vadd.f32 %v5292, %v5313
  %v5330 = vadd.f32 %v5293, %v5314
  %v5331 = vadd.f32 %v5294, %v5315
  %v5332 = vadd.f32 %v5295, %v5316
  %v5333 = vadd.f32 %v5296, %v5317
  %v5334 = vadd.f32 %v5297, %v5318
  %v5335 = vadd.f32 %v5298, %v5319
  %v5336 = vadd.f32 %v5299, %v5320
  %v5337 = vadd.f32 %v5300, %v5321
  %v5338 = vadd.f32 %v5301, %v5322
  %v5339 = vadd.f32 %v5302, %v5323
  %v5340 = vadd.f32 %v5303, %v5324
  %v5341 = vld [vmem:[%s2345 + $0x4] sm:$0x1]
  %v5342 = vlaneseq
  %v5343 = vshrl.u32 %v5342, 7
  %v5344 = vsub.s32 0, %v5343
  %v5345 = vrot.slane %v5341, %v5344
  %v5346 = vmul.f32 %v5171, %v5345
  %v5347 = vmul.f32 %v5172, %v5345
  %v5348 = vmul.f32 %v5173, %v5345
  %v5349 = vmul.f32 %v5174, %v5345
  %v5350 = vmul.f32 %v5175, %v5345
  %v5351 = vmul.f32 %v5176, %v5345
  %v5352 = vmul.f32 %v5177, %v5345
  %v5353 = vmul.f32 %v5178, %v5345
  %v5354 = vmul.f32 %v5179, %v5345
  %v5355 = vmul.f32 %v5180, %v5345
  %v5356 = vmul.f32 %v5181, %v5345
  %v5357 = vmul.f32 %v5182, %v5345
  %v5358 = vmul.f32 %v5183, %v5345
  %v5359 = vmul.f32 %v5184, %v5345
  %v5360 = vmul.f32 %v5185, %v5345
  %v5361 = vmul.f32 %v5186, %v5345
  %v5362 = vadd.f32 %v5325, %v5346
  %v5363 = vadd.f32 %v5326, %v5347
  %v5364 = vadd.f32 %v5327, %v5348
  %v5365 = vadd.f32 %v5328, %v5349
  %v5366 = vadd.f32 %v5329, %v5350
  %v5367 = vadd.f32 %v5330, %v5351
  %v5368 = vadd.f32 %v5331, %v5352
  %v5369 = vadd.f32 %v5332, %v5353
  %v5370 = vadd.f32 %v5333, %v5354
  %v5371 = vadd.f32 %v5334, %v5355
  %v5372 = vadd.f32 %v5335, %v5356
  %v5373 = vadd.f32 %v5336, %v5357
  %v5374 = vadd.f32 %v5337, %v5358
  %v5375 = vadd.f32 %v5338, %v5359
  %v5376 = vadd.f32 %v5339, %v5360
  %v5377 = vadd.f32 %v5340, %v5361
  %v5378 = vld [vmem:[%s2345 + $0x5] sm:$0x1]
  %v5379 = vlaneseq
  %v5380 = vshrl.u32 %v5379, 7
  %v5381 = vsub.s32 0, %v5380
  %v5382 = vrot.slane %v5378, %v5381
  %v5383 = vmul.f32 %v5173, %v5382
  %v5384 = vmul.f32 %v5174, %v5382
  %v5385 = vmul.f32 %v5175, %v5382
  %v5386 = vmul.f32 %v5176, %v5382
  %v5387 = vmul.f32 %v5177, %v5382
  %v5388 = vmul.f32 %v5178, %v5382
  %v5389 = vmul.f32 %v5179, %v5382
  %v5390 = vmul.f32 %v5180, %v5382
  %v5391 = vmul.f32 %v5181, %v5382
  %v5392 = vmul.f32 %v5182, %v5382
  %v5393 = vmul.f32 %v5183, %v5382
  %v5394 = vmul.f32 %v5184, %v5382
  %v5395 = vmul.f32 %v5185, %v5382
  %v5396 = vmul.f32 %v5186, %v5382
  %v5397 = vmul.f32 %v5187, %v5382
  %v5398 = vmul.f32 %v5188, %v5382
  %v5399 = vadd.f32 %v5362, %v5383
  %v5400 = vadd.f32 %v5363, %v5384
  %v5401 = vadd.f32 %v5364, %v5385
  %v5402 = vadd.f32 %v5365, %v5386
  %v5403 = vadd.f32 %v5366, %v5387
  %v5404 = vadd.f32 %v5367, %v5388
  %v5405 = vadd.f32 %v5368, %v5389
  %v5406 = vadd.f32 %v5369, %v5390
  %v5407 = vadd.f32 %v5370, %v5391
  %v5408 = vadd.f32 %v5371, %v5392
  %v5409 = vadd.f32 %v5372, %v5393
  %v5410 = vadd.f32 %v5373, %v5394
  %v5411 = vadd.f32 %v5374, %v5395
  %v5412 = vadd.f32 %v5375, %v5396
  %v5413 = vadd.f32 %v5376, %v5397
  %v5414 = vadd.f32 %v5377, %v5398
  %v5415 = vld [vmem:[%s2345 + $0x6] sm:$0x1]
  %v5416 = vlaneseq
  %v5417 = vshrl.u32 %v5416, 7
  %v5418 = vsub.s32 0, %v5417
  %v5419 = vrot.slane %v5415, %v5418
  %v5420 = vmul.f32 %v5175, %v5419
  %v5421 = vmul.f32 %v5176, %v5419
  %v5422 = vmul.f32 %v5177, %v5419
  %v5423 = vmul.f32 %v5178, %v5419
  %v5424 = vmul.f32 %v5179, %v5419
  %v5425 = vmul.f32 %v5180, %v5419
  %v5426 = vmul.f32 %v5181, %v5419
  %v5427 = vmul.f32 %v5182, %v5419
  %v5428 = vmul.f32 %v5183, %v5419
  %v5429 = vmul.f32 %v5184, %v5419
  %v5430 = vmul.f32 %v5185, %v5419
  %v5431 = vmul.f32 %v5186, %v5419
  %v5432 = vmul.f32 %v5187, %v5419
  %v5433 = vmul.f32 %v5188, %v5419
  %v5434 = vmul.f32 %v5189, %v5419
  %v5435 = vmul.f32 %v5190, %v5419
  %v5436 = vadd.f32 %v5399, %v5420
  %v5437 = vadd.f32 %v5400, %v5421
  %v5438 = vadd.f32 %v5401, %v5422
  %v5439 = vadd.f32 %v5402, %v5423
  %v5440 = vadd.f32 %v5403, %v5424
  %v5441 = vadd.f32 %v5404, %v5425
  %v5442 = vadd.f32 %v5405, %v5426
  %v5443 = vadd.f32 %v5406, %v5427
  %v5444 = vadd.f32 %v5407, %v5428
  %v5445 = vadd.f32 %v5408, %v5429
  %v5446 = vadd.f32 %v5409, %v5430
  %v5447 = vadd.f32 %v5410, %v5431
  %v5448 = vadd.f32 %v5411, %v5432
  %v5449 = vadd.f32 %v5412, %v5433
  %v5450 = vadd.f32 %v5413, %v5434
  %v5451 = vadd.f32 %v5414, %v5435
  %v5452 = vld [vmem:[%s2345 + $0x7] sm:$0x1]
  %v5453 = vlaneseq
  %v5454 = vshrl.u32 %v5453, 7
  %v5455 = vsub.s32 0, %v5454
  %v5456 = vrot.slane %v5452, %v5455
  %v5457 = vmul.f32 %v5177, %v5456
  %v5458 = vmul.f32 %v5178, %v5456
  %v5459 = vmul.f32 %v5179, %v5456
  %v5460 = vmul.f32 %v5180, %v5456
  %v5461 = vmul.f32 %v5181, %v5456
  %v5462 = vmul.f32 %v5182, %v5456
  %v5463 = vmul.f32 %v5183, %v5456
  %v5464 = vmul.f32 %v5184, %v5456
  %v5465 = vmul.f32 %v5185, %v5456
  %v5466 = vmul.f32 %v5186, %v5456
  %v5467 = vmul.f32 %v5187, %v5456
  %v5468 = vmul.f32 %v5188, %v5456
  %v5469 = vmul.f32 %v5189, %v5456
  %v5470 = vmul.f32 %v5190, %v5456
  %v5471 = vmul.f32 %v5191, %v5456
  %v5472 = vmul.f32 %v5192, %v5456
  %v5473 = vadd.f32 %v5436, %v5457
  %v5474 = vadd.f32 %v5437, %v5458
  %v5475 = vadd.f32 %v5438, %v5459
  %v5476 = vadd.f32 %v5439, %v5460
  %v5477 = vadd.f32 %v5440, %v5461
  %v5478 = vadd.f32 %v5441, %v5462
  %v5479 = vadd.f32 %v5442, %v5463
  %v5480 = vadd.f32 %v5443, %v5464
  %v5481 = vadd.f32 %v5444, %v5465
  %v5482 = vadd.f32 %v5445, %v5466
  %v5483 = vadd.f32 %v5446, %v5467
  %v5484 = vadd.f32 %v5447, %v5468
  %v5485 = vadd.f32 %v5448, %v5469
  %v5486 = vadd.f32 %v5449, %v5470
  %v5487 = vadd.f32 %v5450, %v5471
  %v5488 = vadd.f32 %v5451, %v5472
  %v5489 = vadd.f32 %v5473, %v2645
  %v5490 = vadd.f32 %v5474, %v2645
  %v5491 = vadd.f32 %v5475, %v2645
  %v5492 = vadd.f32 %v5476, %v2645
  %v5493 = vadd.f32 %v5477, %v2645
  %v5494 = vadd.f32 %v5478, %v2645
  %v5495 = vadd.f32 %v5479, %v2645
  %v5496 = vadd.f32 %v5480, %v2645
  %v5497 = vadd.f32 %v5481, %v2645
  %v5498 = vadd.f32 %v5482, %v2645
  %v5499 = vadd.f32 %v5483, %v2645
  %v5500 = vadd.f32 %v5484, %v2645
  %v5501 = vadd.f32 %v5485, %v2645
  %v5502 = vadd.f32 %v5486, %v2645
  %v5503 = vadd.f32 %v5487, %v2645
  %v5504 = vadd.f32 %v5488, %v2645
  %v5505 = vmul.f32 %v5489, 0.5
  %v5506 = vmul.f32 %v5490, 0.5
  %v5507 = vmul.f32 %v5491, 0.5
  %v5508 = vmul.f32 %v5492, 0.5
  %v5509 = vmul.f32 %v5493, 0.5
  %v5510 = vmul.f32 %v5494, 0.5
  %v5511 = vmul.f32 %v5495, 0.5
  %v5512 = vmul.f32 %v5496, 0.5
  %v5513 = vmul.f32 %v5497, 0.5
  %v5514 = vmul.f32 %v5498, 0.5
  %v5515 = vmul.f32 %v5499, 0.5
  %v5516 = vmul.f32 %v5500, 0.5
  %v5517 = vmul.f32 %v5501, 0.5
  %v5518 = vmul.f32 %v5502, 0.5
  %v5519 = vmul.f32 %v5503, 0.5
  %v5520 = vmul.f32 %v5504, 0.5
  %v5521 = vmul.f32 %v5489, %v5489
  %v5522 = vmul.f32 %v5490, %v5490
  %v5523 = vmul.f32 %v5491, %v5491
  %v5524 = vmul.f32 %v5492, %v5492
  %v5525 = vmul.f32 %v5493, %v5493
  %v5526 = vmul.f32 %v5494, %v5494
  %v5527 = vmul.f32 %v5495, %v5495
  %v5528 = vmul.f32 %v5496, %v5496
  %v5529 = vmul.f32 %v5497, %v5497
  %v5530 = vmul.f32 %v5498, %v5498
  %v5531 = vmul.f32 %v5499, %v5499
  %v5532 = vmul.f32 %v5500, %v5500
  %v5533 = vmul.f32 %v5501, %v5501
  %v5534 = vmul.f32 %v5502, %v5502
  %v5535 = vmul.f32 %v5503, %v5503
  %v5536 = vmul.f32 %v5504, %v5504
  %v5537 = vmul.f32 %v5521, %v5489
  %v5538 = vmul.f32 %v5522, %v5490
  %v5539 = vmul.f32 %v5523, %v5491
  %v5540 = vmul.f32 %v5524, %v5492
  %v5541 = vmul.f32 %v5525, %v5493
  %v5542 = vmul.f32 %v5526, %v5494
  %v5543 = vmul.f32 %v5527, %v5495
  %v5544 = vmul.f32 %v5528, %v5496
  %v5545 = vmul.f32 %v5529, %v5497
  %v5546 = vmul.f32 %v5530, %v5498
  %v5547 = vmul.f32 %v5531, %v5499
  %v5548 = vmul.f32 %v5532, %v5500
  %v5549 = vmul.f32 %v5533, %v5501
  %v5550 = vmul.f32 %v5534, %v5502
  %v5551 = vmul.f32 %v5535, %v5503
  %v5552 = vmul.f32 %v5536, %v5504
  %v5553 = vmul.f32 %v5537, 0.044715
  %v5554 = vmul.f32 %v5538, 0.044715
  %v5555 = vmul.f32 %v5539, 0.044715
  %v5556 = vmul.f32 %v5540, 0.044715
  %v5557 = vmul.f32 %v5541, 0.044715
  %v5558 = vmul.f32 %v5542, 0.044715
  %v5559 = vmul.f32 %v5543, 0.044715
  %v5560 = vmul.f32 %v5544, 0.044715
  %v5561 = vmul.f32 %v5545, 0.044715
  %v5562 = vmul.f32 %v5546, 0.044715
  %v5563 = vmul.f32 %v5547, 0.044715
  %v5564 = vmul.f32 %v5548, 0.044715
  %v5565 = vmul.f32 %v5549, 0.044715
  %v5566 = vmul.f32 %v5550, 0.044715
  %v5567 = vmul.f32 %v5551, 0.044715
  %v5568 = vmul.f32 %v5552, 0.044715
  %v5569 = vadd.f32 %v5489, %v5553
  %v5570 = vadd.f32 %v5490, %v5554
  %v5571 = vadd.f32 %v5491, %v5555
  %v5572 = vadd.f32 %v5492, %v5556
  %v5573 = vadd.f32 %v5493, %v5557
  %v5574 = vadd.f32 %v5494, %v5558
  %v5575 = vadd.f32 %v5495, %v5559
  %v5576 = vadd.f32 %v5496, %v5560
  %v5577 = vadd.f32 %v5497, %v5561
  %v5578 = vadd.f32 %v5498, %v5562
  %v5579 = vadd.f32 %v5499, %v5563
  %v5580 = vadd.f32 %v5500, %v5564
  %v5581 = vadd.f32 %v5501, %v5565
  %v5582 = vadd.f32 %v5502, %v5566
  %v5583 = vadd.f32 %v5503, %v5567
  %v5584 = vadd.f32 %v5504, %v5568
  %v5585 = vmul.f32 %v5569, 0.7978846
  %v5586 = vmul.f32 %v5570, 0.7978846
  %v5587 = vmul.f32 %v5571, 0.7978846
  %v5588 = vmul.f32 %v5572, 0.7978846
  %v5589 = vmul.f32 %v5573, 0.7978846
  %v5590 = vmul.f32 %v5574, 0.7978846
  %v5591 = vmul.f32 %v5575, 0.7978846
  %v5592 = vmul.f32 %v5576, 0.7978846
  %v5593 = vmul.f32 %v5577, 0.7978846
  %v5594 = vmul.f32 %v5578, 0.7978846
  %v5595 = vmul.f32 %v5579, 0.7978846
  %v5596 = vmul.f32 %v5580, 0.7978846
  %v5597 = vmul.f32 %v5581, 0.7978846
  %v5598 = vmul.f32 %v5582, 0.7978846
  %v5599 = vmul.f32 %v5583, 0.7978846
  %v5600 = vmul.f32 %v5584, 0.7978846
  %v5601 = vtanh.pop %v5585
  %v5602 = vtanh.pop %v5586
  %v5603 = vtanh.pop %v5587
  %v5604 = vtanh.pop %v5588
  %v5605 = vtanh.pop %v5589
  %v5606 = vtanh.pop %v5590
  %v5607 = vtanh.pop %v5591
  %v5608 = vtanh.pop %v5592
  %v5609 = vtanh.pop %v5593
  %v5610 = vtanh.pop %v5594
  %v5611 = vtanh.pop %v5595
  %v5612 = vtanh.pop %v5596
  %v5613 = vtanh.pop %v5597
  %v5614 = vtanh.pop %v5598
  %v5615 = vtanh.pop %v5599
  %v5616 = vtanh.pop %v5600
  %v5617 = vadd.f32 %v5601, 1.0
  %v5618 = vadd.f32 %v5602, 1.0
  %v5619 = vadd.f32 %v5603, 1.0
  %v5620 = vadd.f32 %v5604, 1.0
  %v5621 = vadd.f32 %v5605, 1.0
  %v5622 = vadd.f32 %v5606, 1.0
  %v5623 = vadd.f32 %v5607, 1.0
  %v5624 = vadd.f32 %v5608, 1.0
  %v5625 = vadd.f32 %v5609, 1.0
  %v5626 = vadd.f32 %v5610, 1.0
  %v5627 = vadd.f32 %v5611, 1.0
  %v5628 = vadd.f32 %v5612, 1.0
  %v5629 = vadd.f32 %v5613, 1.0
  %v5630 = vadd.f32 %v5614, 1.0
  %v5631 = vadd.f32 %v5615, 1.0
  %v5632 = vadd.f32 %v5616, 1.0
  %v5633 = vmul.f32 %v5505, %v5617
  %v5634 = vmul.f32 %v5506, %v5618
  %v5635 = vmul.f32 %v5507, %v5619
  %v5636 = vmul.f32 %v5508, %v5620
  %v5637 = vmul.f32 %v5509, %v5621
  %v5638 = vmul.f32 %v5510, %v5622
  %v5639 = vmul.f32 %v5511, %v5623
  %v5640 = vmul.f32 %v5512, %v5624
  %v5641 = vmul.f32 %v5513, %v5625
  %v5642 = vmul.f32 %v5514, %v5626
  %v5643 = vmul.f32 %v5515, %v5627
  %v5644 = vmul.f32 %v5516, %v5628
  %v5645 = vmul.f32 %v5517, %v5629
  %v5646 = vmul.f32 %v5518, %v5630
  %v5647 = vmul.f32 %v5519, %v5631
  %v5648 = vmul.f32 %v5520, %v5632
  %v5649 = vmul.f32 %v5633, %v2809
  %v5650 = vmul.f32 %v5634, %v2809
  %v5651 = vmul.f32 %v5635, %v2809
  %v5652 = vmul.f32 %v5636, %v2809
  %v5653 = vmul.f32 %v5637, %v2809
  %v5654 = vmul.f32 %v5638, %v2809
  %v5655 = vmul.f32 %v5639, %v2809
  %v5656 = vmul.f32 %v5640, %v2809
  %v5657 = vmul.f32 %v5641, %v2809
  %v5658 = vmul.f32 %v5642, %v2809
  %v5659 = vmul.f32 %v5643, %v2809
  %v5660 = vmul.f32 %v5644, %v2809
  %v5661 = vmul.f32 %v5645, %v2809
  %v5662 = vmul.f32 %v5646, %v2809
  %v5663 = vmul.f32 %v5647, %v2809
  %v5664 = vmul.f32 %v5648, %v2809
  %v5665 = vadd.f32 %v5649, %v2829
  %v5666 = vadd.f32 %v5650, %v2829
  %v5667 = vadd.f32 %v5651, %v2829
  %v5668 = vadd.f32 %v5652, %v2829
  %v5669 = vadd.f32 %v5653, %v2829
  %v5670 = vadd.f32 %v5654, %v2829
  %v5671 = vadd.f32 %v5655, %v2829
  %v5672 = vadd.f32 %v5656, %v2829
  %v5673 = vadd.f32 %v5657, %v2829
  %v5674 = vadd.f32 %v5658, %v2829
  %v5675 = vadd.f32 %v5659, %v2829
  %v5676 = vadd.f32 %v5660, %v2829
  %v5677 = vadd.f32 %v5661, %v2829
  %v5678 = vadd.f32 %v5662, %v2829
  %v5679 = vadd.f32 %v5663, %v2829
  %v5680 = vadd.f32 %v5664, %v2829
  %v5681 = vadd.f32 %v5665, %v5169
  %v5682 = vadd.f32 %v5666, %v5170
  %v5683 = vadd.f32 %v5667, %v5171
  %v5684 = vadd.f32 %v5668, %v5172
  %v5685 = vadd.f32 %v5669, %v5173
  %v5686 = vadd.f32 %v5670, %v5174
  %v5687 = vadd.f32 %v5671, %v5175
  %v5688 = vadd.f32 %v5672, %v5176
  %v5689 = vadd.f32 %v5673, %v5177
  %v5690 = vadd.f32 %v5674, %v5178
  %v5691 = vadd.f32 %v5675, %v5179
  %v5692 = vadd.f32 %v5676, %v5180
  %v5693 = vadd.f32 %v5677, %v5181
  %v5694 = vadd.f32 %v5678, %v5182
  %v5695 = vadd.f32 %v5679, %v5183
  %v5696 = vadd.f32 %v5680, %v5184
  %v5697 = vpack.c.bf16 %v5682, %v5681
  %v5698 = vpack.c.bf16 %v5684, %v5683
  %v5699 = vpack.c.bf16 %v5686, %v5685
  %v5700 = vpack.c.bf16 %v5688, %v5687
  %v5701 = vpack.c.bf16 %v5690, %v5689
  %v5702 = vpack.c.bf16 %v5692, %v5691
  %v5703 = vpack.c.bf16 %v5694, %v5693
  %v5704 = vpack.c.bf16 %v5696, %v5695
  %5705 = vst [vmem:[#allocation2 + $0x40] sm:$0xff] %v5697
  %5706 = vst [vmem:[#allocation2 + $0x48] sm:$0xff] %v5698
  %5707 = vst [vmem:[#allocation2 + $0x50] sm:$0xff] %v5699
  %5708 = vst [vmem:[#allocation2 + $0x58] sm:$0xff] %v5700
  %5709 = vst [vmem:[#allocation2 + $0x60] sm:$0xff] %v5701
  %5710 = vst [vmem:[#allocation2 + $0x68] sm:$0xff] %v5702
  %5711 = vst [vmem:[#allocation2 + $0x70] sm:$0xff] %v5703
  %5712 = vst [vmem:[#allocation2 + $0x78] sm:$0xff] %v5704
  %v5713 = vld [vmem:[#allocation2] sm:$0xff]
  %v5714 = vld [vmem:[#allocation2 + $0x8] sm:$0xff]
  %v5715 = vld [vmem:[#allocation2 + $0x10] sm:$0xff]
  %v5716 = vld [vmem:[#allocation2 + $0x18] sm:$0xff]
  %v5717 = vld [vmem:[#allocation2 + $0x20] sm:$0xff]
  %v5718 = vld [vmem:[#allocation2 + $0x28] sm:$0xff]
  %v5719 = vld [vmem:[#allocation2 + $0x30] sm:$0xff]
  %v5720 = vld [vmem:[#allocation2 + $0x38] sm:$0xff]
  %v5721 = vld [vmem:[#allocation2 + $0x40] sm:$0xff]
  %v5722 = vld [vmem:[#allocation2 + $0x48] sm:$0xff]
  %v5723 = vld [vmem:[#allocation2 + $0x50] sm:$0xff]
  %v5724 = vld [vmem:[#allocation2 + $0x58] sm:$0xff]
  %v5725 = vld [vmem:[#allocation2 + $0x60] sm:$0xff]
  %v5726 = vld [vmem:[#allocation2 + $0x68] sm:$0xff]
  %v5727 = vld [vmem:[#allocation2 + $0x70] sm:$0xff]
  %v5728 = vld [vmem:[#allocation2 + $0x78] sm:$0xff]
  %v5729 = vld [vmem:[%s3] sm:$0xf]
  %v5730 = vld [vmem:[%s3 + $0x4] sm:$0xf]
  %v5731 = vld [vmem:[%s3 + $0x8] sm:$0xf]
  %v5732 = vld [vmem:[%s3 + $0xc] sm:$0xf]
  %v5733 = vld [vmem:[%s3 + $0x10] sm:$0xf]
  %v5734 = vld [vmem:[%s3 + $0x14] sm:$0xf]
  %v5735 = vld [vmem:[%s3 + $0x18] sm:$0xf]
  %v5736 = vld [vmem:[%s3 + $0x1c] sm:$0xf]
  %v5737 = vld [vmem:[%s3 + $0x20] sm:$0xf]
  %v5738 = vld [vmem:[%s3 + $0x24] sm:$0xf]
  %v5739 = vld [vmem:[%s3 + $0x28] sm:$0xf]
  %v5740 = vld [vmem:[%s3 + $0x2c] sm:$0xf]
  %v5741 = vld [vmem:[%s3 + $0x30] sm:$0xf]
  %v5742 = vld [vmem:[%s3 + $0x34] sm:$0xf]
  %v5743 = vld [vmem:[%s3 + $0x38] sm:$0xf]
  %v5744 = vld [vmem:[%s3 + $0x3c] sm:$0xf]
  %v5745 = vlaneseq
  %v5746 = vshrl.u32 %v5745, 7
  %v5747 = vsub.s32 0, %v5746
  %v5748 = vrot.slane %v22, %v5747
  %v5765 = vunpack.c.l.b16 %v5729
  %v5766 = vunpack.c.l.b16 %v5730
  %v5767 = vunpack.c.l.b16 %v5731
  %v5768 = vunpack.c.l.b16 %v5732
  %v5769 = vunpack.c.l.b16 %v5733
  %v5770 = vunpack.c.l.b16 %v5734
  %v5771 = vunpack.c.l.b16 %v5735
  %v5772 = vunpack.c.l.b16 %v5736
  %v5773 = vunpack.c.l.b16 %v5737
  %v5774 = vunpack.c.l.b16 %v5738
  %v5775 = vunpack.c.l.b16 %v5739
  %v5776 = vunpack.c.l.b16 %v5740
  %v5777 = vunpack.c.l.b16 %v5741
  %v5778 = vunpack.c.l.b16 %v5742
  %v5779 = vunpack.c.l.b16 %v5743
  %v5780 = vunpack.c.l.b16 %v5744
  %v5781 = vpack.c.b16 %v5766, %v5765
  %v5782 = vpack.c.b16 %v5768, %v5767
  %v5783 = vpack.c.b16 %v5770, %v5769
  %v5784 = vpack.c.b16 %v5772, %v5771
  %v5785 = vpack.c.b16 %v5774, %v5773
  %v5786 = vpack.c.b16 %v5776, %v5775
  %v5787 = vpack.c.b16 %v5778, %v5777
  %v5788 = vpack.c.b16 %v5780, %v5779
  %5797 = vmatprep.subr.bf16.mxu0 0
  %5798 = vmatpush1.bf16.msra.mxu0 %v5781
  %5799 = vmatprep.subr.bf16.mxu0 0
  %5800 = vmatpush1.bf16.msra.mxu0 %v5782
  %5801 = vmatprep.subr.bf16.mxu0 0
  %5802 = vmatpush1.bf16.msra.mxu0 %v5783
  %5803 = vmatprep.subr.bf16.mxu0 0
  %5804 = vmatpush1.bf16.msra.mxu0 %v5784
  %5805 = vmatprep.subr.bf16.mxu0 0
  %5806 = vmatpush1.bf16.msra.mxu0 %v5785
  %5807 = vmatprep.subr.bf16.mxu0 0
  %5808 = vmatpush1.bf16.msra.mxu0 %v5786
  %5809 = vmatprep.subr.bf16.mxu0 0
  %5810 = vmatpush1.bf16.msra.mxu0 %v5787
  %5811 = vmatprep.subr.bf16.mxu0 0
  %5812 = vmatpush1.bf16.msra.mxu0 %v5788
  %5813 = vmatprep.subr.bf16.mxu0 0
  %5814 = vmatpush1.bf16.msra.mxu0 0
  %5815 = vmatprep.subr.bf16.mxu0 0
  %5816 = vmatpush1.bf16.msra.mxu0 0
  %5817 = vmatprep.subr.bf16.mxu0 0
  %5818 = vmatpush1.bf16.msra.mxu0 0
  %5819 = vmatprep.subr.bf16.mxu0 0
  %5820 = vmatpush1.bf16.msra.mxu0 0
  %5821 = vmatprep.subr.bf16.mxu0 0
  %5822 = vmatpush1.bf16.msra.mxu0 0
  %5823 = vmatprep.subr.bf16.mxu0 0
  %5824 = vmatpush1.bf16.msra.mxu0 0
  %5825 = vmatprep.subr.bf16.mxu0 0
  %5826 = vmatpush1.bf16.msra.mxu0 0
  %5827 = vmatprep.subr.bf16.mxu0 0
  %5828 = vmatpush1.bf16.msra.mxu0 0
  %5829 = vmatprep.mubr.bf16.mxu0 0
  %5830 = vmatmul.mubr.bf16.gmra.mrb[0].mxu0 %v5713
  %v5831 = vpop.f32.mrb[0].mxu0
  %v5832 = vadd.f32 %v5748, %v5831
  %v5833 = vpop.f32.mrb[0].mxu0
  %v5834 = vpop.f32.mrb[0].mxu0
  %v5835 = vadd.f32 %v5748, %v5834
  %v5836 = vpop.f32.mrb[0].mxu0
  %5837 = vmatprep.mubr.bf16.mxu0 0
  %5838 = vmatmul.mubr.bf16.gmra.mrb[0].mxu0 %v5714
  %v5839 = vpop.f32.mrb[0].mxu0
  %v5840 = vadd.f32 %v5748, %v5839
  %v5841 = vpop.f32.mrb[0].mxu0
  %v5842 = vpop.f32.mrb[0].mxu0
  %v5843 = vadd.f32 %v5748, %v5842
  %v5844 = vpop.f32.mrb[0].mxu0
  %5845 = vmatprep.mubr.bf16.mxu0 0
  %5846 = vmatmul.mubr.bf16.gmra.mrb[0].mxu0 %v5715
  %v5847 = vpop.f32.mrb[0].mxu0
  %v5848 = vadd.f32 %v5748, %v5847
  %v5849 = vpop.f32.mrb[0].mxu0
  %v5850 = vpop.f32.mrb[0].mxu0
  %v5851 = vadd.f32 %v5748, %v5850
  %v5852 = vpop.f32.mrb[0].mxu0
  %5853 = vmatprep.mubr.bf16.mxu0 0
  %5854 = vmatmul.mubr.bf16.gmra.mrb[0].mxu0 %v5716
  %v5855 = vpop.f32.mrb[0].mxu0
  %v5856 = vadd.f32 %v5748, %v5855
  %v5857 = vpop.f32.mrb[0].mxu0
  %v5858 = vpop.f32.mrb[0].mxu0
  %v5859 = vadd.f32 %v5748, %v5858
  %v5860 = vpop.f32.mrb[0].mxu0
  %5861 = vmatprep.mubr.bf16.mxu0 0
  %5862 = vmatmul.mubr.bf16.gmra.mrb[0].mxu0 %v5717
  %v5863 = vpop.f32.mrb[0].mxu0
  %v5864 = vadd.f32 %v5748, %v5863
  %v5865 = vpop.f32.mrb[0].mxu0
  %v5866 = vpop.f32.mrb[0].mxu0
  %v5867 = vadd.f32 %v5748, %v5866
  %v5868 = vpop.f32.mrb[0].mxu0
  %5869 = vmatprep.mubr.bf16.mxu0 0
  %5870 = vmatmul.mubr.bf16.gmra.mrb[0].mxu0 %v5718
  %v5871 = vpop.f32.mrb[0].mxu0
  %v5872 = vadd.f32 %v5748, %v5871
  %v5873 = vpop.f32.mrb[0].mxu0
  %v5874 = vpop.f32.mrb[0].mxu0
  %v5875 = vadd.f32 %v5748, %v5874
  %v5876 = vpop.f32.mrb[0].mxu0
  %5877 = vmatprep.mubr.bf16.mxu0 0
  %5878 = vmatmul.mubr.bf16.gmra.mrb[0].mxu0 %v5719
  %v5879 = vpop.f32.mrb[0].mxu0
  %v5880 = vadd.f32 %v5748, %v5879
  %v5881 = vpop.f32.mrb[0].mxu0
  %v5882 = vpop.f32.mrb[0].mxu0
  %v5883 = vadd.f32 %v5748, %v5882
  %v5884 = vpop.f32.mrb[0].mxu0
  %5885 = vmatprep.mubr.bf16.mxu0 0
  %5886 = vmatmul.mubr.bf16.gmra.mrb[0].mxu0 %v5720
  %v5887 = vpop.f32.mrb[0].mxu0
  %v5888 = vadd.f32 %v5748, %v5887
  %v5889 = vpop.f32.mrb[0].mxu0
  %v5890 = vpop.f32.mrb[0].mxu0
  %v5891 = vadd.f32 %v5748, %v5890
  %v5892 = vpop.f32.mrb[0].mxu0
  %5893 = vmatprep.mubr.bf16.mxu0 0
  %5894 = vmatmul.mubr.bf16.gmra.mrb[0].mxu0 %v5721
  %v5895 = vpop.f32.mrb[0].mxu0
  %v5896 = vadd.f32 %v5748, %v5895
  %v5897 = vpop.f32.mrb[0].mxu0
  %v5898 = vpop.f32.mrb[0].mxu0
  %v5899 = vadd.f32 %v5748, %v5898
  %v5900 = vpop.f32.mrb[0].mxu0
  %5901 = vmatprep.mubr.bf16.mxu0 0
  %5902 = vmatmul.mubr.bf16.gmra.mrb[0].mxu0 %v5722
  %v5903 = vpop.f32.mrb[0].mxu0
  %v5904 = vadd.f32 %v5748, %v5903
  %v5905 = vpop.f32.mrb[0].mxu0
  %v5906 = vpop.f32.mrb[0].mxu0
  %v5907 = vadd.f32 %v5748, %v5906
  %v5908 = vpop.f32.mrb[0].mxu0
  %5909 = vmatprep.mubr.bf16.mxu0 0
  %5910 = vmatmul.mubr.bf16.gmra.mrb[0].mxu0 %v5723
  %v5911 = vpop.f32.mrb[0].mxu0
  %v5912 = vadd.f32 %v5748, %v5911
  %v5913 = vpop.f32.mrb[0].mxu0
  %v5914 = vpop.f32.mrb[0].mxu0
  %v5915 = vadd.f32 %v5748, %v5914
  %v5916 = vpop.f32.mrb[0].mxu0
  %5917 = vmatprep.mubr.bf16.mxu0 0
  %5918 = vmatmul.mubr.bf16.gmra.mrb[0].mxu0 %v5724
  %v5919 = vpop.f32.mrb[0].mxu0
  %v5920 = vadd.f32 %v5748, %v5919
  %v5921 = vpop.f32.mrb[0].mxu0
  %v5922 = vpop.f32.mrb[0].mxu0
  %v5923 = vadd.f32 %v5748, %v5922
  %v5924 = vpop.f32.mrb[0].mxu0
  %5925 = vmatprep.mubr.bf16.mxu0 0
  %5926 = vmatmul.mubr.bf16.gmra.mrb[0].mxu0 %v5725
  %v5927 = vpop.f32.mrb[0].mxu0
  %v5928 = vadd.f32 %v5748, %v5927
  %v5929 = vpop.f32.mrb[0].mxu0
  %v5930 = vpop.f32.mrb[0].mxu0
  %v5931 = vadd.f32 %v5748, %v5930
  %v5932 = vpop.f32.mrb[0].mxu0
  %5933 = vmatprep.mubr.bf16.mxu0 0
  %5934 = vmatmul.mubr.bf16.gmra.mrb[0].mxu0 %v5726
  %v5935 = vpop.f32.mrb[0].mxu0
  %v5936 = vadd.f32 %v5748, %v5935
  %v5937 = vpop.f32.mrb[0].mxu0
  %v5938 = vpop.f32.mrb[0].mxu0
  %v5939 = vadd.f32 %v5748, %v5938
  %v5940 = vpop.f32.mrb[0].mxu0
  %5941 = vmatprep.mubr.bf16.mxu0 0
  %5942 = vmatmul.mubr.bf16.gmra.mrb[0].mxu0 %v5727
  %v5943 = vpop.f32.mrb[0].mxu0
  %v5944 = vadd.f32 %v5748, %v5943
  %v5945 = vpop.f32.mrb[0].mxu0
  %v5946 = vpop.f32.mrb[0].mxu0
  %v5947 = vadd.f32 %v5748, %v5946
  %v5948 = vpop.f32.mrb[0].mxu0
  %5949 = vmatprep.mubr.bf16.mxu0 0
  %5950 = vmatmul.mubr.bf16.gmra.mrb[0].mxu0 %v5728
  %v5951 = vpop.f32.mrb[0].mxu0
  %v5952 = vadd.f32 %v5748, %v5951
  %v5953 = vpop.f32.mrb[0].mxu0
  %v5954 = vpop.f32.mrb[0].mxu0
  %v5955 = vadd.f32 %v5748, %v5954
  %v5956 = vpop.f32.mrb[0].mxu0
  %5957 = vdwg.mxu0
  %v5958 = vmul.f32 %v5832, 0.5
  %v5959 = vmul.f32 %v5835, 0.5
  %v5960 = vmul.f32 %v5840, 0.5
  %v5961 = vmul.f32 %v5843, 0.5
  %v5962 = vmul.f32 %v5848, 0.5
  %v5963 = vmul.f32 %v5851, 0.5
  %v5964 = vmul.f32 %v5856, 0.5
  %v5965 = vmul.f32 %v5859, 0.5
  %v5966 = vmul.f32 %v5864, 0.5
  %v5967 = vmul.f32 %v5867, 0.5
  %v5968 = vmul.f32 %v5872, 0.5
  %v5969 = vmul.f32 %v5875, 0.5
  %v5970 = vmul.f32 %v5880, 0.5
  %v5971 = vmul.f32 %v5883, 0.5
  %v5972 = vmul.f32 %v5888, 0.5
  %v5973 = vmul.f32 %v5891, 0.5
  %v5974 = vmul.f32 %v5896, 0.5
  %v5975 = vmul.f32 %v5899, 0.5
  %v5976 = vmul.f32 %v5904, 0.5
  %v5977 = vmul.f32 %v5907, 0.5
  %v5978 = vmul.f32 %v5912, 0.5
  %v5979 = vmul.f32 %v5915, 0.5
  %v5980 = vmul.f32 %v5920, 0.5
  %v5981 = vmul.f32 %v5923, 0.5
  %v5982 = vmul.f32 %v5928, 0.5
  %v5983 = vmul.f32 %v5931, 0.5
  %v5984 = vmul.f32 %v5936, 0.5
  %v5985 = vmul.f32 %v5939, 0.5
  %v5986 = vmul.f32 %v5944, 0.5
  %v5987 = vmul.f32 %v5947, 0.5
  %v5988 = vmul.f32 %v5952, 0.5
  %v5989 = vmul.f32 %v5955, 0.5
  %v5990 = vmul.f32 %v5832, %v5832
  %v5991 = vmul.f32 %v5835, %v5835
  %v5992 = vmul.f32 %v5840, %v5840
  %v5993 = vmul.f32 %v5843, %v5843
  %v5994 = vmul.f32 %v5848, %v5848
  %v5995 = vmul.f32 %v5851, %v5851
  %v5996 = vmul.f32 %v5856, %v5856
  %v5997 = vmul.f32 %v5859, %v5859
  %v5998 = vmul.f32 %v5864, %v5864
  %v5999 = vmul.f32 %v5867, %v5867
  %v6000 = vmul.f32 %v5872, %v5872
  %v6001 = vmul.f32 %v5875, %v5875
  %v6002 = vmul.f32 %v5880, %v5880
  %v6003 = vmul.f32 %v5883, %v5883
  %v6004 = vmul.f32 %v5888, %v5888
  %v6005 = vmul.f32 %v5891, %v5891
  %v6006 = vmul.f32 %v5896, %v5896
  %v6007 = vmul.f32 %v5899, %v5899
  %v6008 = vmul.f32 %v5904, %v5904
  %v6009 = vmul.f32 %v5907, %v5907
  %v6010 = vmul.f32 %v5912, %v5912
  %v6011 = vmul.f32 %v5915, %v5915
  %v6012 = vmul.f32 %v5920, %v5920
  %v6013 = vmul.f32 %v5923, %v5923
  %v6014 = vmul.f32 %v5928, %v5928
  %v6015 = vmul.f32 %v5931, %v5931
  %v6016 = vmul.f32 %v5936, %v5936
  %v6017 = vmul.f32 %v5939, %v5939
  %v6018 = vmul.f32 %v5944, %v5944
  %v6019 = vmul.f32 %v5947, %v5947
  %v6020 = vmul.f32 %v5952, %v5952
  %v6021 = vmul.f32 %v5955, %v5955
  %v6022 = vmul.f32 %v5990, %v5832
  %v6023 = vmul.f32 %v5991, %v5835
  %v6024 = vmul.f32 %v5992, %v5840
  %v6025 = vmul.f32 %v5993, %v5843
  %v6026 = vmul.f32 %v5994, %v5848
  %v6027 = vmul.f32 %v5995, %v5851
  %v6028 = vmul.f32 %v5996, %v5856
  %v6029 = vmul.f32 %v5997, %v5859
  %v6030 = vmul.f32 %v5998, %v5864
  %v6031 = vmul.f32 %v5999, %v5867
  %v6032 = vmul.f32 %v6000, %v5872
  %v6033 = vmul.f32 %v6001, %v5875
  %v6034 = vmul.f32 %v6002, %v5880
  %v6035 = vmul.f32 %v6003, %v5883
  %v6036 = vmul.f32 %v6004, %v5888
  %v6037 = vmul.f32 %v6005, %v5891
  %v6038 = vmul.f32 %v6006, %v5896
  %v6039 = vmul.f32 %v6007, %v5899
  %v6040 = vmul.f32 %v6008, %v5904
  %v6041 = vmul.f32 %v6009, %v5907
  %v6042 = vmul.f32 %v6010, %v5912
  %v6043 = vmul.f32 %v6011, %v5915
  %v6044 = vmul.f32 %v6012, %v5920
  %v6045 = vmul.f32 %v6013, %v5923
  %v6046 = vmul.f32 %v6014, %v5928
  %v6047 = vmul.f32 %v6015, %v5931
  %v6048 = vmul.f32 %v6016, %v5936
  %v6049 = vmul.f32 %v6017, %v5939
  %v6050 = vmul.f32 %v6018, %v5944
  %v6051 = vmul.f32 %v6019, %v5947
  %v6052 = vmul.f32 %v6020, %v5952
  %v6053 = vmul.f32 %v6021, %v5955
  %v6054 = vmul.f32 %v6022, 0.044715
  %v6055 = vmul.f32 %v6023, 0.044715
  %v6056 = vmul.f32 %v6024, 0.044715
  %v6057 = vmul.f32 %v6025, 0.044715
  %v6058 = vmul.f32 %v6026, 0.044715
  %v6059 = vmul.f32 %v6027, 0.044715
  %v6060 = vmul.f32 %v6028, 0.044715
  %v6061 = vmul.f32 %v6029, 0.044715
  %v6062 = vmul.f32 %v6030, 0.044715
  %v6063 = vmul.f32 %v6031, 0.044715
  %v6064 = vmul.f32 %v6032, 0.044715
  %v6065 = vmul.f32 %v6033, 0.044715
  %v6066 = vmul.f32 %v6034, 0.044715
  %v6067 = vmul.f32 %v6035, 0.044715
  %v6068 = vmul.f32 %v6036, 0.044715
  %v6069 = vmul.f32 %v6037, 0.044715
  %v6070 = vmul.f32 %v6038, 0.044715
  %v6071 = vmul.f32 %v6039, 0.044715
  %v6072 = vmul.f32 %v6040, 0.044715
  %v6073 = vmul.f32 %v6041, 0.044715
  %v6074 = vmul.f32 %v6042, 0.044715
  %v6075 = vmul.f32 %v6043, 0.044715
  %v6076 = vmul.f32 %v6044, 0.044715
  %v6077 = vmul.f32 %v6045, 0.044715
  %v6078 = vmul.f32 %v6046, 0.044715
  %v6079 = vmul.f32 %v6047, 0.044715
  %v6080 = vmul.f32 %v6048, 0.044715
  %v6081 = vmul.f32 %v6049, 0.044715
  %v6082 = vmul.f32 %v6050, 0.044715
  %v6083 = vmul.f32 %v6051, 0.044715
  %v6084 = vmul.f32 %v6052, 0.044715
  %v6085 = vmul.f32 %v6053, 0.044715
  %v6086 = vadd.f32 %v5832, %v6054
  %v6087 = vadd.f32 %v5835, %v6055
  %v6088 = vadd.f32 %v5840, %v6056
  %v6089 = vadd.f32 %v5843, %v6057
  %v6090 = vadd.f32 %v5848, %v6058
  %v6091 = vadd.f32 %v5851, %v6059
  %v6092 = vadd.f32 %v5856, %v6060
  %v6093 = vadd.f32 %v5859, %v6061
  %v6094 = vadd.f32 %v5864, %v6062
  %v6095 = vadd.f32 %v5867, %v6063
  %v6096 = vadd.f32 %v5872, %v6064
  %v6097 = vadd.f32 %v5875, %v6065
  %v6098 = vadd.f32 %v5880, %v6066
  %v6099 = vadd.f32 %v5883, %v6067
  %v6100 = vadd.f32 %v5888, %v6068
  %v6101 = vadd.f32 %v5891, %v6069
  %v6102 = vadd.f32 %v5896, %v6070
  %v6103 = vadd.f32 %v5899, %v6071
  %v6104 = vadd.f32 %v5904, %v6072
  %v6105 = vadd.f32 %v5907, %v6073
  %v6106 = vadd.f32 %v5912, %v6074
  %v6107 = vadd.f32 %v5915, %v6075
  %v6108 = vadd.f32 %v5920, %v6076
  %v6109 = vadd.f32 %v5923, %v6077
  %v6110 = vadd.f32 %v5928, %v6078
  %v6111 = vadd.f32 %v5931, %v6079
  %v6112 = vadd.f32 %v5936, %v6080
  %v6113 = vadd.f32 %v5939, %v6081
  %v6114 = vadd.f32 %v5944, %v6082
  %v6115 = vadd.f32 %v5947, %v6083
  %v6116 = vadd.f32 %v5952, %v6084
  %v6117 = vadd.f32 %v5955, %v6085
  %v6118 = vmul.f32 %v6086, 0.7978846
  %v6119 = vmul.f32 %v6087, 0.7978846
  %v6120 = vmul.f32 %v6088, 0.7978846
  %v6121 = vmul.f32 %v6089, 0.7978846
  %v6122 = vmul.f32 %v6090, 0.7978846
  %v6123 = vmul.f32 %v6091, 0.7978846
  %v6124 = vmul.f32 %v6092, 0.7978846
  %v6125 = vmul.f32 %v6093, 0.7978846
  %v6126 = vmul.f32 %v6094, 0.7978846
  %v6127 = vmul.f32 %v6095, 0.7978846
  %v6128 = vmul.f32 %v6096, 0.7978846
  %v6129 = vmul.f32 %v6097, 0.7978846
  %v6130 = vmul.f32 %v6098, 0.7978846
  %v6131 = vmul.f32 %v6099, 0.7978846
  %v6132 = vmul.f32 %v6100, 0.7978846
  %v6133 = vmul.f32 %v6101, 0.7978846
  %v6134 = vmul.f32 %v6102, 0.7978846
  %v6135 = vmul.f32 %v6103, 0.7978846
  %v6136 = vmul.f32 %v6104, 0.7978846
  %v6137 = vmul.f32 %v6105, 0.7978846
  %v6138 = vmul.f32 %v6106, 0.7978846
  %v6139 = vmul.f32 %v6107, 0.7978846
  %v6140 = vmul.f32 %v6108, 0.7978846
  %v6141 = vmul.f32 %v6109, 0.7978846
  %v6142 = vmul.f32 %v6110, 0.7978846
  %v6143 = vmul.f32 %v6111, 0.7978846
  %v6144 = vmul.f32 %v6112, 0.7978846
  %v6145 = vmul.f32 %v6113, 0.7978846
  %v6146 = vmul.f32 %v6114, 0.7978846
  %v6147 = vmul.f32 %v6115, 0.7978846
  %v6148 = vmul.f32 %v6116, 0.7978846
  %v6149 = vmul.f32 %v6117, 0.7978846
  %v6150 = vtanh.pop %v6118
  %v6151 = vtanh.pop %v6119
  %v6152 = vtanh.pop %v6120
  %v6153 = vtanh.pop %v6121
  %v6154 = vtanh.pop %v6122
  %v6155 = vtanh.pop %v6123
  %v6156 = vtanh.pop %v6124
  %v6157 = vtanh.pop %v6125
  %v6158 = vtanh.pop %v6126
  %v6159 = vtanh.pop %v6127
  %v6160 = vtanh.pop %v6128
  %v6161 = vtanh.pop %v6129
  %v6162 = vtanh.pop %v6130
  %v6163 = vtanh.pop %v6131
  %v6164 = vtanh.pop %v6132
  %v6165 = vtanh.pop %v6133
  %v6166 = vtanh.pop %v6134
  %v6167 = vtanh.pop %v6135
  %v6168 = vtanh.pop %v6136
  %v6169 = vtanh.pop %v6137
  %v6170 = vtanh.pop %v6138
  %v6171 = vtanh.pop %v6139
  %v6172 = vtanh.pop %v6140
  %v6173 = vtanh.pop %v6141
  %v6174 = vtanh.pop %v6142
  %v6175 = vtanh.pop %v6143
  %v6176 = vtanh.pop %v6144
  %v6177 = vtanh.pop %v6145
  %v6178 = vtanh.pop %v6146
  %v6179 = vtanh.pop %v6147
  %v6180 = vtanh.pop %v6148
  %v6181 = vtanh.pop %v6149
  %v6182 = vadd.f32 %v6150, 1.0
  %v6183 = vadd.f32 %v6151, 1.0
  %v6184 = vadd.f32 %v6152, 1.0
  %v6185 = vadd.f32 %v6153, 1.0
  %v6186 = vadd.f32 %v6154, 1.0
  %v6187 = vadd.f32 %v6155, 1.0
  %v6188 = vadd.f32 %v6156, 1.0
  %v6189 = vadd.f32 %v6157, 1.0
  %v6190 = vadd.f32 %v6158, 1.0
  %v6191 = vadd.f32 %v6159, 1.0
  %v6192 = vadd.f32 %v6160, 1.0
  %v6193 = vadd.f32 %v6161, 1.0
  %v6194 = vadd.f32 %v6162, 1.0
  %v6195 = vadd.f32 %v6163, 1.0
  %v6196 = vadd.f32 %v6164, 1.0
  %v6197 = vadd.f32 %v6165, 1.0
  %v6198 = vadd.f32 %v6166, 1.0
  %v6199 = vadd.f32 %v6167, 1.0
  %v6200 = vadd.f32 %v6168, 1.0
  %v6201 = vadd.f32 %v6169, 1.0
  %v6202 = vadd.f32 %v6170, 1.0
  %v6203 = vadd.f32 %v6171, 1.0
  %v6204 = vadd.f32 %v6172, 1.0
  %v6205 = vadd.f32 %v6173, 1.0
  %v6206 = vadd.f32 %v6174, 1.0
  %v6207 = vadd.f32 %v6175, 1.0
  %v6208 = vadd.f32 %v6176, 1.0
  %v6209 = vadd.f32 %v6177, 1.0
  %v6210 = vadd.f32 %v6178, 1.0
  %v6211 = vadd.f32 %v6179, 1.0
  %v6212 = vadd.f32 %v6180, 1.0
  %v6213 = vadd.f32 %v6181, 1.0
  %v6214 = vmul.f32 %v5958, %v6182
  %v6215 = vmul.f32 %v5959, %v6183
  %v6216 = vmul.f32 %v5960, %v6184
  %v6217 = vmul.f32 %v5961, %v6185
  %v6218 = vmul.f32 %v5962, %v6186
  %v6219 = vmul.f32 %v5963, %v6187
  %v6220 = vmul.f32 %v5964, %v6188
  %v6221 = vmul.f32 %v5965, %v6189
  %v6222 = vmul.f32 %v5966, %v6190
  %v6223 = vmul.f32 %v5967, %v6191
  %v6224 = vmul.f32 %v5968, %v6192
  %v6225 = vmul.f32 %v5969, %v6193
  %v6226 = vmul.f32 %v5970, %v6194
  %v6227 = vmul.f32 %v5971, %v6195
  %v6228 = vmul.f32 %v5972, %v6196
  %v6229 = vmul.f32 %v5973, %v6197
  %v6230 = vmul.f32 %v5974, %v6198
  %v6231 = vmul.f32 %v5975, %v6199
  %v6232 = vmul.f32 %v5976, %v6200
  %v6233 = vmul.f32 %v5977, %v6201
  %v6234 = vmul.f32 %v5978, %v6202
  %v6235 = vmul.f32 %v5979, %v6203
  %v6236 = vmul.f32 %v5980, %v6204
  %v6237 = vmul.f32 %v5981, %v6205
  %v6238 = vmul.f32 %v5982, %v6206
  %v6239 = vmul.f32 %v5983, %v6207
  %v6240 = vmul.f32 %v5984, %v6208
  %v6241 = vmul.f32 %v5985, %v6209
  %v6242 = vmul.f32 %v5986, %v6210
  %v6243 = vmul.f32 %v5987, %v6211
  %v6244 = vmul.f32 %v5988, %v6212
  %v6245 = vmul.f32 %v5989, %v6213
  %v6246 = vlaneseq
  %v6247 = vshrl.u32 %v6246, 7
  %v6248 = vsub.s32 0, %v6247
  %v6249 = vrot.slane %v23, %v6248
  %v6250 = vmul.f32 %v6214, %v6249
  %v6251 = vmul.f32 %v6215, %v6249
  %v6252 = vmul.f32 %v6216, %v6249
  %v6253 = vmul.f32 %v6217, %v6249
  %v6254 = vmul.f32 %v6218, %v6249
  %v6255 = vmul.f32 %v6219, %v6249
  %v6256 = vmul.f32 %v6220, %v6249
  %v6257 = vmul.f32 %v6221, %v6249
  %v6258 = vmul.f32 %v6222, %v6249
  %v6259 = vmul.f32 %v6223, %v6249
  %v6260 = vmul.f32 %v6224, %v6249
  %v6261 = vmul.f32 %v6225, %v6249
  %v6262 = vmul.f32 %v6226, %v6249
  %v6263 = vmul.f32 %v6227, %v6249
  %v6264 = vmul.f32 %v6228, %v6249
  %v6265 = vmul.f32 %v6229, %v6249
  %v6266 = vmul.f32 %v6230, %v6249
  %v6267 = vmul.f32 %v6231, %v6249
  %v6268 = vmul.f32 %v6232, %v6249
  %v6269 = vmul.f32 %v6233, %v6249
  %v6270 = vmul.f32 %v6234, %v6249
  %v6271 = vmul.f32 %v6235, %v6249
  %v6272 = vmul.f32 %v6236, %v6249
  %v6273 = vmul.f32 %v6237, %v6249
  %v6274 = vmul.f32 %v6238, %v6249
  %v6275 = vmul.f32 %v6239, %v6249
  %v6276 = vmul.f32 %v6240, %v6249
  %v6277 = vmul.f32 %v6241, %v6249
  %v6278 = vmul.f32 %v6242, %v6249
  %v6279 = vmul.f32 %v6243, %v6249
  %v6280 = vmul.f32 %v6244, %v6249
  %v6281 = vmul.f32 %v6245, %v6249
  %v6282 = vlaneseq
  %v6283 = vshrl.u32 %v6282, 7
  %v6284 = vsub.s32 0, %v6283
  %v6285 = vrot.slane %v24, %v6284
  %v6286 = vadd.f32 %v6250, %v6285
  %v6287 = vadd.f32 %v6251, %v6285
  %v6288 = vadd.f32 %v6252, %v6285
  %v6289 = vadd.f32 %v6253, %v6285
  %v6290 = vadd.f32 %v6254, %v6285
  %v6291 = vadd.f32 %v6255, %v6285
  %v6292 = vadd.f32 %v6256, %v6285
  %v6293 = vadd.f32 %v6257, %v6285
  %v6294 = vadd.f32 %v6258, %v6285
  %v6295 = vadd.f32 %v6259, %v6285
  %v6296 = vadd.f32 %v6260, %v6285
  %v6297 = vadd.f32 %v6261, %v6285
  %v6298 = vadd.f32 %v6262, %v6285
  %v6299 = vadd.f32 %v6263, %v6285
  %v6300 = vadd.f32 %v6264, %v6285
  %v6301 = vadd.f32 %v6265, %v6285
  %v6302 = vadd.f32 %v6266, %v6285
  %v6303 = vadd.f32 %v6267, %v6285
  %v6304 = vadd.f32 %v6268, %v6285
  %v6305 = vadd.f32 %v6269, %v6285
  %v6306 = vadd.f32 %v6270, %v6285
  %v6307 = vadd.f32 %v6271, %v6285
  %v6308 = vadd.f32 %v6272, %v6285
  %v6309 = vadd.f32 %v6273, %v6285
  %v6310 = vadd.f32 %v6274, %v6285
  %v6311 = vadd.f32 %v6275, %v6285
  %v6312 = vadd.f32 %v6276, %v6285
  %v6313 = vadd.f32 %v6277, %v6285
  %v6314 = vadd.f32 %v6278, %v6285
  %v6315 = vadd.f32 %v6279, %v6285
  %v6316 = vadd.f32 %v6280, %v6285
  %v6317 = vadd.f32 %v6281, %v6285
  %6318 = vst [vmem:[%s4] sm:$0xff] %v6286
  %6319 = vst [vmem:[%s4 + $0x8] sm:$0xff] %v6287
  %6320 = vst [vmem:[%s4 + $0x10] sm:$0xff] %v6288
  %6321 = vst [vmem:[%s4 + $0x18] sm:$0xff] %v6289
  %6322 = vst [vmem:[%s4 + $0x20] sm:$0xff] %v6290
  %6323 = vst [vmem:[%s4 + $0x28] sm:$0xff] %v6291
  %6324 = vst [vmem:[%s4 + $0x30] sm:$0xff] %v6292
  %6325 = vst [vmem:[%s4 + $0x38] sm:$0xff] %v6293
  %6326 = vst [vmem:[%s4 + $0x40] sm:$0xff] %v6294
  %6327 = vst [vmem:[%s4 + $0x48] sm:$0xff] %v6295
  %6328 = vst [vmem:[%s4 + $0x50] sm:$0xff] %v6296
  %6329 = vst [vmem:[%s4 + $0x58] sm:$0xff] %v6297
  %6330 = vst [vmem:[%s4 + $0x60] sm:$0xff] %v6298
  %6331 = vst [vmem:[%s4 + $0x68] sm:$0xff] %v6299
  %6332 = vst [vmem:[%s4 + $0x70] sm:$0xff] %v6300
  %6333 = vst [vmem:[%s4 + $0x78] sm:$0xff] %v6301
  %6334 = vst [vmem:[%s4 + $0x80] sm:$0xff] %v6302
  %6335 = vst [vmem:[%s4 + $0x88] sm:$0xff] %v6303
  %6336 = vst [vmem:[%s4 + $0x90] sm:$0xff] %v6304
  %6337 = vst [vmem:[%s4 + $0x98] sm:$0xff] %v6305
  %6338 = vst [vmem:[%s4 + $0xa0] sm:$0xff] %v6306
  %6339 = vst [vmem:[%s4 + $0xa8] sm:$0xff] %v6307
  %6340 = vst [vmem:[%s4 + $0xb0] sm:$0xff] %v6308
  %6341 = vst [vmem:[%s4 + $0xb8] sm:$0xff] %v6309
  %6342 = vst [vmem:[%s4 + $0xc0] sm:$0xff] %v6310
  %6343 = vst [vmem:[%s4 + $0xc8] sm:$0xff] %v6311
  %6344 = vst [vmem:[%s4 + $0xd0] sm:$0xff] %v6312
  %6345 = vst [vmem:[%s4 + $0xd8] sm:$0xff] %v6313
  %6346 = vst [vmem:[%s4 + $0xe0] sm:$0xff] %v6314
  %6347 = vst [vmem:[%s4 + $0xe8] sm:$0xff] %v6315
  %6348 = vst [vmem:[%s4 + $0xf0] sm:$0xff] %v6316
  %6349 = vst [vmem:[%s4 + $0xf8] sm:$0xff] %v6317
  // Predicated region
  $region18: #{_convmixer_block_impl.1} parent=0 // pred_check
    _
  $region19: #{_convmixer_block_impl.1} parent=0 // pred_check_branch
    %6351 = sbr.rel (0) target = $region21
  $region20: #{_convmixer_block_impl.1} parent=0 // pred_region
    _
  $region21: #{_convmixer_block_impl.1} parent=0 // pred_fallthru
    _
  // Predicated region
  $region22: #{_convmixer_block_impl.1} parent=0 // pred_check
    _
  $region23: #{_convmixer_block_impl.1} parent=0 // pred_check_branch
    %6353 = sbr.rel (0) target = $region25
  $region24: #{_convmixer_block_impl.1} parent=0 // pred_region
    _
  $region25: #{_convmixer_block_impl.1} parent=0 // pred_fallthru
    _

</llo_original>
